<compile_context>
chip_gen: v7x
topology: tpu7x:2x2x1
jax: 0.10.0
libtpu: 0.0.40
codegen_flags: <defaults>
</compile_context>

<pallas_src>
import math

import jax
import jax.numpy as jnp
from jax.experimental import pallas as pl
from jax.experimental.pallas import tpu as pltpu

# -------------------- toy hyper-parameters (uniform shrink of the 768-dim model) -------------------
DIM = 128                          # stands in for 768; = one full 128-lane tile
HEADS = 8                          # nn.MultiheadAttention(num_heads=8)
HEAD_DIM = DIM // HEADS            # 16
MLP_DIM = 4 * DIM                  # 512
DEPTH = 12
PATCH = 16
IMG = 32                           # 2x2 = 4 patches per frame
FRAMES = 2
NUM_CLASSES = 5
NUM_LATENTS = 4                    # unused (AdaptFormer latent fusion unavailable -- see TODO above)
N_POINTS = 8
BATCH = 2

S_RGB = 1 + FRAMES * (IMG // PATCH) ** 2   # 9 tokens (cls + 2 frames x 4 patches)
S_RGB_PAD = 16                             # per-batch row pad -> sublane aligned
S_PC = N_POINTS                            # 8 (already sublane aligned)
CLS_PAD = 128                              # classifier output padded to a full lane tile
OUT_ROWS = 8                               # per-batch logits block padded to a full sublane tile
EPS_VIT = 1e-6
EPS_PC = 1e-5
_GELU_C = math.sqrt(2.0 / math.pi)
_NEG_BIG = -1e9


# ==================================== in-kernel helpers ===========================================

def _mm(x, w):
    """MXU matmul: bf16 operands (weights already stored bf16), f32 accumulation."""
    return jnp.dot(x.astype(jnp.bfloat16), w.astype(jnp.bfloat16),
                   preferred_element_type=jnp.float32)


def _layernorm(x, g, b, eps):
    x = x.astype(jnp.float32)
    mu = jnp.mean(x, axis=-1, keepdims=True)
    var = jnp.mean(jnp.square(x - mu), axis=-1, keepdims=True)
    return (x - mu) * jax.lax.rsqrt(var + eps) * g + b


def _gelu(x):
    # tanh-approximate GELU: runs on the (otherwise idle) EUP slot instead of a VALU erf polynomial
    return 0.5 * x * (1.0 + jnp.tanh(_GELU_C * (x + 0.044715 * x * x * x)))


def _mha(x, n_rows, w_qkv, b_qkv, w_o, b_o, attn_ref, key_bias=None):
    """Multi-head self-attention for ONE batch element resident in VMEM.

    x: (n_rows, DIM) f32.  All ops stay 2-D; each head's (n_rows, HEAD_DIM) output is stored into
    the `attn_ref` VMEM slab at a static column offset (no lane concatenation, no pad re-assembly),
    then the slab feeds the output projection in a single matmul.  `key_bias` is an additive
    (1, n_rows) mask (-1e9 on padded key columns) so padded rows never contaminate real tokens.
    """
    qkv = _mm(x, w_qkv) + b_qkv                                  # (n_rows, 3*DIM) f32
    scale = 1.0 / math.sqrt(HEAD_DIM)
    for h in range(HEADS):
        c = h * HEAD_DIM
        q = qkv[:, c:c + HEAD_DIM]
        k = qkv[:, DIM + c:DIM + c + HEAD_DIM]
        v = qkv[:, 2 * DIM + c:2 * DIM + c + HEAD_DIM]
        s = jax.lax.dot_general(q, k, (((1,), (1,)), ((), ())),
                                preferred_element_type=jnp.float32) * scale
        if key_bias is not None:
            s = s + key_bias                                     # kill padded key columns
        s = s - jnp.max(s, axis=-1, keepdims=True)
        p = jnp.exp(s)
        p = p * pl.reciprocal(jnp.sum(p, axis=-1, keepdims=True), approx=True)
        attn_ref[0:n_rows, c:c + HEAD_DIM] = jnp.dot(p, v, preferred_element_type=jnp.float32)
    return _mm(attn_ref[0:n_rows, :], w_o) + b_o


# ==================================== fused encoder kernel ========================================

def _av_encoder_kernel(
    # initial token embeddings (per-batch blocks)
    rgb0_ref, pc0_ref,
    # per-depth ViT block weights (depth axis blocked by the grid)
    v_ln_ref, v_wqkv_ref, v_bqkv_ref, v_wo_ref, v_bo_ref,
    v_wfc1_ref, v_bfc1_ref, v_wfc2_ref, v_bfc2_ref,
    # shared PointCloudEncoder weights (constant blocks, fetched once)
    p_ln_ref, p_wqkv_ref, p_bqkv_ref, p_wo_ref, p_bo_ref,
    p_wfc1_ref, p_bfc1_ref, p_wfc2_ref, p_bfc2_ref,
    # epilogue weights (constant blocks)
    post_ln_ref, cls_w_ref, cls_b_ref,
    # output (padded logits, per-batch block)
    out_ref,
    # VMEM scratch: stream activations resident across the depth axis + attention head slab
    rgb_ref, pc_ref, attn_ref,
):
    d = pl.program_id(1)

    @pl.when(d == 0)
    def _init():
        rgb_ref[...] = rgb0_ref[...]
        pc_ref[...] = pc0_ref[...]
        out_ref[...] = jnp.zeros_like(out_ref)

    # additive key-padding bias for the RGB stream (tokens S_RGB..S_RGB_PAD-1 are pads)
    col = jax.lax.broadcasted_iota(jnp.int32, (1, S_RGB_PAD), 1)
    rgb_key_bias = jnp.where(col < S_RGB, 0.0, _NEG_BIG).astype(jnp.float32)

    # ---------------- PC stream: shared PointCloudEncoder applied at every depth -----------------
    # PointCloudEncoder.forward: x = x + attn(x,x,x); x = x + mlp(norm2(x)); return norm1(x)
    pc_x = pc_ref[...]
    pln = p_ln_ref[...]                                          # rows: [ln1_g, ln1_b, ln2_g, ln2_b]
    pc_x = pc_x + _mha(pc_x, S_PC,
                       p_wqkv_ref[...], p_bqkv_ref[...],
                       p_wo_ref[...], p_bo_ref[...], attn_ref)
    y = _layernorm(pc_x, pln[2:3], pln[3:4], EPS_PC)             # norm2
    y = _gelu(_mm(y, p_wfc1_ref[...]) + p_bfc1_ref[...])
    y = _mm(y, p_wfc2_ref[...]) + p_bfc2_ref[...]
    pc_x = pc_x + y
    pc_x = _layernorm(pc_x, pln[0:1], pln[1:2], EPS_PC)          # norm1 (returned value)
    pc_ref[...] = pc_x

    # ---------------- RGB stream: timm ViT block d (pre-norm attn + pre-norm MLP) -----------------
    rgb_x = rgb_ref[...]
    vln = v_ln_ref[0]                                            # rows: [ln1_g, ln1_b, ln2_g, ln2_b]
    y = _layernorm(rgb_x, vln[0:1], vln[1:2], EPS_VIT)
    rgb_x = rgb_x + _mha(y, S_RGB_PAD,
                         v_wqkv_ref[0], v_bqkv_ref[0],
                         v_wo_ref[0], v_bo_ref[0], attn_ref, key_bias=rgb_key_bias)
    y = _layernorm(rgb_x, vln[2:3], vln[3:4], EPS_VIT)
    y = _gelu(_mm(y, v_wfc1_ref[0]) + v_bfc1_ref[0])
    y = _mm(y, v_wfc2_ref[0]) + v_bfc2_ref[0]
    rgb_x = rgb_x + y
    rgb_ref[...] = rgb_x

    # ---------------- epilogue: shared post-norm on CLS tokens + classifier -----------------------
    @pl.when(d == DEPTH - 1)
    def _final():
        pnl = post_ln_ref[...]
        g, b = pnl[0:1], pnl[1:2]
        fused = 0.5 * (_layernorm(pc_x[0:1, :], g, b, EPS_VIT)
                       + _layernorm(rgb_x[0:1, :], g, b, EPS_VIT))
        logits = _mm(fused, cls_w_ref[...]) + cls_b_ref[...]     # (1, CLS_PAD), lane-dense
        out_ref[0:1, :] = logits


def _stacked_spec(shape):
    zeros = (0,) * (len(shape) - 1)
    return pl.BlockSpec(shape, lambda b, d: (d,) + zeros)


def _const_spec(shape):
    zeros = (0,) * len(shape)
    return pl.BlockSpec(shape, lambda b, d: zeros)


def _batch_spec(shape):
    zeros = (0,) * (len(shape) - 1)
    return pl.BlockSpec(shape, lambda b, d: (b,) + zeros)


def _fused_encoder(params, rgb_tokens, pc_tokens):
    """One pallas_call for all 12 dual-stream blocks + post-norm + classifier.

    grid = (BATCH, DEPTH): batch axis is 'parallel' (second TensorCore on v7x), depth axis is
    'arbitrary' (sequential residual stream, weights streamed per depth).
    """
    assert pc_tokens.shape[0] == BATCH
    # pad token rows to sublane-aligned per-batch blocks and flatten to lane-dense 2-D (rows, DIM)
    rgb0 = jnp.pad(rgb_tokens, ((0, 0), (0, S_RGB_PAD - S_RGB), (0, 0)))
    rgb0 = rgb0.reshape(BATCH * S_RGB_PAD, DIM).astype(jnp.float32)
    pc0 = pc_tokens.reshape(BATCH * S_PC, DIM).astype(jnp.float32)

    in_specs = [
        _batch_spec((S_RGB_PAD, DIM)), _batch_spec((S_PC, DIM)),
        _stacked_spec((1, 4, DIM)),
        _stacked_spec((1, DIM, 3 * DIM)), _stacked_spec((1, 1, 3 * DIM)),
        _stacked_spec((1, DIM, DIM)), _stacked_spec((1, 1, DIM)),
        _stacked_spec((1, DIM, MLP_DIM)), _stacked_spec((1, 1, MLP_DIM)),
        _stacked_spec((1, MLP_DIM, DIM)), _stacked_spec((1, 1, DIM)),
        _const_spec((4, DIM)),
        _const_spec((DIM, 3 * DIM)), _const_spec((1, 3 * DIM)),
        _const_spec((DIM, DIM)), _const_spec((1, DIM)),
        _const_spec((DIM, MLP_DIM)), _const_spec((1, MLP_DIM)),
        _const_spec((MLP_DIM, DIM)), _const_spec((1, DIM)),
        _const_spec((2, DIM)), _const_spec((DIM, CLS_PAD)), _const_spec((1, CLS_PAD)),
    ]

    out = pl.pallas_call(
        _av_encoder_kernel,
        out_shape=jax.ShapeDtypeStruct((BATCH * OUT_ROWS, CLS_PAD), jnp.float32),
        grid_spec=pltpu.PrefetchScalarGridSpec(
            num_scalar_prefetch=0,
            grid=(BATCH, DEPTH),
            in_specs=in_specs,
            out_specs=_batch_spec((OUT_ROWS, CLS_PAD)),
            scratch_shapes=[
                pltpu.VMEM((S_RGB_PAD, DIM), jnp.float32),   # rgb activations (resident over depth)
                pltpu.VMEM((S_PC, DIM), jnp.float32),        # pc activations (resident over depth)
                pltpu.VMEM((S_RGB_PAD, DIM), jnp.float32),   # attention head-output slab
            ]),
        compiler_params=pltpu.CompilerParams(
            dimension_semantics=("parallel", "arbitrary")),  # batch parallel; depth sequential
    )(
        rgb0, pc0,
        params["vit_ln"], params["vit_wqkv"], params["vit_bqkv"],
        params["vit_wo"], params["vit_bo"],
        params["vit_wfc1"], params["vit_bfc1"],
        params["vit_wfc2"], params["vit_bfc2"],
        params["pc_ln"], params["pc_wqkv"], params["pc_bqkv"],
        params["pc_wo"], params["pc_bo"],
        params["pc_wfc1"], params["pc_bfc1"],
        params["pc_wfc2"], params["pc_bfc2"],
        params["post_ln"], params["cls_w"], params["cls_b"],
    )
    return out.reshape(BATCH, OUT_ROWS, CLS_PAD)[:, 0, 0:NUM_CLASSES]


# ==================================== embedding prologue (plain JAX, one-time) ====================

def _interp_linear(p, out_len):
    """F.interpolate(mode='linear', align_corners=False) along the last axis of (1, D, L_in)."""
    L_in = p.shape[-1]
    scale = L_in / out_len
    src = (jnp.arange(out_len, dtype=jnp.float32) + 0.5) * scale - 0.5
    src = jnp.clip(src, 0.0, L_in - 1)
    lo = jnp.floor(src).astype(jnp.int32)
    hi = jnp.minimum(lo + 1, L_in - 1)
    w = src - lo.astype(jnp.float32)
    return p[..., lo] * (1.0 - w) + p[..., hi] * w


def _rgb_tokens(rgb, params):
    """forward_rgb_features: patch embed + frame flatten + cls token + (interpolated) pos embed."""
    B, F, C, H, W = rgb.shape
    nH, nW = H // PATCH, W // PATCH
    x = rgb.reshape(B * F, C, nH, PATCH, nW, PATCH)
    x = x.transpose(0, 2, 4, 1, 3, 5).reshape(B * F, nH * nW, C * PATCH * PATCH)
    x = x @ params["patch_w"] + params["patch_b"]                # (B*F, n_patches, DIM)
    num_patches = nH * nW
    x = x.reshape(B, F, num_patches, DIM)
    x = x.transpose(0, 3, 1, 2).reshape(B, DIM, F * num_patches).transpose(0, 2, 1)
    cls = jnp.broadcast_to(params["cls_token"], (B, 1, DIM))
    x = jnp.concatenate([cls, x], axis=1)                        # (B, S_RGB, DIM)
    pos = params["pos_embed"]                                    # (1, 1 + n_patches_single, DIM)
    if pos.shape[1] != x.shape[1]:
        pos = _interp_linear(pos.transpose(0, 2, 1), x.shape[1]).transpose(0, 2, 1)
    return x + pos


def avmodel_forward(params, pc, rgb):
    # tiny one-time embedding glue stays in plain JAX; everything else is ONE fused pallas_call
    pc_tok = pc @ params["pc_proj_w"] + params["pc_proj_b"]      # (B, N_POINTS, DIM)
    rgb_tok = _rgb_tokens(rgb, params)                           # (B, S_RGB, DIM)
    return _fused_encoder(params, rgb_tok, pc_tok)


# ==================================== parameter init ==============================================

def _dense(key, fan_in, fan_out, scale=0.02):
    return scale * jax.random.normal(key, (fan_in, fan_out), jnp.float32)


def _ln_rows(n):
    rows = []
    for _ in range(n):
        rows.extend([jnp.ones((DIM,), jnp.float32), jnp.zeros((DIM,), jnp.float32)])
    return jnp.stack(rows)


def init_params(key):
    n_patches_single = (IMG // PATCH) ** 2
    patch_in = 3 * PATCH * PATCH
    keys = jax.random.split(key, 10 + 2 * DEPTH)

    params = {
        "patch_w": _dense(keys[0], patch_in, DIM),
        "patch_b": jnp.zeros((DIM,), jnp.float32),
        "cls_token": 0.02 * jax.random.normal(keys[1], (1, 1, DIM), jnp.float32),
        "pos_embed": 0.02 * jax.random.normal(keys[2], (1, 1 + n_patches_single, DIM), jnp.float32),
        "pc_proj_w": _dense(keys[3], 3, DIM),
        "pc_proj_b": jnp.zeros((DIM,), jnp.float32),
    }

    # shared PointCloudEncoder weights (ONE instance reused by all 12 AdaptFormer blocks)
    params["pc_ln"] = _ln_rows(2)                                           # [ln1_g, ln1_b, ln2_g, ln2_b]
    params["pc_wqkv"] = _dense(keys[4], DIM, 3 * DIM).astype(jnp.bfloat16)
    params["pc_bqkv"] = jnp.zeros((1, 3 * DIM), jnp.float32)
    params["pc_wo"] = _dense(keys[5], DIM, DIM).astype(jnp.bfloat16)
    params["pc_bo"] = jnp.zeros((1, DIM), jnp.float32)
    params["pc_wfc1"] = _dense(keys[6], DIM, MLP_DIM).astype(jnp.bfloat16)
    params["pc_bfc1"] = jnp.zeros((1, MLP_DIM), jnp.float32)
    params["pc_wfc2"] = _dense(keys[7], MLP_DIM, DIM).astype(jnp.bfloat16)
    params["pc_bfc2"] = jnp.zeros((1, DIM), jnp.float32)

    # per-depth ViT block weights, stacked along a leading depth axis (blocked by the kernel grid)
    vln, wqkv, wo, wfc1, wfc2 = [], [], [], [], []
    for i in range(DEPTH):
        ka1, ka2 = jax.random.split(keys[10 + 2 * i])
        km1, km2 = jax.random.split(keys[11 + 2 * i])
        vln.append(_ln_rows(2))
        wqkv.append(_dense(ka1, DIM, 3 * DIM))
        wo.append(_dense(ka2, DIM, DIM))
        wfc1.append(_dense(km1, DIM, MLP_DIM))
        wfc2.append(_dense(km2, MLP_DIM, DIM))
    params["vit_ln"] = jnp.stack(vln)                                       # (DEPTH, 4, DIM) f32
    params["vit_wqkv"] = jnp.stack(wqkv).astype(jnp.bfloat16)               # (DEPTH, DIM, 3*DIM)
    params["vit_bqkv"] = jnp.zeros((DEPTH, 1, 3 * DIM), jnp.float32)
    params["vit_wo"] = jnp.stack(wo).astype(jnp.bfloat16)
    params["vit_bo"] = jnp.zeros((DEPTH, 1, DIM), jnp.float32)
    params["vit_wfc1"] = jnp.stack(wfc1).astype(jnp.bfloat16)
    params["vit_bfc1"] = jnp.zeros((DEPTH, 1, MLP_DIM), jnp.float32)
    params["vit_wfc2"] = jnp.stack(wfc2).astype(jnp.bfloat16)
    params["vit_bfc2"] = jnp.zeros((DEPTH, 1, DIM), jnp.float32)

    # shared post-norm + classifier (classifier columns padded to a full 128-lane tile)
    params["post_ln"] = _ln_rows(1)                                         # (2, DIM): [g, b]
    cls_w = _dense(keys[8], DIM, NUM_CLASSES)
    params["cls_w"] = jnp.pad(cls_w, ((0, 0), (0, CLS_PAD - NUM_CLASSES))).astype(jnp.bfloat16)
    params["cls_b"] = jnp.zeros((1, CLS_PAD), jnp.float32)
    return params


# ==================================== main =========================================================

if __name__ == "__main__":
    root = jax.random.PRNGKey(0)
    k_params, k_pc, k_rgb = jax.random.split(root, 3)

    params = init_params(k_params)
    pc = jax.random.normal(k_pc, (BATCH, N_POINTS, 3), jnp.float32)
    rgb = jax.random.normal(k_rgb, (BATCH, FRAMES, 3, IMG, IMG), jnp.float32)

    fwd = jax.jit(avmodel_forward)
    logits = fwd(params, pc, rgb)
    jax.block_until_ready(logits)
    assert logits.shape == (BATCH, NUM_CLASSES), logits.shape
    assert bool(jnp.all(jnp.isfinite(logits)))
    print("KERNEL_OK")
</pallas_src>

<mosaic_0001>
module attributes {stable_mosaic.version = 11 : i64} {
  func.func @_av_encoder_kernel(%arg0: i32, %arg1: i32, %arg2: memref<16x128xf32, #tpu.memory_space<vmem>>, %arg3: memref<8x128xf32, #tpu.memory_space<vmem>>, %arg4: memref<1x4x128xf32, #tpu.memory_space<vmem>>, %arg5: memref<1x128x384xbf16, #tpu.memory_space<vmem>>, %arg6: memref<1x1x384xf32, #tpu.memory_space<vmem>>, %arg7: memref<1x128x128xbf16, #tpu.memory_space<vmem>>, %arg8: memref<1x1x128xf32, #tpu.memory_space<vmem>>, %arg9: memref<1x128x512xbf16, #tpu.memory_space<vmem>>, %arg10: memref<1x1x512xf32, #tpu.memory_space<vmem>>, %arg11: memref<1x512x128xbf16, #tpu.memory_space<vmem>>, %arg12: memref<1x1x128xf32, #tpu.memory_space<vmem>>, %arg13: memref<4x128xf32, #tpu.memory_space<vmem>>, %arg14: memref<128x384xbf16, #tpu.memory_space<vmem>>, %arg15: memref<1x384xf32, #tpu.memory_space<vmem>>, %arg16: memref<128x128xbf16, #tpu.memory_space<vmem>>, %arg17: memref<1x128xf32, #tpu.memory_space<vmem>>, %arg18: memref<128x512xbf16, #tpu.memory_space<vmem>>, %arg19: memref<1x512xf32, #tpu.memory_space<vmem>>, %arg20: memref<512x128xbf16, #tpu.memory_space<vmem>>, %arg21: memref<1x128xf32, #tpu.memory_space<vmem>>, %arg22: memref<2x128xf32, #tpu.memory_space<vmem>>, %arg23: memref<128x128xbf16, #tpu.memory_space<vmem>>, %arg24: memref<1x128xf32, #tpu.memory_space<vmem>>, %arg25: memref<8x128xf32, #tpu.memory_space<vmem>>, %arg26: memref<16x128xf32, #tpu.memory_space<vmem>>, %arg27: memref<8x128xf32, #tpu.memory_space<vmem>>, %arg28: memref<16x128xf32, #tpu.memory_space<vmem>>) attributes {dimension_semantics = [#tpu.dimension_semantics<parallel>, #tpu.dimension_semantics<arbitrary>], iteration_bounds = array<i64: 2, 12>, scalar_prefetch = 0 : i64, scratch_operands = 3 : i64, tpu.core_type = #tpu.core_type<tc>, window_params = [{transform_indices = @transform_0, window_bounds = array<i64: 16, 128>}, {transform_indices = @transform_1, window_bounds = array<i64: 8, 128>}, {transform_indices = @transform_2, window_bounds = array<i64: 1, 4, 128>}, {transform_indices = @transform_3, window_bounds = array<i64: 1, 128, 384>}, {transform_indices = @transform_4, window_bounds = array<i64: 1, 1, 384>}, {transform_indices = @transform_5, window_bounds = array<i64: 1, 128, 128>}, {transform_indices = @transform_6, window_bounds = array<i64: 1, 1, 128>}, {transform_indices = @transform_7, window_bounds = array<i64: 1, 128, 512>}, {transform_indices = @transform_8, window_bounds = array<i64: 1, 1, 512>}, {transform_indices = @transform_9, window_bounds = array<i64: 1, 512, 128>}, {transform_indices = @transform_10, window_bounds = array<i64: 1, 1, 128>}, {pipeline_mode = #tpu.pipeline_mode<synchronous>, transform_indices = @transform_11, window_bounds = array<i64: 4, 128>}, {pipeline_mode = #tpu.pipeline_mode<synchronous>, transform_indices = @transform_12, window_bounds = array<i64: 128, 384>}, {pipeline_mode = #tpu.pipeline_mode<synchronous>, transform_indices = @transform_13, window_bounds = array<i64: 1, 384>}, {pipeline_mode = #tpu.pipeline_mode<synchronous>, transform_indices = @transform_14, window_bounds = array<i64: 128, 128>}, {pipeline_mode = #tpu.pipeline_mode<synchronous>, transform_indices = @transform_15, window_bounds = array<i64: 1, 128>}, {pipeline_mode = #tpu.pipeline_mode<synchronous>, transform_indices = @transform_16, window_bounds = array<i64: 128, 512>}, {pipeline_mode = #tpu.pipeline_mode<synchronous>, transform_indices = @transform_17, window_bounds = array<i64: 1, 512>}, {pipeline_mode = #tpu.pipeline_mode<synchronous>, transform_indices = @transform_18, window_bounds = array<i64: 512, 128>}, {pipeline_mode = #tpu.pipeline_mode<synchronous>, transform_indices = @transform_19, window_bounds = array<i64: 1, 128>}, {pipeline_mode = #tpu.pipeline_mode<synchronous>, transform_indices = @transform_20, window_bounds = array<i64: 2, 128>}, {pipeline_mode = #tpu.pipeline_mode<synchronous>, transform_indices = @transform_21, window_bounds = array<i64: 128, 128>}, {pipeline_mode = #tpu.pipeline_mode<synchronous>, transform_indices = @transform_22, window_bounds = array<i64: 1, 128>}, {transform_indices = @transform_23, window_bounds = array<i64: 8, 128>}]} {
    %c0_i32 = arith.constant 0 : i32
    %0 = arith.cmpi eq, %arg1, %c0_i32 : i32
    %1 = arith.extui %0 : i1 to i32
    %c0_i32_0 = arith.constant 0 : i32
    %2 = arith.cmpi ne, %1, %c0_i32_0 : i32
    scf.if %2 {
      %c0_200 = arith.constant 0 : index
      %c0_201 = arith.constant 0 : index
      %507 = vector.load %arg2[%c0_200, %c0_201] : memref<16x128xf32, #tpu.memory_space<vmem>>, vector<16x128xf32>
      %c0_202 = arith.constant 0 : index
      %c0_203 = arith.constant 0 : index
      %508 = vector.load %arg26[%c0_202, %c0_203] : memref<16x128xf32, #tpu.memory_space<vmem>>, vector<16x128xf32>
      tpu.vector_store %arg26[%c0_202, %c0_203], %507 {strides = array<i32>} : memref<16x128xf32, #tpu.memory_space<vmem>>, vector<16x128xf32>,
      %c0_204 = arith.constant 0 : index
      %c0_205 = arith.constant 0 : index
      %509 = vector.load %arg3[%c0_204, %c0_205] : memref<8x128xf32, #tpu.memory_space<vmem>>, vector<8x128xf32>
      %c0_206 = arith.constant 0 : index
      %c0_207 = arith.constant 0 : index
      %510 = vector.load %arg27[%c0_206, %c0_207] : memref<8x128xf32, #tpu.memory_space<vmem>>, vector<8x128xf32>
      tpu.vector_store %arg27[%c0_206, %c0_207], %509 {strides = array<i32>} : memref<8x128xf32, #tpu.memory_space<vmem>>, vector<8x128xf32>,
      %cst_208 = arith.constant 0.000000e+00 : f32
      %511 = vector.broadcast %cst_208 : f32 to vector<8x128xf32>
      %c0_209 = arith.constant 0 : index
      %c0_210 = arith.constant 0 : index
      %512 = vector.load %arg25[%c0_209, %c0_210] : memref<8x128xf32, #tpu.memory_space<vmem>>, vector<8x128xf32>
      tpu.vector_store %arg25[%c0_209, %c0_210], %511 {strides = array<i32>} : memref<8x128xf32, #tpu.memory_space<vmem>>, vector<8x128xf32>,
    } else {
    }
    %3 = tpu.iota {dimensions = array<i32: 1>} : vector<1x16xi32>
    %c9_i32 = arith.constant 9 : i32
    %4 = vector.broadcast %c9_i32 : i32 to vector<1x16xi32>
    %5 = arith.cmpi slt, %3, %4 : vector<1x16xi32>
    %cst = arith.constant 0.000000e+00 : f32
    %cst_1 = arith.constant -1.000000e+09 : f32
    %6 = vector.broadcast %cst : f32 to vector<1x16xf32>
    %7 = vector.broadcast %cst_1 : f32 to vector<1x16xf32>
    %8 = arith.select %5, %6, %7 : vector<1x16xi1>, vector<1x16xf32>
    %c0 = arith.constant 0 : index
    %c0_2 = arith.constant 0 : index
    %9 = vector.load %arg27[%c0, %c0_2] : memref<8x128xf32, #tpu.memory_space<vmem>>, vector<8x128xf32>
    %c0_3 = arith.constant 0 : index
    %c0_4 = arith.constant 0 : index
    %10 = vector.load %arg13[%c0_3, %c0_4] : memref<4x128xf32, #tpu.memory_space<vmem>>, vector<4x128xf32>
    %c0_5 = arith.constant 0 : index
    %c0_6 = arith.constant 0 : index
    %11 = vector.load %arg14[%c0_5, %c0_6] : memref<128x384xbf16, #tpu.memory_space<vmem>>, vector<128x384xbf16>
    %c0_7 = arith.constant 0 : index
    %c0_8 = arith.constant 0 : index
    %12 = vector.load %arg15[%c0_7, %c0_8] : memref<1x384xf32, #tpu.memory_space<vmem>>, vector<1x384xf32>
    %c0_9 = arith.constant 0 : index
    %c0_10 = arith.constant 0 : index
    %13 = vector.load %arg16[%c0_9, %c0_10] : memref<128x128xbf16, #tpu.memory_space<vmem>>, vector<128x128xbf16>
    %c0_11 = arith.constant 0 : index
    %c0_12 = arith.constant 0 : index
    %14 = vector.load %arg17[%c0_11, %c0_12] : memref<1x128xf32, #tpu.memory_space<vmem>>, vector<1x128xf32>
    %15 = arith.truncf %9 : vector<8x128xf32> to vector<8x128xbf16>
    %cst_13 = arith.constant dense<0.000000e+00> : vector<8x384xf32>
    %16 = tpu.matmul %15, %11, %cst_13 {dimension_numbers = #tpu.dot_dimension_numbers<[1], [0], [0], [1], [0, 0, 1, 1], [], []>} : vector<8x128xbf16>, vector<128x384xbf16>, vector<8x384xf32> -> vector<8x384xf32>
    %17 = vector.broadcast %12 : vector<1x384xf32> to vector<8x384xf32>
    %18 = arith.addf %16, %17 : vector<8x384xf32>
    %19 = vector.extract_strided_slice %18 {offsets = [0, 0], sizes = [8, 16], strides = [1, 1]} : vector<8x384xf32> to vector<8x16xf32>
    %20 = vector.extract_strided_slice %18 {offsets = [0, 128], sizes = [8, 16], strides = [1, 1]} : vector<8x384xf32> to vector<8x16xf32>
    %21 = vector.extract_strided_slice %18 {offsets = [0, 256], sizes = [8, 16], strides = [1, 1]} : vector<8x384xf32> to vector<8x16xf32>
    %cst_14 = arith.constant dense<0.000000e+00> : vector<8x8xf32>
    %22 = tpu.matmul %19, %20, %cst_14 {dimension_numbers = #tpu.dot_dimension_numbers<[1], [1], [0], [0], [0, 0, 1, 0], [], []>} : vector<8x16xf32>, vector<8x16xf32>, vector<8x8xf32> -> vector<8x8xf32>
    %cst_15 = arith.constant 2.500000e-01 : f32
    %23 = vector.broadcast %cst_15 : f32 to vector<8x8xf32>
    %24 = arith.mulf %22, %23 : vector<8x8xf32>
    %cst_16 = arith.constant dense<0xFF800000> : vector<8xf32>
    %25 = vector.multi_reduction <maximumf>, %24, %cst_16 [1] : vector<8x8xf32> to vector<8xf32>
    %26 = vector.shape_cast %25 : vector<8xf32> to vector<8x1xf32>
    %27 = vector.broadcast %26 : vector<8x1xf32> to vector<8x8xf32>
    %28 = arith.subf %24, %27 : vector<8x8xf32>
    %29 = math.exp %28 : vector<8x8xf32>
    %cst_17 = arith.constant dense<0.000000e+00> : vector<8xf32>
    %30 = vector.multi_reduction <add>, %29, %cst_17 [1] : vector<8x8xf32> to vector<8xf32>
    %31 = vector.shape_cast %30 : vector<8xf32> to vector<8x1xf32>
    %32 = tpu.reciprocal %31 {approx = true} : vector<8x1xf32> -> vector<8x1xf32>
    %33 = vector.broadcast %32 : vector<8x1xf32> to vector<8x8xf32>
    %34 = arith.mulf %29, %33 : vector<8x8xf32>
    %cst_18 = arith.constant dense<0.000000e+00> : vector<8x16xf32>
    %35 = tpu.matmul %34, %21, %cst_18 {dimension_numbers = #tpu.dot_dimension_numbers<[1], [0], [0], [1], [0, 0, 1, 1], [], []>} : vector<8x8xf32>, vector<8x16xf32>, vector<8x16xf32> -> vector<8x16xf32>
    %c0_19 = arith.constant 0 : index
    %c0_20 = arith.constant 0 : index
    %36 = vector.load %arg28[%c0_19, %c0_20] : memref<16x128xf32, #tpu.memory_space<vmem>>, vector<8x16xf32>
    tpu.vector_store %arg28[%c0_19, %c0_20], %35 {strides = array<i32>} : memref<16x128xf32, #tpu.memory_space<vmem>>, vector<8x16xf32>,
    %37 = vector.extract_strided_slice %18 {offsets = [0, 16], sizes = [8, 16], strides = [1, 1]} : vector<8x384xf32> to vector<8x16xf32>
    %38 = vector.extract_strided_slice %18 {offsets = [0, 144], sizes = [8, 16], strides = [1, 1]} : vector<8x384xf32> to vector<8x16xf32>
    %39 = vector.extract_strided_slice %18 {offsets = [0, 272], sizes = [8, 16], strides = [1, 1]} : vector<8x384xf32> to vector<8x16xf32>
    %cst_21 = arith.constant dense<0.000000e+00> : vector<8x8xf32>
    %40 = tpu.matmul %37, %38, %cst_21 {dimension_numbers = #tpu.dot_dimension_numbers<[1], [1], [0], [0], [0, 0, 1, 0], [], []>} : vector<8x16xf32>, vector<8x16xf32>, vector<8x8xf32> -> vector<8x8xf32>
    %cst_22 = arith.constant 2.500000e-01 : f32
    %41 = vector.broadcast %cst_22 : f32 to vector<8x8xf32>
    %42 = arith.mulf %40, %41 : vector<8x8xf32>
    %cst_23 = arith.constant dense<0xFF800000> : vector<8xf32>
    %43 = vector.multi_reduction <maximumf>, %42, %cst_23 [1] : vector<8x8xf32> to vector<8xf32>
    %44 = vector.shape_cast %43 : vector<8xf32> to vector<8x1xf32>
    %45 = vector.broadcast %44 : vector<8x1xf32> to vector<8x8xf32>
    %46 = arith.subf %42, %45 : vector<8x8xf32>
    %47 = math.exp %46 : vector<8x8xf32>
    %cst_24 = arith.constant dense<0.000000e+00> : vector<8xf32>
    %48 = vector.multi_reduction <add>, %47, %cst_24 [1] : vector<8x8xf32> to vector<8xf32>
    %49 = vector.shape_cast %48 : vector<8xf32> to vector<8x1xf32>
    %50 = tpu.reciprocal %49 {approx = true} : vector<8x1xf32> -> vector<8x1xf32>
    %51 = vector.broadcast %50 : vector<8x1xf32> to vector<8x8xf32>
    %52 = arith.mulf %47, %51 : vector<8x8xf32>
    %cst_25 = arith.constant dense<0.000000e+00> : vector<8x16xf32>
    %53 = tpu.matmul %52, %39, %cst_25 {dimension_numbers = #tpu.dot_dimension_numbers<[1], [0], [0], [1], [0, 0, 1, 1], [], []>} : vector<8x8xf32>, vector<8x16xf32>, vector<8x16xf32> -> vector<8x16xf32>
    %c0_26 = arith.constant 0 : index
    %c16 = arith.constant 16 : index
    %54 = vector.load %arg28[%c0_26, %c16] : memref<16x128xf32, #tpu.memory_space<vmem>>, vector<8x16xf32>
    tpu.vector_store %arg28[%c0_26, %c16], %53 {strides = array<i32>} : memref<16x128xf32, #tpu.memory_space<vmem>>, vector<8x16xf32>,
    %55 = vector.extract_strided_slice %18 {offsets = [0, 32], sizes = [8, 16], strides = [1, 1]} : vector<8x384xf32> to vector<8x16xf32>
    %56 = vector.extract_strided_slice %18 {offsets = [0, 160], sizes = [8, 16], strides = [1, 1]} : vector<8x384xf32> to vector<8x16xf32>
    %57 = vector.extract_strided_slice %18 {offsets = [0, 288], sizes = [8, 16], strides = [1, 1]} : vector<8x384xf32> to vector<8x16xf32>
    %cst_27 = arith.constant dense<0.000000e+00> : vector<8x8xf32>
    %58 = tpu.matmul %55, %56, %cst_27 {dimension_numbers = #tpu.dot_dimension_numbers<[1], [1], [0], [0], [0, 0, 1, 0], [], []>} : vector<8x16xf32>, vector<8x16xf32>, vector<8x8xf32> -> vector<8x8xf32>
    %cst_28 = arith.constant 2.500000e-01 : f32
    %59 = vector.broadcast %cst_28 : f32 to vector<8x8xf32>
    %60 = arith.mulf %58, %59 : vector<8x8xf32>
    %cst_29 = arith.constant dense<0xFF800000> : vector<8xf32>
    %61 = vector.multi_reduction <maximumf>, %60, %cst_29 [1] : vector<8x8xf32> to vector<8xf32>
    %62 = vector.shape_cast %61 : vector<8xf32> to vector<8x1xf32>
    %63 = vector.broadcast %62 : vector<8x1xf32> to vector<8x8xf32>
    %64 = arith.subf %60, %63 : vector<8x8xf32>
    %65 = math.exp %64 : vector<8x8xf32>
    %cst_30 = arith.constant dense<0.000000e+00> : vector<8xf32>
    %66 = vector.multi_reduction <add>, %65, %cst_30 [1] : vector<8x8xf32> to vector<8xf32>
    %67 = vector.shape_cast %66 : vector<8xf32> to vector<8x1xf32>
    %68 = tpu.reciprocal %67 {approx = true} : vector<8x1xf32> -> vector<8x1xf32>
    %69 = vector.broadcast %68 : vector<8x1xf32> to vector<8x8xf32>
    %70 = arith.mulf %65, %69 : vector<8x8xf32>
    %cst_31 = arith.constant dense<0.000000e+00> : vector<8x16xf32>
    %71 = tpu.matmul %70, %57, %cst_31 {dimension_numbers = #tpu.dot_dimension_numbers<[1], [0], [0], [1], [0, 0, 1, 1], [], []>} : vector<8x8xf32>, vector<8x16xf32>, vector<8x16xf32> -> vector<8x16xf32>
    %c0_32 = arith.constant 0 : index
    %c32 = arith.constant 32 : index
    %72 = vector.load %arg28[%c0_32, %c32] : memref<16x128xf32, #tpu.memory_space<vmem>>, vector<8x16xf32>
    tpu.vector_store %arg28[%c0_32, %c32], %71 {strides = array<i32>} : memref<16x128xf32, #tpu.memory_space<vmem>>, vector<8x16xf32>,
    %73 = vector.extract_strided_slice %18 {offsets = [0, 48], sizes = [8, 16], strides = [1, 1]} : vector<8x384xf32> to vector<8x16xf32>
    %74 = vector.extract_strided_slice %18 {offsets = [0, 176], sizes = [8, 16], strides = [1, 1]} : vector<8x384xf32> to vector<8x16xf32>
    %75 = vector.extract_strided_slice %18 {offsets = [0, 304], sizes = [8, 16], strides = [1, 1]} : vector<8x384xf32> to vector<8x16xf32>
    %cst_33 = arith.constant dense<0.000000e+00> : vector<8x8xf32>
    %76 = tpu.matmul %73, %74, %cst_33 {dimension_numbers = #tpu.dot_dimension_numbers<[1], [1], [0], [0], [0, 0, 1, 0], [], []>} : vector<8x16xf32>, vector<8x16xf32>, vector<8x8xf32> -> vector<8x8xf32>
    %cst_34 = arith.constant 2.500000e-01 : f32
    %77 = vector.broadcast %cst_34 : f32 to vector<8x8xf32>
    %78 = arith.mulf %76, %77 : vector<8x8xf32>
    %cst_35 = arith.constant dense<0xFF800000> : vector<8xf32>
    %79 = vector.multi_reduction <maximumf>, %78, %cst_35 [1] : vector<8x8xf32> to vector<8xf32>
    %80 = vector.shape_cast %79 : vector<8xf32> to vector<8x1xf32>
    %81 = vector.broadcast %80 : vector<8x1xf32> to vector<8x8xf32>
    %82 = arith.subf %78, %81 : vector<8x8xf32>
    %83 = math.exp %82 : vector<8x8xf32>
    %cst_36 = arith.constant dense<0.000000e+00> : vector<8xf32>
    %84 = vector.multi_reduction <add>, %83, %cst_36 [1] : vector<8x8xf32> to vector<8xf32>
    %85 = vector.shape_cast %84 : vector<8xf32> to vector<8x1xf32>
    %86 = tpu.reciprocal %85 {approx = true} : vector<8x1xf32> -> vector<8x1xf32>
    %87 = vector.broadcast %86 : vector<8x1xf32> to vector<8x8xf32>
    %88 = arith.mulf %83, %87 : vector<8x8xf32>
    %cst_37 = arith.constant dense<0.000000e+00> : vector<8x16xf32>
    %89 = tpu.matmul %88, %75, %cst_37 {dimension_numbers = #tpu.dot_dimension_numbers<[1], [0], [0], [1], [0, 0, 1, 1], [], []>} : vector<8x8xf32>, vector<8x16xf32>, vector<8x16xf32> -> vector<8x16xf32>
    %c0_38 = arith.constant 0 : index
    %c48 = arith.constant 48 : index
    %90 = vector.load %arg28[%c0_38, %c48] : memref<16x128xf32, #tpu.memory_space<vmem>>, vector<8x16xf32>
    tpu.vector_store %arg28[%c0_38, %c48], %89 {strides = array<i32>} : memref<16x128xf32, #tpu.memory_space<vmem>>, vector<8x16xf32>,
    %91 = vector.extract_strided_slice %18 {offsets = [0, 64], sizes = [8, 16], strides = [1, 1]} : vector<8x384xf32> to vector<8x16xf32>
    %92 = vector.extract_strided_slice %18 {offsets = [0, 192], sizes = [8, 16], strides = [1, 1]} : vector<8x384xf32> to vector<8x16xf32>
    %93 = vector.extract_strided_slice %18 {offsets = [0, 320], sizes = [8, 16], strides = [1, 1]} : vector<8x384xf32> to vector<8x16xf32>
    %cst_39 = arith.constant dense<0.000000e+00> : vector<8x8xf32>
    %94 = tpu.matmul %91, %92, %cst_39 {dimension_numbers = #tpu.dot_dimension_numbers<[1], [1], [0], [0], [0, 0, 1, 0], [], []>} : vector<8x16xf32>, vector<8x16xf32>, vector<8x8xf32> -> vector<8x8xf32>
    %cst_40 = arith.constant 2.500000e-01 : f32
    %95 = vector.broadcast %cst_40 : f32 to vector<8x8xf32>
    %96 = arith.mulf %94, %95 : vector<8x8xf32>
    %cst_41 = arith.constant dense<0xFF800000> : vector<8xf32>
    %97 = vector.multi_reduction <maximumf>, %96, %cst_41 [1] : vector<8x8xf32> to vector<8xf32>
    %98 = vector.shape_cast %97 : vector<8xf32> to vector<8x1xf32>
    %99 = vector.broadcast %98 : vector<8x1xf32> to vector<8x8xf32>
    %100 = arith.subf %96, %99 : vector<8x8xf32>
    %101 = math.exp %100 : vector<8x8xf32>
    %cst_42 = arith.constant dense<0.000000e+00> : vector<8xf32>
    %102 = vector.multi_reduction <add>, %101, %cst_42 [1] : vector<8x8xf32> to vector<8xf32>
    %103 = vector.shape_cast %102 : vector<8xf32> to vector<8x1xf32>
    %104 = tpu.reciprocal %103 {approx = true} : vector<8x1xf32> -> vector<8x1xf32>
    %105 = vector.broadcast %104 : vector<8x1xf32> to vector<8x8xf32>
    %106 = arith.mulf %101, %105 : vector<8x8xf32>
    %cst_43 = arith.constant dense<0.000000e+00> : vector<8x16xf32>
    %107 = tpu.matmul %106, %93, %cst_43 {dimension_numbers = #tpu.dot_dimension_numbers<[1], [0], [0], [1], [0, 0, 1, 1], [], []>} : vector<8x8xf32>, vector<8x16xf32>, vector<8x16xf32> -> vector<8x16xf32>
    %c0_44 = arith.constant 0 : index
    %c64 = arith.constant 64 : index
    %108 = vector.load %arg28[%c0_44, %c64] : memref<16x128xf32, #tpu.memory_space<vmem>>, vector<8x16xf32>
    tpu.vector_store %arg28[%c0_44, %c64], %107 {strides = array<i32>} : memref<16x128xf32, #tpu.memory_space<vmem>>, vector<8x16xf32>,
    %109 = vector.extract_strided_slice %18 {offsets = [0, 80], sizes = [8, 16], strides = [1, 1]} : vector<8x384xf32> to vector<8x16xf32>
    %110 = vector.extract_strided_slice %18 {offsets = [0, 208], sizes = [8, 16], strides = [1, 1]} : vector<8x384xf32> to vector<8x16xf32>
    %111 = vector.extract_strided_slice %18 {offsets = [0, 336], sizes = [8, 16], strides = [1, 1]} : vector<8x384xf32> to vector<8x16xf32>
    %cst_45 = arith.constant dense<0.000000e+00> : vector<8x8xf32>
    %112 = tpu.matmul %109, %110, %cst_45 {dimension_numbers = #tpu.dot_dimension_numbers<[1], [1], [0], [0], [0, 0, 1, 0], [], []>} : vector<8x16xf32>, vector<8x16xf32>, vector<8x8xf32> -> vector<8x8xf32>
    %cst_46 = arith.constant 2.500000e-01 : f32
    %113 = vector.broadcast %cst_46 : f32 to vector<8x8xf32>
    %114 = arith.mulf %112, %113 : vector<8x8xf32>
    %cst_47 = arith.constant dense<0xFF800000> : vector<8xf32>
    %115 = vector.multi_reduction <maximumf>, %114, %cst_47 [1] : vector<8x8xf32> to vector<8xf32>
    %116 = vector.shape_cast %115 : vector<8xf32> to vector<8x1xf32>
    %117 = vector.broadcast %116 : vector<8x1xf32> to vector<8x8xf32>
    %118 = arith.subf %114, %117 : vector<8x8xf32>
    %119 = math.exp %118 : vector<8x8xf32>
    %cst_48 = arith.constant dense<0.000000e+00> : vector<8xf32>
    %120 = vector.multi_reduction <add>, %119, %cst_48 [1] : vector<8x8xf32> to vector<8xf32>
    %121 = vector.shape_cast %120 : vector<8xf32> to vector<8x1xf32>
    %122 = tpu.reciprocal %121 {approx = true} : vector<8x1xf32> -> vector<8x1xf32>
    %123 = vector.broadcast %122 : vector<8x1xf32> to vector<8x8xf32>
    %124 = arith.mulf %119, %123 : vector<8x8xf32>
    %cst_49 = arith.constant dense<0.000000e+00> : vector<8x16xf32>
    %125 = tpu.matmul %124, %111, %cst_49 {dimension_numbers = #tpu.dot_dimension_numbers<[1], [0], [0], [1], [0, 0, 1, 1], [], []>} : vector<8x8xf32>, vector<8x16xf32>, vector<8x16xf32> -> vector<8x16xf32>
    %c0_50 = arith.constant 0 : index
    %c80 = arith.constant 80 : index
    %126 = vector.load %arg28[%c0_50, %c80] : memref<16x128xf32, #tpu.memory_space<vmem>>, vector<8x16xf32>
    tpu.vector_store %arg28[%c0_50, %c80], %125 {strides = array<i32>} : memref<16x128xf32, #tpu.memory_space<vmem>>, vector<8x16xf32>,
    %127 = vector.extract_strided_slice %18 {offsets = [0, 96], sizes = [8, 16], strides = [1, 1]} : vector<8x384xf32> to vector<8x16xf32>
    %128 = vector.extract_strided_slice %18 {offsets = [0, 224], sizes = [8, 16], strides = [1, 1]} : vector<8x384xf32> to vector<8x16xf32>
    %129 = vector.extract_strided_slice %18 {offsets = [0, 352], sizes = [8, 16], strides = [1, 1]} : vector<8x384xf32> to vector<8x16xf32>
    %cst_51 = arith.constant dense<0.000000e+00> : vector<8x8xf32>
    %130 = tpu.matmul %127, %128, %cst_51 {dimension_numbers = #tpu.dot_dimension_numbers<[1], [1], [0], [0], [0, 0, 1, 0], [], []>} : vector<8x16xf32>, vector<8x16xf32>, vector<8x8xf32> -> vector<8x8xf32>
    %cst_52 = arith.constant 2.500000e-01 : f32
    %131 = vector.broadcast %cst_52 : f32 to vector<8x8xf32>
    %132 = arith.mulf %130, %131 : vector<8x8xf32>
    %cst_53 = arith.constant dense<0xFF800000> : vector<8xf32>
    %133 = vector.multi_reduction <maximumf>, %132, %cst_53 [1] : vector<8x8xf32> to vector<8xf32>
    %134 = vector.shape_cast %133 : vector<8xf32> to vector<8x1xf32>
    %135 = vector.broadcast %134 : vector<8x1xf32> to vector<8x8xf32>
    %136 = arith.subf %132, %135 : vector<8x8xf32>
    %137 = math.exp %136 : vector<8x8xf32>
    %cst_54 = arith.constant dense<0.000000e+00> : vector<8xf32>
    %138 = vector.multi_reduction <add>, %137, %cst_54 [1] : vector<8x8xf32> to vector<8xf32>
    %139 = vector.shape_cast %138 : vector<8xf32> to vector<8x1xf32>
    %140 = tpu.reciprocal %139 {approx = true} : vector<8x1xf32> -> vector<8x1xf32>
    %141 = vector.broadcast %140 : vector<8x1xf32> to vector<8x8xf32>
    %142 = arith.mulf %137, %141 : vector<8x8xf32>
    %cst_55 = arith.constant dense<0.000000e+00> : vector<8x16xf32>
    %143 = tpu.matmul %142, %129, %cst_55 {dimension_numbers = #tpu.dot_dimension_numbers<[1], [0], [0], [1], [0, 0, 1, 1], [], []>} : vector<8x8xf32>, vector<8x16xf32>, vector<8x16xf32> -> vector<8x16xf32>
    %c0_56 = arith.constant 0 : index
    %c96 = arith.constant 96 : index
    %144 = vector.load %arg28[%c0_56, %c96] : memref<16x128xf32, #tpu.memory_space<vmem>>, vector<8x16xf32>
    tpu.vector_store %arg28[%c0_56, %c96], %143 {strides = array<i32>} : memref<16x128xf32, #tpu.memory_space<vmem>>, vector<8x16xf32>,
    %145 = vector.extract_strided_slice %18 {offsets = [0, 112], sizes = [8, 16], strides = [1, 1]} : vector<8x384xf32> to vector<8x16xf32>
    %146 = vector.extract_strided_slice %18 {offsets = [0, 240], sizes = [8, 16], strides = [1, 1]} : vector<8x384xf32> to vector<8x16xf32>
    %147 = vector.extract_strided_slice %18 {offsets = [0, 368], sizes = [8, 16], strides = [1, 1]} : vector<8x384xf32> to vector<8x16xf32>
    %cst_57 = arith.constant dense<0.000000e+00> : vector<8x8xf32>
    %148 = tpu.matmul %145, %146, %cst_57 {dimension_numbers = #tpu.dot_dimension_numbers<[1], [1], [0], [0], [0, 0, 1, 0], [], []>} : vector<8x16xf32>, vector<8x16xf32>, vector<8x8xf32> -> vector<8x8xf32>
    %cst_58 = arith.constant 2.500000e-01 : f32
    %149 = vector.broadcast %cst_58 : f32 to vector<8x8xf32>
    %150 = arith.mulf %148, %149 : vector<8x8xf32>
    %cst_59 = arith.constant dense<0xFF800000> : vector<8xf32>
    %151 = vector.multi_reduction <maximumf>, %150, %cst_59 [1] : vector<8x8xf32> to vector<8xf32>
    %152 = vector.shape_cast %151 : vector<8xf32> to vector<8x1xf32>
    %153 = vector.broadcast %152 : vector<8x1xf32> to vector<8x8xf32>
    %154 = arith.subf %150, %153 : vector<8x8xf32>
    %155 = math.exp %154 : vector<8x8xf32>
    %cst_60 = arith.constant dense<0.000000e+00> : vector<8xf32>
    %156 = vector.multi_reduction <add>, %155, %cst_60 [1] : vector<8x8xf32> to vector<8xf32>
    %157 = vector.shape_cast %156 : vector<8xf32> to vector<8x1xf32>
    %158 = tpu.reciprocal %157 {approx = true} : vector<8x1xf32> -> vector<8x1xf32>
    %159 = vector.broadcast %158 : vector<8x1xf32> to vector<8x8xf32>
    %160 = arith.mulf %155, %159 : vector<8x8xf32>
    %cst_61 = arith.constant dense<0.000000e+00> : vector<8x16xf32>
    %161 = tpu.matmul %160, %147, %cst_61 {dimension_numbers = #tpu.dot_dimension_numbers<[1], [0], [0], [1], [0, 0, 1, 1], [], []>} : vector<8x8xf32>, vector<8x16xf32>, vector<8x16xf32> -> vector<8x16xf32>
    %c0_62 = arith.constant 0 : index
    %c112 = arith.constant 112 : index
    %162 = vector.load %arg28[%c0_62, %c112] : memref<16x128xf32, #tpu.memory_space<vmem>>, vector<8x16xf32>
    tpu.vector_store %arg28[%c0_62, %c112], %161 {strides = array<i32>} : memref<16x128xf32, #tpu.memory_space<vmem>>, vector<8x16xf32>,
    %c0_63 = arith.constant 0 : index
    %c0_64 = arith.constant 0 : index
    %163 = vector.load %arg28[%c0_63, %c0_64] : memref<16x128xf32, #tpu.memory_space<vmem>>, vector<8x128xf32>
    %164 = arith.truncf %163 : vector<8x128xf32> to vector<8x128xbf16>
    %cst_65 = arith.constant dense<0.000000e+00> : vector<8x128xf32>
    %165 = tpu.matmul %164, %13, %cst_65 {dimension_numbers = #tpu.dot_dimension_numbers<[1], [0], [0], [1], [0, 0, 1, 1], [], []>} : vector<8x128xbf16>, vector<128x128xbf16>, vector<8x128xf32> -> vector<8x128xf32>
    %166 = vector.broadcast %14 : vector<1x128xf32> to vector<8x128xf32>
    %167 = arith.addf %165, %166 : vector<8x128xf32>
    %168 = arith.addf %9, %167 : vector<8x128xf32>
    %169 = vector.extract_strided_slice %10 {offsets = [2, 0], sizes = [1, 128], strides = [1, 1]} : vector<4x128xf32> to vector<1x128xf32>
    %170 = vector.extract_strided_slice %10 {offsets = [3, 0], sizes = [1, 128], strides = [1, 1]} : vector<4x128xf32> to vector<1x128xf32>
    %cst_66 = arith.constant dense<0.000000e+00> : vector<8xf32>
    %171 = vector.multi_reduction <add>, %168, %cst_66 [1] : vector<8x128xf32> to vector<8xf32>
    %172 = vector.shape_cast %171 : vector<8xf32> to vector<8x1xf32>
    %cst_67 = arith.constant 1.280000e+02 : f32
    %173 = vector.broadcast %cst_67 : f32 to vector<8x1xf32>
    %174 = arith.divf %172, %173 : vector<8x1xf32>
    %175 = vector.broadcast %174 : vector<8x1xf32> to vector<8x128xf32>
    %176 = arith.subf %168, %175 : vector<8x128xf32>
    %177 = arith.mulf %176, %176 : vector<8x128xf32>
    %cst_68 = arith.constant dense<0.000000e+00> : vector<8xf32>
    %178 = vector.multi_reduction <add>, %177, %cst_68 [1] : vector<8x128xf32> to vector<8xf32>
    %179 = vector.shape_cast %178 : vector<8xf32> to vector<8x1xf32>
    %cst_69 = arith.constant 1.280000e+02 : f32
    %180 = vector.broadcast %cst_69 : f32 to vector<8x1xf32>
    %181 = arith.divf %179, %180 : vector<8x1xf32>
    %182 = vector.broadcast %174 : vector<8x1xf32> to vector<8x128xf32>
    %183 = arith.subf %168, %182 : vector<8x128xf32>
    %cst_70 = arith.constant 9.99999974E-6 : f32
    %184 = vector.broadcast %cst_70 : f32 to vector<8x1xf32>
    %185 = arith.addf %181, %184 : vector<8x1xf32>
    %186 = math.rsqrt %185 : vector<8x1xf32>
    %187 = vector.broadcast %186 : vector<8x1xf32> to vector<8x128xf32>
    %188 = arith.mulf %183, %187 : vector<8x128xf32>
    %189 = vector.broadcast %169 : vector<1x128xf32> to vector<8x128xf32>
    %190 = arith.mulf %188, %189 : vector<8x128xf32>
    %191 = vector.broadcast %170 : vector<1x128xf32> to vector<8x128xf32>
    %192 = arith.addf %190, %191 : vector<8x128xf32>
    %c0_71 = arith.constant 0 : index
    %c0_72 = arith.constant 0 : index
    %193 = vector.load %arg18[%c0_71, %c0_72] : memref<128x512xbf16, #tpu.memory_space<vmem>>, vector<128x512xbf16>
    %194 = arith.truncf %192 : vector<8x128xf32> to vector<8x128xbf16>
    %cst_73 = arith.constant dense<0.000000e+00> : vector<8x512xf32>
    %195 = tpu.matmul %194, %193, %cst_73 {dimension_numbers = #tpu.dot_dimension_numbers<[1], [0], [0], [1], [0, 0, 1, 1], [], []>} : vector<8x128xbf16>, vector<128x512xbf16>, vector<8x512xf32> -> vector<8x512xf32>
    %c0_74 = arith.constant 0 : index
    %c0_75 = arith.constant 0 : index
    %196 = vector.load %arg19[%c0_74, %c0_75] : memref<1x512xf32, #tpu.memory_space<vmem>>, vector<1x512xf32>
    %197 = vector.broadcast %196 : vector<1x512xf32> to vector<8x512xf32>
    %198 = arith.addf %195, %197 : vector<8x512xf32>
    %cst_76 = arith.constant 5.000000e-01 : f32
    %199 = vector.broadcast %cst_76 : f32 to vector<8x512xf32>
    %200 = arith.mulf %199, %198 : vector<8x512xf32>
    %cst_77 = arith.constant 4.471500e-02 : f32
    %201 = vector.broadcast %cst_77 : f32 to vector<8x512xf32>
    %202 = arith.mulf %201, %198 : vector<8x512xf32>
    %203 = arith.mulf %202, %198 : vector<8x512xf32>
    %204 = arith.mulf %203, %198 : vector<8x512xf32>
    %205 = arith.addf %198, %204 : vector<8x512xf32>
    %cst_78 = arith.constant 0.797884583 : f32
    %206 = vector.broadcast %cst_78 : f32 to vector<8x512xf32>
    %207 = arith.mulf %206, %205 : vector<8x512xf32>
    %208 = math.tanh %207 : vector<8x512xf32>
    %cst_79 = arith.constant 1.000000e+00 : f32
    %209 = vector.broadcast %cst_79 : f32 to vector<8x512xf32>
    %210 = arith.addf %209, %208 : vector<8x512xf32>
    %211 = arith.mulf %200, %210 : vector<8x512xf32>
    %c0_80 = arith.constant 0 : index
    %c0_81 = arith.constant 0 : index
    %212 = vector.load %arg20[%c0_80, %c0_81] : memref<512x128xbf16, #tpu.memory_space<vmem>>, vector<512x128xbf16>
    %213 = arith.truncf %211 : vector<8x512xf32> to vector<8x512xbf16>
    %cst_82 = arith.constant dense<0.000000e+00> : vector<8x128xf32>
    %214 = tpu.matmul %213, %212, %cst_82 {dimension_numbers = #tpu.dot_dimension_numbers<[1], [0], [0], [1], [0, 0, 1, 1], [], []>} : vector<8x512xbf16>, vector<512x128xbf16>, vector<8x128xf32> -> vector<8x128xf32>
    %c0_83 = arith.constant 0 : index
    %c0_84 = arith.constant 0 : index
    %215 = vector.load %arg21[%c0_83, %c0_84] : memref<1x128xf32, #tpu.memory_space<vmem>>, vector<1x128xf32>
    %216 = vector.broadcast %215 : vector<1x128xf32> to vector<8x128xf32>
    %217 = arith.addf %214, %216 : vector<8x128xf32>
    %218 = arith.addf %168, %217 : vector<8x128xf32>
    %219 = vector.extract_strided_slice %10 {offsets = [0, 0], sizes = [1, 128], strides = [1, 1]} : vector<4x128xf32> to vector<1x128xf32>
    %220 = vector.extract_strided_slice %10 {offsets = [1, 0], sizes = [1, 128], strides = [1, 1]} : vector<4x128xf32> to vector<1x128xf32>
    %cst_85 = arith.constant dense<0.000000e+00> : vector<8xf32>
    %221 = vector.multi_reduction <add>, %218, %cst_85 [1] : vector<8x128xf32> to vector<8xf32>
    %222 = vector.shape_cast %221 : vector<8xf32> to vector<8x1xf32>
    %cst_86 = arith.constant 1.280000e+02 : f32
    %223 = vector.broadcast %cst_86 : f32 to vector<8x1xf32>
    %224 = arith.divf %222, %223 : vector<8x1xf32>
    %225 = vector.broadcast %224 : vector<8x1xf32> to vector<8x128xf32>
    %226 = arith.subf %218, %225 : vector<8x128xf32>
    %227 = arith.mulf %226, %226 : vector<8x128xf32>
    %cst_87 = arith.constant dense<0.000000e+00> : vector<8xf32>
    %228 = vector.multi_reduction <add>, %227, %cst_87 [1] : vector<8x128xf32> to vector<8xf32>
    %229 = vector.shape_cast %228 : vector<8xf32> to vector<8x1xf32>
    %cst_88 = arith.constant 1.280000e+02 : f32
    %230 = vector.broadcast %cst_88 : f32 to vector<8x1xf32>
    %231 = arith.divf %229, %230 : vector<8x1xf32>
    %232 = vector.broadcast %224 : vector<8x1xf32> to vector<8x128xf32>
    %233 = arith.subf %218, %232 : vector<8x128xf32>
    %cst_89 = arith.constant 9.99999974E-6 : f32
    %234 = vector.broadcast %cst_89 : f32 to vector<8x1xf32>
    %235 = arith.addf %231, %234 : vector<8x1xf32>
    %236 = math.rsqrt %235 : vector<8x1xf32>
    %237 = vector.broadcast %236 : vector<8x1xf32> to vector<8x128xf32>
    %238 = arith.mulf %233, %237 : vector<8x128xf32>
    %239 = vector.broadcast %219 : vector<1x128xf32> to vector<8x128xf32>
    %240 = arith.mulf %238, %239 : vector<8x128xf32>
    %241 = vector.broadcast %220 : vector<1x128xf32> to vector<8x128xf32>
    %242 = arith.addf %240, %241 : vector<8x128xf32>
    %c0_90 = arith.constant 0 : index
    %c0_91 = arith.constant 0 : index
    %243 = vector.load %arg27[%c0_90, %c0_91] : memref<8x128xf32, #tpu.memory_space<vmem>>, vector<8x128xf32>
    tpu.vector_store %arg27[%c0_90, %c0_91], %242 {strides = array<i32>} : memref<8x128xf32, #tpu.memory_space<vmem>>, vector<8x128xf32>,
    %c0_92 = arith.constant 0 : index
    %c0_93 = arith.constant 0 : index
    %244 = vector.load %arg26[%c0_92, %c0_93] : memref<16x128xf32, #tpu.memory_space<vmem>>, vector<16x128xf32>
    %c0_94 = arith.constant 0 : index
    %c0_95 = arith.constant 0 : index
    %c0_96 = arith.constant 0 : index
    %245 = vector.load %arg4[%c0_94, %c0_95, %c0_96] : memref<1x4x128xf32, #tpu.memory_space<vmem>>, vector<1x4x128xf32>
    %246 = vector.shape_cast %245 : vector<1x4x128xf32> to vector<4x128xf32>
    %247 = vector.extract_strided_slice %246 {offsets = [0, 0], sizes = [1, 128], strides = [1, 1]} : vector<4x128xf32> to vector<1x128xf32>
    %248 = vector.extract_strided_slice %246 {offsets = [1, 0], sizes = [1, 128], strides = [1, 1]} : vector<4x128xf32> to vector<1x128xf32>
    %cst_97 = arith.constant dense<0.000000e+00> : vector<16xf32>
    %249 = vector.multi_reduction <add>, %244, %cst_97 [1] : vector<16x128xf32> to vector<16xf32>
    %250 = vector.shape_cast %249 : vector<16xf32> to vector<16x1xf32>
    %cst_98 = arith.constant 1.280000e+02 : f32
    %251 = vector.broadcast %cst_98 : f32 to vector<16x1xf32>
    %252 = arith.divf %250, %251 : vector<16x1xf32>
    %253 = vector.broadcast %252 : vector<16x1xf32> to vector<16x128xf32>
    %254 = arith.subf %244, %253 : vector<16x128xf32>
    %255 = arith.mulf %254, %254 : vector<16x128xf32>
    %cst_99 = arith.constant dense<0.000000e+00> : vector<16xf32>
    %256 = vector.multi_reduction <add>, %255, %cst_99 [1] : vector<16x128xf32> to vector<16xf32>
    %257 = vector.shape_cast %256 : vector<16xf32> to vector<16x1xf32>
    %cst_100 = arith.constant 1.280000e+02 : f32
    %258 = vector.broadcast %cst_100 : f32 to vector<16x1xf32>
    %259 = arith.divf %257, %258 : vector<16x1xf32>
    %260 = vector.broadcast %252 : vector<16x1xf32> to vector<16x128xf32>
    %261 = arith.subf %244, %260 : vector<16x128xf32>
    %cst_101 = arith.constant 9.99999997E-7 : f32
    %262 = vector.broadcast %cst_101 : f32 to vector<16x1xf32>
    %263 = arith.addf %259, %262 : vector<16x1xf32>
    %264 = math.rsqrt %263 : vector<16x1xf32>
    %265 = vector.broadcast %264 : vector<16x1xf32> to vector<16x128xf32>
    %266 = arith.mulf %261, %265 : vector<16x128xf32>
    %267 = vector.broadcast %247 : vector<1x128xf32> to vector<16x128xf32>
    %268 = arith.mulf %266, %267 : vector<16x128xf32>
    %269 = vector.broadcast %248 : vector<1x128xf32> to vector<16x128xf32>
    %270 = arith.addf %268, %269 : vector<16x128xf32>
    %c0_102 = arith.constant 0 : index
    %c0_103 = arith.constant 0 : index
    %c0_104 = arith.constant 0 : index
    %271 = vector.load %arg5[%c0_102, %c0_103, %c0_104] : memref<1x128x384xbf16, #tpu.memory_space<vmem>>, vector<1x128x384xbf16>
    %272 = vector.shape_cast %271 : vector<1x128x384xbf16> to vector<128x384xbf16>
    %c0_105 = arith.constant 0 : index
    %c0_106 = arith.constant 0 : index
    %c0_107 = arith.constant 0 : index
    %273 = vector.load %arg6[%c0_105, %c0_106, %c0_107] : memref<1x1x384xf32, #tpu.memory_space<vmem>>, vector<1x1x384xf32>
    %274 = vector.shape_cast %273 : vector<1x1x384xf32> to vector<1x384xf32>
    %c0_108 = arith.constant 0 : index
    %c0_109 = arith.constant 0 : index
    %c0_110 = arith.constant 0 : index
    %275 = vector.load %arg7[%c0_108, %c0_109, %c0_110] : memref<1x128x128xbf16, #tpu.memory_space<vmem>>, vector<1x128x128xbf16>
    %276 = vector.shape_cast %275 : vector<1x128x128xbf16> to vector<128x128xbf16>
    %c0_111 = arith.constant 0 : index
    %c0_112 = arith.constant 0 : index
    %c0_113 = arith.constant 0 : index
    %277 = vector.load %arg8[%c0_111, %c0_112, %c0_113] : memref<1x1x128xf32, #tpu.memory_space<vmem>>, vector<1x1x128xf32>
    %278 = vector.shape_cast %277 : vector<1x1x128xf32> to vector<1x128xf32>
    %279 = arith.truncf %270 : vector<16x128xf32> to vector<16x128xbf16>
    %cst_114 = arith.constant dense<0.000000e+00> : vector<16x384xf32>
    %280 = tpu.matmul %279, %272, %cst_114 {dimension_numbers = #tpu.dot_dimension_numbers<[1], [0], [0], [1], [0, 0, 1, 1], [], []>} : vector<16x128xbf16>, vector<128x384xbf16>, vector<16x384xf32> -> vector<16x384xf32>
    %281 = vector.broadcast %274 : vector<1x384xf32> to vector<16x384xf32>
    %282 = arith.addf %280, %281 : vector<16x384xf32>
    %283 = vector.extract_strided_slice %282 {offsets = [0, 0], sizes = [16, 16], strides = [1, 1]} : vector<16x384xf32> to vector<16x16xf32>
    %284 = vector.extract_strided_slice %282 {offsets = [0, 128], sizes = [16, 16], strides = [1, 1]} : vector<16x384xf32> to vector<16x16xf32>
    %285 = vector.extract_strided_slice %282 {offsets = [0, 256], sizes = [16, 16], strides = [1, 1]} : vector<16x384xf32> to vector<16x16xf32>
    %cst_115 = arith.constant dense<0.000000e+00> : vector<16x16xf32>
    %286 = tpu.matmul %283, %284, %cst_115 {dimension_numbers = #tpu.dot_dimension_numbers<[1], [1], [0], [0], [0, 0, 1, 0], [], []>} : vector<16x16xf32>, vector<16x16xf32>, vector<16x16xf32> -> vector<16x16xf32>
    %cst_116 = arith.constant 2.500000e-01 : f32
    %287 = vector.broadcast %cst_116 : f32 to vector<16x16xf32>
    %288 = arith.mulf %286, %287 : vector<16x16xf32>
    %289 = vector.broadcast %8 : vector<1x16xf32> to vector<16x16xf32>
    %290 = arith.addf %288, %289 : vector<16x16xf32>
    %cst_117 = arith.constant dense<0xFF800000> : vector<16xf32>
    %291 = vector.multi_reduction <maximumf>, %290, %cst_117 [1] : vector<16x16xf32> to vector<16xf32>
    %292 = vector.shape_cast %291 : vector<16xf32> to vector<16x1xf32>
    %293 = vector.broadcast %292 : vector<16x1xf32> to vector<16x16xf32>
    %294 = arith.subf %290, %293 : vector<16x16xf32>
    %295 = math.exp %294 : vector<16x16xf32>
    %cst_118 = arith.constant dense<0.000000e+00> : vector<16xf32>
    %296 = vector.multi_reduction <add>, %295, %cst_118 [1] : vector<16x16xf32> to vector<16xf32>
    %297 = vector.shape_cast %296 : vector<16xf32> to vector<16x1xf32>
    %298 = tpu.reciprocal %297 {approx = true} : vector<16x1xf32> -> vector<16x1xf32>
    %299 = vector.broadcast %298 : vector<16x1xf32> to vector<16x16xf32>
    %300 = arith.mulf %295, %299 : vector<16x16xf32>
    %cst_119 = arith.constant dense<0.000000e+00> : vector<16x16xf32>
    %301 = tpu.matmul %300, %285, %cst_119 {dimension_numbers = #tpu.dot_dimension_numbers<[1], [0], [0], [1], [0, 0, 1, 1], [], []>} : vector<16x16xf32>, vector<16x16xf32>, vector<16x16xf32> -> vector<16x16xf32>
    %c0_120 = arith.constant 0 : index
    %c0_121 = arith.constant 0 : index
    %302 = vector.load %arg28[%c0_120, %c0_121] : memref<16x128xf32, #tpu.memory_space<vmem>>, vector<16x16xf32>
    tpu.vector_store %arg28[%c0_120, %c0_121], %301 {strides = array<i32>} : memref<16x128xf32, #tpu.memory_space<vmem>>, vector<16x16xf32>,
    %303 = vector.extract_strided_slice %282 {offsets = [0, 16], sizes = [16, 16], strides = [1, 1]} : vector<16x384xf32> to vector<16x16xf32>
    %304 = vector.extract_strided_slice %282 {offsets = [0, 144], sizes = [16, 16], strides = [1, 1]} : vector<16x384xf32> to vector<16x16xf32>
    %305 = vector.extract_strided_slice %282 {offsets = [0, 272], sizes = [16, 16], strides = [1, 1]} : vector<16x384xf32> to vector<16x16xf32>
    %cst_122 = arith.constant dense<0.000000e+00> : vector<16x16xf32>
    %306 = tpu.matmul %303, %304, %cst_122 {dimension_numbers = #tpu.dot_dimension_numbers<[1], [1], [0], [0], [0, 0, 1, 0], [], []>} : vector<16x16xf32>, vector<16x16xf32>, vector<16x16xf32> -> vector<16x16xf32>
    %cst_123 = arith.constant 2.500000e-01 : f32
    %307 = vector.broadcast %cst_123 : f32 to vector<16x16xf32>
    %308 = arith.mulf %306, %307 : vector<16x16xf32>
    %309 = vector.broadcast %8 : vector<1x16xf32> to vector<16x16xf32>
    %310 = arith.addf %308, %309 : vector<16x16xf32>
    %cst_124 = arith.constant dense<0xFF800000> : vector<16xf32>
    %311 = vector.multi_reduction <maximumf>, %310, %cst_124 [1] : vector<16x16xf32> to vector<16xf32>
    %312 = vector.shape_cast %311 : vector<16xf32> to vector<16x1xf32>
    %313 = vector.broadcast %312 : vector<16x1xf32> to vector<16x16xf32>
    %314 = arith.subf %310, %313 : vector<16x16xf32>
    %315 = math.exp %314 : vector<16x16xf32>
    %cst_125 = arith.constant dense<0.000000e+00> : vector<16xf32>
    %316 = vector.multi_reduction <add>, %315, %cst_125 [1] : vector<16x16xf32> to vector<16xf32>
    %317 = vector.shape_cast %316 : vector<16xf32> to vector<16x1xf32>
    %318 = tpu.reciprocal %317 {approx = true} : vector<16x1xf32> -> vector<16x1xf32>
    %319 = vector.broadcast %318 : vector<16x1xf32> to vector<16x16xf32>
    %320 = arith.mulf %315, %319 : vector<16x16xf32>
    %cst_126 = arith.constant dense<0.000000e+00> : vector<16x16xf32>
    %321 = tpu.matmul %320, %305, %cst_126 {dimension_numbers = #tpu.dot_dimension_numbers<[1], [0], [0], [1], [0, 0, 1, 1], [], []>} : vector<16x16xf32>, vector<16x16xf32>, vector<16x16xf32> -> vector<16x16xf32>
    %c0_127 = arith.constant 0 : index
    %c16_128 = arith.constant 16 : index
    %322 = vector.load %arg28[%c0_127, %c16_128] : memref<16x128xf32, #tpu.memory_space<vmem>>, vector<16x16xf32>
    tpu.vector_store %arg28[%c0_127, %c16_128], %321 {strides = array<i32>} : memref<16x128xf32, #tpu.memory_space<vmem>>, vector<16x16xf32>,
    %323 = vector.extract_strided_slice %282 {offsets = [0, 32], sizes = [16, 16], strides = [1, 1]} : vector<16x384xf32> to vector<16x16xf32>
    %324 = vector.extract_strided_slice %282 {offsets = [0, 160], sizes = [16, 16], strides = [1, 1]} : vector<16x384xf32> to vector<16x16xf32>
    %325 = vector.extract_strided_slice %282 {offsets = [0, 288], sizes = [16, 16], strides = [1, 1]} : vector<16x384xf32> to vector<16x16xf32>
    %cst_129 = arith.constant dense<0.000000e+00> : vector<16x16xf32>
    %326 = tpu.matmul %323, %324, %cst_129 {dimension_numbers = #tpu.dot_dimension_numbers<[1], [1], [0], [0], [0, 0, 1, 0], [], []>} : vector<16x16xf32>, vector<16x16xf32>, vector<16x16xf32> -> vector<16x16xf32>
    %cst_130 = arith.constant 2.500000e-01 : f32
    %327 = vector.broadcast %cst_130 : f32 to vector<16x16xf32>
    %328 = arith.mulf %326, %327 : vector<16x16xf32>
    %329 = vector.broadcast %8 : vector<1x16xf32> to vector<16x16xf32>
    %330 = arith.addf %328, %329 : vector<16x16xf32>
    %cst_131 = arith.constant dense<0xFF800000> : vector<16xf32>
    %331 = vector.multi_reduction <maximumf>, %330, %cst_131 [1] : vector<16x16xf32> to vector<16xf32>
    %332 = vector.shape_cast %331 : vector<16xf32> to vector<16x1xf32>
    %333 = vector.broadcast %332 : vector<16x1xf32> to vector<16x16xf32>
    %334 = arith.subf %330, %333 : vector<16x16xf32>
    %335 = math.exp %334 : vector<16x16xf32>
    %cst_132 = arith.constant dense<0.000000e+00> : vector<16xf32>
    %336 = vector.multi_reduction <add>, %335, %cst_132 [1] : vector<16x16xf32> to vector<16xf32>
    %337 = vector.shape_cast %336 : vector<16xf32> to vector<16x1xf32>
    %338 = tpu.reciprocal %337 {approx = true} : vector<16x1xf32> -> vector<16x1xf32>
    %339 = vector.broadcast %338 : vector<16x1xf32> to vector<16x16xf32>
    %340 = arith.mulf %335, %339 : vector<16x16xf32>
    %cst_133 = arith.constant dense<0.000000e+00> : vector<16x16xf32>
    %341 = tpu.matmul %340, %325, %cst_133 {dimension_numbers = #tpu.dot_dimension_numbers<[1], [0], [0], [1], [0, 0, 1, 1], [], []>} : vector<16x16xf32>, vector<16x16xf32>, vector<16x16xf32> -> vector<16x16xf32>
    %c0_134 = arith.constant 0 : index
    %c32_135 = arith.constant 32 : index
    %342 = vector.load %arg28[%c0_134, %c32_135] : memref<16x128xf32, #tpu.memory_space<vmem>>, vector<16x16xf32>
    tpu.vector_store %arg28[%c0_134, %c32_135], %341 {strides = array<i32>} : memref<16x128xf32, #tpu.memory_space<vmem>>, vector<16x16xf32>,
    %343 = vector.extract_strided_slice %282 {offsets = [0, 48], sizes = [16, 16], strides = [1, 1]} : vector<16x384xf32> to vector<16x16xf32>
    %344 = vector.extract_strided_slice %282 {offsets = [0, 176], sizes = [16, 16], strides = [1, 1]} : vector<16x384xf32> to vector<16x16xf32>
    %345 = vector.extract_strided_slice %282 {offsets = [0, 304], sizes = [16, 16], strides = [1, 1]} : vector<16x384xf32> to vector<16x16xf32>
    %cst_136 = arith.constant dense<0.000000e+00> : vector<16x16xf32>
    %346 = tpu.matmul %343, %344, %cst_136 {dimension_numbers = #tpu.dot_dimension_numbers<[1], [1], [0], [0], [0, 0, 1, 0], [], []>} : vector<16x16xf32>, vector<16x16xf32>, vector<16x16xf32> -> vector<16x16xf32>
    %cst_137 = arith.constant 2.500000e-01 : f32
    %347 = vector.broadcast %cst_137 : f32 to vector<16x16xf32>
    %348 = arith.mulf %346, %347 : vector<16x16xf32>
    %349 = vector.broadcast %8 : vector<1x16xf32> to vector<16x16xf32>
    %350 = arith.addf %348, %349 : vector<16x16xf32>
    %cst_138 = arith.constant dense<0xFF800000> : vector<16xf32>
    %351 = vector.multi_reduction <maximumf>, %350, %cst_138 [1] : vector<16x16xf32> to vector<16xf32>
    %352 = vector.shape_cast %351 : vector<16xf32> to vector<16x1xf32>
    %353 = vector.broadcast %352 : vector<16x1xf32> to vector<16x16xf32>
    %354 = arith.subf %350, %353 : vector<16x16xf32>
    %355 = math.exp %354 : vector<16x16xf32>
    %cst_139 = arith.constant dense<0.000000e+00> : vector<16xf32>
    %356 = vector.multi_reduction <add>, %355, %cst_139 [1] : vector<16x16xf32> to vector<16xf32>
    %357 = vector.shape_cast %356 : vector<16xf32> to vector<16x1xf32>
    %358 = tpu.reciprocal %357 {approx = true} : vector<16x1xf32> -> vector<16x1xf32>
    %359 = vector.broadcast %358 : vector<16x1xf32> to vector<16x16xf32>
    %360 = arith.mulf %355, %359 : vector<16x16xf32>
    %cst_140 = arith.constant dense<0.000000e+00> : vector<16x16xf32>
    %361 = tpu.matmul %360, %345, %cst_140 {dimension_numbers = #tpu.dot_dimension_numbers<[1], [0], [0], [1], [0, 0, 1, 1], [], []>} : vector<16x16xf32>, vector<16x16xf32>, vector<16x16xf32> -> vector<16x16xf32>
    %c0_141 = arith.constant 0 : index
    %c48_142 = arith.constant 48 : index
    %362 = vector.load %arg28[%c0_141, %c48_142] : memref<16x128xf32, #tpu.memory_space<vmem>>, vector<16x16xf32>
    tpu.vector_store %arg28[%c0_141, %c48_142], %361 {strides = array<i32>} : memref<16x128xf32, #tpu.memory_space<vmem>>, vector<16x16xf32>,
    %363 = vector.extract_strided_slice %282 {offsets = [0, 64], sizes = [16, 16], strides = [1, 1]} : vector<16x384xf32> to vector<16x16xf32>
    %364 = vector.extract_strided_slice %282 {offsets = [0, 192], sizes = [16, 16], strides = [1, 1]} : vector<16x384xf32> to vector<16x16xf32>
    %365 = vector.extract_strided_slice %282 {offsets = [0, 320], sizes = [16, 16], strides = [1, 1]} : vector<16x384xf32> to vector<16x16xf32>
    %cst_143 = arith.constant dense<0.000000e+00> : vector<16x16xf32>
    %366 = tpu.matmul %363, %364, %cst_143 {dimension_numbers = #tpu.dot_dimension_numbers<[1], [1], [0], [0], [0, 0, 1, 0], [], []>} : vector<16x16xf32>, vector<16x16xf32>, vector<16x16xf32> -> vector<16x16xf32>
    %cst_144 = arith.constant 2.500000e-01 : f32
    %367 = vector.broadcast %cst_144 : f32 to vector<16x16xf32>
    %368 = arith.mulf %366, %367 : vector<16x16xf32>
    %369 = vector.broadcast %8 : vector<1x16xf32> to vector<16x16xf32>
    %370 = arith.addf %368, %369 : vector<16x16xf32>
    %cst_145 = arith.constant dense<0xFF800000> : vector<16xf32>
    %371 = vector.multi_reduction <maximumf>, %370, %cst_145 [1] : vector<16x16xf32> to vector<16xf32>
    %372 = vector.shape_cast %371 : vector<16xf32> to vector<16x1xf32>
    %373 = vector.broadcast %372 : vector<16x1xf32> to vector<16x16xf32>
    %374 = arith.subf %370, %373 : vector<16x16xf32>
    %375 = math.exp %374 : vector<16x16xf32>
    %cst_146 = arith.constant dense<0.000000e+00> : vector<16xf32>
    %376 = vector.multi_reduction <add>, %375, %cst_146 [1] : vector<16x16xf32> to vector<16xf32>
    %377 = vector.shape_cast %376 : vector<16xf32> to vector<16x1xf32>
    %378 = tpu.reciprocal %377 {approx = true} : vector<16x1xf32> -> vector<16x1xf32>
    %379 = vector.broadcast %378 : vector<16x1xf32> to vector<16x16xf32>
    %380 = arith.mulf %375, %379 : vector<16x16xf32>
    %cst_147 = arith.constant dense<0.000000e+00> : vector<16x16xf32>
    %381 = tpu.matmul %380, %365, %cst_147 {dimension_numbers = #tpu.dot_dimension_numbers<[1], [0], [0], [1], [0, 0, 1, 1], [], []>} : vector<16x16xf32>, vector<16x16xf32>, vector<16x16xf32> -> vector<16x16xf32>
    %c0_148 = arith.constant 0 : index
    %c64_149 = arith.constant 64 : index
    %382 = vector.load %arg28[%c0_148, %c64_149] : memref<16x128xf32, #tpu.memory_space<vmem>>, vector<16x16xf32>
    tpu.vector_store %arg28[%c0_148, %c64_149], %381 {strides = array<i32>} : memref<16x128xf32, #tpu.memory_space<vmem>>, vector<16x16xf32>,
    %383 = vector.extract_strided_slice %282 {offsets = [0, 80], sizes = [16, 16], strides = [1, 1]} : vector<16x384xf32> to vector<16x16xf32>
    %384 = vector.extract_strided_slice %282 {offsets = [0, 208], sizes = [16, 16], strides = [1, 1]} : vector<16x384xf32> to vector<16x16xf32>
    %385 = vector.extract_strided_slice %282 {offsets = [0, 336], sizes = [16, 16], strides = [1, 1]} : vector<16x384xf32> to vector<16x16xf32>
    %cst_150 = arith.constant dense<0.000000e+00> : vector<16x16xf32>
    %386 = tpu.matmul %383, %384, %cst_150 {dimension_numbers = #tpu.dot_dimension_numbers<[1], [1], [0], [0], [0, 0, 1, 0], [], []>} : vector<16x16xf32>, vector<16x16xf32>, vector<16x16xf32> -> vector<16x16xf32>
    %cst_151 = arith.constant 2.500000e-01 : f32
    %387 = vector.broadcast %cst_151 : f32 to vector<16x16xf32>
    %388 = arith.mulf %386, %387 : vector<16x16xf32>
    %389 = vector.broadcast %8 : vector<1x16xf32> to vector<16x16xf32>
    %390 = arith.addf %388, %389 : vector<16x16xf32>
    %cst_152 = arith.constant dense<0xFF800000> : vector<16xf32>
    %391 = vector.multi_reduction <maximumf>, %390, %cst_152 [1] : vector<16x16xf32> to vector<16xf32>
    %392 = vector.shape_cast %391 : vector<16xf32> to vector<16x1xf32>
    %393 = vector.broadcast %392 : vector<16x1xf32> to vector<16x16xf32>
    %394 = arith.subf %390, %393 : vector<16x16xf32>
    %395 = math.exp %394 : vector<16x16xf32>
    %cst_153 = arith.constant dense<0.000000e+00> : vector<16xf32>
    %396 = vector.multi_reduction <add>, %395, %cst_153 [1] : vector<16x16xf32> to vector<16xf32>
    %397 = vector.shape_cast %396 : vector<16xf32> to vector<16x1xf32>
    %398 = tpu.reciprocal %397 {approx = true} : vector<16x1xf32> -> vector<16x1xf32>
    %399 = vector.broadcast %398 : vector<16x1xf32> to vector<16x16xf32>
    %400 = arith.mulf %395, %399 : vector<16x16xf32>
    %cst_154 = arith.constant dense<0.000000e+00> : vector<16x16xf32>
    %401 = tpu.matmul %400, %385, %cst_154 {dimension_numbers = #tpu.dot_dimension_numbers<[1], [0], [0], [1], [0, 0, 1, 1], [], []>} : vector<16x16xf32>, vector<16x16xf32>, vector<16x16xf32> -> vector<16x16xf32>
    %c0_155 = arith.constant 0 : index
    %c80_156 = arith.constant 80 : index
    %402 = vector.load %arg28[%c0_155, %c80_156] : memref<16x128xf32, #tpu.memory_space<vmem>>, vector<16x16xf32>
    tpu.vector_store %arg28[%c0_155, %c80_156], %401 {strides = array<i32>} : memref<16x128xf32, #tpu.memory_space<vmem>>, vector<16x16xf32>,
    %403 = vector.extract_strided_slice %282 {offsets = [0, 96], sizes = [16, 16], strides = [1, 1]} : vector<16x384xf32> to vector<16x16xf32>
    %404 = vector.extract_strided_slice %282 {offsets = [0, 224], sizes = [16, 16], strides = [1, 1]} : vector<16x384xf32> to vector<16x16xf32>
    %405 = vector.extract_strided_slice %282 {offsets = [0, 352], sizes = [16, 16], strides = [1, 1]} : vector<16x384xf32> to vector<16x16xf32>
    %cst_157 = arith.constant dense<0.000000e+00> : vector<16x16xf32>
    %406 = tpu.matmul %403, %404, %cst_157 {dimension_numbers = #tpu.dot_dimension_numbers<[1], [1], [0], [0], [0, 0, 1, 0], [], []>} : vector<16x16xf32>, vector<16x16xf32>, vector<16x16xf32> -> vector<16x16xf32>
    %cst_158 = arith.constant 2.500000e-01 : f32
    %407 = vector.broadcast %cst_158 : f32 to vector<16x16xf32>
    %408 = arith.mulf %406, %407 : vector<16x16xf32>
    %409 = vector.broadcast %8 : vector<1x16xf32> to vector<16x16xf32>
    %410 = arith.addf %408, %409 : vector<16x16xf32>
    %cst_159 = arith.constant dense<0xFF800000> : vector<16xf32>
    %411 = vector.multi_reduction <maximumf>, %410, %cst_159 [1] : vector<16x16xf32> to vector<16xf32>
    %412 = vector.shape_cast %411 : vector<16xf32> to vector<16x1xf32>
    %413 = vector.broadcast %412 : vector<16x1xf32> to vector<16x16xf32>
    %414 = arith.subf %410, %413 : vector<16x16xf32>
    %415 = math.exp %414 : vector<16x16xf32>
    %cst_160 = arith.constant dense<0.000000e+00> : vector<16xf32>
    %416 = vector.multi_reduction <add>, %415, %cst_160 [1] : vector<16x16xf32> to vector<16xf32>
    %417 = vector.shape_cast %416 : vector<16xf32> to vector<16x1xf32>
    %418 = tpu.reciprocal %417 {approx = true} : vector<16x1xf32> -> vector<16x1xf32>
    %419 = vector.broadcast %418 : vector<16x1xf32> to vector<16x16xf32>
    %420 = arith.mulf %415, %419 : vector<16x16xf32>
    %cst_161 = arith.constant dense<0.000000e+00> : vector<16x16xf32>
    %421 = tpu.matmul %420, %405, %cst_161 {dimension_numbers = #tpu.dot_dimension_numbers<[1], [0], [0], [1], [0, 0, 1, 1], [], []>} : vector<16x16xf32>, vector<16x16xf32>, vector<16x16xf32> -> vector<16x16xf32>
    %c0_162 = arith.constant 0 : index
    %c96_163 = arith.constant 96 : index
    %422 = vector.load %arg28[%c0_162, %c96_163] : memref<16x128xf32, #tpu.memory_space<vmem>>, vector<16x16xf32>
    tpu.vector_store %arg28[%c0_162, %c96_163], %421 {strides = array<i32>} : memref<16x128xf32, #tpu.memory_space<vmem>>, vector<16x16xf32>,
    %423 = vector.extract_strided_slice %282 {offsets = [0, 112], sizes = [16, 16], strides = [1, 1]} : vector<16x384xf32> to vector<16x16xf32>
    %424 = vector.extract_strided_slice %282 {offsets = [0, 240], sizes = [16, 16], strides = [1, 1]} : vector<16x384xf32> to vector<16x16xf32>
    %425 = vector.extract_strided_slice %282 {offsets = [0, 368], sizes = [16, 16], strides = [1, 1]} : vector<16x384xf32> to vector<16x16xf32>
    %cst_164 = arith.constant dense<0.000000e+00> : vector<16x16xf32>
    %426 = tpu.matmul %423, %424, %cst_164 {dimension_numbers = #tpu.dot_dimension_numbers<[1], [1], [0], [0], [0, 0, 1, 0], [], []>} : vector<16x16xf32>, vector<16x16xf32>, vector<16x16xf32> -> vector<16x16xf32>
    %cst_165 = arith.constant 2.500000e-01 : f32
    %427 = vector.broadcast %cst_165 : f32 to vector<16x16xf32>
    %428 = arith.mulf %426, %427 : vector<16x16xf32>
    %429 = vector.broadcast %8 : vector<1x16xf32> to vector<16x16xf32>
    %430 = arith.addf %428, %429 : vector<16x16xf32>
    %cst_166 = arith.constant dense<0xFF800000> : vector<16xf32>
    %431 = vector.multi_reduction <maximumf>, %430, %cst_166 [1] : vector<16x16xf32> to vector<16xf32>
    %432 = vector.shape_cast %431 : vector<16xf32> to vector<16x1xf32>
    %433 = vector.broadcast %432 : vector<16x1xf32> to vector<16x16xf32>
    %434 = arith.subf %430, %433 : vector<16x16xf32>
    %435 = math.exp %434 : vector<16x16xf32>
    %cst_167 = arith.constant dense<0.000000e+00> : vector<16xf32>
    %436 = vector.multi_reduction <add>, %435, %cst_167 [1] : vector<16x16xf32> to vector<16xf32>
    %437 = vector.shape_cast %436 : vector<16xf32> to vector<16x1xf32>
    %438 = tpu.reciprocal %437 {approx = true} : vector<16x1xf32> -> vector<16x1xf32>
    %439 = vector.broadcast %438 : vector<16x1xf32> to vector<16x16xf32>
    %440 = arith.mulf %435, %439 : vector<16x16xf32>
    %cst_168 = arith.constant dense<0.000000e+00> : vector<16x16xf32>
    %441 = tpu.matmul %440, %425, %cst_168 {dimension_numbers = #tpu.dot_dimension_numbers<[1], [0], [0], [1], [0, 0, 1, 1], [], []>} : vector<16x16xf32>, vector<16x16xf32>, vector<16x16xf32> -> vector<16x16xf32>
    %c0_169 = arith.constant 0 : index
    %c112_170 = arith.constant 112 : index
    %442 = vector.load %arg28[%c0_169, %c112_170] : memref<16x128xf32, #tpu.memory_space<vmem>>, vector<16x16xf32>
    tpu.vector_store %arg28[%c0_169, %c112_170], %441 {strides = array<i32>} : memref<16x128xf32, #tpu.memory_space<vmem>>, vector<16x16xf32>,
    %c0_171 = arith.constant 0 : index
    %c0_172 = arith.constant 0 : index
    %443 = vector.load %arg28[%c0_171, %c0_172] : memref<16x128xf32, #tpu.memory_space<vmem>>, vector<16x128xf32>
    %444 = arith.truncf %443 : vector<16x128xf32> to vector<16x128xbf16>
    %cst_173 = arith.constant dense<0.000000e+00> : vector<16x128xf32>
    %445 = tpu.matmul %444, %276, %cst_173 {dimension_numbers = #tpu.dot_dimension_numbers<[1], [0], [0], [1], [0, 0, 1, 1], [], []>} : vector<16x128xbf16>, vector<128x128xbf16>, vector<16x128xf32> -> vector<16x128xf32>
    %446 = vector.broadcast %278 : vector<1x128xf32> to vector<16x128xf32>
    %447 = arith.addf %445, %446 : vector<16x128xf32>
    %448 = arith.addf %244, %447 : vector<16x128xf32>
    %449 = vector.extract_strided_slice %246 {offsets = [2, 0], sizes = [1, 128], strides = [1, 1]} : vector<4x128xf32> to vector<1x128xf32>
    %450 = vector.extract_strided_slice %246 {offsets = [3, 0], sizes = [1, 128], strides = [1, 1]} : vector<4x128xf32> to vector<1x128xf32>
    %cst_174 = arith.constant dense<0.000000e+00> : vector<16xf32>
    %451 = vector.multi_reduction <add>, %448, %cst_174 [1] : vector<16x128xf32> to vector<16xf32>
    %452 = vector.shape_cast %451 : vector<16xf32> to vector<16x1xf32>
    %cst_175 = arith.constant 1.280000e+02 : f32
    %453 = vector.broadcast %cst_175 : f32 to vector<16x1xf32>
    %454 = arith.divf %452, %453 : vector<16x1xf32>
    %455 = vector.broadcast %454 : vector<16x1xf32> to vector<16x128xf32>
    %456 = arith.subf %448, %455 : vector<16x128xf32>
    %457 = arith.mulf %456, %456 : vector<16x128xf32>
    %cst_176 = arith.constant dense<0.000000e+00> : vector<16xf32>
    %458 = vector.multi_reduction <add>, %457, %cst_176 [1] : vector<16x128xf32> to vector<16xf32>
    %459 = vector.shape_cast %458 : vector<16xf32> to vector<16x1xf32>
    %cst_177 = arith.constant 1.280000e+02 : f32
    %460 = vector.broadcast %cst_177 : f32 to vector<16x1xf32>
    %461 = arith.divf %459, %460 : vector<16x1xf32>
    %462 = vector.broadcast %454 : vector<16x1xf32> to vector<16x128xf32>
    %463 = arith.subf %448, %462 : vector<16x128xf32>
    %cst_178 = arith.constant 9.99999997E-7 : f32
    %464 = vector.broadcast %cst_178 : f32 to vector<16x1xf32>
    %465 = arith.addf %461, %464 : vector<16x1xf32>
    %466 = math.rsqrt %465 : vector<16x1xf32>
    %467 = vector.broadcast %466 : vector<16x1xf32> to vector<16x128xf32>
    %468 = arith.mulf %463, %467 : vector<16x128xf32>
    %469 = vector.broadcast %449 : vector<1x128xf32> to vector<16x128xf32>
    %470 = arith.mulf %468, %469 : vector<16x128xf32>
    %471 = vector.broadcast %450 : vector<1x128xf32> to vector<16x128xf32>
    %472 = arith.addf %470, %471 : vector<16x128xf32>
    %c0_179 = arith.constant 0 : index
    %c0_180 = arith.constant 0 : index
    %c0_181 = arith.constant 0 : index
    %473 = vector.load %arg9[%c0_179, %c0_180, %c0_181] : memref<1x128x512xbf16, #tpu.memory_space<vmem>>, vector<1x128x512xbf16>
    %474 = vector.shape_cast %473 : vector<1x128x512xbf16> to vector<128x512xbf16>
    %475 = arith.truncf %472 : vector<16x128xf32> to vector<16x128xbf16>
    %cst_182 = arith.constant dense<0.000000e+00> : vector<16x512xf32>
    %476 = tpu.matmul %475, %474, %cst_182 {dimension_numbers = #tpu.dot_dimension_numbers<[1], [0], [0], [1], [0, 0, 1, 1], [], []>} : vector<16x128xbf16>, vector<128x512xbf16>, vector<16x512xf32> -> vector<16x512xf32>
    %c0_183 = arith.constant 0 : index
    %c0_184 = arith.constant 0 : index
    %c0_185 = arith.constant 0 : index
    %477 = vector.load %arg10[%c0_183, %c0_184, %c0_185] : memref<1x1x512xf32, #tpu.memory_space<vmem>>, vector<1x1x512xf32>
    %478 = vector.shape_cast %477 : vector<1x1x512xf32> to vector<1x512xf32>
    %479 = vector.broadcast %478 : vector<1x512xf32> to vector<16x512xf32>
    %480 = arith.addf %476, %479 : vector<16x512xf32>
    %cst_186 = arith.constant 5.000000e-01 : f32
    %481 = vector.broadcast %cst_186 : f32 to vector<16x512xf32>
    %482 = arith.mulf %481, %480 : vector<16x512xf32>
    %cst_187 = arith.constant 4.471500e-02 : f32
    %483 = vector.broadcast %cst_187 : f32 to vector<16x512xf32>
    %484 = arith.mulf %483, %480 : vector<16x512xf32>
    %485 = arith.mulf %484, %480 : vector<16x512xf32>
    %486 = arith.mulf %485, %480 : vector<16x512xf32>
    %487 = arith.addf %480, %486 : vector<16x512xf32>
    %cst_188 = arith.constant 0.797884583 : f32
    %488 = vector.broadcast %cst_188 : f32 to vector<16x512xf32>
    %489 = arith.mulf %488, %487 : vector<16x512xf32>
    %490 = math.tanh %489 : vector<16x512xf32>
    %cst_189 = arith.constant 1.000000e+00 : f32
    %491 = vector.broadcast %cst_189 : f32 to vector<16x512xf32>
    %492 = arith.addf %491, %490 : vector<16x512xf32>
    %493 = arith.mulf %482, %492 : vector<16x512xf32>
    %c0_190 = arith.constant 0 : index
    %c0_191 = arith.constant 0 : index
    %c0_192 = arith.constant 0 : index
    %494 = vector.load %arg11[%c0_190, %c0_191, %c0_192] : memref<1x512x128xbf16, #tpu.memory_space<vmem>>, vector<1x512x128xbf16>
    %495 = vector.shape_cast %494 : vector<1x512x128xbf16> to vector<512x128xbf16>
    %496 = arith.truncf %493 : vector<16x512xf32> to vector<16x512xbf16>
    %cst_193 = arith.constant dense<0.000000e+00> : vector<16x128xf32>
    %497 = tpu.matmul %496, %495, %cst_193 {dimension_numbers = #tpu.dot_dimension_numbers<[1], [0], [0], [1], [0, 0, 1, 1], [], []>} : vector<16x512xbf16>, vector<512x128xbf16>, vector<16x128xf32> -> vector<16x128xf32>
    %c0_194 = arith.constant 0 : index
    %c0_195 = arith.constant 0 : index
    %c0_196 = arith.constant 0 : index
    %498 = vector.load %arg12[%c0_194, %c0_195, %c0_196] : memref<1x1x128xf32, #tpu.memory_space<vmem>>, vector<1x1x128xf32>
    %499 = vector.shape_cast %498 : vector<1x1x128xf32> to vector<1x128xf32>
    %500 = vector.broadcast %499 : vector<1x128xf32> to vector<16x128xf32>
    %501 = arith.addf %497, %500 : vector<16x128xf32>
    %502 = arith.addf %448, %501 : vector<16x128xf32>
    %c0_197 = arith.constant 0 : index
    %c0_198 = arith.constant 0 : index
    %503 = vector.load %arg26[%c0_197, %c0_198] : memref<16x128xf32, #tpu.memory_space<vmem>>, vector<16x128xf32>
    tpu.vector_store %arg26[%c0_197, %c0_198], %502 {strides = array<i32>} : memref<16x128xf32, #tpu.memory_space<vmem>>, vector<16x128xf32>,
    %c11_i32 = arith.constant 11 : i32
    %504 = arith.cmpi eq, %arg1, %c11_i32 : i32
    %505 = arith.extui %504 : i1 to i32
    %c0_i32_199 = arith.constant 0 : i32
    %506 = arith.cmpi ne, %505, %c0_i32_199 : i32
    scf.if %506 {
      %c0_200 = arith.constant 0 : index
      %c0_201 = arith.constant 0 : index
      %507 = vector.load %arg22[%c0_200, %c0_201] : memref<2x128xf32, #tpu.memory_space<vmem>>, vector<2x128xf32>
      %508 = vector.extract_strided_slice %507 {offsets = [0, 0], sizes = [1, 128], strides = [1, 1]} : vector<2x128xf32> to vector<1x128xf32>
      %509 = vector.extract_strided_slice %507 {offsets = [1, 0], sizes = [1, 128], strides = [1, 1]} : vector<2x128xf32> to vector<1x128xf32>
      %510 = vector.extract_strided_slice %242 {offsets = [0, 0], sizes = [1, 128], strides = [1, 1]} : vector<8x128xf32> to vector<1x128xf32>
      %cst_202 = arith.constant dense<0.000000e+00> : vector<1xf32>
      %511 = vector.multi_reduction <add>, %510, %cst_202 [1] : vector<1x128xf32> to vector<1xf32>
      %512 = vector.shape_cast %511 : vector<1xf32> to vector<1x1xf32>
      %cst_203 = arith.constant 1.280000e+02 : f32
      %513 = vector.broadcast %cst_203 : f32 to vector<1x1xf32>
      %514 = arith.divf %512, %513 : vector<1x1xf32>
      %515 = vector.broadcast %514 : vector<1x1xf32> to vector<1x128xf32>
      %516 = arith.subf %510, %515 : vector<1x128xf32>
      %517 = arith.mulf %516, %516 : vector<1x128xf32>
      %cst_204 = arith.constant dense<0.000000e+00> : vector<1xf32>
      %518 = vector.multi_reduction <add>, %517, %cst_204 [1] : vector<1x128xf32> to vector<1xf32>
      %519 = vector.shape_cast %518 : vector<1xf32> to vector<1x1xf32>
      %cst_205 = arith.constant 1.280000e+02 : f32
      %520 = vector.broadcast %cst_205 : f32 to vector<1x1xf32>
      %521 = arith.divf %519, %520 : vector<1x1xf32>
      %522 = vector.broadcast %514 : vector<1x1xf32> to vector<1x128xf32>
      %523 = arith.subf %510, %522 : vector<1x128xf32>
      %cst_206 = arith.constant 9.99999997E-7 : f32
      %524 = vector.broadcast %cst_206 : f32 to vector<1x1xf32>
      %525 = arith.addf %521, %524 : vector<1x1xf32>
      %526 = math.rsqrt %525 : vector<1x1xf32>
      %527 = vector.broadcast %526 : vector<1x1xf32> to vector<1x128xf32>
      %528 = arith.mulf %523, %527 : vector<1x128xf32>
      %529 = arith.mulf %528, %508 : vector<1x128xf32>
      %530 = arith.addf %529, %509 : vector<1x128xf32>
      %531 = vector.extract_strided_slice %502 {offsets = [0, 0], sizes = [1, 128], strides = [1, 1]} : vector<16x128xf32> to vector<1x128xf32>
      %cst_207 = arith.constant dense<0.000000e+00> : vector<1xf32>
      %532 = vector.multi_reduction <add>, %531, %cst_207 [1] : vector<1x128xf32> to vector<1xf32>
      %533 = vector.shape_cast %532 : vector<1xf32> to vector<1x1xf32>
      %cst_208 = arith.constant 1.280000e+02 : f32
      %534 = vector.broadcast %cst_208 : f32 to vector<1x1xf32>
      %535 = arith.divf %533, %534 : vector<1x1xf32>
      %536 = vector.broadcast %535 : vector<1x1xf32> to vector<1x128xf32>
      %537 = arith.subf %531, %536 : vector<1x128xf32>
      %538 = arith.mulf %537, %537 : vector<1x128xf32>
      %cst_209 = arith.constant dense<0.000000e+00> : vector<1xf32>
      %539 = vector.multi_reduction <add>, %538, %cst_209 [1] : vector<1x128xf32> to vector<1xf32>
      %540 = vector.shape_cast %539 : vector<1xf32> to vector<1x1xf32>
      %cst_210 = arith.constant 1.280000e+02 : f32
      %541 = vector.broadcast %cst_210 : f32 to vector<1x1xf32>
      %542 = arith.divf %540, %541 : vector<1x1xf32>
      %543 = vector.broadcast %535 : vector<1x1xf32> to vector<1x128xf32>
      %544 = arith.subf %531, %543 : vector<1x128xf32>
      %cst_211 = arith.constant 9.99999997E-7 : f32
      %545 = vector.broadcast %cst_211 : f32 to vector<1x1xf32>
      %546 = arith.addf %542, %545 : vector<1x1xf32>
      %547 = math.rsqrt %546 : vector<1x1xf32>
      %548 = vector.broadcast %547 : vector<1x1xf32> to vector<1x128xf32>
      %549 = arith.mulf %544, %548 : vector<1x128xf32>
      %550 = arith.mulf %549, %508 : vector<1x128xf32>
      %551 = arith.addf %550, %509 : vector<1x128xf32>
      %552 = arith.addf %530, %551 : vector<1x128xf32>
      %cst_212 = arith.constant 5.000000e-01 : f32
      %553 = vector.broadcast %cst_212 : f32 to vector<1x128xf32>
      %554 = arith.mulf %553, %552 : vector<1x128xf32>
      %c0_213 = arith.constant 0 : index
      %c0_214 = arith.constant 0 : index
      %555 = vector.load %arg23[%c0_213, %c0_214] : memref<128x128xbf16, #tpu.memory_space<vmem>>, vector<128x128xbf16>
      %556 = arith.truncf %554 : vector<1x128xf32> to vector<1x128xbf16>
      %cst_215 = arith.constant dense<0.000000e+00> : vector<1x128xf32>
      %557 = tpu.matmul %556, %555, %cst_215 {dimension_numbers = #tpu.dot_dimension_numbers<[1], [0], [0], [1], [0, 0, 1, 1], [], []>} : vector<1x128xbf16>, vector<128x128xbf16>, vector<1x128xf32> -> vector<1x128xf32>
      %c0_216 = arith.constant 0 : index
      %c0_217 = arith.constant 0 : index
      %558 = vector.load %arg24[%c0_216, %c0_217] : memref<1x128xf32, #tpu.memory_space<vmem>>, vector<1x128xf32>
      %559 = arith.addf %557, %558 : vector<1x128xf32>
      %c0_218 = arith.constant 0 : index
      %c0_219 = arith.constant 0 : index
      %560 = vector.load %arg25[%c0_218, %c0_219] : memref<8x128xf32, #tpu.memory_space<vmem>>, vector<1x128xf32>
      tpu.vector_store %arg25[%c0_218, %c0_219], %559 {strides = array<i32>} : memref<8x128xf32, #tpu.memory_space<vmem>>, vector<1x128xf32>,
    } else {
    }
    return
  }
  func.func @transform_0(%arg0: i32, %arg1: i32) -> (i32, i32) {
    %c0_i32 = arith.constant 0 : i32
    %c0_i32_0 = arith.constant 0 : i32
    return %arg0, %c0_i32 : i32, i32
  }
  func.func @transform_1(%arg0: i32, %arg1: i32) -> (i32, i32) {
    %c0_i32 = arith.constant 0 : i32
    %c0_i32_0 = arith.constant 0 : i32
    return %arg0, %c0_i32 : i32, i32
  }
  func.func @transform_2(%arg0: i32, %arg1: i32) -> (i32, i32, i32) {
    %c0_i32 = arith.constant 0 : i32
    %c0_i32_0 = arith.constant 0 : i32
    %c0_i32_1 = arith.constant 0 : i32
    return %arg1, %c0_i32, %c0_i32_0 : i32, i32, i32
  }
  func.func @transform_3(%arg0: i32, %arg1: i32) -> (i32, i32, i32) {
    %c0_i32 = arith.constant 0 : i32
    %c0_i32_0 = arith.constant 0 : i32
    %c0_i32_1 = arith.constant 0 : i32
    return %arg1, %c0_i32, %c0_i32_0 : i32, i32, i32
  }
  func.func @transform_4(%arg0: i32, %arg1: i32) -> (i32, i32, i32) {
    %c0_i32 = arith.constant 0 : i32
    %c0_i32_0 = arith.constant 0 : i32
    %c0_i32_1 = arith.constant 0 : i32
    return %arg1, %c0_i32, %c0_i32_0 : i32, i32, i32
  }
  func.func @transform_5(%arg0: i32, %arg1: i32) -> (i32, i32, i32) {
    %c0_i32 = arith.constant 0 : i32
    %c0_i32_0 = arith.constant 0 : i32
    %c0_i32_1 = arith.constant 0 : i32
    return %arg1, %c0_i32, %c0_i32_0 : i32, i32, i32
  }
  func.func @transform_6(%arg0: i32, %arg1: i32) -> (i32, i32, i32) {
    %c0_i32 = arith.constant 0 : i32
    %c0_i32_0 = arith.constant 0 : i32
    %c0_i32_1 = arith.constant 0 : i32
    return %arg1, %c0_i32, %c0_i32_0 : i32, i32, i32
  }
  func.func @transform_7(%arg0: i32, %arg1: i32) -> (i32, i32, i32) {
    %c0_i32 = arith.constant 0 : i32
    %c0_i32_0 = arith.constant 0 : i32
    %c0_i32_1 = arith.constant 0 : i32
    return %arg1, %c0_i32, %c0_i32_0 : i32, i32, i32
  }
  func.func @transform_8(%arg0: i32, %arg1: i32) -> (i32, i32, i32) {
    %c0_i32 = arith.constant 0 : i32
    %c0_i32_0 = arith.constant 0 : i32
    %c0_i32_1 = arith.constant 0 : i32
    return %arg1, %c0_i32, %c0_i32_0 : i32, i32, i32
  }
  func.func @transform_9(%arg0: i32, %arg1: i32) -> (i32, i32, i32) {
    %c0_i32 = arith.constant 0 : i32
    %c0_i32_0 = arith.constant 0 : i32
    %c0_i32_1 = arith.constant 0 : i32
    return %arg1, %c0_i32, %c0_i32_0 : i32, i32, i32
  }
  func.func @transform_10(%arg0: i32, %arg1: i32) -> (i32, i32, i32) {
    %c0_i32 = arith.constant 0 : i32
    %c0_i32_0 = arith.constant 0 : i32
    %c0_i32_1 = arith.constant 0 : i32
    return %arg1, %c0_i32, %c0_i32_0 : i32, i32, i32
  }
  func.func @transform_11(%arg0: i32, %arg1: i32) -> (i32, i32) {
    %c0_i32 = arith.constant 0 : i32
    %c0_i32_0 = arith.constant 0 : i32
    %c0_i32_1 = arith.constant 0 : i32
    return %c0_i32, %c0_i32_0 : i32, i32
  }
  func.func @transform_12(%arg0: i32, %arg1: i32) -> (i32, i32) {
    %c0_i32 = arith.constant 0 : i32
    %c0_i32_0 = arith.constant 0 : i32
    %c0_i32_1 = arith.constant 0 : i32
    return %c0_i32, %c0_i32_0 : i32, i32
  }
  func.func @transform_13(%arg0: i32, %arg1: i32) -> (i32, i32) {
    %c0_i32 = arith.constant 0 : i32
    %c0_i32_0 = arith.constant 0 : i32
    %c0_i32_1 = arith.constant 0 : i32
    return %c0_i32, %c0_i32_0 : i32, i32
  }
  func.func @transform_14(%arg0: i32, %arg1: i32) -> (i32, i32) {
    %c0_i32 = arith.constant 0 : i32
    %c0_i32_0 = arith.constant 0 : i32
    %c0_i32_1 = arith.constant 0 : i32
    return %c0_i32, %c0_i32_0 : i32, i32
  }
  func.func @transform_15(%arg0: i32, %arg1: i32) -> (i32, i32) {
    %c0_i32 = arith.constant 0 : i32
    %c0_i32_0 = arith.constant 0 : i32
    %c0_i32_1 = arith.constant 0 : i32
    return %c0_i32, %c0_i32_0 : i32, i32
  }
  func.func @transform_16(%arg0: i32, %arg1: i32) -> (i32, i32) {
    %c0_i32 = arith.constant 0 : i32
    %c0_i32_0 = arith.constant 0 : i32
    %c0_i32_1 = arith.constant 0 : i32
    return %c0_i32, %c0_i32_0 : i32, i32
  }
  func.func @transform_17(%arg0: i32, %arg1: i32) -> (i32, i32) {
    %c0_i32 = arith.constant 0 : i32
    %c0_i32_0 = arith.constant 0 : i32
    %c0_i32_1 = arith.constant 0 : i32
    return %c0_i32, %c0_i32_0 : i32, i32
  }
  func.func @transform_18(%arg0: i32, %arg1: i32) -> (i32, i32) {
    %c0_i32 = arith.constant 0 : i32
    %c0_i32_0 = arith.constant 0 : i32
    %c0_i32_1 = arith.constant 0 : i32
    return %c0_i32, %c0_i32_0 : i32, i32
  }
  func.func @transform_19(%arg0: i32, %arg1: i32) -> (i32, i32) {
    %c0_i32 = arith.constant 0 : i32
    %c0_i32_0 = arith.constant 0 : i32
    %c0_i32_1 = arith.constant 0 : i32
    return %c0_i32, %c0_i32_0 : i32, i32
  }
  func.func @transform_20(%arg0: i32, %arg1: i32) -> (i32, i32) {
    %c0_i32 = arith.constant 0 : i32
    %c0_i32_0 = arith.constant 0 : i32
    %c0_i32_1 = arith.constant 0 : i32
    return %c0_i32, %c0_i32_0 : i32, i32
  }
  func.func @transform_21(%arg0: i32, %arg1: i32) -> (i32, i32) {
    %c0_i32 = arith.constant 0 : i32
    %c0_i32_0 = arith.constant 0 : i32
    %c0_i32_1 = arith.constant 0 : i32
    return %c0_i32, %c0_i32_0 : i32, i32
  }
  func.func @transform_22(%arg0: i32, %arg1: i32) -> (i32, i32) {
    %c0_i32 = arith.constant 0 : i32
    %c0_i32_0 = arith.constant 0 : i32
    %c0_i32_1 = arith.constant 0 : i32
    return %c0_i32, %c0_i32_0 : i32, i32
  }
  func.func @transform_23(%arg0: i32, %arg1: i32) -> (i32, i32) {
    %c0_i32 = arith.constant 0 : i32
    %c0_i32_0 = arith.constant 0 : i32
    return %arg0, %c0_i32 : i32, i32
  }
}

</mosaic_0001>

<llo_original>
// kernel: avmodel_forward.1
$region0: #{avmodel_forward.1}
  #allocation0 [shape = 'u32[]', space=smem, size = 0x4, offset = 0x4, fixed_abs, tag = 'smem constant byte address 0x4 - core index']
  #allocation1 [shape = 'u32[144,128]{1,0:T(1,128)}', space=vmem, size = 0x12000, scoped, tag = 'internal scratch']
  #allocation2 [shape = 'f32[16,128]{1,0:T(8,128)}', space=vmem, size = 0x2000, scoped, tag = 'scratch operand']
  #allocation3 [shape = 'f32[8,128]{1,0:T(8,128)}', space=vmem, size = 0x1000, scoped, tag = 'scratch operand']
  #allocation4 [shape = 'f32[16,128]{1,0:T(8,128)}', space=vmem, size = 0x2000, scoped, tag = 'scratch operand']
  %s0 = inlined_call_operand.vmem [shape: f32[32,128], index: 0, kind: input, shape index: {}]
  %s1 = inlined_call_operand.vmem [shape: f32[16,128], index: 1, kind: input, shape index: {}]
  %s2 = inlined_call_operand.hbm [shape: f32[12,4,128], index: 2, kind: input, shape index: {}]
  %s3 = inlined_call_operand.vmem [shape: bf16[12,128,384], index: 3, kind: input, shape index: {}]
  %s4 = inlined_call_operand.hbm [shape: f32[12,1,384], index: 4, kind: input, shape index: {}]
  %s5 = inlined_call_operand.hbm [shape: bf16[12,128,128], index: 5, kind: input, shape index: {}]
  %s6 = inlined_call_operand.vmem [shape: f32[12,1,128], index: 6, kind: input, shape index: {}]
  %s7 = inlined_call_operand.vmem [shape: bf16[12,128,512], index: 7, kind: input, shape index: {}]
  %s8 = inlined_call_operand.hbm [shape: f32[12,1,512], index: 8, kind: input, shape index: {}]
  %s9 = inlined_call_operand.hbm [shape: bf16[12,512,128], index: 9, kind: input, shape index: {}]
  %s10 = inlined_call_operand.hbm [shape: f32[12,1,128], index: 10, kind: input, shape index: {}]
  %s11 = inlined_call_operand.hbm [shape: f32[4,128], index: 11, kind: input, shape index: {}]
  %s12 = inlined_call_operand.hbm [shape: bf16[128,384], index: 12, kind: input, shape index: {}]
  %s13 = inlined_call_operand.hbm [shape: f32[1,384], index: 13, kind: input, shape index: {}]
  %s14 = inlined_call_operand.vmem [shape: bf16[128,128], index: 14, kind: input, shape index: {}]
  %s15 = inlined_call_operand.vmem [shape: f32[1,128], index: 15, kind: input, shape index: {}]
  %s16 = inlined_call_operand.hbm [shape: bf16[128,512], index: 16, kind: input, shape index: {}]
  %s17 = inlined_call_operand.hbm [shape: f32[1,512], index: 17, kind: input, shape index: {}]
  %s18 = inlined_call_operand.hbm [shape: bf16[512,128], index: 18, kind: input, shape index: {}]
  %s19 = inlined_call_operand.hbm [shape: f32[1,128], index: 19, kind: input, shape index: {}]
  %s20 = inlined_call_operand.hbm [shape: f32[2,128], index: 20, kind: input, shape index: {}]
  %s21 = inlined_call_operand.hbm [shape: bf16[128,128], index: 21, kind: input, shape index: {}]
  %s22 = inlined_call_operand.hbm [shape: f32[1,128], index: 22, kind: input, shape index: {}]
  %s23 = inlined_call_operand.vmem [shape: f32[16,128], index: 23, kind: output, shape index: {}]
  %s24 = sld [smem:[#allocation0]]
  $region197: #{avmodel_forward.1} parent=0
    _
  %s26 = ssub.s32 1, %s24
  %s27 = scalar_select 0, %s26, %s24
  $region1: #{avmodel_forward.1} parent=0
    #allocation5 [shape = 'u8[4096]{0}', space=vmem, size = 0x1000, scoped, tag = 'input window, operand 2']
    #allocation6 [shape = 's32[2]{0}', space=sflag, size = 0x8, scoped, tag = 'scoped memory for avmodel_forward.1']
    #allocation7 [shape = 'u8[3072]{0}', space=vmem, size = 0xc00, scoped, tag = 'input window, operand 4']
    #allocation8 [shape = 's32[2]{0}', space=sflag, size = 0x8, scoped, tag = 'scoped memory for avmodel_forward.1']
    #allocation9 [shape = 'u8[65536]{0}', space=vmem, size = 0x10000, scoped, tag = 'input window, operand 5']
    #allocation10 [shape = 'u8[4096]{0}', space=vmem, size = 0x1000, scoped, tag = 'input window, operand 8']
    #allocation11 [shape = 's32[2]{0}', space=sflag, size = 0x8, scoped, tag = 'scoped memory for avmodel_forward.1']
    #allocation12 [shape = 'u8[262144]{0}', space=vmem, size = 0x40000, scoped, tag = 'input window, operand 9']
    #allocation13 [shape = 'u8[1024]{0}', space=vmem, size = 0x400, scoped, tag = 'input window, operand 10']
    #allocation14 [shape = 's32[2]{0}', space=sflag, size = 0x8, scoped, tag = 'scoped memory for avmodel_forward.1']
    #allocation15 [shape = 'u8[2048]{0}', space=vmem, size = 0x800, scoped, tag = 'input window, operand 11, single buffered']
    #allocation16 [shape = 'u8[98304]{0}', space=vmem, size = 0x18000, scoped, tag = 'input window, operand 12, single buffered']
    #allocation17 [shape = 's32[1]{0}', space=sflag, size = 0x4, scoped, tag = 'scoped memory for avmodel_forward.1']
    #allocation18 [shape = 'u8[1536]{0}', space=vmem, size = 0x800, scoped, tag = 'input window, operand 13, single buffered']
    #allocation19 [shape = 'u8[131072]{0}', space=vmem, size = 0x20000, scoped, tag = 'input window, operand 16, single buffered']
    #allocation20 [shape = 's32[1]{0}', space=sflag, size = 0x4, scoped, tag = 'scoped memory for avmodel_forward.1']
    #allocation21 [shape = 'u8[2048]{0}', space=vmem, size = 0x800, scoped, tag = 'input window, operand 17, single buffered']
    #allocation22 [shape = 'u8[131072]{0}', space=vmem, size = 0x20000, scoped, tag = 'input window, operand 18, single buffered']
    #allocation23 [shape = 's32[1]{0}', space=sflag, size = 0x4, scoped, tag = 'scoped memory for avmodel_forward.1']
    #allocation24 [shape = 'u8[512]{0}', space=vmem, size = 0x400, scoped, tag = 'input window, operand 19, single buffered']
    #allocation25 [shape = 'u8[1024]{0}', space=vmem, size = 0x400, scoped, tag = 'input window, operand 20, single buffered']
    #allocation26 [shape = 's32[1]{0}', space=sflag, size = 0x4, scoped, tag = 'scoped memory for avmodel_forward.1']
    #allocation27 [shape = 'u8[32768]{0}', space=vmem, size = 0x8000, scoped, tag = 'input window, operand 21, single buffered']
    #allocation28 [shape = 'u8[512]{0}', space=vmem, size = 0x400, scoped, tag = 'input window, operand 22, single buffered']
    #allocation29 [shape = 's32[1]{0}', space=sflag, size = 0x4, scoped, tag = 'scoped memory for avmodel_forward.1']
    %28 = vsyncpa [#allocation6], 0
    %s29 = scalar_lea.sflag [#allocation6], 1
    %30 = vsyncpa %s29, 0
    %31 = vsyncpa [#allocation8], 0
    %s32 = scalar_lea.sflag [#allocation8], 1
    %33 = vsyncpa %s32, 0
    %34 = vsyncpa [#allocation11], 0
    %s35 = scalar_lea.sflag [#allocation11], 1
    %36 = vsyncpa %s35, 0
    %37 = vsyncpa [#allocation14], 0
    %s38 = scalar_lea.sflag [#allocation14], 1
    %39 = vsyncpa %s38, 0
    %40 = vsyncpa [#allocation17], 0
    %41 = vsyncpa [#allocation20], 0
    %42 = vsyncpa [#allocation23], 0
    %43 = vsyncpa [#allocation26], 0
    %44 = vsyncpa [#allocation29], 0
    loop: start=0, step=1, limit=26
    $region2: #{avmodel_forward.1} parent=1 // loop_pre_header
      _
    $region3: #{avmodel_forward.1} parent=1 // loop_header
      %s46 = sphi 0, %s50
      %p47 = scmp.ge.s32.totalorder %s46, 26
      %s53 = sphi 0, %s65
      %s54 = sphi 0, %s61
      %s55 = sphi 0, %s53
      %s56 = sphi 0, %s54
      %s57 = sphi 0, %s55
      %s58 = sphi 0, %s56
      %s68 = sphi 0, %s70
      %s71 = sphi 0, %s68
      %s72 = sphi 0, %s71
      %s88 = sphi 0, %s72
      %s94 = sphi 0, %s96
      %s97 = sphi 0, %s94
      %s98 = sphi 0, %s97
      %s114 = sphi 0, %s98
      %s120 = sphi 0, %s122
      %s123 = sphi 0, %s120
      %s124 = sphi 0, %s123
      %s140 = sphi 0, %s124
      %s146 = sphi 0, %s148
      %s149 = sphi 0, %s146
      %s150 = sphi 0, %s149
      %s166 = sphi 0, %s150
      %s172 = sphi 0, %s174
      %s175 = sphi 0, %s172
      %s176 = sphi 0, %s175
      %s192 = sphi 0, %s176
      %s198 = sphi 0, %s200
      %s201 = sphi 0, %s198
      %s202 = sphi 0, %s201
      %s218 = sphi 0, %s202
      %s224 = sphi 0, %s226
      %s227 = sphi 0, %s224
      %s228 = sphi 0, %s227
      %s244 = sphi 0, %s228
      %s250 = sphi 0, %s252
      %s253 = sphi 0, %s250
      %s254 = sphi 0, %s253
      %s270 = sphi 0, %s254
      %s276 = sphi 0, %s278
      %s279 = sphi 0, %s276
      %s280 = sphi 0, %s279
      %s296 = sphi 0, %s280
      %s302 = sphi 0, %s304
      %s305 = sphi 0, %s302
      %s306 = sphi 0, %s305
      %s322 = sphi 0, %s306
      %s328 = sphi 0, %s330
      %s331 = sphi 0, %s328
      %s332 = sphi 0, %s331
      %s348 = sphi 0, %s332
      %s352 = sphi 0, %s352
      %s354 = sphi 0, %s352
      %s355 = sphi 0, %s354
      %s369 = sphi 0, %s355
      %s373 = sphi 0, %s373
      %s375 = sphi 0, %s373
      %s376 = sphi 0, %s375
      %s390 = sphi 0, %s376
      %s394 = sphi 0, %s394
      %s396 = sphi 0, %s394
      %s397 = sphi 0, %s396
      %s411 = sphi 0, %s397
      %s415 = sphi 0, %s415
      %s417 = sphi 0, %s415
      %s418 = sphi 0, %s417
      %s432 = sphi 0, %s418
      %s436 = sphi 0, %s436
      %s438 = sphi 0, %s436
      %s439 = sphi 0, %s438
      %s453 = sphi 0, %s439
      %s457 = sphi 0, %s457
      %s459 = sphi 0, %s457
      %s460 = sphi 0, %s459
      %s474 = sphi 0, %s460
      %s478 = sphi 0, %s478
      %s480 = sphi 0, %s478
      %s481 = sphi 0, %s480
      %s495 = sphi 0, %s481
      %s499 = sphi 0, %s499
      %s501 = sphi 0, %s499
      %s502 = sphi 0, %s501
      %s516 = sphi 0, %s502
      %s520 = sphi 0, %s520
      %s522 = sphi 0, %s520
      %s523 = sphi 0, %s522
      %s537 = sphi 0, %s523
      %s541 = sphi 0, %s541
      %s543 = sphi 0, %s541
      %s544 = sphi 0, %s543
      %s558 = sphi 0, %s544
      %s562 = sphi 0, %s562
      %s564 = sphi 0, %s562
      %s565 = sphi 0, %s564
      %s579 = sphi 0, %s565
      %s583 = sphi 0, %s583
      %s585 = sphi 0, %s583
      %s586 = sphi 0, %s585
      %s600 = sphi 0, %s586
      %s606 = sphi 0, %s608
      %s609 = sphi 0, %s606
      %s610 = sphi 0, %s609
      %s626 = sphi 0, %s610
    $region4: #{avmodel_forward.1} parent=1 // loop_header_branch
      %49 = sbr.rel (%p47) target = $region8
    $region5: #{avmodel_forward.1} parent=1 // loop_body
      %s51 = ssub.s32 %s46, 1
      %s52 = ssub.s32 %s46, 2
      %s59 = sadd.s32 1, %s54
      %p60 = scmp.ge.s32.totalorder %s59, 12
      %s61 = scalar_select %p60, 0, %s59
      %s62 = sadd.s32 1, %s53
      %s63 = scalar_select %p60, %s62, %s53
      %p64 = scmp.ge.s32.totalorder %s63, 2
      %s65 = scalar_select %p64, 0, %s63
      %s66 = ssub.s32 %s53, %s65
      %p67 = scmp.eq.s32.totalorder %s66, 0
      %s69 = sadd.s32 %s68, 1
      %s70 = scalar_select %p67, %s68, %s69
      %p73 = pneg %p67
      %p74 = scmp.eq.s32.totalorder %s46, 23
      %p75 = por %p73, %p74
      %p76 = scmp.ne.s32.totalorder %s68, %s71
      %p77 = scmp.eq.s32.totalorder %s46, 0
      %p78 = por %p76, %p77
      %p79 = scmp.ne.s32.totalorder %s68, %s71
      %p80 = scmp.eq.s32.totalorder %s51, 23
      %p81 = por %p79, %p80
      %p82 = scmp.ne.s32.totalorder %s71, %s72
      %p83 = scmp.eq.s32.totalorder %s51, 0
      %p84 = por %p82, %p83
      %p85 = scmp.ne.s32.totalorder %s71, %s72
      %p86 = scmp.eq.s32.totalorder %s52, 23
      %p87 = por %p85, %p86
      %p89 = scmp.ne.s32.totalorder %s72, %s88
      %p90 = scmp.eq.s32.totalorder %s52, 0
      %p91 = por %p89, %p90
      %s92 = ssub.s32 %s53, %s65
      %p93 = scmp.eq.s32.totalorder %s92, 0
      %s95 = sadd.s32 %s94, 1
      %s96 = scalar_select %p93, %s94, %s95
      %p99 = pneg %p93
      %p100 = scmp.eq.s32.totalorder %s46, 23
      %p101 = por %p99, %p100
      %p102 = scmp.ne.s32.totalorder %s94, %s97
      %p103 = scmp.eq.s32.totalorder %s46, 0
      %p104 = por %p102, %p103
      %p105 = scmp.ne.s32.totalorder %s94, %s97
      %p106 = scmp.eq.s32.totalorder %s51, 23
      %p107 = por %p105, %p106
      %p108 = scmp.ne.s32.totalorder %s97, %s98
      %p109 = scmp.eq.s32.totalorder %s51, 0
      %p110 = por %p108, %p109
      %p111 = scmp.ne.s32.totalorder %s97, %s98
      %p112 = scmp.eq.s32.totalorder %s52, 23
      %p113 = por %p111, %p112
      %p115 = scmp.ne.s32.totalorder %s98, %s114
      %p116 = scmp.eq.s32.totalorder %s52, 0
      %p117 = por %p115, %p116
      %s118 = ssub.s32 %s54, %s61
      %p119 = scmp.eq.s32.totalorder %s118, 0
      %s121 = sadd.s32 %s120, 1
      %s122 = scalar_select %p119, %s120, %s121
      %p125 = pneg %p119
      %p126 = scmp.eq.s32.totalorder %s46, 23
      %p127 = por %p125, %p126
      %p128 = scmp.ne.s32.totalorder %s120, %s123
      %p129 = scmp.eq.s32.totalorder %s46, 0
      %p130 = por %p128, %p129
      %p131 = scmp.ne.s32.totalorder %s120, %s123
      %p132 = scmp.eq.s32.totalorder %s51, 23
      %p133 = por %p131, %p132
      %p134 = scmp.ne.s32.totalorder %s123, %s124
      %p135 = scmp.eq.s32.totalorder %s51, 0
      %p136 = por %p134, %p135
      %p137 = scmp.ne.s32.totalorder %s123, %s124
      %p138 = scmp.eq.s32.totalorder %s52, 23
      %p139 = por %p137, %p138
      %p141 = scmp.ne.s32.totalorder %s124, %s140
      %p142 = scmp.eq.s32.totalorder %s52, 0
      %p143 = por %p141, %p142
      %s144 = ssub.s32 %s54, %s61
      %p145 = scmp.eq.s32.totalorder %s144, 0
      %s147 = sadd.s32 %s146, 1
      %s148 = scalar_select %p145, %s146, %s147
      %p151 = pneg %p145
      %p152 = scmp.eq.s32.totalorder %s46, 23
      %p153 = por %p151, %p152
      %p154 = scmp.ne.s32.totalorder %s146, %s149
      %p155 = scmp.eq.s32.totalorder %s46, 0
      %p156 = por %p154, %p155
      %p157 = scmp.ne.s32.totalorder %s146, %s149
      %p158 = scmp.eq.s32.totalorder %s51, 23
      %p159 = por %p157, %p158
      %p160 = scmp.ne.s32.totalorder %s149, %s150
      %p161 = scmp.eq.s32.totalorder %s51, 0
      %p162 = por %p160, %p161
      %p163 = scmp.ne.s32.totalorder %s149, %s150
      %p164 = scmp.eq.s32.totalorder %s52, 23
      %p165 = por %p163, %p164
      %p167 = scmp.ne.s32.totalorder %s150, %s166
      %p168 = scmp.eq.s32.totalorder %s52, 0
      %p169 = por %p167, %p168
      %s170 = ssub.s32 %s54, %s61
      %p171 = scmp.eq.s32.totalorder %s170, 0
      %s173 = sadd.s32 %s172, 1
      %s174 = scalar_select %p171, %s172, %s173
      %p177 = pneg %p171
      %p178 = scmp.eq.s32.totalorder %s46, 23
      %p179 = por %p177, %p178
      %p180 = scmp.ne.s32.totalorder %s172, %s175
      %p181 = scmp.eq.s32.totalorder %s46, 0
      %p182 = por %p180, %p181
      %p183 = scmp.ne.s32.totalorder %s172, %s175
      %p184 = scmp.eq.s32.totalorder %s51, 23
      %p185 = por %p183, %p184
      %p186 = scmp.ne.s32.totalorder %s175, %s176
      %p187 = scmp.eq.s32.totalorder %s51, 0
      %p188 = por %p186, %p187
      %p189 = scmp.ne.s32.totalorder %s175, %s176
      %p190 = scmp.eq.s32.totalorder %s52, 23
      %p191 = por %p189, %p190
      %p193 = scmp.ne.s32.totalorder %s176, %s192
      %p194 = scmp.eq.s32.totalorder %s52, 0
      %p195 = por %p193, %p194
      %s196 = ssub.s32 %s54, %s61
      %p197 = scmp.eq.s32.totalorder %s196, 0
      %s199 = sadd.s32 %s198, 1
      %s200 = scalar_select %p197, %s198, %s199
      %p203 = pneg %p197
      %p204 = scmp.eq.s32.totalorder %s46, 23
      %p205 = por %p203, %p204
      %p206 = scmp.ne.s32.totalorder %s198, %s201
      %p207 = scmp.eq.s32.totalorder %s46, 0
      %p208 = por %p206, %p207
      %p209 = scmp.ne.s32.totalorder %s198, %s201
      %p210 = scmp.eq.s32.totalorder %s51, 23
      %p211 = por %p209, %p210
      %p212 = scmp.ne.s32.totalorder %s201, %s202
      %p213 = scmp.eq.s32.totalorder %s51, 0
      %p214 = por %p212, %p213
      %p215 = scmp.ne.s32.totalorder %s201, %s202
      %p216 = scmp.eq.s32.totalorder %s52, 23
      %p217 = por %p215, %p216
      %p219 = scmp.ne.s32.totalorder %s202, %s218
      %p220 = scmp.eq.s32.totalorder %s52, 0
      %p221 = por %p219, %p220
      %s222 = ssub.s32 %s54, %s61
      %p223 = scmp.eq.s32.totalorder %s222, 0
      %s225 = sadd.s32 %s224, 1
      %s226 = scalar_select %p223, %s224, %s225
      %p229 = pneg %p223
      %p230 = scmp.eq.s32.totalorder %s46, 23
      %p231 = por %p229, %p230
      %p232 = scmp.ne.s32.totalorder %s224, %s227
      %p233 = scmp.eq.s32.totalorder %s46, 0
      %p234 = por %p232, %p233
      %p235 = scmp.ne.s32.totalorder %s224, %s227
      %p236 = scmp.eq.s32.totalorder %s51, 23
      %p237 = por %p235, %p236
      %p238 = scmp.ne.s32.totalorder %s227, %s228
      %p239 = scmp.eq.s32.totalorder %s51, 0
      %p240 = por %p238, %p239
      %p241 = scmp.ne.s32.totalorder %s227, %s228
      %p242 = scmp.eq.s32.totalorder %s52, 23
      %p243 = por %p241, %p242
      %p245 = scmp.ne.s32.totalorder %s228, %s244
      %p246 = scmp.eq.s32.totalorder %s52, 0
      %p247 = por %p245, %p246
      %s248 = ssub.s32 %s54, %s61
      %p249 = scmp.eq.s32.totalorder %s248, 0
      %s251 = sadd.s32 %s250, 1
      %s252 = scalar_select %p249, %s250, %s251
      %p255 = pneg %p249
      %p256 = scmp.eq.s32.totalorder %s46, 23
      %p257 = por %p255, %p256
      %p258 = scmp.ne.s32.totalorder %s250, %s253
      %p259 = scmp.eq.s32.totalorder %s46, 0
      %p260 = por %p258, %p259
      %p261 = scmp.ne.s32.totalorder %s250, %s253
      %p262 = scmp.eq.s32.totalorder %s51, 23
      %p263 = por %p261, %p262
      %p264 = scmp.ne.s32.totalorder %s253, %s254
      %p265 = scmp.eq.s32.totalorder %s51, 0
      %p266 = por %p264, %p265
      %p267 = scmp.ne.s32.totalorder %s253, %s254
      %p268 = scmp.eq.s32.totalorder %s52, 23
      %p269 = por %p267, %p268
      %p271 = scmp.ne.s32.totalorder %s254, %s270
      %p272 = scmp.eq.s32.totalorder %s52, 0
      %p273 = por %p271, %p272
      %s274 = ssub.s32 %s54, %s61
      %p275 = scmp.eq.s32.totalorder %s274, 0
      %s277 = sadd.s32 %s276, 1
      %s278 = scalar_select %p275, %s276, %s277
      %p281 = pneg %p275
      %p282 = scmp.eq.s32.totalorder %s46, 23
      %p283 = por %p281, %p282
      %p284 = scmp.ne.s32.totalorder %s276, %s279
      %p285 = scmp.eq.s32.totalorder %s46, 0
      %p286 = por %p284, %p285
      %p287 = scmp.ne.s32.totalorder %s276, %s279
      %p288 = scmp.eq.s32.totalorder %s51, 23
      %p289 = por %p287, %p288
      %p290 = scmp.ne.s32.totalorder %s279, %s280
      %p291 = scmp.eq.s32.totalorder %s51, 0
      %p292 = por %p290, %p291
      %p293 = scmp.ne.s32.totalorder %s279, %s280
      %p294 = scmp.eq.s32.totalorder %s52, 23
      %p295 = por %p293, %p294
      %p297 = scmp.ne.s32.totalorder %s280, %s296
      %p298 = scmp.eq.s32.totalorder %s52, 0
      %p299 = por %p297, %p298
      %s300 = ssub.s32 %s54, %s61
      %p301 = scmp.eq.s32.totalorder %s300, 0
      %s303 = sadd.s32 %s302, 1
      %s304 = scalar_select %p301, %s302, %s303
      %p307 = pneg %p301
      %p308 = scmp.eq.s32.totalorder %s46, 23
      %p309 = por %p307, %p308
      %p310 = scmp.ne.s32.totalorder %s302, %s305
      %p311 = scmp.eq.s32.totalorder %s46, 0
      %p312 = por %p310, %p311
      %p313 = scmp.ne.s32.totalorder %s302, %s305
      %p314 = scmp.eq.s32.totalorder %s51, 23
      %p315 = por %p313, %p314
      %p316 = scmp.ne.s32.totalorder %s305, %s306
      %p317 = scmp.eq.s32.totalorder %s51, 0
      %p318 = por %p316, %p317
      %p319 = scmp.ne.s32.totalorder %s305, %s306
      %p320 = scmp.eq.s32.totalorder %s52, 23
      %p321 = por %p319, %p320
      %p323 = scmp.ne.s32.totalorder %s306, %s322
      %p324 = scmp.eq.s32.totalorder %s52, 0
      %p325 = por %p323, %p324
      %s326 = ssub.s32 %s54, %s61
      %p327 = scmp.eq.s32.totalorder %s326, 0
      %s329 = sadd.s32 %s328, 1
      %s330 = scalar_select %p327, %s328, %s329
      %p333 = pneg %p327
      %p334 = scmp.eq.s32.totalorder %s46, 23
      %p335 = por %p333, %p334
      %p336 = scmp.ne.s32.totalorder %s328, %s331
      %p337 = scmp.eq.s32.totalorder %s46, 0
      %p338 = por %p336, %p337
      %p339 = scmp.ne.s32.totalorder %s328, %s331
      %p340 = scmp.eq.s32.totalorder %s51, 23
      %p341 = por %p339, %p340
      %p342 = scmp.ne.s32.totalorder %s331, %s332
      %p343 = scmp.eq.s32.totalorder %s51, 0
      %p344 = por %p342, %p343
      %p345 = scmp.ne.s32.totalorder %s331, %s332
      %p346 = scmp.eq.s32.totalorder %s52, 23
      %p347 = por %p345, %p346
      %p349 = scmp.ne.s32.totalorder %s332, %s348
      %p350 = scmp.eq.s32.totalorder %s52, 0
      %p351 = por %p349, %p350
      %s353 = sadd.s32 %s352, 1
      %p356 = scmp.eq.s32.totalorder %s46, 23
      %p357 = scmp.ne.s32.totalorder %s352, %s354
      %p358 = scmp.eq.s32.totalorder %s46, 0
      %p359 = por %p357, %p358
      %p360 = scmp.ne.s32.totalorder %s352, %s354
      %p361 = scmp.eq.s32.totalorder %s51, 23
      %p362 = por %p360, %p361
      %p363 = scmp.ne.s32.totalorder %s354, %s355
      %p364 = scmp.eq.s32.totalorder %s51, 0
      %p365 = por %p363, %p364
      %p366 = scmp.ne.s32.totalorder %s354, %s355
      %p367 = scmp.eq.s32.totalorder %s52, 23
      %p368 = por %p366, %p367
      %p370 = scmp.ne.s32.totalorder %s355, %s369
      %p371 = scmp.eq.s32.totalorder %s52, 0
      %p372 = por %p370, %p371
      %s374 = sadd.s32 %s373, 1
      %p377 = scmp.eq.s32.totalorder %s46, 23
      %p378 = scmp.ne.s32.totalorder %s373, %s375
      %p379 = scmp.eq.s32.totalorder %s46, 0
      %p380 = por %p378, %p379
      %p381 = scmp.ne.s32.totalorder %s373, %s375
      %p382 = scmp.eq.s32.totalorder %s51, 23
      %p383 = por %p381, %p382
      %p384 = scmp.ne.s32.totalorder %s375, %s376
      %p385 = scmp.eq.s32.totalorder %s51, 0
      %p386 = por %p384, %p385
      %p387 = scmp.ne.s32.totalorder %s375, %s376
      %p388 = scmp.eq.s32.totalorder %s52, 23
      %p389 = por %p387, %p388
      %p391 = scmp.ne.s32.totalorder %s376, %s390
      %p392 = scmp.eq.s32.totalorder %s52, 0
      %p393 = por %p391, %p392
      %s395 = sadd.s32 %s394, 1
      %p398 = scmp.eq.s32.totalorder %s46, 23
      %p399 = scmp.ne.s32.totalorder %s394, %s396
      %p400 = scmp.eq.s32.totalorder %s46, 0
      %p401 = por %p399, %p400
      %p402 = scmp.ne.s32.totalorder %s394, %s396
      %p403 = scmp.eq.s32.totalorder %s51, 23
      %p404 = por %p402, %p403
      %p405 = scmp.ne.s32.totalorder %s396, %s397
      %p406 = scmp.eq.s32.totalorder %s51, 0
      %p407 = por %p405, %p406
      %p408 = scmp.ne.s32.totalorder %s396, %s397
      %p409 = scmp.eq.s32.totalorder %s52, 23
      %p410 = por %p408, %p409
      %p412 = scmp.ne.s32.totalorder %s397, %s411
      %p413 = scmp.eq.s32.totalorder %s52, 0
      %p414 = por %p412, %p413
      %s416 = sadd.s32 %s415, 1
      %p419 = scmp.eq.s32.totalorder %s46, 23
      %p420 = scmp.ne.s32.totalorder %s415, %s417
      %p421 = scmp.eq.s32.totalorder %s46, 0
      %p422 = por %p420, %p421
      %p423 = scmp.ne.s32.totalorder %s415, %s417
      %p424 = scmp.eq.s32.totalorder %s51, 23
      %p425 = por %p423, %p424
      %p426 = scmp.ne.s32.totalorder %s417, %s418
      %p427 = scmp.eq.s32.totalorder %s51, 0
      %p428 = por %p426, %p427
      %p429 = scmp.ne.s32.totalorder %s417, %s418
      %p430 = scmp.eq.s32.totalorder %s52, 23
      %p431 = por %p429, %p430
      %p433 = scmp.ne.s32.totalorder %s418, %s432
      %p434 = scmp.eq.s32.totalorder %s52, 0
      %p435 = por %p433, %p434
      %s437 = sadd.s32 %s436, 1
      %p440 = scmp.eq.s32.totalorder %s46, 23
      %p441 = scmp.ne.s32.totalorder %s436, %s438
      %p442 = scmp.eq.s32.totalorder %s46, 0
      %p443 = por %p441, %p442
      %p444 = scmp.ne.s32.totalorder %s436, %s438
      %p445 = scmp.eq.s32.totalorder %s51, 23
      %p446 = por %p444, %p445
      %p447 = scmp.ne.s32.totalorder %s438, %s439
      %p448 = scmp.eq.s32.totalorder %s51, 0
      %p449 = por %p447, %p448
      %p450 = scmp.ne.s32.totalorder %s438, %s439
      %p451 = scmp.eq.s32.totalorder %s52, 23
      %p452 = por %p450, %p451
      %p454 = scmp.ne.s32.totalorder %s439, %s453
      %p455 = scmp.eq.s32.totalorder %s52, 0
      %p456 = por %p454, %p455
      %s458 = sadd.s32 %s457, 1
      %p461 = scmp.eq.s32.totalorder %s46, 23
      %p462 = scmp.ne.s32.totalorder %s457, %s459
      %p463 = scmp.eq.s32.totalorder %s46, 0
      %p464 = por %p462, %p463
      %p465 = scmp.ne.s32.totalorder %s457, %s459
      %p466 = scmp.eq.s32.totalorder %s51, 23
      %p467 = por %p465, %p466
      %p468 = scmp.ne.s32.totalorder %s459, %s460
      %p469 = scmp.eq.s32.totalorder %s51, 0
      %p470 = por %p468, %p469
      %p471 = scmp.ne.s32.totalorder %s459, %s460
      %p472 = scmp.eq.s32.totalorder %s52, 23
      %p473 = por %p471, %p472
      %p475 = scmp.ne.s32.totalorder %s460, %s474
      %p476 = scmp.eq.s32.totalorder %s52, 0
      %p477 = por %p475, %p476
      %s479 = sadd.s32 %s478, 1
      %p482 = scmp.eq.s32.totalorder %s46, 23
      %p483 = scmp.ne.s32.totalorder %s478, %s480
      %p484 = scmp.eq.s32.totalorder %s46, 0
      %p485 = por %p483, %p484
      %p486 = scmp.ne.s32.totalorder %s478, %s480
      %p487 = scmp.eq.s32.totalorder %s51, 23
      %p488 = por %p486, %p487
      %p489 = scmp.ne.s32.totalorder %s480, %s481
      %p490 = scmp.eq.s32.totalorder %s51, 0
      %p491 = por %p489, %p490
      %p492 = scmp.ne.s32.totalorder %s480, %s481
      %p493 = scmp.eq.s32.totalorder %s52, 23
      %p494 = por %p492, %p493
      %p496 = scmp.ne.s32.totalorder %s481, %s495
      %p497 = scmp.eq.s32.totalorder %s52, 0
      %p498 = por %p496, %p497
      %s500 = sadd.s32 %s499, 1
      %p503 = scmp.eq.s32.totalorder %s46, 23
      %p504 = scmp.ne.s32.totalorder %s499, %s501
      %p505 = scmp.eq.s32.totalorder %s46, 0
      %p506 = por %p504, %p505
      %p507 = scmp.ne.s32.totalorder %s499, %s501
      %p508 = scmp.eq.s32.totalorder %s51, 23
      %p509 = por %p507, %p508
      %p510 = scmp.ne.s32.totalorder %s501, %s502
      %p511 = scmp.eq.s32.totalorder %s51, 0
      %p512 = por %p510, %p511
      %p513 = scmp.ne.s32.totalorder %s501, %s502
      %p514 = scmp.eq.s32.totalorder %s52, 23
      %p515 = por %p513, %p514
      %p517 = scmp.ne.s32.totalorder %s502, %s516
      %p518 = scmp.eq.s32.totalorder %s52, 0
      %p519 = por %p517, %p518
      %s521 = sadd.s32 %s520, 1
      %p524 = scmp.eq.s32.totalorder %s46, 23
      %p525 = scmp.ne.s32.totalorder %s520, %s522
      %p526 = scmp.eq.s32.totalorder %s46, 0
      %p527 = por %p525, %p526
      %p528 = scmp.ne.s32.totalorder %s520, %s522
      %p529 = scmp.eq.s32.totalorder %s51, 23
      %p530 = por %p528, %p529
      %p531 = scmp.ne.s32.totalorder %s522, %s523
      %p532 = scmp.eq.s32.totalorder %s51, 0
      %p533 = por %p531, %p532
      %p534 = scmp.ne.s32.totalorder %s522, %s523
      %p535 = scmp.eq.s32.totalorder %s52, 23
      %p536 = por %p534, %p535
      %p538 = scmp.ne.s32.totalorder %s523, %s537
      %p539 = scmp.eq.s32.totalorder %s52, 0
      %p540 = por %p538, %p539
      %s542 = sadd.s32 %s541, 1
      %p545 = scmp.eq.s32.totalorder %s46, 23
      %p546 = scmp.ne.s32.totalorder %s541, %s543
      %p547 = scmp.eq.s32.totalorder %s46, 0
      %p548 = por %p546, %p547
      %p549 = scmp.ne.s32.totalorder %s541, %s543
      %p550 = scmp.eq.s32.totalorder %s51, 23
      %p551 = por %p549, %p550
      %p552 = scmp.ne.s32.totalorder %s543, %s544
      %p553 = scmp.eq.s32.totalorder %s51, 0
      %p554 = por %p552, %p553
      %p555 = scmp.ne.s32.totalorder %s543, %s544
      %p556 = scmp.eq.s32.totalorder %s52, 23
      %p557 = por %p555, %p556
      %p559 = scmp.ne.s32.totalorder %s544, %s558
      %p560 = scmp.eq.s32.totalorder %s52, 0
      %p561 = por %p559, %p560
      %s563 = sadd.s32 %s562, 1
      %p566 = scmp.eq.s32.totalorder %s46, 23
      %p567 = scmp.ne.s32.totalorder %s562, %s564
      %p568 = scmp.eq.s32.totalorder %s46, 0
      %p569 = por %p567, %p568
      %p570 = scmp.ne.s32.totalorder %s562, %s564
      %p571 = scmp.eq.s32.totalorder %s51, 23
      %p572 = por %p570, %p571
      %p573 = scmp.ne.s32.totalorder %s564, %s565
      %p574 = scmp.eq.s32.totalorder %s51, 0
      %p575 = por %p573, %p574
      %p576 = scmp.ne.s32.totalorder %s564, %s565
      %p577 = scmp.eq.s32.totalorder %s52, 23
      %p578 = por %p576, %p577
      %p580 = scmp.ne.s32.totalorder %s565, %s579
      %p581 = scmp.eq.s32.totalorder %s52, 0
      %p582 = por %p580, %p581
      %s584 = sadd.s32 %s583, 1
      %p587 = scmp.eq.s32.totalorder %s46, 23
      %p588 = scmp.ne.s32.totalorder %s583, %s585
      %p589 = scmp.eq.s32.totalorder %s46, 0
      %p590 = por %p588, %p589
      %p591 = scmp.ne.s32.totalorder %s583, %s585
      %p592 = scmp.eq.s32.totalorder %s51, 23
      %p593 = por %p591, %p592
      %p594 = scmp.ne.s32.totalorder %s585, %s586
      %p595 = scmp.eq.s32.totalorder %s51, 0
      %p596 = por %p594, %p595
      %p597 = scmp.ne.s32.totalorder %s585, %s586
      %p598 = scmp.eq.s32.totalorder %s52, 23
      %p599 = por %p597, %p598
      %p601 = scmp.ne.s32.totalorder %s586, %s600
      %p602 = scmp.eq.s32.totalorder %s52, 0
      %p603 = por %p601, %p602
      %s604 = ssub.s32 %s53, %s65
      %p605 = scmp.eq.s32.totalorder %s604, 0
      %s607 = sadd.s32 %s606, 1
      %s608 = scalar_select %p605, %s606, %s607
      %p611 = pneg %p605
      %p612 = scmp.eq.s32.totalorder %s46, 23
      %p613 = por %p611, %p612
      %p614 = scmp.ne.s32.totalorder %s606, %s609
      %p615 = scmp.eq.s32.totalorder %s46, 0
      %p616 = por %p614, %p615
      %p617 = scmp.ne.s32.totalorder %s606, %s609
      %p618 = scmp.eq.s32.totalorder %s51, 23
      %p619 = por %p617, %p618
      %p620 = scmp.ne.s32.totalorder %s609, %s610
      %p621 = scmp.eq.s32.totalorder %s51, 0
      %p622 = por %p620, %p621
      %p623 = scmp.ne.s32.totalorder %s609, %s610
      %p624 = scmp.eq.s32.totalorder %s52, 23
      %p625 = por %p623, %p624
      %p627 = scmp.ne.s32.totalorder %s610, %s626
      %p628 = scmp.eq.s32.totalorder %s52, 0
      %p629 = por %p627, %p628
      %p630 = scmp.le.s32.totalorder 1, %s46
      %p631 = scmp.lt.s32.totalorder %s46, 25
      %p632 = pnand %p630, %p631
      %p633 = pneg %p632
      // Predicated region
      $region9: #{avmodel_forward.1} parent=5 // pred_check
        _
      $region10: #{avmodel_forward.1} parent=5 // pred_check_branch
        %635 = sbr.rel (%p632) target = $region12
      $region11: #{avmodel_forward.1} parent=5 // pred_region
        %s636 = ssub.s32 %s46, 1
        // Predicated region
        $region13: #{avmodel_forward.1} parent=11 // pred_check
          %p637 = pneg %p365
        $region14: #{avmodel_forward.1} parent=11 // pred_check_branch
          %639 = sbr.rel (%p637) target = $region16
        $region15: #{avmodel_forward.1} parent=11 // pred_region
          %s641 = ssub.s32 64, 64
          %642 = vsyncadd [#allocation14], %s641
          %s644 = sshll.u32 [#allocation15], 4
          %s645 = int_to_ptr.vmem [resolvable:$true] %s644
          %647 = dma.hbm_to_vmem [thread:$0]  %s11, 64, %s645, [#allocation14]
        $region16: #{avmodel_forward.1} parent=11 // pred_fallthru
          _
        // Predicated region
        $region17: #{avmodel_forward.1} parent=11 // pred_check
          %p648 = pneg %p386
        $region18: #{avmodel_forward.1} parent=11 // pred_check_branch
          %650 = sbr.rel (%p648) target = $region20
        $region19: #{avmodel_forward.1} parent=11 // pred_region
          %s652 = ssub.s32 3072, 3072
          %653 = vsyncadd [#allocation17], %s652
          %s654 = sshll.u32 [#allocation16], 4
          %s655 = int_to_ptr.vmem [resolvable:$true] %s654
          %660 = dma.hbm_to_vmem [thread:$0]  %s12, 3072, %s655, [#allocation17], 192, 192, 12
        $region20: #{avmodel_forward.1} parent=11 // pred_fallthru
          _
        // Predicated region
        $region21: #{avmodel_forward.1} parent=11 // pred_check
          %p661 = pneg %p407
        $region22: #{avmodel_forward.1} parent=11 // pred_check_branch
          %663 = sbr.rel (%p661) target = $region24
        $region23: #{avmodel_forward.1} parent=11 // pred_region
          %s665 = ssub.s32 48, 48
          %666 = vsyncadd [#allocation17], %s665
          %s668 = sshll.u32 [#allocation18], 4
          %s669 = int_to_ptr.vmem [resolvable:$true] %s668
          %671 = dma.hbm_to_vmem [thread:$0]  %s13, 48, %s669, [#allocation17]
        $region24: #{avmodel_forward.1} parent=11 // pred_fallthru
          _
        // Predicated region
        $region25: #{avmodel_forward.1} parent=11 // pred_check
          %p672 = pneg %p428
        $region26: #{avmodel_forward.1} parent=11 // pred_check_branch
          %674 = sbr.rel (%p672) target = $region28
        $region27: #{avmodel_forward.1} parent=11 // pred_region
          _
        $region28: #{avmodel_forward.1} parent=11 // pred_fallthru
          _
        // Predicated region
        $region29: #{avmodel_forward.1} parent=11 // pred_check
          %p675 = pneg %p449
        $region30: #{avmodel_forward.1} parent=11 // pred_check_branch
          %677 = sbr.rel (%p675) target = $region32
        $region31: #{avmodel_forward.1} parent=11 // pred_region
          _
        $region32: #{avmodel_forward.1} parent=11 // pred_fallthru
          _
        // Predicated region
        $region33: #{avmodel_forward.1} parent=11 // pred_check
          %p678 = pneg %p470
        $region34: #{avmodel_forward.1} parent=11 // pred_check_branch
          %680 = sbr.rel (%p678) target = $region36
        $region35: #{avmodel_forward.1} parent=11 // pred_region
          %s682 = ssub.s32 4096, 4096
          %683 = vsyncadd [#allocation20], %s682
          %s684 = sshll.u32 [#allocation19], 4
          %s685 = int_to_ptr.vmem [resolvable:$true] %s684
          %690 = dma.hbm_to_vmem [thread:$0]  %s16, 4096, %s685, [#allocation20], 256, 256, 16
        $region36: #{avmodel_forward.1} parent=11 // pred_fallthru
          _
        // Predicated region
        $region37: #{avmodel_forward.1} parent=11 // pred_check
          %p691 = pneg %p491
        $region38: #{avmodel_forward.1} parent=11 // pred_check_branch
          %693 = sbr.rel (%p691) target = $region40
        $region39: #{avmodel_forward.1} parent=11 // pred_region
          %s695 = ssub.s32 64, 64
          %696 = vsyncadd [#allocation20], %s695
          %s698 = sshll.u32 [#allocation21], 4
          %s699 = int_to_ptr.vmem [resolvable:$true] %s698
          %701 = dma.hbm_to_vmem [thread:$0]  %s17, 64, %s699, [#allocation20]
        $region40: #{avmodel_forward.1} parent=11 // pred_fallthru
          _
        // Predicated region
        $region41: #{avmodel_forward.1} parent=11 // pred_check
          %p702 = pneg %p512
        $region42: #{avmodel_forward.1} parent=11 // pred_check_branch
          %704 = sbr.rel (%p702) target = $region44
        $region43: #{avmodel_forward.1} parent=11 // pred_region
          %s706 = ssub.s32 4096, 4096
          %707 = vsyncadd [#allocation23], %s706
          %s708 = sshll.u32 [#allocation22], 4
          %s709 = int_to_ptr.vmem [resolvable:$true] %s708
          %714 = dma.hbm_to_vmem [thread:$0]  %s18, 4096, %s709, [#allocation23], 64, 64, 4
        $region44: #{avmodel_forward.1} parent=11 // pred_fallthru
          _
        // Predicated region
        $region45: #{avmodel_forward.1} parent=11 // pred_check
          %p715 = pneg %p533
        $region46: #{avmodel_forward.1} parent=11 // pred_check_branch
          %717 = sbr.rel (%p715) target = $region48
        $region47: #{avmodel_forward.1} parent=11 // pred_region
          %s719 = ssub.s32 16, 16
          %720 = vsyncadd [#allocation23], %s719
          %s722 = sshll.u32 [#allocation24], 4
          %s723 = int_to_ptr.vmem [resolvable:$true] %s722
          %725 = dma.hbm_to_vmem [thread:$0]  %s19, 16, %s723, [#allocation23]
        $region48: #{avmodel_forward.1} parent=11 // pred_fallthru
          _
        // Predicated region
        $region49: #{avmodel_forward.1} parent=11 // pred_check
          %p726 = pneg %p554
        $region50: #{avmodel_forward.1} parent=11 // pred_check_branch
          %728 = sbr.rel (%p726) target = $region52
        $region51: #{avmodel_forward.1} parent=11 // pred_region
          %s730 = ssub.s32 32, 32
          %731 = vsyncadd [#allocation26], %s730
          %s733 = sshll.u32 [#allocation25], 4
          %s734 = int_to_ptr.vmem [resolvable:$true] %s733
          %736 = dma.hbm_to_vmem [thread:$0]  %s20, 32, %s734, [#allocation26]
        $region52: #{avmodel_forward.1} parent=11 // pred_fallthru
          _
        // Predicated region
        $region53: #{avmodel_forward.1} parent=11 // pred_check
          %p737 = pneg %p575
        $region54: #{avmodel_forward.1} parent=11 // pred_check_branch
          %739 = sbr.rel (%p737) target = $region56
        $region55: #{avmodel_forward.1} parent=11 // pred_region
          %s741 = ssub.s32 1024, 1024
          %742 = vsyncadd [#allocation26], %s741
          %s743 = sshll.u32 [#allocation27], 4
          %s744 = int_to_ptr.vmem [resolvable:$true] %s743
          %749 = dma.hbm_to_vmem [thread:$0]  %s21, 1024, %s744, [#allocation26], 64, 64, 4
        $region56: #{avmodel_forward.1} parent=11 // pred_fallthru
          _
        // Predicated region
        $region57: #{avmodel_forward.1} parent=11 // pred_check
          %p750 = pneg %p596
        $region58: #{avmodel_forward.1} parent=11 // pred_check_branch
          %752 = sbr.rel (%p750) target = $region60
        $region59: #{avmodel_forward.1} parent=11 // pred_region
          %s754 = ssub.s32 16, 16
          %755 = vsyncadd [#allocation29], %s754
          %s757 = sshll.u32 [#allocation28], 4
          %s758 = int_to_ptr.vmem [resolvable:$true] %s757
          %760 = dma.hbm_to_vmem [thread:$0]  %s22, 16, %s758, [#allocation29]
        $region60: #{avmodel_forward.1} parent=11 // pred_fallthru
          _
      $region12: #{avmodel_forward.1} parent=5 // pred_fallthru
        _
      %p761 = scmp.lt.s32.totalorder %s46, 24
      // Predicated region
      $region61: #{avmodel_forward.1} parent=5 // pred_check
        %p762 = pneg %p761
      $region62: #{avmodel_forward.1} parent=5 // pred_check_branch
        %764 = sbr.rel (%p762) target = $region64
      $region63: #{avmodel_forward.1} parent=5 // pred_region
        // Predicated region
        $region65: #{avmodel_forward.1} parent=63 // pred_check
          %p765 = pneg %p78
        $region66: #{avmodel_forward.1} parent=63 // pred_check_branch
          %767 = sbr.rel (%p765) target = $region68
        $region67: #{avmodel_forward.1} parent=63 // pred_region
          %s768 = smul.u32 2, %s53
          %p769 = scmp.lt.s32.totalorder %s768, 3
          %s770 = scalar_select %p769, %s768, 3
          %s771 = smul.addr %s770, 8
          %s772 = scalar_lea.vmem %s0, %s771
          %s773 = smul.u32 2, %s53
        $region68: #{avmodel_forward.1} parent=63 // pred_fallthru
          _
        // Predicated region
        $region69: #{avmodel_forward.1} parent=63 // pred_check
          %p774 = pneg %p104
        $region70: #{avmodel_forward.1} parent=63 // pred_check_branch
          %776 = sbr.rel (%p774) target = $region72
        $region71: #{avmodel_forward.1} parent=63 // pred_region
          %p777 = scmp.lt.s32.totalorder %s53, 1
          %s778 = scalar_select %p777, %s53, 1
          %s779 = smul.addr %s778, 8
          %s780 = scalar_lea.vmem %s1, %s779
        $region72: #{avmodel_forward.1} parent=63 // pred_fallthru
          _
        // Predicated region
        $region73: #{avmodel_forward.1} parent=63 // pred_check
          %p781 = pneg %p130
        $region74: #{avmodel_forward.1} parent=63 // pred_check_branch
          %783 = sbr.rel (%p781) target = $region76
        $region75: #{avmodel_forward.1} parent=63 // pred_region
          %s784 = sand.u32 %s120, 1
          %s785 = scalar_lea.sflag [#allocation6], %s784
          %s786 = sand.u32 %s120, 1
          %s787 = smul.addr %s786, 4
          %s788 = scalar_lea.vmem [#allocation5], %s787
          %s790 = ssub.s32 64, 64
          %791 = vsyncadd %s785, %s790
          %s792 = smul.addr %s54, 64
          %s793 = scalar_lea.hbm %s2, %s792
          %s795 = sshll.u32 %s788, 4
          %s796 = int_to_ptr.vmem [resolvable:$true] %s795
          %798 = dma.hbm_to_vmem [thread:$0]  %s793, 64, %s796, %s785
        $region76: #{avmodel_forward.1} parent=63 // pred_fallthru
          _
        // Predicated region
        $region77: #{avmodel_forward.1} parent=63 // pred_check
          %p799 = pneg %p156
        $region78: #{avmodel_forward.1} parent=63 // pred_check_branch
          %801 = sbr.rel (%p799) target = $region80
        $region79: #{avmodel_forward.1} parent=63 // pred_region
          %p802 = scmp.lt.s32.totalorder %s54, 11
          %s803 = scalar_select %p802, %s54, 11
          %s804 = smul.addr %s803, 48
          %s805 = smul.addr %s804, 4
          %s806 = scalar_lea.vmem %s3, %s805
        $region80: #{avmodel_forward.1} parent=63 // pred_fallthru
          _
        // Predicated region
        $region81: #{avmodel_forward.1} parent=63 // pred_check
          %p807 = pneg %p182
        $region82: #{avmodel_forward.1} parent=63 // pred_check_branch
          %809 = sbr.rel (%p807) target = $region84
        $region83: #{avmodel_forward.1} parent=63 // pred_region
          %s810 = sand.u32 %s46, 1
          %s811 = scalar_lea.sflag [#allocation8], %s810
          %s812 = sand.u32 %s172, 1
          %s813 = smul.addr %s812, 3
          %s814 = scalar_lea.vmem [#allocation7], %s813
          %s816 = ssub.s32 48, 48
          %817 = vsyncadd %s811, %s816
          %s818 = smul.addr %s54, 3
          %s819 = smul.addr %s818, 16
          %s820 = scalar_lea.hbm %s4, %s819
          %s822 = sshll.u32 %s814, 4
          %s823 = int_to_ptr.vmem [resolvable:$true] %s822
          %825 = dma.hbm_to_vmem [thread:$0]  %s820, 48, %s823, %s811
        $region84: #{avmodel_forward.1} parent=63 // pred_fallthru
          _
        // Predicated region
        $region85: #{avmodel_forward.1} parent=63 // pred_check
          %p826 = pneg %p208
        $region86: #{avmodel_forward.1} parent=63 // pred_check_branch
          %828 = sbr.rel (%p826) target = $region88
        $region87: #{avmodel_forward.1} parent=63 // pred_region
          %s829 = sand.u32 %s46, 1
          %s830 = scalar_lea.sflag [#allocation8], %s829
          %s831 = sand.u32 %s198, 1
          %s832 = smul.addr %s831, 64
          %s833 = scalar_lea.vmem [#allocation9], %s832
          %s835 = ssub.s32 1024, 1024
          %836 = vsyncadd %s830, %s835
          %s837 = smul.addr %s54, 16
          %s838 = smul.addr %s837, 64
          %s839 = scalar_lea.hbm %s5, %s838
          %s840 = sshll.u32 %s833, 4
          %s841 = int_to_ptr.vmem [resolvable:$true] %s840
          %846 = dma.hbm_to_vmem [thread:$0]  %s839, 1024, %s841, %s830, 64, 64, 4
        $region88: #{avmodel_forward.1} parent=63 // pred_fallthru
          _
        // Predicated region
        $region89: #{avmodel_forward.1} parent=63 // pred_check
          %p847 = pneg %p234
        $region90: #{avmodel_forward.1} parent=63 // pred_check_branch
          %849 = sbr.rel (%p847) target = $region92
        $region91: #{avmodel_forward.1} parent=63 // pred_region
          %p850 = scmp.lt.s32.totalorder %s54, 11
          %s851 = scalar_select %p850, %s54, 11
          %s852 = scalar_lea.vmem %s6, %s851
        $region92: #{avmodel_forward.1} parent=63 // pred_fallthru
          _
        // Predicated region
        $region93: #{avmodel_forward.1} parent=63 // pred_check
          %p853 = pneg %p260
        $region94: #{avmodel_forward.1} parent=63 // pred_check_branch
          %855 = sbr.rel (%p853) target = $region96
        $region95: #{avmodel_forward.1} parent=63 // pred_region
          %p856 = scmp.lt.s32.totalorder %s54, 11
          %s857 = scalar_select %p856, %s54, 11
          %s858 = smul.addr %s857, 64
          %s859 = smul.addr %s858, 4
          %s860 = scalar_lea.vmem %s7, %s859
        $region96: #{avmodel_forward.1} parent=63 // pred_fallthru
          _
        // Predicated region
        $region97: #{avmodel_forward.1} parent=63 // pred_check
          %p861 = pneg %p286
        $region98: #{avmodel_forward.1} parent=63 // pred_check_branch
          %863 = sbr.rel (%p861) target = $region100
        $region99: #{avmodel_forward.1} parent=63 // pred_region
          %s864 = sand.u32 %s46, 1
          %s865 = scalar_lea.sflag [#allocation11], %s864
          %s866 = sand.u32 %s276, 1
          %s867 = smul.addr %s866, 4
          %s868 = scalar_lea.vmem [#allocation10], %s867
          %s870 = ssub.s32 64, 64
          %871 = vsyncadd %s865, %s870
          %s872 = smul.addr %s54, 4
          %s873 = smul.addr %s872, 16
          %s874 = scalar_lea.hbm %s8, %s873
          %s876 = sshll.u32 %s868, 4
          %s877 = int_to_ptr.vmem [resolvable:$true] %s876
          %879 = dma.hbm_to_vmem [thread:$0]  %s874, 64, %s877, %s865
        $region100: #{avmodel_forward.1} parent=63 // pred_fallthru
          _
        // Predicated region
        $region101: #{avmodel_forward.1} parent=63 // pred_check
          %p880 = pneg %p312
        $region102: #{avmodel_forward.1} parent=63 // pred_check_branch
          %882 = sbr.rel (%p880) target = $region104
        $region103: #{avmodel_forward.1} parent=63 // pred_region
          %s883 = sand.u32 %s46, 1
          %s884 = scalar_lea.sflag [#allocation11], %s883
          %s885 = sand.u32 %s302, 1
          %s886 = smul.addr %s885, 256
          %s887 = scalar_lea.vmem [#allocation12], %s886
          %s889 = ssub.s32 4096, 4096
          %890 = vsyncadd %s884, %s889
          %s891 = smul.addr %s54, 64
          %s892 = smul.addr %s891, 64
          %s893 = scalar_lea.hbm %s9, %s892
          %s894 = sshll.u32 %s887, 4
          %s895 = int_to_ptr.vmem [resolvable:$true] %s894
          %900 = dma.hbm_to_vmem [thread:$0]  %s893, 4096, %s895, %s884, 64, 64, 4
        $region104: #{avmodel_forward.1} parent=63 // pred_fallthru
          _
        // Predicated region
        $region105: #{avmodel_forward.1} parent=63 // pred_check
          %p901 = pneg %p338
        $region106: #{avmodel_forward.1} parent=63 // pred_check_branch
          %903 = sbr.rel (%p901) target = $region108
        $region107: #{avmodel_forward.1} parent=63 // pred_region
          %s904 = sand.u32 %s46, 1
          %s905 = scalar_lea.sflag [#allocation14], %s904
          %s906 = sand.u32 %s328, 1
          %s907 = scalar_lea.vmem [#allocation13], %s906
          %s909 = ssub.s32 16, 16
          %910 = vsyncadd %s905, %s909
          %s911 = smul.addr %s54, 16
          %s912 = scalar_lea.hbm %s10, %s911
          %s914 = sshll.u32 %s907, 4
          %s915 = int_to_ptr.vmem [resolvable:$true] %s914
          %917 = dma.hbm_to_vmem [thread:$0]  %s912, 16, %s915, %s905
        $region108: #{avmodel_forward.1} parent=63 // pred_fallthru
          _
      $region64: #{avmodel_forward.1} parent=5 // pred_fallthru
        _
      %p918 = scmp.le.s32.totalorder 1, %s46
      %p919 = scmp.lt.s32.totalorder %s46, 25
      %p920 = pnand %p918, %p919
      %p921 = pneg %p920
      // Predicated region
      $region109: #{avmodel_forward.1} parent=5 // pred_check
        _
      $region110: #{avmodel_forward.1} parent=5 // pred_check_branch
        %923 = sbr.rel (%p920) target = $region112
      $region111: #{avmodel_forward.1} parent=5 // pred_region
        %s924 = ssub.s32 %s46, 1
        %s925 = sand.u32 %s123, 1
        %s926 = scalar_lea.sflag [#allocation6], %s925
        %s927 = sand.u32 %s123, 1
        %s928 = smul.addr %s927, 4
        %s929 = scalar_lea.vmem [#allocation5], %s928
        // Predicated region
        $region113: #{avmodel_forward.1} parent=111 // pred_check
          %p930 = pneg %p136
        $region114: #{avmodel_forward.1} parent=111 // pred_check_branch
          %932 = sbr.rel (%p930) target = $region116
        $region115: #{avmodel_forward.1} parent=111 // pred_region
          %933 = dma.done %s926, 64
        $region116: #{avmodel_forward.1} parent=111 // pred_fallthru
          _
        %s934 = sand.u32 %s51, 1
        %s935 = scalar_lea.sflag [#allocation8], %s934
        %s936 = sand.u32 %s175, 1
        %s937 = smul.addr %s936, 3
        %s938 = scalar_lea.vmem [#allocation7], %s937
        // Predicated region
        $region117: #{avmodel_forward.1} parent=111 // pred_check
          %p939 = pneg %p188
        $region118: #{avmodel_forward.1} parent=111 // pred_check_branch
          %941 = sbr.rel (%p939) target = $region120
        $region119: #{avmodel_forward.1} parent=111 // pred_region
          %942 = dma.done %s935, 48
        $region120: #{avmodel_forward.1} parent=111 // pred_fallthru
          _
        %s943 = sand.u32 %s51, 1
        %s944 = scalar_lea.sflag [#allocation8], %s943
        %s945 = sand.u32 %s201, 1
        %s946 = smul.addr %s945, 64
        %s947 = scalar_lea.vmem [#allocation9], %s946
        // Predicated region
        $region121: #{avmodel_forward.1} parent=111 // pred_check
          %p948 = pneg %p214
        $region122: #{avmodel_forward.1} parent=111 // pred_check_branch
          %950 = sbr.rel (%p948) target = $region124
        $region123: #{avmodel_forward.1} parent=111 // pred_region
          %951 = dma.done %s944, 1024
        $region124: #{avmodel_forward.1} parent=111 // pred_fallthru
          _
        %s952 = sand.u32 %s51, 1
        %s953 = scalar_lea.sflag [#allocation11], %s952
        %s954 = sand.u32 %s279, 1
        %s955 = smul.addr %s954, 4
        %s956 = scalar_lea.vmem [#allocation10], %s955
        // Predicated region
        $region125: #{avmodel_forward.1} parent=111 // pred_check
          %p957 = pneg %p292
        $region126: #{avmodel_forward.1} parent=111 // pred_check_branch
          %959 = sbr.rel (%p957) target = $region128
        $region127: #{avmodel_forward.1} parent=111 // pred_region
          %960 = dma.done %s953, 64
        $region128: #{avmodel_forward.1} parent=111 // pred_fallthru
          _
        %s961 = sand.u32 %s51, 1
        %s962 = scalar_lea.sflag [#allocation11], %s961
        %s963 = sand.u32 %s305, 1
        %s964 = smul.addr %s963, 256
        %s965 = scalar_lea.vmem [#allocation12], %s964
        // Predicated region
        $region129: #{avmodel_forward.1} parent=111 // pred_check
          %p966 = pneg %p318
        $region130: #{avmodel_forward.1} parent=111 // pred_check_branch
          %968 = sbr.rel (%p966) target = $region132
        $region131: #{avmodel_forward.1} parent=111 // pred_region
          %969 = dma.done %s962, 4096
        $region132: #{avmodel_forward.1} parent=111 // pred_fallthru
          _
        %s970 = sand.u32 %s51, 1
        %s971 = scalar_lea.sflag [#allocation14], %s970
        %s972 = sand.u32 %s331, 1
        %s973 = scalar_lea.vmem [#allocation13], %s972
        // Predicated region
        $region133: #{avmodel_forward.1} parent=111 // pred_check
          %p974 = pneg %p344
        $region134: #{avmodel_forward.1} parent=111 // pred_check_branch
          %976 = sbr.rel (%p974) target = $region136
        $region135: #{avmodel_forward.1} parent=111 // pred_region
          %977 = dma.done %s971, 16
        $region136: #{avmodel_forward.1} parent=111 // pred_fallthru
          _
        // Predicated region
        $region137: #{avmodel_forward.1} parent=111 // pred_check
          %p978 = pneg %p365
        $region138: #{avmodel_forward.1} parent=111 // pred_check_branch
          %980 = sbr.rel (%p978) target = $region140
        $region139: #{avmodel_forward.1} parent=111 // pred_region
          %981 = dma.done [#allocation14], 64
        $region140: #{avmodel_forward.1} parent=111 // pred_fallthru
          _
        // Predicated region
        $region141: #{avmodel_forward.1} parent=111 // pred_check
          %p982 = pneg %p386
        $region142: #{avmodel_forward.1} parent=111 // pred_check_branch
          %984 = sbr.rel (%p982) target = $region144
        $region143: #{avmodel_forward.1} parent=111 // pred_region
          %985 = dma.done [#allocation17], 3072
        $region144: #{avmodel_forward.1} parent=111 // pred_fallthru
          _
        // Predicated region
        $region145: #{avmodel_forward.1} parent=111 // pred_check
          %p986 = pneg %p407
        $region146: #{avmodel_forward.1} parent=111 // pred_check_branch
          %988 = sbr.rel (%p986) target = $region148
        $region147: #{avmodel_forward.1} parent=111 // pred_region
          %989 = dma.done [#allocation17], 48
        $region148: #{avmodel_forward.1} parent=111 // pred_fallthru
          _
        // Predicated region
        $region149: #{avmodel_forward.1} parent=111 // pred_check
          %p990 = pneg %p470
        $region150: #{avmodel_forward.1} parent=111 // pred_check_branch
          %992 = sbr.rel (%p990) target = $region152
        $region151: #{avmodel_forward.1} parent=111 // pred_region
          %993 = dma.done [#allocation20], 4096
        $region152: #{avmodel_forward.1} parent=111 // pred_fallthru
          _
        // Predicated region
        $region153: #{avmodel_forward.1} parent=111 // pred_check
          %p994 = pneg %p491
        $region154: #{avmodel_forward.1} parent=111 // pred_check_branch
          %996 = sbr.rel (%p994) target = $region156
        $region155: #{avmodel_forward.1} parent=111 // pred_region
          %997 = dma.done [#allocation20], 64
        $region156: #{avmodel_forward.1} parent=111 // pred_fallthru
          _
        // Predicated region
        $region157: #{avmodel_forward.1} parent=111 // pred_check
          %p998 = pneg %p512
        $region158: #{avmodel_forward.1} parent=111 // pred_check_branch
          %1000 = sbr.rel (%p998) target = $region160
        $region159: #{avmodel_forward.1} parent=111 // pred_region
          %1001 = dma.done [#allocation23], 4096
        $region160: #{avmodel_forward.1} parent=111 // pred_fallthru
          _
        // Predicated region
        $region161: #{avmodel_forward.1} parent=111 // pred_check
          %p1002 = pneg %p533
        $region162: #{avmodel_forward.1} parent=111 // pred_check_branch
          %1004 = sbr.rel (%p1002) target = $region164
        $region163: #{avmodel_forward.1} parent=111 // pred_region
          %1005 = dma.done [#allocation23], 16
        $region164: #{avmodel_forward.1} parent=111 // pred_fallthru
          _
        // Predicated region
        $region165: #{avmodel_forward.1} parent=111 // pred_check
          %p1006 = pneg %p554
        $region166: #{avmodel_forward.1} parent=111 // pred_check_branch
          %1008 = sbr.rel (%p1006) target = $region168
        $region167: #{avmodel_forward.1} parent=111 // pred_region
          %1009 = dma.done [#allocation26], 32
        $region168: #{avmodel_forward.1} parent=111 // pred_fallthru
          _
        // Predicated region
        $region169: #{avmodel_forward.1} parent=111 // pred_check
          %p1010 = pneg %p575
        $region170: #{avmodel_forward.1} parent=111 // pred_check_branch
          %1012 = sbr.rel (%p1010) target = $region172
        $region171: #{avmodel_forward.1} parent=111 // pred_region
          %1013 = dma.done [#allocation26], 1024
        $region172: #{avmodel_forward.1} parent=111 // pred_fallthru
          _
        // Predicated region
        $region173: #{avmodel_forward.1} parent=111 // pred_check
          %p1014 = pneg %p596
        $region174: #{avmodel_forward.1} parent=111 // pred_check_branch
          %1016 = sbr.rel (%p1014) target = $region176
        $region175: #{avmodel_forward.1} parent=111 // pred_region
          %1017 = dma.done [#allocation29], 16
        $region176: #{avmodel_forward.1} parent=111 // pred_fallthru
          _
        %s1018 = smul.u32 2, %s55
        %p1019 = scmp.lt.s32.totalorder %s1018, 3
        %s1020 = scalar_select %p1019, %s1018, 3
        %s1021 = smul.addr %s1020, 8
        %s1022 = scalar_lea.vmem %s0, %s1021
        %p1023 = pneg %p84
        %p1024 = pneg %p81
        %p1025 = scmp.lt.s32.totalorder %s55, 1
        %s1026 = scalar_select %p1025, %s55, 1
        %s1027 = smul.addr %s1026, 8
        %s1028 = scalar_lea.vmem %s1, %s1027
        %p1029 = pneg %p110
        %p1030 = pneg %p107
        %s1031 = sand.u32 %s123, 1
        %s1032 = scalar_lea.sflag [#allocation6], %s1031
        %s1033 = sand.u32 %s123, 1
        %s1034 = smul.addr %s1033, 4
        %s1035 = scalar_lea.vmem [#allocation5], %s1034
        %p1036 = pneg %p136
        %p1037 = pneg %p133
        %p1038 = scmp.lt.s32.totalorder %s56, 11
        %s1039 = scalar_select %p1038, %s56, 11
        %s1040 = smul.addr %s1039, 48
        %s1041 = smul.addr %s1040, 4
        %s1042 = scalar_lea.vmem %s3, %s1041
        %p1043 = pneg %p162
        %p1044 = pneg %p159
        %s1045 = sand.u32 %s51, 1
        %s1046 = scalar_lea.sflag [#allocation8], %s1045
        %s1047 = sand.u32 %s175, 1
        %s1048 = smul.addr %s1047, 3
        %s1049 = scalar_lea.vmem [#allocation7], %s1048
        %p1050 = pneg %p188
        %p1051 = pneg %p185
        %s1052 = sand.u32 %s51, 1
        %s1053 = scalar_lea.sflag [#allocation8], %s1052
        %s1054 = sand.u32 %s201, 1
        %s1055 = smul.addr %s1054, 64
        %s1056 = scalar_lea.vmem [#allocation9], %s1055
        %p1057 = pneg %p214
        %p1058 = pneg %p211
        %p1059 = scmp.lt.s32.totalorder %s56, 11
        %s1060 = scalar_select %p1059, %s56, 11
        %s1061 = scalar_lea.vmem %s6, %s1060
        %p1062 = pneg %p240
        %p1063 = pneg %p237
        %p1064 = scmp.lt.s32.totalorder %s56, 11
        %s1065 = scalar_select %p1064, %s56, 11
        %s1066 = smul.addr %s1065, 64
        %s1067 = smul.addr %s1066, 4
        %s1068 = scalar_lea.vmem %s7, %s1067
        %p1069 = pneg %p266
        %p1070 = pneg %p263
        %s1071 = sand.u32 %s51, 1
        %s1072 = scalar_lea.sflag [#allocation11], %s1071
        %s1073 = sand.u32 %s279, 1
        %s1074 = smul.addr %s1073, 4
        %s1075 = scalar_lea.vmem [#allocation10], %s1074
        %p1076 = pneg %p292
        %p1077 = pneg %p289
        %s1078 = sand.u32 %s51, 1
        %s1079 = scalar_lea.sflag [#allocation11], %s1078
        %s1080 = sand.u32 %s305, 1
        %s1081 = smul.addr %s1080, 256
        %s1082 = scalar_lea.vmem [#allocation12], %s1081
        %p1083 = pneg %p318
        %p1084 = pneg %p315
        %s1085 = sand.u32 %s51, 1
        %s1086 = scalar_lea.sflag [#allocation14], %s1085
        %s1087 = sand.u32 %s331, 1
        %s1088 = scalar_lea.vmem [#allocation13], %s1087
        %p1089 = pneg %p344
        %p1090 = pneg %p341
        %p1091 = pneg %p365
        %p1092 = pneg %p362
        %p1093 = pneg %p386
        %p1094 = pneg %p383
        %p1095 = pneg %p407
        %p1096 = pneg %p404
        %p1097 = pneg %p428
        %p1098 = pneg %p425
        %p1099 = pneg %p449
        %p1100 = pneg %p446
        %p1101 = pneg %p470
        %p1102 = pneg %p467
        %p1103 = pneg %p491
        %p1104 = pneg %p488
        %p1105 = pneg %p512
        %p1106 = pneg %p509
        %p1107 = pneg %p533
        %p1108 = pneg %p530
        %p1109 = pneg %p554
        %p1110 = pneg %p551
        %p1111 = pneg %p575
        %p1112 = pneg %p572
        %p1113 = pneg %p596
        %p1114 = pneg %p593
        %p1115 = pneg %p622
        %p1116 = pneg %p619
        %p1117 = scmp.lt.s32.totalorder %s55, 1
        %s1118 = scalar_select %p1117, %s55, 1
        %s1119 = smul.addr %s1118, 8
        %s1120 = scalar_lea.vmem %s23, %s1119
        %s1121 = smul.u32 2, %s55
        %p1122 = scmp.lt.s32.totalorder %s1121, 3
        %s1123 = scalar_select %p1122, %s1121, 3
        %s1124 = smul.addr %s1123, 8
        %s1125 = scalar_lea.vmem %s0, %s1124
        %s1126 = smul.u32 2, %s55
        %p1127 = scmp.lt.s32.totalorder %s55, 1
        %s1128 = scalar_select %p1127, %s55, 1
        %s1129 = smul.addr %s1128, 8
        %s1130 = scalar_lea.vmem %s1, %s1129
        %p1131 = scmp.lt.s32.totalorder %s56, 11
        %s1132 = scalar_select %p1131, %s56, 11
        %s1133 = smul.addr %s1132, 48
        %s1134 = smul.addr %s1133, 4
        %s1135 = scalar_lea.vmem %s3, %s1134
        %p1136 = scmp.lt.s32.totalorder %s56, 11
        %s1137 = scalar_select %p1136, %s56, 11
        %s1138 = scalar_lea.vmem %s6, %s1137
        %p1139 = scmp.lt.s32.totalorder %s56, 11
        %s1140 = scalar_select %p1139, %s56, 11
        %s1141 = smul.addr %s1140, 64
        %s1142 = smul.addr %s1141, 4
        %s1143 = scalar_lea.vmem %s7, %s1142
        %p1144 = scmp.lt.s32.totalorder %s55, 1
        %s1145 = scalar_select %p1144, %s55, 1
        %s1146 = smul.addr %s1145, 8
        %s1147 = scalar_lea.vmem %s23, %s1146
        %p1149 = scmp.eq.s32.totalorder %s56, 0
        // Predicated region
        $region177: #{avmodel_forward.1} parent=111 // pred_check
          %p1150 = pneg %p1149
        $region178: #{avmodel_forward.1} parent=111 // pred_check_branch
          %1152 = sbr.rel (%p1150) target = $region180
        $region179: #{avmodel_forward.1} parent=111 // pred_region
          %v1153 = vld [vmem:[%s1125] sm:$0xff]
          %v1154 = vld [vmem:[%s1125 + $0x8] sm:$0xff]
          %1155 = vst [vmem:[#allocation2] sm:$0xff] %v1153
          %1156 = vst [vmem:[#allocation2 + $0x8] sm:$0xff] %v1154
          %v1157 = vld [vmem:[%s1130] sm:$0xff]
          %1158 = vst [vmem:[#allocation3] sm:$0xff] %v1157
          %1159 = vst [vmem:[%s1147] sm:$0xff] 0.0
        $region180: #{avmodel_forward.1} parent=111 // pred_fallthru
          _
        %v1160 = vlaneseq
        %v1161 = vand.u32 %v1160, 127
        %vm1162 = vcmp.lt.s32.totalorder %v1161, 9
        %v1163 = vsel %vm1162, 0.0, -1e+09
        %v1164 = vld [vmem:[#allocation3] sm:$0xff]
        %v1165 = vld [vmem:[#allocation15] sm:$0xf]
        %v1166 = vld [vmem:[#allocation16] sm:$0xff]
        %v1167 = vld [vmem:[#allocation16 + $0x8] sm:$0xf]
        %v1168 = vld [vmem:[#allocation16 + $0xc] sm:$0xff]
        %v1169 = vld [vmem:[#allocation16 + $0x14] sm:$0xf]
        %v1170 = vld [vmem:[#allocation16 + $0x18] sm:$0xff]
        %v1171 = vld [vmem:[#allocation16 + $0x20] sm:$0xf]
        %v1172 = vld [vmem:[#allocation16 + $0x24] sm:$0xff]
        %v1173 = vld [vmem:[#allocation16 + $0x2c] sm:$0xf]
        %v1174 = vld [vmem:[#allocation16 + $0x30] sm:$0xff]
        %v1175 = vld [vmem:[#allocation16 + $0x38] sm:$0xf]
        %v1176 = vld [vmem:[#allocation16 + $0x3c] sm:$0xff]
        %v1177 = vld [vmem:[#allocation16 + $0x44] sm:$0xf]
        %v1178 = vld [vmem:[#allocation16 + $0x48] sm:$0xff]
        %v1179 = vld [vmem:[#allocation16 + $0x50] sm:$0xf]
        %v1180 = vld [vmem:[#allocation16 + $0x54] sm:$0xff]
        %v1181 = vld [vmem:[#allocation16 + $0x5c] sm:$0xf]
        %v1182 = vld [vmem:[#allocation16 + $0x60] sm:$0xff]
        %v1183 = vld [vmem:[#allocation16 + $0x68] sm:$0xf]
        %v1184 = vld [vmem:[#allocation16 + $0x6c] sm:$0xff]
        %v1185 = vld [vmem:[#allocation16 + $0x74] sm:$0xf]
        %v1186 = vld [vmem:[#allocation16 + $0x78] sm:$0xff]
        %v1187 = vld [vmem:[#allocation16 + $0x80] sm:$0xf]
        %v1188 = vld [vmem:[#allocation16 + $0x84] sm:$0xff]
        %v1189 = vld [vmem:[#allocation16 + $0x8c] sm:$0xf]
        %v1190 = vld [vmem:[#allocation16 + $0x90] sm:$0xff]
        %v1191 = vld [vmem:[#allocation16 + $0x98] sm:$0xf]
        %v1192 = vld [vmem:[#allocation16 + $0x9c] sm:$0xff]
        %v1193 = vld [vmem:[#allocation16 + $0xa4] sm:$0xf]
        %v1194 = vld [vmem:[#allocation16 + $0xa8] sm:$0xff]
        %v1195 = vld [vmem:[#allocation16 + $0xb0] sm:$0xf]
        %v1196 = vld [vmem:[#allocation16 + $0xb4] sm:$0xff]
        %v1197 = vld [vmem:[#allocation16 + $0xbc] sm:$0xf]
        %v1198 = vld [vmem:[#allocation18] sm:$0x7]
        %v1199 = vld [vmem:[%s14] sm:$0xf]
        %v1200 = vld [vmem:[%s14 + $0x4] sm:$0xf]
        %v1201 = vld [vmem:[%s14 + $0x8] sm:$0xf]
        %v1202 = vld [vmem:[%s14 + $0xc] sm:$0xf]
        %v1203 = vld [vmem:[%s14 + $0x10] sm:$0xf]
        %v1204 = vld [vmem:[%s14 + $0x14] sm:$0xf]
        %v1205 = vld [vmem:[%s14 + $0x18] sm:$0xf]
        %v1206 = vld [vmem:[%s14 + $0x1c] sm:$0xf]
        %v1207 = vld [vmem:[%s14 + $0x20] sm:$0xf]
        %v1208 = vld [vmem:[%s14 + $0x24] sm:$0xf]
        %v1209 = vld [vmem:[%s14 + $0x28] sm:$0xf]
        %v1210 = vld [vmem:[%s14 + $0x2c] sm:$0xf]
        %v1211 = vld [vmem:[%s14 + $0x30] sm:$0xf]
        %v1212 = vld [vmem:[%s14 + $0x34] sm:$0xf]
        %v1213 = vld [vmem:[%s14 + $0x38] sm:$0xf]
        %v1214 = vld [vmem:[%s14 + $0x3c] sm:$0xf]
        %v1215 = vld [vmem:[%s15] sm:$0x1]
        %v1216 = vpack.c.bf16 %v1164, %v1164
        %v1218 = vlaneseq
        %v1219 = vshrl.u32 %v1218, 7
        %v1220 = vsub.s32 0, %v1219
        %v1221 = vrot.slane %v1198, %v1220
        %v1222 = vlaneseq
        %v1223 = vshrl.u32 %v1222, 7
        %v1224 = vsub.s32 1, %v1223
        %v1225 = vrot.slane %v1198, %v1224
        %v1226 = vlaneseq
        %v1227 = vshrl.u32 %v1226, 7
        %v1228 = vsub.s32 2, %v1227
        %v1229 = vrot.slane %v1198, %v1228
        %v1265 = vunpack.c.l.b16 %v1166
        %v1266 = vunpack.c.h.b16 %v1166
        %v1267 = vunpack.c.l.b16 %v1167
        %v1268 = vunpack.c.l.b16 %v1168
        %v1269 = vunpack.c.h.b16 %v1168
        %v1270 = vunpack.c.l.b16 %v1169
        %v1271 = vunpack.c.l.b16 %v1170
        %v1272 = vunpack.c.h.b16 %v1170
        %v1273 = vunpack.c.l.b16 %v1171
        %v1274 = vunpack.c.l.b16 %v1172
        %v1275 = vunpack.c.h.b16 %v1172
        %v1276 = vunpack.c.l.b16 %v1173
        %v1277 = vunpack.c.l.b16 %v1174
        %v1278 = vunpack.c.h.b16 %v1174
        %v1279 = vunpack.c.l.b16 %v1175
        %v1280 = vunpack.c.l.b16 %v1176
        %v1281 = vunpack.c.h.b16 %v1176
        %v1282 = vunpack.c.l.b16 %v1177
        %v1283 = vunpack.c.l.b16 %v1178
        %v1284 = vunpack.c.h.b16 %v1178
        %v1285 = vunpack.c.l.b16 %v1179
        %v1286 = vunpack.c.l.b16 %v1180
        %v1287 = vunpack.c.h.b16 %v1180
        %v1288 = vunpack.c.l.b16 %v1181
        %v1289 = vunpack.c.l.b16 %v1182
        %v1290 = vunpack.c.h.b16 %v1182
        %v1291 = vunpack.c.l.b16 %v1183
        %v1292 = vunpack.c.l.b16 %v1184
        %v1293 = vunpack.c.h.b16 %v1184
        %v1294 = vunpack.c.l.b16 %v1185
        %v1295 = vunpack.c.l.b16 %v1186
        %v1296 = vunpack.c.h.b16 %v1186
        %v1297 = vunpack.c.l.b16 %v1187
        %v1298 = vunpack.c.l.b16 %v1188
        %v1299 = vunpack.c.h.b16 %v1188
        %v1300 = vunpack.c.l.b16 %v1189
        %v1301 = vunpack.c.l.b16 %v1190
        %v1302 = vunpack.c.h.b16 %v1190
        %v1303 = vunpack.c.l.b16 %v1191
        %v1304 = vunpack.c.l.b16 %v1192
        %v1305 = vunpack.c.h.b16 %v1192
        %v1306 = vunpack.c.l.b16 %v1193
        %v1307 = vunpack.c.l.b16 %v1194
        %v1308 = vunpack.c.h.b16 %v1194
        %v1309 = vunpack.c.l.b16 %v1195
        %v1310 = vunpack.c.l.b16 %v1196
        %v1311 = vunpack.c.h.b16 %v1196
        %v1312 = vunpack.c.l.b16 %v1197
        %v1313 = vpack.c.b16 %v1268, %v1265
        %v1314 = vpack.c.b16 %v1269, %v1266
        %v1315 = vpack.c.b16 %v1270, %v1267
        %v1316 = vpack.c.b16 %v1274, %v1271
        %v1317 = vpack.c.b16 %v1275, %v1272
        %v1318 = vpack.c.b16 %v1276, %v1273
        %v1319 = vpack.c.b16 %v1280, %v1277
        %v1320 = vpack.c.b16 %v1281, %v1278
        %v1321 = vpack.c.b16 %v1282, %v1279
        %v1322 = vpack.c.b16 %v1286, %v1283
        %v1323 = vpack.c.b16 %v1287, %v1284
        %v1324 = vpack.c.b16 %v1288, %v1285
        %v1325 = vpack.c.b16 %v1292, %v1289
        %v1326 = vpack.c.b16 %v1293, %v1290
        %v1327 = vpack.c.b16 %v1294, %v1291
        %v1328 = vpack.c.b16 %v1298, %v1295
        %v1329 = vpack.c.b16 %v1299, %v1296
        %v1330 = vpack.c.b16 %v1300, %v1297
        %v1331 = vpack.c.b16 %v1304, %v1301
        %v1332 = vpack.c.b16 %v1305, %v1302
        %v1333 = vpack.c.b16 %v1306, %v1303
        %v1334 = vpack.c.b16 %v1310, %v1307
        %v1335 = vpack.c.b16 %v1311, %v1308
        %v1336 = vpack.c.b16 %v1312, %v1309
        %1361 = vmatprep.subr.bf16.mxu0 %v1314
        %1362 = vmatpush1.bf16.msra.mxu0 %v1313
        %1363 = vmatprep.subr.bf16.mxu0 %v1317
        %1364 = vmatpush1.bf16.msra.mxu0 %v1316
        %1365 = vmatprep.subr.bf16.mxu0 %v1320
        %1366 = vmatpush1.bf16.msra.mxu0 %v1319
        %1367 = vmatprep.subr.bf16.mxu0 %v1323
        %1368 = vmatpush1.bf16.msra.mxu0 %v1322
        %1369 = vmatprep.subr.bf16.mxu0 %v1326
        %1370 = vmatpush1.bf16.msra.mxu0 %v1325
        %1371 = vmatprep.subr.bf16.mxu0 %v1329
        %1372 = vmatpush1.bf16.msra.mxu0 %v1328
        %1373 = vmatprep.subr.bf16.mxu0 %v1332
        %1374 = vmatpush1.bf16.msra.mxu0 %v1331
        %1375 = vmatprep.subr.bf16.mxu0 %v1335
        %1376 = vmatpush1.bf16.msra.mxu0 %v1334
        %1377 = vmatprep.subr.bf16.mxu0 0
        %1378 = vmatpush1.bf16.msra.mxu0 0
        %1379 = vmatprep.subr.bf16.mxu0 0
        %1380 = vmatpush1.bf16.msra.mxu0 0
        %1381 = vmatprep.subr.bf16.mxu0 0
        %1382 = vmatpush1.bf16.msra.mxu0 0
        %1383 = vmatprep.subr.bf16.mxu0 0
        %1384 = vmatpush1.bf16.msra.mxu0 0
        %1385 = vmatprep.subr.bf16.mxu0 0
        %1386 = vmatpush1.bf16.msra.mxu0 0
        %1387 = vmatprep.subr.bf16.mxu0 0
        %1388 = vmatpush1.bf16.msra.mxu0 0
        %1389 = vmatprep.subr.bf16.mxu0 0
        %1390 = vmatpush1.bf16.msra.mxu0 0
        %1391 = vmatprep.subr.bf16.mxu0 0
        %1392 = vmatpush1.bf16.msra.mxu0 0
        %1393 = vmatprep.mubr.bf16.mxu0 0
        %1394 = vmatmul.mubr.bf16.gmra.mrb[0].mxu0 %v1216
        %v1395 = vpop.f32.mrb[0].mxu0
        %v1396 = vadd.f32 %v1221, %v1395
        %v1397 = vpop.f32.mrb[0].mxu0
        %v1398 = vadd.f32 %v1225, %v1397
        %v1399 = vpop.f32.mrb[0].mxu0
        %v1400 = vpop.f32.mrb[0].mxu0
        %1401 = vdwg.mxu0
        %1402 = vmatprep.subr.bf16.mxu0 0
        %1403 = vmatpush1.bf16.msra.mxu0 %v1315
        %1404 = vmatprep.subr.bf16.mxu0 0
        %1405 = vmatpush1.bf16.msra.mxu0 %v1318
        %1406 = vmatprep.subr.bf16.mxu0 0
        %1407 = vmatpush1.bf16.msra.mxu0 %v1321
        %1408 = vmatprep.subr.bf16.mxu0 0
        %1409 = vmatpush1.bf16.msra.mxu0 %v1324
        %1410 = vmatprep.subr.bf16.mxu0 0
        %1411 = vmatpush1.bf16.msra.mxu0 %v1327
        %1412 = vmatprep.subr.bf16.mxu0 0
        %1413 = vmatpush1.bf16.msra.mxu0 %v1330
        %1414 = vmatprep.subr.bf16.mxu0 0
        %1415 = vmatpush1.bf16.msra.mxu0 %v1333
        %1416 = vmatprep.subr.bf16.mxu0 0
        %1417 = vmatpush1.bf16.msra.mxu0 %v1336
        %1418 = vmatprep.subr.bf16.mxu0 0
        %1419 = vmatpush1.bf16.msra.mxu0 0
        %1420 = vmatprep.subr.bf16.mxu0 0
        %1421 = vmatpush1.bf16.msra.mxu0 0
        %1422 = vmatprep.subr.bf16.mxu0 0
        %1423 = vmatpush1.bf16.msra.mxu0 0
        %1424 = vmatprep.subr.bf16.mxu0 0
        %1425 = vmatpush1.bf16.msra.mxu0 0
        %1426 = vmatprep.subr.bf16.mxu0 0
        %1427 = vmatpush1.bf16.msra.mxu0 0
        %1428 = vmatprep.subr.bf16.mxu0 0
        %1429 = vmatpush1.bf16.msra.mxu0 0
        %1430 = vmatprep.subr.bf16.mxu0 0
        %1431 = vmatpush1.bf16.msra.mxu0 0
        %1432 = vmatprep.subr.bf16.mxu0 0
        %1433 = vmatpush1.bf16.msra.mxu0 0
        %1434 = vmatprep.mubr.bf16.mxu0 0
        %1435 = vmatmul.mubr.bf16.gmra.mrb[0].mxu0 %v1216
        %v1436 = vpop.f32.mrb[0].mxu0
        %v1437 = vadd.f32 %v1229, %v1436
        %v1438 = vpop.f32.mrb[0].mxu0
        %v1439 = vpop.f32.mrb[0].mxu0
        %v1440 = vpop.f32.mrb[0].mxu0
        %1441 = vdwg.mxu0
        %vm1442 = vcmask 130048
        %v1444 = vsel %vm1442, %v1396, 0
        %v1447 = vsel %vm1442, %v1398, 0
        %1449 = vmatprep.subr.mxu0 0.0
        %1450 = vmatpush1.xpose.msra.mxu0 %v1447
        %1451 = vmatprep.subr.mxu0 0.0
        %1452 = vmatpush1.xpose.msra.mxu0 0.0
        %1453 = vmatprep.subr.mxu0 0.0
        %1454 = vmatpush1.xpose.msra.mxu0 0.0
        %1455 = vmatprep.subr.mxu0 0.0
        %1456 = vmatpush1.xpose.msra.mxu0 0.0
        %1457 = vmatprep.subr.mxu0 0.0
        %1458 = vmatpush1.xpose.msra.mxu0 0.0
        %1459 = vmatprep.subr.mxu0 0.0
        %1460 = vmatpush1.xpose.msra.mxu0 0.0
        %1461 = vmatprep.subr.mxu0 0.0
        %1462 = vmatpush1.xpose.msra.mxu0 0.0
        %1463 = vmatprep.subr.mxu0 0.0
        %1464 = vmatpush1.xpose.msra.mxu0 0.0
        %1465 = vmatprep.subr.mxu0 0.0
        %1466 = vmatpush1.xpose.msra.mxu0 0.0
        %1467 = vmatprep.subr.mxu0 0.0
        %1468 = vmatpush1.xpose.msra.mxu0 0.0
        %1469 = vmatprep.subr.mxu0 0.0
        %1470 = vmatpush1.xpose.msra.mxu0 0.0
        %1471 = vmatprep.subr.mxu0 0.0
        %1472 = vmatpush1.xpose.msra.mxu0 0.0
        %1473 = vmatprep.subr.mxu0 0.0
        %1474 = vmatpush1.xpose.msra.mxu0 0.0
        %1475 = vmatprep.subr.mxu0 0.0
        %1476 = vmatpush1.xpose.msra.mxu0 0.0
        %1477 = vmatprep.subr.mxu0 0.0
        %1478 = vmatpush1.xpose.msra.mxu0 0.0
        %1479 = vmatprep.subr.mxu0 0.0
        %1480 = vmatpush1.xpose.msra.mxu0 0.0
        %1481 = vmatprep.subr.mxu0 0.0
        %1482 = vmatpush1.xpose.msra.mxu0 0.0
        %1483 = vmatprep.subr.mxu0 0.0
        %1484 = vmatpush1.xpose.msra.mxu0 0.0
        %1485 = vmatprep.subr.mxu0 0.0
        %1486 = vmatpush1.xpose.msra.mxu0 0.0
        %1487 = vmatprep.subr.mxu0 0.0
        %1488 = vmatpush1.xpose.msra.mxu0 0.0
        %1489 = vmatprep.subr.mxu0 0.0
        %1490 = vmatpush1.xpose.msra.mxu0 0.0
        %1491 = vmatprep.subr.mxu0 0.0
        %1492 = vmatpush1.xpose.msra.mxu0 0.0
        %1493 = vmatprep.subr.mxu0 0.0
        %1494 = vmatpush1.xpose.msra.mxu0 0.0
        %1495 = vmatprep.subr.mxu0 0.0
        %1496 = vmatpush1.xpose.msra.mxu0 0.0
        %1497 = vmatprep.subr.mxu0 0.0
        %1498 = vmatpush1.xpose.msra.mxu0 0.0
        %1499 = vmatprep.subr.mxu0 0.0
        %1500 = vmatpush1.xpose.msra.mxu0 0.0
        %1501 = vmatprep.subr.mxu0 0.0
        %1502 = vmatpush1.xpose.msra.mxu0 0.0
        %1503 = vmatprep.subr.mxu0 0.0
        %1504 = vmatpush1.xpose.msra.mxu0 0.0
        %1505 = vmatprep.subr.mxu0 0.0
        %1506 = vmatpush1.xpose.msra.mxu0 0.0
        %1507 = vmatprep.subr.mxu0 0.0
        %1508 = vmatpush1.xpose.msra.mxu0 0.0
        %1509 = vmatprep.subr.mxu0 0.0
        %1510 = vmatpush1.xpose.msra.mxu0 0.0
        %1511 = vmatprep.subr.mxu0 0.0
        %1512 = vmatpush1.xpose.msra.mxu0 0.0
        %1513 = vmatprep.mubr.f32.mxu0 0.0
        %1514 = vmatmul.mubr.f32.gmra.mrb[0].mxu0 %v1444
        %v1515 = vpop.f32.mrb[0].mxu0
        %v1516 = vadd.f32 0.0, %v1515
        %v1517 = vpop.f32.mrb[0].mxu0
        %1518 = vdwg.mxu0
        %v1519 = vmul.f32 %v1516, 0.25
        %vm1520 = vcmask 64512
        %v1521 = vsel %vm1520, %v1519, -inf
        %1522 = vmax.xlane.f32.xlu0 %v1521
        %v1523 = vpop.xlane.xlu0 %1522
        %v1524 = vsub.f32 %v1519, %v1523
        %v1525 = vmul.f32 %v1524, 1.442695
        %v1526 = vpow.pop %v1525
        %v1527 = vsel %vm1520, %v1526, 0.0
        %1528 = vadd.xlane.f32.xlu0 %v1527
        %v1529 = vpop.xlane.xlu0 %1528
        %v1530 = vrcp.pop %v1529
        %v1531 = vmul.f32 %v1526, %v1530
        %v1533 = vsel %vm1520, %v1531, 0
        %1535 = vmatprep.subr.mxu0 0.0
        %1536 = vmatpush1.msra.mxu0 %v1437
        %1537 = vmatprep.subr.mxu0 0.0
        %1538 = vmatpush1.msra.mxu0 0.0
        %1539 = vmatprep.subr.mxu0 0.0
        %1540 = vmatpush1.msra.mxu0 0.0
        %1541 = vmatprep.subr.mxu0 0.0
        %1542 = vmatpush1.msra.mxu0 0.0
        %1543 = vmatprep.subr.mxu0 0.0
        %1544 = vmatpush1.msra.mxu0 0.0
        %1545 = vmatprep.subr.mxu0 0.0
        %1546 = vmatpush1.msra.mxu0 0.0
        %1547 = vmatprep.subr.mxu0 0.0
        %1548 = vmatpush1.msra.mxu0 0.0
        %1549 = vmatprep.subr.mxu0 0.0
        %1550 = vmatpush1.msra.mxu0 0.0
        %1551 = vmatprep.subr.mxu0 0.0
        %1552 = vmatpush1.msra.mxu0 0.0
        %1553 = vmatprep.subr.mxu0 0.0
        %1554 = vmatpush1.msra.mxu0 0.0
        %1555 = vmatprep.subr.mxu0 0.0
        %1556 = vmatpush1.msra.mxu0 0.0
        %1557 = vmatprep.subr.mxu0 0.0
        %1558 = vmatpush1.msra.mxu0 0.0
        %1559 = vmatprep.subr.mxu0 0.0
        %1560 = vmatpush1.msra.mxu0 0.0
        %1561 = vmatprep.subr.mxu0 0.0
        %1562 = vmatpush1.msra.mxu0 0.0
        %1563 = vmatprep.subr.mxu0 0.0
        %1564 = vmatpush1.msra.mxu0 0.0
        %1565 = vmatprep.subr.mxu0 0.0
        %1566 = vmatpush1.msra.mxu0 0.0
        %1567 = vmatprep.subr.mxu0 0.0
        %1568 = vmatpush1.msra.mxu0 0.0
        %1569 = vmatprep.subr.mxu0 0.0
        %1570 = vmatpush1.msra.mxu0 0.0
        %1571 = vmatprep.subr.mxu0 0.0
        %1572 = vmatpush1.msra.mxu0 0.0
        %1573 = vmatprep.subr.mxu0 0.0
        %1574 = vmatpush1.msra.mxu0 0.0
        %1575 = vmatprep.subr.mxu0 0.0
        %1576 = vmatpush1.msra.mxu0 0.0
        %1577 = vmatprep.subr.mxu0 0.0
        %1578 = vmatpush1.msra.mxu0 0.0
        %1579 = vmatprep.subr.mxu0 0.0
        %1580 = vmatpush1.msra.mxu0 0.0
        %1581 = vmatprep.subr.mxu0 0.0
        %1582 = vmatpush1.msra.mxu0 0.0
        %1583 = vmatprep.subr.mxu0 0.0
        %1584 = vmatpush1.msra.mxu0 0.0
        %1585 = vmatprep.subr.mxu0 0.0
        %1586 = vmatpush1.msra.mxu0 0.0
        %1587 = vmatprep.subr.mxu0 0.0
        %1588 = vmatpush1.msra.mxu0 0.0
        %1589 = vmatprep.subr.mxu0 0.0
        %1590 = vmatpush1.msra.mxu0 0.0
        %1591 = vmatprep.subr.mxu0 0.0
        %1592 = vmatpush1.msra.mxu0 0.0
        %1593 = vmatprep.subr.mxu0 0.0
        %1594 = vmatpush1.msra.mxu0 0.0
        %1595 = vmatprep.subr.mxu0 0.0
        %1596 = vmatpush1.msra.mxu0 0.0
        %1597 = vmatprep.subr.mxu0 0.0
        %1598 = vmatpush1.msra.mxu0 0.0
        %1599 = vmatprep.mubr.f32.mxu0 0.0
        %1600 = vmatmul.mubr.f32.gmra.mrb[0].mxu0 %v1533
        %v1601 = vpop.f32.mrb[0].mxu0
        %v1602 = vadd.f32 0.0, %v1601
        %v1603 = vpop.f32.mrb[0].mxu0
        %1604 = vdwg.mxu0
        %1605 = vst.msk [vmem:[#allocation4] sm:$0xff] %vm1442, %v1602
        %1606 = vrot.lane.b32.xlu0 %v1396, 112
        %v1607 = vpop.permute.xlu0 %1606
        %1608 = vrot.lane.b32.xlu0 %v1398, 112
        %v1609 = vpop.permute.xlu0 %1608
        %v1610 = vsel %vm1442, %v1607, 0
        %v1612 = vsel %vm1442, %v1609, 0
        %1614 = vmatprep.subr.mxu0 0.0
        %1615 = vmatpush1.xpose.msra.mxu0 %v1612
        %1616 = vmatprep.subr.mxu0 0.0
        %1617 = vmatpush1.xpose.msra.mxu0 0.0
        %1618 = vmatprep.subr.mxu0 0.0
        %1619 = vmatpush1.xpose.msra.mxu0 0.0
        %1620 = vmatprep.subr.mxu0 0.0
        %1621 = vmatpush1.xpose.msra.mxu0 0.0
        %1622 = vmatprep.subr.mxu0 0.0
        %1623 = vmatpush1.xpose.msra.mxu0 0.0
        %1624 = vmatprep.subr.mxu0 0.0
        %1625 = vmatpush1.xpose.msra.mxu0 0.0
        %1626 = vmatprep.subr.mxu0 0.0
        %1627 = vmatpush1.xpose.msra.mxu0 0.0
        %1628 = vmatprep.subr.mxu0 0.0
        %1629 = vmatpush1.xpose.msra.mxu0 0.0
        %1630 = vmatprep.subr.mxu0 0.0
        %1631 = vmatpush1.xpose.msra.mxu0 0.0
        %1632 = vmatprep.subr.mxu0 0.0
        %1633 = vmatpush1.xpose.msra.mxu0 0.0
        %1634 = vmatprep.subr.mxu0 0.0
        %1635 = vmatpush1.xpose.msra.mxu0 0.0
        %1636 = vmatprep.subr.mxu0 0.0
        %1637 = vmatpush1.xpose.msra.mxu0 0.0
        %1638 = vmatprep.subr.mxu0 0.0
        %1639 = vmatpush1.xpose.msra.mxu0 0.0
        %1640 = vmatprep.subr.mxu0 0.0
        %1641 = vmatpush1.xpose.msra.mxu0 0.0
        %1642 = vmatprep.subr.mxu0 0.0
        %1643 = vmatpush1.xpose.msra.mxu0 0.0
        %1644 = vmatprep.subr.mxu0 0.0
        %1645 = vmatpush1.xpose.msra.mxu0 0.0
        %1646 = vmatprep.subr.mxu0 0.0
        %1647 = vmatpush1.xpose.msra.mxu0 0.0
        %1648 = vmatprep.subr.mxu0 0.0
        %1649 = vmatpush1.xpose.msra.mxu0 0.0
        %1650 = vmatprep.subr.mxu0 0.0
        %1651 = vmatpush1.xpose.msra.mxu0 0.0
        %1652 = vmatprep.subr.mxu0 0.0
        %1653 = vmatpush1.xpose.msra.mxu0 0.0
        %1654 = vmatprep.subr.mxu0 0.0
        %1655 = vmatpush1.xpose.msra.mxu0 0.0
        %1656 = vmatprep.subr.mxu0 0.0
        %1657 = vmatpush1.xpose.msra.mxu0 0.0
        %1658 = vmatprep.subr.mxu0 0.0
        %1659 = vmatpush1.xpose.msra.mxu0 0.0
        %1660 = vmatprep.subr.mxu0 0.0
        %1661 = vmatpush1.xpose.msra.mxu0 0.0
        %1662 = vmatprep.subr.mxu0 0.0
        %1663 = vmatpush1.xpose.msra.mxu0 0.0
        %1664 = vmatprep.subr.mxu0 0.0
        %1665 = vmatpush1.xpose.msra.mxu0 0.0
        %1666 = vmatprep.subr.mxu0 0.0
        %1667 = vmatpush1.xpose.msra.mxu0 0.0
        %1668 = vmatprep.subr.mxu0 0.0
        %1669 = vmatpush1.xpose.msra.mxu0 0.0
        %1670 = vmatprep.subr.mxu0 0.0
        %1671 = vmatpush1.xpose.msra.mxu0 0.0
        %1672 = vmatprep.subr.mxu0 0.0
        %1673 = vmatpush1.xpose.msra.mxu0 0.0
        %1674 = vmatprep.subr.mxu0 0.0
        %1675 = vmatpush1.xpose.msra.mxu0 0.0
        %1676 = vmatprep.subr.mxu0 0.0
        %1677 = vmatpush1.xpose.msra.mxu0 0.0
        %1678 = vmatprep.mubr.f32.mxu0 0.0
        %1679 = vmatmul.mubr.f32.gmra.mrb[0].mxu0 %v1610
        %v1680 = vpop.f32.mrb[0].mxu0
        %v1681 = vadd.f32 0.0, %v1680
        %v1682 = vpop.f32.mrb[0].mxu0
        %1683 = vdwg.mxu0
        %v1684 = vmul.f32 %v1681, 0.25
        %v1685 = vsel %vm1520, %v1684, -inf
        %1686 = vmax.xlane.f32.xlu0 %v1685
        %v1687 = vpop.xlane.xlu0 %1686
        %v1688 = vsub.f32 %v1684, %v1687
        %v1689 = vmul.f32 %v1688, 1.442695
        %v1690 = vpow.pop %v1689
        %v1691 = vsel %vm1520, %v1690, 0.0
        %1692 = vadd.xlane.f32.xlu0 %v1691
        %v1693 = vpop.xlane.xlu0 %1692
        %v1694 = vrcp.pop %v1693
        %v1695 = vmul.f32 %v1690, %v1694
        %1697 = vrot.lane.b32.xlu0 %v1437, 112
        %v1698 = vpop.permute.xlu0 %1697
        %v1701 = vsel %vm1520, %v1695, 0
        %1703 = vmatprep.subr.mxu0 0.0
        %1704 = vmatpush1.msra.mxu0 %v1698
        %1705 = vmatprep.subr.mxu0 0.0
        %1706 = vmatpush1.msra.mxu0 0.0
        %1707 = vmatprep.subr.mxu0 0.0
        %1708 = vmatpush1.msra.mxu0 0.0
        %1709 = vmatprep.subr.mxu0 0.0
        %1710 = vmatpush1.msra.mxu0 0.0
        %1711 = vmatprep.subr.mxu0 0.0
        %1712 = vmatpush1.msra.mxu0 0.0
        %1713 = vmatprep.subr.mxu0 0.0
        %1714 = vmatpush1.msra.mxu0 0.0
        %1715 = vmatprep.subr.mxu0 0.0
        %1716 = vmatpush1.msra.mxu0 0.0
        %1717 = vmatprep.subr.mxu0 0.0
        %1718 = vmatpush1.msra.mxu0 0.0
        %1719 = vmatprep.subr.mxu0 0.0
        %1720 = vmatpush1.msra.mxu0 0.0
        %1721 = vmatprep.subr.mxu0 0.0
        %1722 = vmatpush1.msra.mxu0 0.0
        %1723 = vmatprep.subr.mxu0 0.0
        %1724 = vmatpush1.msra.mxu0 0.0
        %1725 = vmatprep.subr.mxu0 0.0
        %1726 = vmatpush1.msra.mxu0 0.0
        %1727 = vmatprep.subr.mxu0 0.0
        %1728 = vmatpush1.msra.mxu0 0.0
        %1729 = vmatprep.subr.mxu0 0.0
        %1730 = vmatpush1.msra.mxu0 0.0
        %1731 = vmatprep.subr.mxu0 0.0
        %1732 = vmatpush1.msra.mxu0 0.0
        %1733 = vmatprep.subr.mxu0 0.0
        %1734 = vmatpush1.msra.mxu0 0.0
        %1735 = vmatprep.subr.mxu0 0.0
        %1736 = vmatpush1.msra.mxu0 0.0
        %1737 = vmatprep.subr.mxu0 0.0
        %1738 = vmatpush1.msra.mxu0 0.0
        %1739 = vmatprep.subr.mxu0 0.0
        %1740 = vmatpush1.msra.mxu0 0.0
        %1741 = vmatprep.subr.mxu0 0.0
        %1742 = vmatpush1.msra.mxu0 0.0
        %1743 = vmatprep.subr.mxu0 0.0
        %1744 = vmatpush1.msra.mxu0 0.0
        %1745 = vmatprep.subr.mxu0 0.0
        %1746 = vmatpush1.msra.mxu0 0.0
        %1747 = vmatprep.subr.mxu0 0.0
        %1748 = vmatpush1.msra.mxu0 0.0
        %1749 = vmatprep.subr.mxu0 0.0
        %1750 = vmatpush1.msra.mxu0 0.0
        %1751 = vmatprep.subr.mxu0 0.0
        %1752 = vmatpush1.msra.mxu0 0.0
        %1753 = vmatprep.subr.mxu0 0.0
        %1754 = vmatpush1.msra.mxu0 0.0
        %1755 = vmatprep.subr.mxu0 0.0
        %1756 = vmatpush1.msra.mxu0 0.0
        %1757 = vmatprep.subr.mxu0 0.0
        %1758 = vmatpush1.msra.mxu0 0.0
        %1759 = vmatprep.subr.mxu0 0.0
        %1760 = vmatpush1.msra.mxu0 0.0
        %1761 = vmatprep.subr.mxu0 0.0
        %1762 = vmatpush1.msra.mxu0 0.0
        %1763 = vmatprep.subr.mxu0 0.0
        %1764 = vmatpush1.msra.mxu0 0.0
        %1765 = vmatprep.subr.mxu0 0.0
        %1766 = vmatpush1.msra.mxu0 0.0
        %1767 = vmatprep.mubr.f32.mxu0 0.0
        %1768 = vmatmul.mubr.f32.gmra.mrb[0].mxu0 %v1701
        %v1769 = vpop.f32.mrb[0].mxu0
        %v1770 = vadd.f32 0.0, %v1769
        %v1771 = vpop.f32.mrb[0].mxu0
        %1772 = vdwg.mxu0
        %1774 = vrot.lane.b32.xlu0 %v1770, 16
        %v1775 = vpop.permute.xlu0 %1774
        %vm1777 = vcmask 261248
        %1778 = vst.msk [vmem:[#allocation4] sm:$0xff] %vm1777, %v1775
        %1779 = vrot.lane.b32.xlu0 %v1396, 96
        %v1780 = vpop.permute.xlu0 %1779
        %1781 = vrot.lane.b32.xlu0 %v1398, 96
        %v1782 = vpop.permute.xlu0 %1781
        %v1783 = vsel %vm1442, %v1780, 0
        %v1785 = vsel %vm1442, %v1782, 0
        %1787 = vmatprep.subr.mxu0 0.0
        %1788 = vmatpush1.xpose.msra.mxu0 %v1785
        %1789 = vmatprep.subr.mxu0 0.0
        %1790 = vmatpush1.xpose.msra.mxu0 0.0
        %1791 = vmatprep.subr.mxu0 0.0
        %1792 = vmatpush1.xpose.msra.mxu0 0.0
        %1793 = vmatprep.subr.mxu0 0.0
        %1794 = vmatpush1.xpose.msra.mxu0 0.0
        %1795 = vmatprep.subr.mxu0 0.0
        %1796 = vmatpush1.xpose.msra.mxu0 0.0
        %1797 = vmatprep.subr.mxu0 0.0
        %1798 = vmatpush1.xpose.msra.mxu0 0.0
        %1799 = vmatprep.subr.mxu0 0.0
        %1800 = vmatpush1.xpose.msra.mxu0 0.0
        %1801 = vmatprep.subr.mxu0 0.0
        %1802 = vmatpush1.xpose.msra.mxu0 0.0
        %1803 = vmatprep.subr.mxu0 0.0
        %1804 = vmatpush1.xpose.msra.mxu0 0.0
        %1805 = vmatprep.subr.mxu0 0.0
        %1806 = vmatpush1.xpose.msra.mxu0 0.0
        %1807 = vmatprep.subr.mxu0 0.0
        %1808 = vmatpush1.xpose.msra.mxu0 0.0
        %1809 = vmatprep.subr.mxu0 0.0
        %1810 = vmatpush1.xpose.msra.mxu0 0.0
        %1811 = vmatprep.subr.mxu0 0.0
        %1812 = vmatpush1.xpose.msra.mxu0 0.0
        %1813 = vmatprep.subr.mxu0 0.0
        %1814 = vmatpush1.xpose.msra.mxu0 0.0
        %1815 = vmatprep.subr.mxu0 0.0
        %1816 = vmatpush1.xpose.msra.mxu0 0.0
        %1817 = vmatprep.subr.mxu0 0.0
        %1818 = vmatpush1.xpose.msra.mxu0 0.0
        %1819 = vmatprep.subr.mxu0 0.0
        %1820 = vmatpush1.xpose.msra.mxu0 0.0
        %1821 = vmatprep.subr.mxu0 0.0
        %1822 = vmatpush1.xpose.msra.mxu0 0.0
        %1823 = vmatprep.subr.mxu0 0.0
        %1824 = vmatpush1.xpose.msra.mxu0 0.0
        %1825 = vmatprep.subr.mxu0 0.0
        %1826 = vmatpush1.xpose.msra.mxu0 0.0
        %1827 = vmatprep.subr.mxu0 0.0
        %1828 = vmatpush1.xpose.msra.mxu0 0.0
        %1829 = vmatprep.subr.mxu0 0.0
        %1830 = vmatpush1.xpose.msra.mxu0 0.0
        %1831 = vmatprep.subr.mxu0 0.0
        %1832 = vmatpush1.xpose.msra.mxu0 0.0
        %1833 = vmatprep.subr.mxu0 0.0
        %1834 = vmatpush1.xpose.msra.mxu0 0.0
        %1835 = vmatprep.subr.mxu0 0.0
        %1836 = vmatpush1.xpose.msra.mxu0 0.0
        %1837 = vmatprep.subr.mxu0 0.0
        %1838 = vmatpush1.xpose.msra.mxu0 0.0
        %1839 = vmatprep.subr.mxu0 0.0
        %1840 = vmatpush1.xpose.msra.mxu0 0.0
        %1841 = vmatprep.subr.mxu0 0.0
        %1842 = vmatpush1.xpose.msra.mxu0 0.0
        %1843 = vmatprep.subr.mxu0 0.0
        %1844 = vmatpush1.xpose.msra.mxu0 0.0
        %1845 = vmatprep.subr.mxu0 0.0
        %1846 = vmatpush1.xpose.msra.mxu0 0.0
        %1847 = vmatprep.subr.mxu0 0.0
        %1848 = vmatpush1.xpose.msra.mxu0 0.0
        %1849 = vmatprep.subr.mxu0 0.0
        %1850 = vmatpush1.xpose.msra.mxu0 0.0
        %1851 = vmatprep.mubr.f32.mxu0 0.0
        %1852 = vmatmul.mubr.f32.gmra.mrb[0].mxu0 %v1783
        %v1853 = vpop.f32.mrb[0].mxu0
        %v1854 = vadd.f32 0.0, %v1853
        %v1855 = vpop.f32.mrb[0].mxu0
        %1856 = vdwg.mxu0
        %v1857 = vmul.f32 %v1854, 0.25
        %v1858 = vsel %vm1520, %v1857, -inf
        %1859 = vmax.xlane.f32.xlu0 %v1858
        %v1860 = vpop.xlane.xlu0 %1859
        %v1861 = vsub.f32 %v1857, %v1860
        %v1862 = vmul.f32 %v1861, 1.442695
        %v1863 = vpow.pop %v1862
        %v1864 = vsel %vm1520, %v1863, 0.0
        %1865 = vadd.xlane.f32.xlu0 %v1864
        %v1866 = vpop.xlane.xlu0 %1865
        %v1867 = vrcp.pop %v1866
        %v1868 = vmul.f32 %v1863, %v1867
        %1869 = vrot.lane.b32.xlu0 %v1437, 96
        %v1870 = vpop.permute.xlu0 %1869
        %v1873 = vsel %vm1520, %v1868, 0
        %1875 = vmatprep.subr.mxu0 0.0
        %1876 = vmatpush1.msra.mxu0 %v1870
        %1877 = vmatprep.subr.mxu0 0.0
        %1878 = vmatpush1.msra.mxu0 0.0
        %1879 = vmatprep.subr.mxu0 0.0
        %1880 = vmatpush1.msra.mxu0 0.0
        %1881 = vmatprep.subr.mxu0 0.0
        %1882 = vmatpush1.msra.mxu0 0.0
        %1883 = vmatprep.subr.mxu0 0.0
        %1884 = vmatpush1.msra.mxu0 0.0
        %1885 = vmatprep.subr.mxu0 0.0
        %1886 = vmatpush1.msra.mxu0 0.0
        %1887 = vmatprep.subr.mxu0 0.0
        %1888 = vmatpush1.msra.mxu0 0.0
        %1889 = vmatprep.subr.mxu0 0.0
        %1890 = vmatpush1.msra.mxu0 0.0
        %1891 = vmatprep.subr.mxu0 0.0
        %1892 = vmatpush1.msra.mxu0 0.0
        %1893 = vmatprep.subr.mxu0 0.0
        %1894 = vmatpush1.msra.mxu0 0.0
        %1895 = vmatprep.subr.mxu0 0.0
        %1896 = vmatpush1.msra.mxu0 0.0
        %1897 = vmatprep.subr.mxu0 0.0
        %1898 = vmatpush1.msra.mxu0 0.0
        %1899 = vmatprep.subr.mxu0 0.0
        %1900 = vmatpush1.msra.mxu0 0.0
        %1901 = vmatprep.subr.mxu0 0.0
        %1902 = vmatpush1.msra.mxu0 0.0
        %1903 = vmatprep.subr.mxu0 0.0
        %1904 = vmatpush1.msra.mxu0 0.0
        %1905 = vmatprep.subr.mxu0 0.0
        %1906 = vmatpush1.msra.mxu0 0.0
        %1907 = vmatprep.subr.mxu0 0.0
        %1908 = vmatpush1.msra.mxu0 0.0
        %1909 = vmatprep.subr.mxu0 0.0
        %1910 = vmatpush1.msra.mxu0 0.0
        %1911 = vmatprep.subr.mxu0 0.0
        %1912 = vmatpush1.msra.mxu0 0.0
        %1913 = vmatprep.subr.mxu0 0.0
        %1914 = vmatpush1.msra.mxu0 0.0
        %1915 = vmatprep.subr.mxu0 0.0
        %1916 = vmatpush1.msra.mxu0 0.0
        %1917 = vmatprep.subr.mxu0 0.0
        %1918 = vmatpush1.msra.mxu0 0.0
        %1919 = vmatprep.subr.mxu0 0.0
        %1920 = vmatpush1.msra.mxu0 0.0
        %1921 = vmatprep.subr.mxu0 0.0
        %1922 = vmatpush1.msra.mxu0 0.0
        %1923 = vmatprep.subr.mxu0 0.0
        %1924 = vmatpush1.msra.mxu0 0.0
        %1925 = vmatprep.subr.mxu0 0.0
        %1926 = vmatpush1.msra.mxu0 0.0
        %1927 = vmatprep.subr.mxu0 0.0
        %1928 = vmatpush1.msra.mxu0 0.0
        %1929 = vmatprep.subr.mxu0 0.0
        %1930 = vmatpush1.msra.mxu0 0.0
        %1931 = vmatprep.subr.mxu0 0.0
        %1932 = vmatpush1.msra.mxu0 0.0
        %1933 = vmatprep.subr.mxu0 0.0
        %1934 = vmatpush1.msra.mxu0 0.0
        %1935 = vmatprep.subr.mxu0 0.0
        %1936 = vmatpush1.msra.mxu0 0.0
        %1937 = vmatprep.subr.mxu0 0.0
        %1938 = vmatpush1.msra.mxu0 0.0
        %1939 = vmatprep.mubr.f32.mxu0 0.0
        %1940 = vmatmul.mubr.f32.gmra.mrb[0].mxu0 %v1873
        %v1941 = vpop.f32.mrb[0].mxu0
        %v1942 = vadd.f32 0.0, %v1941
        %v1943 = vpop.f32.mrb[0].mxu0
        %1944 = vdwg.mxu0
        %1946 = vrot.lane.b32.xlu0 %v1942, 32
        %v1947 = vpop.permute.xlu0 %1946
        %vm1949 = vcmask 392448
        %1950 = vst.msk [vmem:[#allocation4] sm:$0xff] %vm1949, %v1947
        %1951 = vrot.lane.b32.xlu0 %v1396, 80
        %v1952 = vpop.permute.xlu0 %1951
        %1953 = vrot.lane.b32.xlu0 %v1398, 80
        %v1954 = vpop.permute.xlu0 %1953
        %v1955 = vsel %vm1442, %v1952, 0
        %v1957 = vsel %vm1442, %v1954, 0
        %1959 = vmatprep.subr.mxu0 0.0
        %1960 = vmatpush1.xpose.msra.mxu0 %v1957
        %1961 = vmatprep.subr.mxu0 0.0
        %1962 = vmatpush1.xpose.msra.mxu0 0.0
        %1963 = vmatprep.subr.mxu0 0.0
        %1964 = vmatpush1.xpose.msra.mxu0 0.0
        %1965 = vmatprep.subr.mxu0 0.0
        %1966 = vmatpush1.xpose.msra.mxu0 0.0
        %1967 = vmatprep.subr.mxu0 0.0
        %1968 = vmatpush1.xpose.msra.mxu0 0.0
        %1969 = vmatprep.subr.mxu0 0.0
        %1970 = vmatpush1.xpose.msra.mxu0 0.0
        %1971 = vmatprep.subr.mxu0 0.0
        %1972 = vmatpush1.xpose.msra.mxu0 0.0
        %1973 = vmatprep.subr.mxu0 0.0
        %1974 = vmatpush1.xpose.msra.mxu0 0.0
        %1975 = vmatprep.subr.mxu0 0.0
        %1976 = vmatpush1.xpose.msra.mxu0 0.0
        %1977 = vmatprep.subr.mxu0 0.0
        %1978 = vmatpush1.xpose.msra.mxu0 0.0
        %1979 = vmatprep.subr.mxu0 0.0
        %1980 = vmatpush1.xpose.msra.mxu0 0.0
        %1981 = vmatprep.subr.mxu0 0.0
        %1982 = vmatpush1.xpose.msra.mxu0 0.0
        %1983 = vmatprep.subr.mxu0 0.0
        %1984 = vmatpush1.xpose.msra.mxu0 0.0
        %1985 = vmatprep.subr.mxu0 0.0
        %1986 = vmatpush1.xpose.msra.mxu0 0.0
        %1987 = vmatprep.subr.mxu0 0.0
        %1988 = vmatpush1.xpose.msra.mxu0 0.0
        %1989 = vmatprep.subr.mxu0 0.0
        %1990 = vmatpush1.xpose.msra.mxu0 0.0
        %1991 = vmatprep.subr.mxu0 0.0
        %1992 = vmatpush1.xpose.msra.mxu0 0.0
        %1993 = vmatprep.subr.mxu0 0.0
        %1994 = vmatpush1.xpose.msra.mxu0 0.0
        %1995 = vmatprep.subr.mxu0 0.0
        %1996 = vmatpush1.xpose.msra.mxu0 0.0
        %1997 = vmatprep.subr.mxu0 0.0
        %1998 = vmatpush1.xpose.msra.mxu0 0.0
        %1999 = vmatprep.subr.mxu0 0.0
        %2000 = vmatpush1.xpose.msra.mxu0 0.0
        %2001 = vmatprep.subr.mxu0 0.0
        %2002 = vmatpush1.xpose.msra.mxu0 0.0
        %2003 = vmatprep.subr.mxu0 0.0
        %2004 = vmatpush1.xpose.msra.mxu0 0.0
        %2005 = vmatprep.subr.mxu0 0.0
        %2006 = vmatpush1.xpose.msra.mxu0 0.0
        %2007 = vmatprep.subr.mxu0 0.0
        %2008 = vmatpush1.xpose.msra.mxu0 0.0
        %2009 = vmatprep.subr.mxu0 0.0
        %2010 = vmatpush1.xpose.msra.mxu0 0.0
        %2011 = vmatprep.subr.mxu0 0.0
        %2012 = vmatpush1.xpose.msra.mxu0 0.0
        %2013 = vmatprep.subr.mxu0 0.0
        %2014 = vmatpush1.xpose.msra.mxu0 0.0
        %2015 = vmatprep.subr.mxu0 0.0
        %2016 = vmatpush1.xpose.msra.mxu0 0.0
        %2017 = vmatprep.subr.mxu0 0.0
        %2018 = vmatpush1.xpose.msra.mxu0 0.0
        %2019 = vmatprep.subr.mxu0 0.0
        %2020 = vmatpush1.xpose.msra.mxu0 0.0
        %2021 = vmatprep.subr.mxu0 0.0
        %2022 = vmatpush1.xpose.msra.mxu0 0.0
        %2023 = vmatprep.mubr.f32.mxu0 0.0
        %2024 = vmatmul.mubr.f32.gmra.mrb[0].mxu0 %v1955
        %v2025 = vpop.f32.mrb[0].mxu0
        %v2026 = vadd.f32 0.0, %v2025
        %v2027 = vpop.f32.mrb[0].mxu0
        %2028 = vdwg.mxu0
        %v2029 = vmul.f32 %v2026, 0.25
        %v2030 = vsel %vm1520, %v2029, -inf
        %2031 = vmax.xlane.f32.xlu0 %v2030
        %v2032 = vpop.xlane.xlu0 %2031
        %v2033 = vsub.f32 %v2029, %v2032
        %v2034 = vmul.f32 %v2033, 1.442695
        %v2035 = vpow.pop %v2034
        %v2036 = vsel %vm1520, %v2035, 0.0
        %2037 = vadd.xlane.f32.xlu0 %v2036
        %v2038 = vpop.xlane.xlu0 %2037
        %v2039 = vrcp.pop %v2038
        %v2040 = vmul.f32 %v2035, %v2039
        %2041 = vrot.lane.b32.xlu0 %v1437, 80
        %v2042 = vpop.permute.xlu0 %2041
        %v2045 = vsel %vm1520, %v2040, 0
        %2047 = vmatprep.subr.mxu0 0.0
        %2048 = vmatpush1.msra.mxu0 %v2042
        %2049 = vmatprep.subr.mxu0 0.0
        %2050 = vmatpush1.msra.mxu0 0.0
        %2051 = vmatprep.subr.mxu0 0.0
        %2052 = vmatpush1.msra.mxu0 0.0
        %2053 = vmatprep.subr.mxu0 0.0
        %2054 = vmatpush1.msra.mxu0 0.0
        %2055 = vmatprep.subr.mxu0 0.0
        %2056 = vmatpush1.msra.mxu0 0.0
        %2057 = vmatprep.subr.mxu0 0.0
        %2058 = vmatpush1.msra.mxu0 0.0
        %2059 = vmatprep.subr.mxu0 0.0
        %2060 = vmatpush1.msra.mxu0 0.0
        %2061 = vmatprep.subr.mxu0 0.0
        %2062 = vmatpush1.msra.mxu0 0.0
        %2063 = vmatprep.subr.mxu0 0.0
        %2064 = vmatpush1.msra.mxu0 0.0
        %2065 = vmatprep.subr.mxu0 0.0
        %2066 = vmatpush1.msra.mxu0 0.0
        %2067 = vmatprep.subr.mxu0 0.0
        %2068 = vmatpush1.msra.mxu0 0.0
        %2069 = vmatprep.subr.mxu0 0.0
        %2070 = vmatpush1.msra.mxu0 0.0
        %2071 = vmatprep.subr.mxu0 0.0
        %2072 = vmatpush1.msra.mxu0 0.0
        %2073 = vmatprep.subr.mxu0 0.0
        %2074 = vmatpush1.msra.mxu0 0.0
        %2075 = vmatprep.subr.mxu0 0.0
        %2076 = vmatpush1.msra.mxu0 0.0
        %2077 = vmatprep.subr.mxu0 0.0
        %2078 = vmatpush1.msra.mxu0 0.0
        %2079 = vmatprep.subr.mxu0 0.0
        %2080 = vmatpush1.msra.mxu0 0.0
        %2081 = vmatprep.subr.mxu0 0.0
        %2082 = vmatpush1.msra.mxu0 0.0
        %2083 = vmatprep.subr.mxu0 0.0
        %2084 = vmatpush1.msra.mxu0 0.0
        %2085 = vmatprep.subr.mxu0 0.0
        %2086 = vmatpush1.msra.mxu0 0.0
        %2087 = vmatprep.subr.mxu0 0.0
        %2088 = vmatpush1.msra.mxu0 0.0
        %2089 = vmatprep.subr.mxu0 0.0
        %2090 = vmatpush1.msra.mxu0 0.0
        %2091 = vmatprep.subr.mxu0 0.0
        %2092 = vmatpush1.msra.mxu0 0.0
        %2093 = vmatprep.subr.mxu0 0.0
        %2094 = vmatpush1.msra.mxu0 0.0
        %2095 = vmatprep.subr.mxu0 0.0
        %2096 = vmatpush1.msra.mxu0 0.0
        %2097 = vmatprep.subr.mxu0 0.0
        %2098 = vmatpush1.msra.mxu0 0.0
        %2099 = vmatprep.subr.mxu0 0.0
        %2100 = vmatpush1.msra.mxu0 0.0
        %2101 = vmatprep.subr.mxu0 0.0
        %2102 = vmatpush1.msra.mxu0 0.0
        %2103 = vmatprep.subr.mxu0 0.0
        %2104 = vmatpush1.msra.mxu0 0.0
        %2105 = vmatprep.subr.mxu0 0.0
        %2106 = vmatpush1.msra.mxu0 0.0
        %2107 = vmatprep.subr.mxu0 0.0
        %2108 = vmatpush1.msra.mxu0 0.0
        %2109 = vmatprep.subr.mxu0 0.0
        %2110 = vmatpush1.msra.mxu0 0.0
        %2111 = vmatprep.mubr.f32.mxu0 0.0
        %2112 = vmatmul.mubr.f32.gmra.mrb[0].mxu0 %v2045
        %v2113 = vpop.f32.mrb[0].mxu0
        %v2114 = vadd.f32 0.0, %v2113
        %v2115 = vpop.f32.mrb[0].mxu0
        %2116 = vdwg.mxu0
        %2118 = vrot.lane.b32.xlu0 %v2114, 48
        %v2119 = vpop.permute.xlu0 %2118
        %vm2121 = vcmask 523648
        %2122 = vst.msk [vmem:[#allocation4] sm:$0xff] %vm2121, %v2119
        %2123 = vrot.lane.b32.xlu0 %v1396, 64
        %v2124 = vpop.permute.xlu0 %2123
        %2125 = vrot.lane.b32.xlu0 %v1398, 64
        %v2126 = vpop.permute.xlu0 %2125
        %v2127 = vsel %vm1442, %v2124, 0
        %v2129 = vsel %vm1442, %v2126, 0
        %2131 = vmatprep.subr.mxu0 0.0
        %2132 = vmatpush1.xpose.msra.mxu0 %v2129
        %2133 = vmatprep.subr.mxu0 0.0
        %2134 = vmatpush1.xpose.msra.mxu0 0.0
        %2135 = vmatprep.subr.mxu0 0.0
        %2136 = vmatpush1.xpose.msra.mxu0 0.0
        %2137 = vmatprep.subr.mxu0 0.0
        %2138 = vmatpush1.xpose.msra.mxu0 0.0
        %2139 = vmatprep.subr.mxu0 0.0
        %2140 = vmatpush1.xpose.msra.mxu0 0.0
        %2141 = vmatprep.subr.mxu0 0.0
        %2142 = vmatpush1.xpose.msra.mxu0 0.0
        %2143 = vmatprep.subr.mxu0 0.0
        %2144 = vmatpush1.xpose.msra.mxu0 0.0
        %2145 = vmatprep.subr.mxu0 0.0
        %2146 = vmatpush1.xpose.msra.mxu0 0.0
        %2147 = vmatprep.subr.mxu0 0.0
        %2148 = vmatpush1.xpose.msra.mxu0 0.0
        %2149 = vmatprep.subr.mxu0 0.0
        %2150 = vmatpush1.xpose.msra.mxu0 0.0
        %2151 = vmatprep.subr.mxu0 0.0
        %2152 = vmatpush1.xpose.msra.mxu0 0.0
        %2153 = vmatprep.subr.mxu0 0.0
        %2154 = vmatpush1.xpose.msra.mxu0 0.0
        %2155 = vmatprep.subr.mxu0 0.0
        %2156 = vmatpush1.xpose.msra.mxu0 0.0
        %2157 = vmatprep.subr.mxu0 0.0
        %2158 = vmatpush1.xpose.msra.mxu0 0.0
        %2159 = vmatprep.subr.mxu0 0.0
        %2160 = vmatpush1.xpose.msra.mxu0 0.0
        %2161 = vmatprep.subr.mxu0 0.0
        %2162 = vmatpush1.xpose.msra.mxu0 0.0
        %2163 = vmatprep.subr.mxu0 0.0
        %2164 = vmatpush1.xpose.msra.mxu0 0.0
        %2165 = vmatprep.subr.mxu0 0.0
        %2166 = vmatpush1.xpose.msra.mxu0 0.0
        %2167 = vmatprep.subr.mxu0 0.0
        %2168 = vmatpush1.xpose.msra.mxu0 0.0
        %2169 = vmatprep.subr.mxu0 0.0
        %2170 = vmatpush1.xpose.msra.mxu0 0.0
        %2171 = vmatprep.subr.mxu0 0.0
        %2172 = vmatpush1.xpose.msra.mxu0 0.0
        %2173 = vmatprep.subr.mxu0 0.0
        %2174 = vmatpush1.xpose.msra.mxu0 0.0
        %2175 = vmatprep.subr.mxu0 0.0
        %2176 = vmatpush1.xpose.msra.mxu0 0.0
        %2177 = vmatprep.subr.mxu0 0.0
        %2178 = vmatpush1.xpose.msra.mxu0 0.0
        %2179 = vmatprep.subr.mxu0 0.0
        %2180 = vmatpush1.xpose.msra.mxu0 0.0
        %2181 = vmatprep.subr.mxu0 0.0
        %2182 = vmatpush1.xpose.msra.mxu0 0.0
        %2183 = vmatprep.subr.mxu0 0.0
        %2184 = vmatpush1.xpose.msra.mxu0 0.0
        %2185 = vmatprep.subr.mxu0 0.0
        %2186 = vmatpush1.xpose.msra.mxu0 0.0
        %2187 = vmatprep.subr.mxu0 0.0
        %2188 = vmatpush1.xpose.msra.mxu0 0.0
        %2189 = vmatprep.subr.mxu0 0.0
        %2190 = vmatpush1.xpose.msra.mxu0 0.0
        %2191 = vmatprep.subr.mxu0 0.0
        %2192 = vmatpush1.xpose.msra.mxu0 0.0
        %2193 = vmatprep.subr.mxu0 0.0
        %2194 = vmatpush1.xpose.msra.mxu0 0.0
        %2195 = vmatprep.mubr.f32.mxu0 0.0
        %2196 = vmatmul.mubr.f32.gmra.mrb[0].mxu0 %v2127
        %v2197 = vpop.f32.mrb[0].mxu0
        %v2198 = vadd.f32 0.0, %v2197
        %v2199 = vpop.f32.mrb[0].mxu0
        %2200 = vdwg.mxu0
        %v2201 = vmul.f32 %v2198, 0.25
        %v2202 = vsel %vm1520, %v2201, -inf
        %2203 = vmax.xlane.f32.xlu0 %v2202
        %v2204 = vpop.xlane.xlu0 %2203
        %v2205 = vsub.f32 %v2201, %v2204
        %v2206 = vmul.f32 %v2205, 1.442695
        %v2207 = vpow.pop %v2206
        %v2208 = vsel %vm1520, %v2207, 0.0
        %2209 = vadd.xlane.f32.xlu0 %v2208
        %v2210 = vpop.xlane.xlu0 %2209
        %v2211 = vrcp.pop %v2210
        %v2212 = vmul.f32 %v2207, %v2211
        %2213 = vrot.lane.b32.xlu0 %v1437, 64
        %v2214 = vpop.permute.xlu0 %2213
        %v2217 = vsel %vm1520, %v2212, 0
        %2219 = vmatprep.subr.mxu0 0.0
        %2220 = vmatpush1.msra.mxu0 %v2214
        %2221 = vmatprep.subr.mxu0 0.0
        %2222 = vmatpush1.msra.mxu0 0.0
        %2223 = vmatprep.subr.mxu0 0.0
        %2224 = vmatpush1.msra.mxu0 0.0
        %2225 = vmatprep.subr.mxu0 0.0
        %2226 = vmatpush1.msra.mxu0 0.0
        %2227 = vmatprep.subr.mxu0 0.0
        %2228 = vmatpush1.msra.mxu0 0.0
        %2229 = vmatprep.subr.mxu0 0.0
        %2230 = vmatpush1.msra.mxu0 0.0
        %2231 = vmatprep.subr.mxu0 0.0
        %2232 = vmatpush1.msra.mxu0 0.0
        %2233 = vmatprep.subr.mxu0 0.0
        %2234 = vmatpush1.msra.mxu0 0.0
        %2235 = vmatprep.subr.mxu0 0.0
        %2236 = vmatpush1.msra.mxu0 0.0
        %2237 = vmatprep.subr.mxu0 0.0
        %2238 = vmatpush1.msra.mxu0 0.0
        %2239 = vmatprep.subr.mxu0 0.0
        %2240 = vmatpush1.msra.mxu0 0.0
        %2241 = vmatprep.subr.mxu0 0.0
        %2242 = vmatpush1.msra.mxu0 0.0
        %2243 = vmatprep.subr.mxu0 0.0
        %2244 = vmatpush1.msra.mxu0 0.0
        %2245 = vmatprep.subr.mxu0 0.0
        %2246 = vmatpush1.msra.mxu0 0.0
        %2247 = vmatprep.subr.mxu0 0.0
        %2248 = vmatpush1.msra.mxu0 0.0
        %2249 = vmatprep.subr.mxu0 0.0
        %2250 = vmatpush1.msra.mxu0 0.0
        %2251 = vmatprep.subr.mxu0 0.0
        %2252 = vmatpush1.msra.mxu0 0.0
        %2253 = vmatprep.subr.mxu0 0.0
        %2254 = vmatpush1.msra.mxu0 0.0
        %2255 = vmatprep.subr.mxu0 0.0
        %2256 = vmatpush1.msra.mxu0 0.0
        %2257 = vmatprep.subr.mxu0 0.0
        %2258 = vmatpush1.msra.mxu0 0.0
        %2259 = vmatprep.subr.mxu0 0.0
        %2260 = vmatpush1.msra.mxu0 0.0
        %2261 = vmatprep.subr.mxu0 0.0
        %2262 = vmatpush1.msra.mxu0 0.0
        %2263 = vmatprep.subr.mxu0 0.0
        %2264 = vmatpush1.msra.mxu0 0.0
        %2265 = vmatprep.subr.mxu0 0.0
        %2266 = vmatpush1.msra.mxu0 0.0
        %2267 = vmatprep.subr.mxu0 0.0
        %2268 = vmatpush1.msra.mxu0 0.0
        %2269 = vmatprep.subr.mxu0 0.0
        %2270 = vmatpush1.msra.mxu0 0.0
        %2271 = vmatprep.subr.mxu0 0.0
        %2272 = vmatpush1.msra.mxu0 0.0
        %2273 = vmatprep.subr.mxu0 0.0
        %2274 = vmatpush1.msra.mxu0 0.0
        %2275 = vmatprep.subr.mxu0 0.0
        %2276 = vmatpush1.msra.mxu0 0.0
        %2277 = vmatprep.subr.mxu0 0.0
        %2278 = vmatpush1.msra.mxu0 0.0
        %2279 = vmatprep.subr.mxu0 0.0
        %2280 = vmatpush1.msra.mxu0 0.0
        %2281 = vmatprep.subr.mxu0 0.0
        %2282 = vmatpush1.msra.mxu0 0.0
        %2283 = vmatprep.mubr.f32.mxu0 0.0
        %2284 = vmatmul.mubr.f32.gmra.mrb[0].mxu0 %v2217
        %v2285 = vpop.f32.mrb[0].mxu0
        %v2286 = vadd.f32 0.0, %v2285
        %v2287 = vpop.f32.mrb[0].mxu0
        %2288 = vdwg.mxu0
        %2290 = vrot.lane.b32.xlu0 %v2286, 64
        %v2291 = vpop.permute.xlu0 %2290
        %vm2293 = vcmask 654848
        %2294 = vst.msk [vmem:[#allocation4] sm:$0xff] %vm2293, %v2291
        %2295 = vrot.lane.b32.xlu0 %v1396, 48
        %v2296 = vpop.permute.xlu0 %2295
        %2297 = vrot.lane.b32.xlu0 %v1398, 48
        %v2298 = vpop.permute.xlu0 %2297
        %v2299 = vsel %vm1442, %v2296, 0
        %v2301 = vsel %vm1442, %v2298, 0
        %2303 = vmatprep.subr.mxu0 0.0
        %2304 = vmatpush1.xpose.msra.mxu0 %v2301
        %2305 = vmatprep.subr.mxu0 0.0
        %2306 = vmatpush1.xpose.msra.mxu0 0.0
        %2307 = vmatprep.subr.mxu0 0.0
        %2308 = vmatpush1.xpose.msra.mxu0 0.0
        %2309 = vmatprep.subr.mxu0 0.0
        %2310 = vmatpush1.xpose.msra.mxu0 0.0
        %2311 = vmatprep.subr.mxu0 0.0
        %2312 = vmatpush1.xpose.msra.mxu0 0.0
        %2313 = vmatprep.subr.mxu0 0.0
        %2314 = vmatpush1.xpose.msra.mxu0 0.0
        %2315 = vmatprep.subr.mxu0 0.0
        %2316 = vmatpush1.xpose.msra.mxu0 0.0
        %2317 = vmatprep.subr.mxu0 0.0
        %2318 = vmatpush1.xpose.msra.mxu0 0.0
        %2319 = vmatprep.subr.mxu0 0.0
        %2320 = vmatpush1.xpose.msra.mxu0 0.0
        %2321 = vmatprep.subr.mxu0 0.0
        %2322 = vmatpush1.xpose.msra.mxu0 0.0
        %2323 = vmatprep.subr.mxu0 0.0
        %2324 = vmatpush1.xpose.msra.mxu0 0.0
        %2325 = vmatprep.subr.mxu0 0.0
        %2326 = vmatpush1.xpose.msra.mxu0 0.0
        %2327 = vmatprep.subr.mxu0 0.0
        %2328 = vmatpush1.xpose.msra.mxu0 0.0
        %2329 = vmatprep.subr.mxu0 0.0
        %2330 = vmatpush1.xpose.msra.mxu0 0.0
        %2331 = vmatprep.subr.mxu0 0.0
        %2332 = vmatpush1.xpose.msra.mxu0 0.0
        %2333 = vmatprep.subr.mxu0 0.0
        %2334 = vmatpush1.xpose.msra.mxu0 0.0
        %2335 = vmatprep.subr.mxu0 0.0
        %2336 = vmatpush1.xpose.msra.mxu0 0.0
        %2337 = vmatprep.subr.mxu0 0.0
        %2338 = vmatpush1.xpose.msra.mxu0 0.0
        %2339 = vmatprep.subr.mxu0 0.0
        %2340 = vmatpush1.xpose.msra.mxu0 0.0
        %2341 = vmatprep.subr.mxu0 0.0
        %2342 = vmatpush1.xpose.msra.mxu0 0.0
        %2343 = vmatprep.subr.mxu0 0.0
        %2344 = vmatpush1.xpose.msra.mxu0 0.0
        %2345 = vmatprep.subr.mxu0 0.0
        %2346 = vmatpush1.xpose.msra.mxu0 0.0
        %2347 = vmatprep.subr.mxu0 0.0
        %2348 = vmatpush1.xpose.msra.mxu0 0.0
        %2349 = vmatprep.subr.mxu0 0.0
        %2350 = vmatpush1.xpose.msra.mxu0 0.0
        %2351 = vmatprep.subr.mxu0 0.0
        %2352 = vmatpush1.xpose.msra.mxu0 0.0
        %2353 = vmatprep.subr.mxu0 0.0
        %2354 = vmatpush1.xpose.msra.mxu0 0.0
        %2355 = vmatprep.subr.mxu0 0.0
        %2356 = vmatpush1.xpose.msra.mxu0 0.0
        %2357 = vmatprep.subr.mxu0 0.0
        %2358 = vmatpush1.xpose.msra.mxu0 0.0
        %2359 = vmatprep.subr.mxu0 0.0
        %2360 = vmatpush1.xpose.msra.mxu0 0.0
        %2361 = vmatprep.subr.mxu0 0.0
        %2362 = vmatpush1.xpose.msra.mxu0 0.0
        %2363 = vmatprep.subr.mxu0 0.0
        %2364 = vmatpush1.xpose.msra.mxu0 0.0
        %2365 = vmatprep.subr.mxu0 0.0
        %2366 = vmatpush1.xpose.msra.mxu0 0.0
        %2367 = vmatprep.mubr.f32.mxu0 0.0
        %2368 = vmatmul.mubr.f32.gmra.mrb[0].mxu0 %v2299
        %v2369 = vpop.f32.mrb[0].mxu0
        %v2370 = vadd.f32 0.0, %v2369
        %v2371 = vpop.f32.mrb[0].mxu0
        %2372 = vdwg.mxu0
        %v2373 = vmul.f32 %v2370, 0.25
        %v2374 = vsel %vm1520, %v2373, -inf
        %2375 = vmax.xlane.f32.xlu0 %v2374
        %v2376 = vpop.xlane.xlu0 %2375
        %v2377 = vsub.f32 %v2373, %v2376
        %v2378 = vmul.f32 %v2377, 1.442695
        %v2379 = vpow.pop %v2378
        %v2380 = vsel %vm1520, %v2379, 0.0
        %2381 = vadd.xlane.f32.xlu0 %v2380
        %v2382 = vpop.xlane.xlu0 %2381
        %v2383 = vrcp.pop %v2382
        %v2384 = vmul.f32 %v2379, %v2383
        %2385 = vrot.lane.b32.xlu0 %v1437, 48
        %v2386 = vpop.permute.xlu0 %2385
        %v2389 = vsel %vm1520, %v2384, 0
        %2391 = vmatprep.subr.mxu0 0.0
        %2392 = vmatpush1.msra.mxu0 %v2386
        %2393 = vmatprep.subr.mxu0 0.0
        %2394 = vmatpush1.msra.mxu0 0.0
        %2395 = vmatprep.subr.mxu0 0.0
        %2396 = vmatpush1.msra.mxu0 0.0
        %2397 = vmatprep.subr.mxu0 0.0
        %2398 = vmatpush1.msra.mxu0 0.0
        %2399 = vmatprep.subr.mxu0 0.0
        %2400 = vmatpush1.msra.mxu0 0.0
        %2401 = vmatprep.subr.mxu0 0.0
        %2402 = vmatpush1.msra.mxu0 0.0
        %2403 = vmatprep.subr.mxu0 0.0
        %2404 = vmatpush1.msra.mxu0 0.0
        %2405 = vmatprep.subr.mxu0 0.0
        %2406 = vmatpush1.msra.mxu0 0.0
        %2407 = vmatprep.subr.mxu0 0.0
        %2408 = vmatpush1.msra.mxu0 0.0
        %2409 = vmatprep.subr.mxu0 0.0
        %2410 = vmatpush1.msra.mxu0 0.0
        %2411 = vmatprep.subr.mxu0 0.0
        %2412 = vmatpush1.msra.mxu0 0.0
        %2413 = vmatprep.subr.mxu0 0.0
        %2414 = vmatpush1.msra.mxu0 0.0
        %2415 = vmatprep.subr.mxu0 0.0
        %2416 = vmatpush1.msra.mxu0 0.0
        %2417 = vmatprep.subr.mxu0 0.0
        %2418 = vmatpush1.msra.mxu0 0.0
        %2419 = vmatprep.subr.mxu0 0.0
        %2420 = vmatpush1.msra.mxu0 0.0
        %2421 = vmatprep.subr.mxu0 0.0
        %2422 = vmatpush1.msra.mxu0 0.0
        %2423 = vmatprep.subr.mxu0 0.0
        %2424 = vmatpush1.msra.mxu0 0.0
        %2425 = vmatprep.subr.mxu0 0.0
        %2426 = vmatpush1.msra.mxu0 0.0
        %2427 = vmatprep.subr.mxu0 0.0
        %2428 = vmatpush1.msra.mxu0 0.0
        %2429 = vmatprep.subr.mxu0 0.0
        %2430 = vmatpush1.msra.mxu0 0.0
        %2431 = vmatprep.subr.mxu0 0.0
        %2432 = vmatpush1.msra.mxu0 0.0
        %2433 = vmatprep.subr.mxu0 0.0
        %2434 = vmatpush1.msra.mxu0 0.0
        %2435 = vmatprep.subr.mxu0 0.0
        %2436 = vmatpush1.msra.mxu0 0.0
        %2437 = vmatprep.subr.mxu0 0.0
        %2438 = vmatpush1.msra.mxu0 0.0
        %2439 = vmatprep.subr.mxu0 0.0
        %2440 = vmatpush1.msra.mxu0 0.0
        %2441 = vmatprep.subr.mxu0 0.0
        %2442 = vmatpush1.msra.mxu0 0.0
        %2443 = vmatprep.subr.mxu0 0.0
        %2444 = vmatpush1.msra.mxu0 0.0
        %2445 = vmatprep.subr.mxu0 0.0
        %2446 = vmatpush1.msra.mxu0 0.0
        %2447 = vmatprep.subr.mxu0 0.0
        %2448 = vmatpush1.msra.mxu0 0.0
        %2449 = vmatprep.subr.mxu0 0.0
        %2450 = vmatpush1.msra.mxu0 0.0
        %2451 = vmatprep.subr.mxu0 0.0
        %2452 = vmatpush1.msra.mxu0 0.0
        %2453 = vmatprep.subr.mxu0 0.0
        %2454 = vmatpush1.msra.mxu0 0.0
        %2455 = vmatprep.mubr.f32.mxu0 0.0
        %2456 = vmatmul.mubr.f32.gmra.mrb[0].mxu0 %v2389
        %v2457 = vpop.f32.mrb[0].mxu0
        %v2458 = vadd.f32 0.0, %v2457
        %v2459 = vpop.f32.mrb[0].mxu0
        %2460 = vdwg.mxu0
        %2462 = vrot.lane.b32.xlu0 %v2458, 80
        %v2463 = vpop.permute.xlu0 %2462
        %vm2465 = vcmask 786048
        %2466 = vst.msk [vmem:[#allocation4] sm:$0xff] %vm2465, %v2463
        %2467 = vrot.lane.b32.xlu0 %v1396, 32
        %v2468 = vpop.permute.xlu0 %2467
        %2469 = vrot.lane.b32.xlu0 %v1398, 32
        %v2470 = vpop.permute.xlu0 %2469
        %v2471 = vsel %vm1442, %v2468, 0
        %v2473 = vsel %vm1442, %v2470, 0
        %2475 = vmatprep.subr.mxu0 0.0
        %2476 = vmatpush1.xpose.msra.mxu0 %v2473
        %2477 = vmatprep.subr.mxu0 0.0
        %2478 = vmatpush1.xpose.msra.mxu0 0.0
        %2479 = vmatprep.subr.mxu0 0.0
        %2480 = vmatpush1.xpose.msra.mxu0 0.0
        %2481 = vmatprep.subr.mxu0 0.0
        %2482 = vmatpush1.xpose.msra.mxu0 0.0
        %2483 = vmatprep.subr.mxu0 0.0
        %2484 = vmatpush1.xpose.msra.mxu0 0.0
        %2485 = vmatprep.subr.mxu0 0.0
        %2486 = vmatpush1.xpose.msra.mxu0 0.0
        %2487 = vmatprep.subr.mxu0 0.0
        %2488 = vmatpush1.xpose.msra.mxu0 0.0
        %2489 = vmatprep.subr.mxu0 0.0
        %2490 = vmatpush1.xpose.msra.mxu0 0.0
        %2491 = vmatprep.subr.mxu0 0.0
        %2492 = vmatpush1.xpose.msra.mxu0 0.0
        %2493 = vmatprep.subr.mxu0 0.0
        %2494 = vmatpush1.xpose.msra.mxu0 0.0
        %2495 = vmatprep.subr.mxu0 0.0
        %2496 = vmatpush1.xpose.msra.mxu0 0.0
        %2497 = vmatprep.subr.mxu0 0.0
        %2498 = vmatpush1.xpose.msra.mxu0 0.0
        %2499 = vmatprep.subr.mxu0 0.0
        %2500 = vmatpush1.xpose.msra.mxu0 0.0
        %2501 = vmatprep.subr.mxu0 0.0
        %2502 = vmatpush1.xpose.msra.mxu0 0.0
        %2503 = vmatprep.subr.mxu0 0.0
        %2504 = vmatpush1.xpose.msra.mxu0 0.0
        %2505 = vmatprep.subr.mxu0 0.0
        %2506 = vmatpush1.xpose.msra.mxu0 0.0
        %2507 = vmatprep.subr.mxu0 0.0
        %2508 = vmatpush1.xpose.msra.mxu0 0.0
        %2509 = vmatprep.subr.mxu0 0.0
        %2510 = vmatpush1.xpose.msra.mxu0 0.0
        %2511 = vmatprep.subr.mxu0 0.0
        %2512 = vmatpush1.xpose.msra.mxu0 0.0
        %2513 = vmatprep.subr.mxu0 0.0
        %2514 = vmatpush1.xpose.msra.mxu0 0.0
        %2515 = vmatprep.subr.mxu0 0.0
        %2516 = vmatpush1.xpose.msra.mxu0 0.0
        %2517 = vmatprep.subr.mxu0 0.0
        %2518 = vmatpush1.xpose.msra.mxu0 0.0
        %2519 = vmatprep.subr.mxu0 0.0
        %2520 = vmatpush1.xpose.msra.mxu0 0.0
        %2521 = vmatprep.subr.mxu0 0.0
        %2522 = vmatpush1.xpose.msra.mxu0 0.0
        %2523 = vmatprep.subr.mxu0 0.0
        %2524 = vmatpush1.xpose.msra.mxu0 0.0
        %2525 = vmatprep.subr.mxu0 0.0
        %2526 = vmatpush1.xpose.msra.mxu0 0.0
        %2527 = vmatprep.subr.mxu0 0.0
        %2528 = vmatpush1.xpose.msra.mxu0 0.0
        %2529 = vmatprep.subr.mxu0 0.0
        %2530 = vmatpush1.xpose.msra.mxu0 0.0
        %2531 = vmatprep.subr.mxu0 0.0
        %2532 = vmatpush1.xpose.msra.mxu0 0.0
        %2533 = vmatprep.subr.mxu0 0.0
        %2534 = vmatpush1.xpose.msra.mxu0 0.0
        %2535 = vmatprep.subr.mxu0 0.0
        %2536 = vmatpush1.xpose.msra.mxu0 0.0
        %2537 = vmatprep.subr.mxu0 0.0
        %2538 = vmatpush1.xpose.msra.mxu0 0.0
        %2539 = vmatprep.mubr.f32.mxu0 0.0
        %2540 = vmatmul.mubr.f32.gmra.mrb[0].mxu0 %v2471
        %v2541 = vpop.f32.mrb[0].mxu0
        %v2542 = vadd.f32 0.0, %v2541
        %v2543 = vpop.f32.mrb[0].mxu0
        %2544 = vdwg.mxu0
        %v2545 = vmul.f32 %v2542, 0.25
        %v2546 = vsel %vm1520, %v2545, -inf
        %2547 = vmax.xlane.f32.xlu0 %v2546
        %v2548 = vpop.xlane.xlu0 %2547
        %v2549 = vsub.f32 %v2545, %v2548
        %v2550 = vmul.f32 %v2549, 1.442695
        %v2551 = vpow.pop %v2550
        %v2552 = vsel %vm1520, %v2551, 0.0
        %2553 = vadd.xlane.f32.xlu0 %v2552
        %v2554 = vpop.xlane.xlu0 %2553
        %v2555 = vrcp.pop %v2554
        %v2556 = vmul.f32 %v2551, %v2555
        %2557 = vrot.lane.b32.xlu0 %v1437, 32
        %v2558 = vpop.permute.xlu0 %2557
        %v2561 = vsel %vm1520, %v2556, 0
        %2563 = vmatprep.subr.mxu0 0.0
        %2564 = vmatpush1.msra.mxu0 %v2558
        %2565 = vmatprep.subr.mxu0 0.0
        %2566 = vmatpush1.msra.mxu0 0.0
        %2567 = vmatprep.subr.mxu0 0.0
        %2568 = vmatpush1.msra.mxu0 0.0
        %2569 = vmatprep.subr.mxu0 0.0
        %2570 = vmatpush1.msra.mxu0 0.0
        %2571 = vmatprep.subr.mxu0 0.0
        %2572 = vmatpush1.msra.mxu0 0.0
        %2573 = vmatprep.subr.mxu0 0.0
        %2574 = vmatpush1.msra.mxu0 0.0
        %2575 = vmatprep.subr.mxu0 0.0
        %2576 = vmatpush1.msra.mxu0 0.0
        %2577 = vmatprep.subr.mxu0 0.0
        %2578 = vmatpush1.msra.mxu0 0.0
        %2579 = vmatprep.subr.mxu0 0.0
        %2580 = vmatpush1.msra.mxu0 0.0
        %2581 = vmatprep.subr.mxu0 0.0
        %2582 = vmatpush1.msra.mxu0 0.0
        %2583 = vmatprep.subr.mxu0 0.0
        %2584 = vmatpush1.msra.mxu0 0.0
        %2585 = vmatprep.subr.mxu0 0.0
        %2586 = vmatpush1.msra.mxu0 0.0
        %2587 = vmatprep.subr.mxu0 0.0
        %2588 = vmatpush1.msra.mxu0 0.0
        %2589 = vmatprep.subr.mxu0 0.0
        %2590 = vmatpush1.msra.mxu0 0.0
        %2591 = vmatprep.subr.mxu0 0.0
        %2592 = vmatpush1.msra.mxu0 0.0
        %2593 = vmatprep.subr.mxu0 0.0
        %2594 = vmatpush1.msra.mxu0 0.0
        %2595 = vmatprep.subr.mxu0 0.0
        %2596 = vmatpush1.msra.mxu0 0.0
        %2597 = vmatprep.subr.mxu0 0.0
        %2598 = vmatpush1.msra.mxu0 0.0
        %2599 = vmatprep.subr.mxu0 0.0
        %2600 = vmatpush1.msra.mxu0 0.0
        %2601 = vmatprep.subr.mxu0 0.0
        %2602 = vmatpush1.msra.mxu0 0.0
        %2603 = vmatprep.subr.mxu0 0.0
        %2604 = vmatpush1.msra.mxu0 0.0
        %2605 = vmatprep.subr.mxu0 0.0
        %2606 = vmatpush1.msra.mxu0 0.0
        %2607 = vmatprep.subr.mxu0 0.0
        %2608 = vmatpush1.msra.mxu0 0.0
        %2609 = vmatprep.subr.mxu0 0.0
        %2610 = vmatpush1.msra.mxu0 0.0
        %2611 = vmatprep.subr.mxu0 0.0
        %2612 = vmatpush1.msra.mxu0 0.0
        %2613 = vmatprep.subr.mxu0 0.0
        %2614 = vmatpush1.msra.mxu0 0.0
        %2615 = vmatprep.subr.mxu0 0.0
        %2616 = vmatpush1.msra.mxu0 0.0
        %2617 = vmatprep.subr.mxu0 0.0
        %2618 = vmatpush1.msra.mxu0 0.0
        %2619 = vmatprep.subr.mxu0 0.0
        %2620 = vmatpush1.msra.mxu0 0.0
        %2621 = vmatprep.subr.mxu0 0.0
        %2622 = vmatpush1.msra.mxu0 0.0
        %2623 = vmatprep.subr.mxu0 0.0
        %2624 = vmatpush1.msra.mxu0 0.0
        %2625 = vmatprep.subr.mxu0 0.0
        %2626 = vmatpush1.msra.mxu0 0.0
        %2627 = vmatprep.mubr.f32.mxu0 0.0
        %2628 = vmatmul.mubr.f32.gmra.mrb[0].mxu0 %v2561
        %v2629 = vpop.f32.mrb[0].mxu0
        %v2630 = vadd.f32 0.0, %v2629
        %v2631 = vpop.f32.mrb[0].mxu0
        %2632 = vdwg.mxu0
        %2634 = vrot.lane.b32.xlu0 %v2630, 96
        %v2635 = vpop.permute.xlu0 %2634
        %vm2637 = vcmask 917248
        %2638 = vst.msk [vmem:[#allocation4] sm:$0xff] %vm2637, %v2635
        %2639 = vrot.lane.b32.xlu0 %v1396, 16
        %v2640 = vpop.permute.xlu0 %2639
        %2641 = vrot.lane.b32.xlu0 %v1398, 16
        %v2642 = vpop.permute.xlu0 %2641
        %v2643 = vsel %vm1442, %v2640, 0
        %v2645 = vsel %vm1442, %v2642, 0
        %2647 = vmatprep.subr.mxu0 0.0
        %2648 = vmatpush1.xpose.msra.mxu0 %v2645
        %2649 = vmatprep.subr.mxu0 0.0
        %2650 = vmatpush1.xpose.msra.mxu0 0.0
        %2651 = vmatprep.subr.mxu0 0.0
        %2652 = vmatpush1.xpose.msra.mxu0 0.0
        %2653 = vmatprep.subr.mxu0 0.0
        %2654 = vmatpush1.xpose.msra.mxu0 0.0
        %2655 = vmatprep.subr.mxu0 0.0
        %2656 = vmatpush1.xpose.msra.mxu0 0.0
        %2657 = vmatprep.subr.mxu0 0.0
        %2658 = vmatpush1.xpose.msra.mxu0 0.0
        %2659 = vmatprep.subr.mxu0 0.0
        %2660 = vmatpush1.xpose.msra.mxu0 0.0
        %2661 = vmatprep.subr.mxu0 0.0
        %2662 = vmatpush1.xpose.msra.mxu0 0.0
        %2663 = vmatprep.subr.mxu0 0.0
        %2664 = vmatpush1.xpose.msra.mxu0 0.0
        %2665 = vmatprep.subr.mxu0 0.0
        %2666 = vmatpush1.xpose.msra.mxu0 0.0
        %2667 = vmatprep.subr.mxu0 0.0
        %2668 = vmatpush1.xpose.msra.mxu0 0.0
        %2669 = vmatprep.subr.mxu0 0.0
        %2670 = vmatpush1.xpose.msra.mxu0 0.0
        %2671 = vmatprep.subr.mxu0 0.0
        %2672 = vmatpush1.xpose.msra.mxu0 0.0
        %2673 = vmatprep.subr.mxu0 0.0
        %2674 = vmatpush1.xpose.msra.mxu0 0.0
        %2675 = vmatprep.subr.mxu0 0.0
        %2676 = vmatpush1.xpose.msra.mxu0 0.0
        %2677 = vmatprep.subr.mxu0 0.0
        %2678 = vmatpush1.xpose.msra.mxu0 0.0
        %2679 = vmatprep.subr.mxu0 0.0
        %2680 = vmatpush1.xpose.msra.mxu0 0.0
        %2681 = vmatprep.subr.mxu0 0.0
        %2682 = vmatpush1.xpose.msra.mxu0 0.0
        %2683 = vmatprep.subr.mxu0 0.0
        %2684 = vmatpush1.xpose.msra.mxu0 0.0
        %2685 = vmatprep.subr.mxu0 0.0
        %2686 = vmatpush1.xpose.msra.mxu0 0.0
        %2687 = vmatprep.subr.mxu0 0.0
        %2688 = vmatpush1.xpose.msra.mxu0 0.0
        %2689 = vmatprep.subr.mxu0 0.0
        %2690 = vmatpush1.xpose.msra.mxu0 0.0
        %2691 = vmatprep.subr.mxu0 0.0
        %2692 = vmatpush1.xpose.msra.mxu0 0.0
        %2693 = vmatprep.subr.mxu0 0.0
        %2694 = vmatpush1.xpose.msra.mxu0 0.0
        %2695 = vmatprep.subr.mxu0 0.0
        %2696 = vmatpush1.xpose.msra.mxu0 0.0
        %2697 = vmatprep.subr.mxu0 0.0
        %2698 = vmatpush1.xpose.msra.mxu0 0.0
        %2699 = vmatprep.subr.mxu0 0.0
        %2700 = vmatpush1.xpose.msra.mxu0 0.0
        %2701 = vmatprep.subr.mxu0 0.0
        %2702 = vmatpush1.xpose.msra.mxu0 0.0
        %2703 = vmatprep.subr.mxu0 0.0
        %2704 = vmatpush1.xpose.msra.mxu0 0.0
        %2705 = vmatprep.subr.mxu0 0.0
        %2706 = vmatpush1.xpose.msra.mxu0 0.0
        %2707 = vmatprep.subr.mxu0 0.0
        %2708 = vmatpush1.xpose.msra.mxu0 0.0
        %2709 = vmatprep.subr.mxu0 0.0
        %2710 = vmatpush1.xpose.msra.mxu0 0.0
        %2711 = vmatprep.mubr.f32.mxu0 0.0
        %2712 = vmatmul.mubr.f32.gmra.mrb[0].mxu0 %v2643
        %v2713 = vpop.f32.mrb[0].mxu0
        %v2714 = vadd.f32 0.0, %v2713
        %v2715 = vpop.f32.mrb[0].mxu0
        %2716 = vdwg.mxu0
        %v2717 = vmul.f32 %v2714, 0.25
        %v2718 = vsel %vm1520, %v2717, -inf
        %2719 = vmax.xlane.f32.xlu0 %v2718
        %v2720 = vpop.xlane.xlu0 %2719
        %v2721 = vsub.f32 %v2717, %v2720
        %v2722 = vmul.f32 %v2721, 1.442695
        %v2723 = vpow.pop %v2722
        %v2724 = vsel %vm1520, %v2723, 0.0
        %2725 = vadd.xlane.f32.xlu0 %v2724
        %v2726 = vpop.xlane.xlu0 %2725
        %v2727 = vrcp.pop %v2726
        %v2728 = vmul.f32 %v2723, %v2727
        %2729 = vrot.lane.b32.xlu0 %v1437, 16
        %v2730 = vpop.permute.xlu0 %2729
        %v2733 = vsel %vm1520, %v2728, 0
        %2735 = vmatprep.subr.mxu0 0.0
        %2736 = vmatpush1.msra.mxu0 %v2730
        %2737 = vmatprep.subr.mxu0 0.0
        %2738 = vmatpush1.msra.mxu0 0.0
        %2739 = vmatprep.subr.mxu0 0.0
        %2740 = vmatpush1.msra.mxu0 0.0
        %2741 = vmatprep.subr.mxu0 0.0
        %2742 = vmatpush1.msra.mxu0 0.0
        %2743 = vmatprep.subr.mxu0 0.0
        %2744 = vmatpush1.msra.mxu0 0.0
        %2745 = vmatprep.subr.mxu0 0.0
        %2746 = vmatpush1.msra.mxu0 0.0
        %2747 = vmatprep.subr.mxu0 0.0
        %2748 = vmatpush1.msra.mxu0 0.0
        %2749 = vmatprep.subr.mxu0 0.0
        %2750 = vmatpush1.msra.mxu0 0.0
        %2751 = vmatprep.subr.mxu0 0.0
        %2752 = vmatpush1.msra.mxu0 0.0
        %2753 = vmatprep.subr.mxu0 0.0
        %2754 = vmatpush1.msra.mxu0 0.0
        %2755 = vmatprep.subr.mxu0 0.0
        %2756 = vmatpush1.msra.mxu0 0.0
        %2757 = vmatprep.subr.mxu0 0.0
        %2758 = vmatpush1.msra.mxu0 0.0
        %2759 = vmatprep.subr.mxu0 0.0
        %2760 = vmatpush1.msra.mxu0 0.0
        %2761 = vmatprep.subr.mxu0 0.0
        %2762 = vmatpush1.msra.mxu0 0.0
        %2763 = vmatprep.subr.mxu0 0.0
        %2764 = vmatpush1.msra.mxu0 0.0
        %2765 = vmatprep.subr.mxu0 0.0
        %2766 = vmatpush1.msra.mxu0 0.0
        %2767 = vmatprep.subr.mxu0 0.0
        %2768 = vmatpush1.msra.mxu0 0.0
        %2769 = vmatprep.subr.mxu0 0.0
        %2770 = vmatpush1.msra.mxu0 0.0
        %2771 = vmatprep.subr.mxu0 0.0
        %2772 = vmatpush1.msra.mxu0 0.0
        %2773 = vmatprep.subr.mxu0 0.0
        %2774 = vmatpush1.msra.mxu0 0.0
        %2775 = vmatprep.subr.mxu0 0.0
        %2776 = vmatpush1.msra.mxu0 0.0
        %2777 = vmatprep.subr.mxu0 0.0
        %2778 = vmatpush1.msra.mxu0 0.0
        %2779 = vmatprep.subr.mxu0 0.0
        %2780 = vmatpush1.msra.mxu0 0.0
        %2781 = vmatprep.subr.mxu0 0.0
        %2782 = vmatpush1.msra.mxu0 0.0
        %2783 = vmatprep.subr.mxu0 0.0
        %2784 = vmatpush1.msra.mxu0 0.0
        %2785 = vmatprep.subr.mxu0 0.0
        %2786 = vmatpush1.msra.mxu0 0.0
        %2787 = vmatprep.subr.mxu0 0.0
        %2788 = vmatpush1.msra.mxu0 0.0
        %2789 = vmatprep.subr.mxu0 0.0
        %2790 = vmatpush1.msra.mxu0 0.0
        %2791 = vmatprep.subr.mxu0 0.0
        %2792 = vmatpush1.msra.mxu0 0.0
        %2793 = vmatprep.subr.mxu0 0.0
        %2794 = vmatpush1.msra.mxu0 0.0
        %2795 = vmatprep.subr.mxu0 0.0
        %2796 = vmatpush1.msra.mxu0 0.0
        %2797 = vmatprep.subr.mxu0 0.0
        %2798 = vmatpush1.msra.mxu0 0.0
        %2799 = vmatprep.mubr.f32.mxu0 0.0
        %2800 = vmatmul.mubr.f32.gmra.mrb[0].mxu0 %v2733
        %v2801 = vpop.f32.mrb[0].mxu0
        %v2802 = vadd.f32 0.0, %v2801
        %v2803 = vpop.f32.mrb[0].mxu0
        %2804 = vdwg.mxu0
        %2806 = vrot.lane.b32.xlu0 %v2802, 112
        %v2807 = vpop.permute.xlu0 %2806
        %vm2809 = vcmask 1048448
        %2810 = vst.msk [vmem:[#allocation4] sm:$0xff] %vm2809, %v2807
        %v2811 = vld [vmem:[#allocation4] sm:$0xff]
        %v2812 = vpack.c.bf16 %v2811, %v2811
        %v2814 = vlaneseq
        %v2815 = vshrl.u32 %v2814, 7
        %v2816 = vsub.s32 0, %v2815
        %v2817 = vrot.slane %v1215, %v2816
        %v2835 = vunpack.c.l.b16 %v1199
        %v2836 = vunpack.c.l.b16 %v1200
        %v2837 = vunpack.c.l.b16 %v1201
        %v2838 = vunpack.c.l.b16 %v1202
        %v2839 = vunpack.c.l.b16 %v1203
        %v2840 = vunpack.c.l.b16 %v1204
        %v2841 = vunpack.c.l.b16 %v1205
        %v2842 = vunpack.c.l.b16 %v1206
        %v2843 = vunpack.c.l.b16 %v1207
        %v2844 = vunpack.c.l.b16 %v1208
        %v2845 = vunpack.c.l.b16 %v1209
        %v2846 = vunpack.c.l.b16 %v1210
        %v2847 = vunpack.c.l.b16 %v1211
        %v2848 = vunpack.c.l.b16 %v1212
        %v2849 = vunpack.c.l.b16 %v1213
        %v2850 = vunpack.c.l.b16 %v1214
        %v2851 = vpack.c.b16 %v2836, %v2835
        %v2852 = vpack.c.b16 %v2838, %v2837
        %v2853 = vpack.c.b16 %v2840, %v2839
        %v2854 = vpack.c.b16 %v2842, %v2841
        %v2855 = vpack.c.b16 %v2844, %v2843
        %v2856 = vpack.c.b16 %v2846, %v2845
        %v2857 = vpack.c.b16 %v2848, %v2847
        %v2858 = vpack.c.b16 %v2850, %v2849
        %2867 = vmatprep.subr.bf16.mxu0 0
        %2868 = vmatpush1.bf16.msra.mxu0 %v2851
        %2869 = vmatprep.subr.bf16.mxu0 0
        %2870 = vmatpush1.bf16.msra.mxu0 %v2852
        %2871 = vmatprep.subr.bf16.mxu0 0
        %2872 = vmatpush1.bf16.msra.mxu0 %v2853
        %2873 = vmatprep.subr.bf16.mxu0 0
        %2874 = vmatpush1.bf16.msra.mxu0 %v2854
        %2875 = vmatprep.subr.bf16.mxu0 0
        %2876 = vmatpush1.bf16.msra.mxu0 %v2855
        %2877 = vmatprep.subr.bf16.mxu0 0
        %2878 = vmatpush1.bf16.msra.mxu0 %v2856
        %2879 = vmatprep.subr.bf16.mxu0 0
        %2880 = vmatpush1.bf16.msra.mxu0 %v2857
        %2881 = vmatprep.subr.bf16.mxu0 0
        %2882 = vmatpush1.bf16.msra.mxu0 %v2858
        %2883 = vmatprep.subr.bf16.mxu0 0
        %2884 = vmatpush1.bf16.msra.mxu0 0
        %2885 = vmatprep.subr.bf16.mxu0 0
        %2886 = vmatpush1.bf16.msra.mxu0 0
        %2887 = vmatprep.subr.bf16.mxu0 0
        %2888 = vmatpush1.bf16.msra.mxu0 0
        %2889 = vmatprep.subr.bf16.mxu0 0
        %2890 = vmatpush1.bf16.msra.mxu0 0
        %2891 = vmatprep.subr.bf16.mxu0 0
        %2892 = vmatpush1.bf16.msra.mxu0 0
        %2893 = vmatprep.subr.bf16.mxu0 0
        %2894 = vmatpush1.bf16.msra.mxu0 0
        %2895 = vmatprep.subr.bf16.mxu0 0
        %2896 = vmatpush1.bf16.msra.mxu0 0
        %2897 = vmatprep.subr.bf16.mxu0 0
        %2898 = vmatpush1.bf16.msra.mxu0 0
        %2899 = vmatprep.mubr.bf16.mxu0 0
        %2900 = vmatmul.mubr.bf16.gmra.mrb[0].mxu0 %v2812
        %v2901 = vpop.f32.mrb[0].mxu0
        %v2902 = vadd.f32 %v2817, %v2901
        %v2903 = vpop.f32.mrb[0].mxu0
        %v2904 = vpop.f32.mrb[0].mxu0
        %v2905 = vpop.f32.mrb[0].mxu0
        %2906 = vdwg.mxu0
        %v2907 = vadd.f32 %v1164, %v2902
        %2908 = vadd.xlane.f32.xlu0 %v2907
        %v2909 = vpop.xlane.xlu0 %2908
        %v2910 = vrcp.pop 128.0
        %v2911 = vmul.f32 %v2909, %v2910
        %v2912 = vsub.f32 %v2907, %v2911
        %v2913 = vmul.f32 %v2912, %v2912
        %2914 = vadd.xlane.f32.xlu0 %v2913
        %v2915 = vpop.xlane.xlu0 %2914
        %v2916 = vmul.f32 %v2915, %v2910
        %v2917 = vadd.f32 %v2916, 1e-05
        %v2918 = vrsqrt.pop %v2917
        %v2919 = vmul.f32 %v2912, %v2918
        %v2920 = vlaneseq
        %v2921 = vshrl.u32 %v2920, 7
        %v2922 = vsub.s32 2, %v2921
        %v2923 = vrot.slane %v1165, %v2922
        %v2924 = vmul.f32 %v2919, %v2923
        %v2925 = vlaneseq
        %v2926 = vshrl.u32 %v2925, 7
        %v2927 = vsub.s32 3, %v2926
        %v2928 = vrot.slane %v1165, %v2927
        %v2929 = vadd.f32 %v2924, %v2928
        %v2930 = vld [vmem:[#allocation19] sm:$0xff]
        %v2931 = vld [vmem:[#allocation19 + $0x8] sm:$0xff]
        %v2932 = vld [vmem:[#allocation19 + $0x10] sm:$0xff]
        %v2933 = vld [vmem:[#allocation19 + $0x18] sm:$0xff]
        %v2934 = vld [vmem:[#allocation19 + $0x20] sm:$0xff]
        %v2935 = vld [vmem:[#allocation19 + $0x28] sm:$0xff]
        %v2936 = vld [vmem:[#allocation19 + $0x30] sm:$0xff]
        %v2937 = vld [vmem:[#allocation19 + $0x38] sm:$0xff]
        %v2938 = vld [vmem:[#allocation19 + $0x40] sm:$0xff]
        %v2939 = vld [vmem:[#allocation19 + $0x48] sm:$0xff]
        %v2940 = vld [vmem:[#allocation19 + $0x50] sm:$0xff]
        %v2941 = vld [vmem:[#allocation19 + $0x58] sm:$0xff]
        %v2942 = vld [vmem:[#allocation19 + $0x60] sm:$0xff]
        %v2943 = vld [vmem:[#allocation19 + $0x68] sm:$0xff]
        %v2944 = vld [vmem:[#allocation19 + $0x70] sm:$0xff]
        %v2945 = vld [vmem:[#allocation19 + $0x78] sm:$0xff]
        %v2946 = vld [vmem:[#allocation19 + $0x80] sm:$0xff]
        %v2947 = vld [vmem:[#allocation19 + $0x88] sm:$0xff]
        %v2948 = vld [vmem:[#allocation19 + $0x90] sm:$0xff]
        %v2949 = vld [vmem:[#allocation19 + $0x98] sm:$0xff]
        %v2950 = vld [vmem:[#allocation19 + $0xa0] sm:$0xff]
        %v2951 = vld [vmem:[#allocation19 + $0xa8] sm:$0xff]
        %v2952 = vld [vmem:[#allocation19 + $0xb0] sm:$0xff]
        %v2953 = vld [vmem:[#allocation19 + $0xb8] sm:$0xff]
        %v2954 = vld [vmem:[#allocation19 + $0xc0] sm:$0xff]
        %v2955 = vld [vmem:[#allocation19 + $0xc8] sm:$0xff]
        %v2956 = vld [vmem:[#allocation19 + $0xd0] sm:$0xff]
        %v2957 = vld [vmem:[#allocation19 + $0xd8] sm:$0xff]
        %v2958 = vld [vmem:[#allocation19 + $0xe0] sm:$0xff]
        %v2959 = vld [vmem:[#allocation19 + $0xe8] sm:$0xff]
        %v2960 = vld [vmem:[#allocation19 + $0xf0] sm:$0xff]
        %v2961 = vld [vmem:[#allocation19 + $0xf8] sm:$0xff]
        %v2962 = vpack.c.bf16 %v2929, %v2929
        %v2963 = vld [vmem:[#allocation21] sm:$0xf]
        %v2965 = vlaneseq
        %v2966 = vshrl.u32 %v2965, 7
        %v2967 = vsub.s32 0, %v2966
        %v2968 = vrot.slane %v2963, %v2967
        %v2969 = vlaneseq
        %v2970 = vshrl.u32 %v2969, 7
        %v2971 = vsub.s32 1, %v2970
        %v2972 = vrot.slane %v2963, %v2971
        %v2973 = vlaneseq
        %v2974 = vshrl.u32 %v2973, 7
        %v2975 = vsub.s32 2, %v2974
        %v2976 = vrot.slane %v2963, %v2975
        %v2977 = vlaneseq
        %v2978 = vshrl.u32 %v2977, 7
        %v2979 = vsub.s32 3, %v2978
        %v2980 = vrot.slane %v2963, %v2979
        %v3017 = vunpack.c.l.b16 %v2930
        %v3018 = vunpack.c.h.b16 %v2930
        %v3019 = vunpack.c.l.b16 %v2931
        %v3020 = vunpack.c.h.b16 %v2931
        %v3021 = vunpack.c.l.b16 %v2932
        %v3022 = vunpack.c.h.b16 %v2932
        %v3023 = vunpack.c.l.b16 %v2933
        %v3024 = vunpack.c.h.b16 %v2933
        %v3025 = vunpack.c.l.b16 %v2934
        %v3026 = vunpack.c.h.b16 %v2934
        %v3027 = vunpack.c.l.b16 %v2935
        %v3028 = vunpack.c.h.b16 %v2935
        %v3029 = vunpack.c.l.b16 %v2936
        %v3030 = vunpack.c.h.b16 %v2936
        %v3031 = vunpack.c.l.b16 %v2937
        %v3032 = vunpack.c.h.b16 %v2937
        %v3033 = vunpack.c.l.b16 %v2938
        %v3034 = vunpack.c.h.b16 %v2938
        %v3035 = vunpack.c.l.b16 %v2939
        %v3036 = vunpack.c.h.b16 %v2939
        %v3037 = vunpack.c.l.b16 %v2940
        %v3038 = vunpack.c.h.b16 %v2940
        %v3039 = vunpack.c.l.b16 %v2941
        %v3040 = vunpack.c.h.b16 %v2941
        %v3041 = vunpack.c.l.b16 %v2942
        %v3042 = vunpack.c.h.b16 %v2942
        %v3043 = vunpack.c.l.b16 %v2943
        %v3044 = vunpack.c.h.b16 %v2943
        %v3045 = vunpack.c.l.b16 %v2944
        %v3046 = vunpack.c.h.b16 %v2944
        %v3047 = vunpack.c.l.b16 %v2945
        %v3048 = vunpack.c.h.b16 %v2945
        %v3049 = vunpack.c.l.b16 %v2946
        %v3050 = vunpack.c.h.b16 %v2946
        %v3051 = vunpack.c.l.b16 %v2947
        %v3052 = vunpack.c.h.b16 %v2947
        %v3053 = vunpack.c.l.b16 %v2948
        %v3054 = vunpack.c.h.b16 %v2948
        %v3055 = vunpack.c.l.b16 %v2949
        %v3056 = vunpack.c.h.b16 %v2949
        %v3057 = vunpack.c.l.b16 %v2950
        %v3058 = vunpack.c.h.b16 %v2950
        %v3059 = vunpack.c.l.b16 %v2951
        %v3060 = vunpack.c.h.b16 %v2951
        %v3061 = vunpack.c.l.b16 %v2952
        %v3062 = vunpack.c.h.b16 %v2952
        %v3063 = vunpack.c.l.b16 %v2953
        %v3064 = vunpack.c.h.b16 %v2953
        %v3065 = vunpack.c.l.b16 %v2954
        %v3066 = vunpack.c.h.b16 %v2954
        %v3067 = vunpack.c.l.b16 %v2955
        %v3068 = vunpack.c.h.b16 %v2955
        %v3069 = vunpack.c.l.b16 %v2956
        %v3070 = vunpack.c.h.b16 %v2956
        %v3071 = vunpack.c.l.b16 %v2957
        %v3072 = vunpack.c.h.b16 %v2957
        %v3073 = vunpack.c.l.b16 %v2958
        %v3074 = vunpack.c.h.b16 %v2958
        %v3075 = vunpack.c.l.b16 %v2959
        %v3076 = vunpack.c.h.b16 %v2959
        %v3077 = vunpack.c.l.b16 %v2960
        %v3078 = vunpack.c.h.b16 %v2960
        %v3079 = vunpack.c.l.b16 %v2961
        %v3080 = vunpack.c.h.b16 %v2961
        %v3081 = vpack.c.b16 %v3021, %v3017
        %v3082 = vpack.c.b16 %v3022, %v3018
        %v3083 = vpack.c.b16 %v3023, %v3019
        %v3084 = vpack.c.b16 %v3024, %v3020
        %v3085 = vpack.c.b16 %v3029, %v3025
        %v3086 = vpack.c.b16 %v3030, %v3026
        %v3087 = vpack.c.b16 %v3031, %v3027
        %v3088 = vpack.c.b16 %v3032, %v3028
        %v3089 = vpack.c.b16 %v3037, %v3033
        %v3090 = vpack.c.b16 %v3038, %v3034
        %v3091 = vpack.c.b16 %v3039, %v3035
        %v3092 = vpack.c.b16 %v3040, %v3036
        %v3093 = vpack.c.b16 %v3045, %v3041
        %v3094 = vpack.c.b16 %v3046, %v3042
        %v3095 = vpack.c.b16 %v3047, %v3043
        %v3096 = vpack.c.b16 %v3048, %v3044
        %v3097 = vpack.c.b16 %v3053, %v3049
        %v3098 = vpack.c.b16 %v3054, %v3050
        %v3099 = vpack.c.b16 %v3055, %v3051
        %v3100 = vpack.c.b16 %v3056, %v3052
        %v3101 = vpack.c.b16 %v3061, %v3057
        %v3102 = vpack.c.b16 %v3062, %v3058
        %v3103 = vpack.c.b16 %v3063, %v3059
        %v3104 = vpack.c.b16 %v3064, %v3060
        %v3105 = vpack.c.b16 %v3069, %v3065
        %v3106 = vpack.c.b16 %v3070, %v3066
        %v3107 = vpack.c.b16 %v3071, %v3067
        %v3108 = vpack.c.b16 %v3072, %v3068
        %v3109 = vpack.c.b16 %v3077, %v3073
        %v3110 = vpack.c.b16 %v3078, %v3074
        %v3111 = vpack.c.b16 %v3079, %v3075
        %v3112 = vpack.c.b16 %v3080, %v3076
        %3145 = vmatprep.subr.bf16.mxu0 %v3082
        %3146 = vmatpush1.bf16.msra.mxu0 %v3081
        %3147 = vmatprep.subr.bf16.mxu0 %v3086
        %3148 = vmatpush1.bf16.msra.mxu0 %v3085
        %3149 = vmatprep.subr.bf16.mxu0 %v3090
        %3150 = vmatpush1.bf16.msra.mxu0 %v3089
        %3151 = vmatprep.subr.bf16.mxu0 %v3094
        %3152 = vmatpush1.bf16.msra.mxu0 %v3093
        %3153 = vmatprep.subr.bf16.mxu0 %v3098
        %3154 = vmatpush1.bf16.msra.mxu0 %v3097
        %3155 = vmatprep.subr.bf16.mxu0 %v3102
        %3156 = vmatpush1.bf16.msra.mxu0 %v3101
        %3157 = vmatprep.subr.bf16.mxu0 %v3106
        %3158 = vmatpush1.bf16.msra.mxu0 %v3105
        %3159 = vmatprep.subr.bf16.mxu0 %v3110
        %3160 = vmatpush1.bf16.msra.mxu0 %v3109
        %3161 = vmatprep.subr.bf16.mxu0 0
        %3162 = vmatpush1.bf16.msra.mxu0 0
        %3163 = vmatprep.subr.bf16.mxu0 0
        %3164 = vmatpush1.bf16.msra.mxu0 0
        %3165 = vmatprep.subr.bf16.mxu0 0
        %3166 = vmatpush1.bf16.msra.mxu0 0
        %3167 = vmatprep.subr.bf16.mxu0 0
        %3168 = vmatpush1.bf16.msra.mxu0 0
        %3169 = vmatprep.subr.bf16.mxu0 0
        %3170 = vmatpush1.bf16.msra.mxu0 0
        %3171 = vmatprep.subr.bf16.mxu0 0
        %3172 = vmatpush1.bf16.msra.mxu0 0
        %3173 = vmatprep.subr.bf16.mxu0 0
        %3174 = vmatpush1.bf16.msra.mxu0 0
        %3175 = vmatprep.subr.bf16.mxu0 0
        %3176 = vmatpush1.bf16.msra.mxu0 0
        %3177 = vmatprep.mubr.bf16.mxu0 0
        %3178 = vmatmul.mubr.bf16.gmra.mrb[0].mxu0 %v2962
        %v3179 = vpop.f32.mrb[0].mxu0
        %v3180 = vadd.f32 %v2968, %v3179
        %v3181 = vpop.f32.mrb[0].mxu0
        %v3182 = vadd.f32 %v2972, %v3181
        %v3183 = vpop.f32.mrb[0].mxu0
        %v3184 = vpop.f32.mrb[0].mxu0
        %3185 = vdwg.mxu0
        %3186 = vmatprep.subr.bf16.mxu0 %v3084
        %3187 = vmatpush1.bf16.msra.mxu0 %v3083
        %3188 = vmatprep.subr.bf16.mxu0 %v3088
        %3189 = vmatpush1.bf16.msra.mxu0 %v3087
        %3190 = vmatprep.subr.bf16.mxu0 %v3092
        %3191 = vmatpush1.bf16.msra.mxu0 %v3091
        %3192 = vmatprep.subr.bf16.mxu0 %v3096
        %3193 = vmatpush1.bf16.msra.mxu0 %v3095
        %3194 = vmatprep.subr.bf16.mxu0 %v3100
        %3195 = vmatpush1.bf16.msra.mxu0 %v3099
        %3196 = vmatprep.subr.bf16.mxu0 %v3104
        %3197 = vmatpush1.bf16.msra.mxu0 %v3103
        %3198 = vmatprep.subr.bf16.mxu0 %v3108
        %3199 = vmatpush1.bf16.msra.mxu0 %v3107
        %3200 = vmatprep.subr.bf16.mxu0 %v3112
        %3201 = vmatpush1.bf16.msra.mxu0 %v3111
        %3202 = vmatprep.subr.bf16.mxu0 0
        %3203 = vmatpush1.bf16.msra.mxu0 0
        %3204 = vmatprep.subr.bf16.mxu0 0
        %3205 = vmatpush1.bf16.msra.mxu0 0
        %3206 = vmatprep.subr.bf16.mxu0 0
        %3207 = vmatpush1.bf16.msra.mxu0 0
        %3208 = vmatprep.subr.bf16.mxu0 0
        %3209 = vmatpush1.bf16.msra.mxu0 0
        %3210 = vmatprep.subr.bf16.mxu0 0
        %3211 = vmatpush1.bf16.msra.mxu0 0
        %3212 = vmatprep.subr.bf16.mxu0 0
        %3213 = vmatpush1.bf16.msra.mxu0 0
        %3214 = vmatprep.subr.bf16.mxu0 0
        %3215 = vmatpush1.bf16.msra.mxu0 0
        %3216 = vmatprep.subr.bf16.mxu0 0
        %3217 = vmatpush1.bf16.msra.mxu0 0
        %3218 = vmatprep.mubr.bf16.mxu0 0
        %3219 = vmatmul.mubr.bf16.gmra.mrb[0].mxu0 %v2962
        %v3220 = vpop.f32.mrb[0].mxu0
        %v3221 = vadd.f32 %v2976, %v3220
        %v3222 = vpop.f32.mrb[0].mxu0
        %v3223 = vadd.f32 %v2980, %v3222
        %v3224 = vpop.f32.mrb[0].mxu0
        %v3225 = vpop.f32.mrb[0].mxu0
        %3226 = vdwg.mxu0
        %v3227 = vmul.f32 %v3180, 0.5
        %v3228 = vmul.f32 %v3182, 0.5
        %v3229 = vmul.f32 %v3221, 0.5
        %v3230 = vmul.f32 %v3223, 0.5
        %v3231 = vmul.f32 %v3180, 0.044715
        %v3232 = vmul.f32 %v3182, 0.044715
        %v3233 = vmul.f32 %v3221, 0.044715
        %v3234 = vmul.f32 %v3223, 0.044715
        %v3235 = vmul.f32 %v3231, %v3180
        %v3236 = vmul.f32 %v3232, %v3182
        %v3237 = vmul.f32 %v3233, %v3221
        %v3238 = vmul.f32 %v3234, %v3223
        %v3239 = vmul.f32 %v3235, %v3180
        %v3240 = vmul.f32 %v3236, %v3182
        %v3241 = vmul.f32 %v3237, %v3221
        %v3242 = vmul.f32 %v3238, %v3223
        %v3243 = vadd.f32 %v3180, %v3239
        %v3244 = vadd.f32 %v3182, %v3240
        %v3245 = vadd.f32 %v3221, %v3241
        %v3246 = vadd.f32 %v3223, %v3242
        %v3247 = vmul.f32 %v3243, 0.7978846
        %v3248 = vmul.f32 %v3244, 0.7978846
        %v3249 = vmul.f32 %v3245, 0.7978846
        %v3250 = vmul.f32 %v3246, 0.7978846
        %v3251 = vtanh.pop %v3247
        %v3252 = vtanh.pop %v3248
        %v3253 = vtanh.pop %v3249
        %v3254 = vtanh.pop %v3250
        %v3255 = vadd.f32 %v3251, 1.0
        %v3256 = vadd.f32 %v3252, 1.0
        %v3257 = vadd.f32 %v3253, 1.0
        %v3258 = vadd.f32 %v3254, 1.0
        %v3259 = vmul.f32 %v3227, %v3255
        %v3260 = vmul.f32 %v3228, %v3256
        %v3261 = vmul.f32 %v3229, %v3257
        %v3262 = vmul.f32 %v3230, %v3258
        %v3263 = vld [vmem:[#allocation22] sm:$0xf]
        %v3264 = vld [vmem:[#allocation22 + $0x4] sm:$0xf]
        %v3265 = vld [vmem:[#allocation22 + $0x8] sm:$0xf]
        %v3266 = vld [vmem:[#allocation22 + $0xc] sm:$0xf]
        %v3267 = vld [vmem:[#allocation22 + $0x10] sm:$0xf]
        %v3268 = vld [vmem:[#allocation22 + $0x14] sm:$0xf]
        %v3269 = vld [vmem:[#allocation22 + $0x18] sm:$0xf]
        %v3270 = vld [vmem:[#allocation22 + $0x1c] sm:$0xf]
        %v3271 = vld [vmem:[#allocation22 + $0x20] sm:$0xf]
        %v3272 = vld [vmem:[#allocation22 + $0x24] sm:$0xf]
        %v3273 = vld [vmem:[#allocation22 + $0x28] sm:$0xf]
        %v3274 = vld [vmem:[#allocation22 + $0x2c] sm:$0xf]
        %v3275 = vld [vmem:[#allocation22 + $0x30] sm:$0xf]
        %v3276 = vld [vmem:[#allocation22 + $0x34] sm:$0xf]
        %v3277 = vld [vmem:[#allocation22 + $0x38] sm:$0xf]
        %v3278 = vld [vmem:[#allocation22 + $0x3c] sm:$0xf]
        %v3279 = vld [vmem:[#allocation22 + $0x40] sm:$0xf]
        %v3280 = vld [vmem:[#allocation22 + $0x44] sm:$0xf]
        %v3281 = vld [vmem:[#allocation22 + $0x48] sm:$0xf]
        %v3282 = vld [vmem:[#allocation22 + $0x4c] sm:$0xf]
        %v3283 = vld [vmem:[#allocation22 + $0x50] sm:$0xf]
        %v3284 = vld [vmem:[#allocation22 + $0x54] sm:$0xf]
        %v3285 = vld [vmem:[#allocation22 + $0x58] sm:$0xf]
        %v3286 = vld [vmem:[#allocation22 + $0x5c] sm:$0xf]
        %v3287 = vld [vmem:[#allocation22 + $0x60] sm:$0xf]
        %v3288 = vld [vmem:[#allocation22 + $0x64] sm:$0xf]
        %v3289 = vld [vmem:[#allocation22 + $0x68] sm:$0xf]
        %v3290 = vld [vmem:[#allocation22 + $0x6c] sm:$0xf]
        %v3291 = vld [vmem:[#allocation22 + $0x70] sm:$0xf]
        %v3292 = vld [vmem:[#allocation22 + $0x74] sm:$0xf]
        %v3293 = vld [vmem:[#allocation22 + $0x78] sm:$0xf]
        %v3294 = vld [vmem:[#allocation22 + $0x7c] sm:$0xf]
        %v3295 = vld [vmem:[#allocation22 + $0x80] sm:$0xf]
        %v3296 = vld [vmem:[#allocation22 + $0x84] sm:$0xf]
        %v3297 = vld [vmem:[#allocation22 + $0x88] sm:$0xf]
        %v3298 = vld [vmem:[#allocation22 + $0x8c] sm:$0xf]
        %v3299 = vld [vmem:[#allocation22 + $0x90] sm:$0xf]
        %v3300 = vld [vmem:[#allocation22 + $0x94] sm:$0xf]
        %v3301 = vld [vmem:[#allocation22 + $0x98] sm:$0xf]
        %v3302 = vld [vmem:[#allocation22 + $0x9c] sm:$0xf]
        %v3303 = vld [vmem:[#allocation22 + $0xa0] sm:$0xf]
        %v3304 = vld [vmem:[#allocation22 + $0xa4] sm:$0xf]
        %v3305 = vld [vmem:[#allocation22 + $0xa8] sm:$0xf]
        %v3306 = vld [vmem:[#allocation22 + $0xac] sm:$0xf]
        %v3307 = vld [vmem:[#allocation22 + $0xb0] sm:$0xf]
        %v3308 = vld [vmem:[#allocation22 + $0xb4] sm:$0xf]
        %v3309 = vld [vmem:[#allocation22 + $0xb8] sm:$0xf]
        %v3310 = vld [vmem:[#allocation22 + $0xbc] sm:$0xf]
        %v3311 = vld [vmem:[#allocation22 + $0xc0] sm:$0xf]
        %v3312 = vld [vmem:[#allocation22 + $0xc4] sm:$0xf]
        %v3313 = vld [vmem:[#allocation22 + $0xc8] sm:$0xf]
        %v3314 = vld [vmem:[#allocation22 + $0xcc] sm:$0xf]
        %v3315 = vld [vmem:[#allocation22 + $0xd0] sm:$0xf]
        %v3316 = vld [vmem:[#allocation22 + $0xd4] sm:$0xf]
        %v3317 = vld [vmem:[#allocation22 + $0xd8] sm:$0xf]
        %v3318 = vld [vmem:[#allocation22 + $0xdc] sm:$0xf]
        %v3319 = vld [vmem:[#allocation22 + $0xe0] sm:$0xf]
        %v3320 = vld [vmem:[#allocation22 + $0xe4] sm:$0xf]
        %v3321 = vld [vmem:[#allocation22 + $0xe8] sm:$0xf]
        %v3322 = vld [vmem:[#allocation22 + $0xec] sm:$0xf]
        %v3323 = vld [vmem:[#allocation22 + $0xf0] sm:$0xf]
        %v3324 = vld [vmem:[#allocation22 + $0xf4] sm:$0xf]
        %v3325 = vld [vmem:[#allocation22 + $0xf8] sm:$0xf]
        %v3326 = vld [vmem:[#allocation22 + $0xfc] sm:$0xf]
        %v3327 = vpack.c.bf16 %v3259, %v3259
        %v3328 = vpack.c.bf16 %v3260, %v3260
        %v3329 = vpack.c.bf16 %v3261, %v3261
        %v3330 = vpack.c.bf16 %v3262, %v3262
        %v3331 = vld [vmem:[#allocation24] sm:$0x1]
        %v3333 = vlaneseq
        %v3334 = vshrl.u32 %v3333, 7
        %v3335 = vsub.s32 0, %v3334
        %v3336 = vrot.slane %v3331, %v3335
        %v3402 = vunpack.c.l.b16 %v3263
        %v3403 = vunpack.c.l.b16 %v3264
        %v3404 = vunpack.c.l.b16 %v3265
        %v3405 = vunpack.c.l.b16 %v3266
        %v3406 = vunpack.c.l.b16 %v3267
        %v3407 = vunpack.c.l.b16 %v3268
        %v3408 = vunpack.c.l.b16 %v3269
        %v3409 = vunpack.c.l.b16 %v3270
        %v3410 = vunpack.c.l.b16 %v3271
        %v3411 = vunpack.c.l.b16 %v3272
        %v3412 = vunpack.c.l.b16 %v3273
        %v3413 = vunpack.c.l.b16 %v3274
        %v3414 = vunpack.c.l.b16 %v3275
        %v3415 = vunpack.c.l.b16 %v3276
        %v3416 = vunpack.c.l.b16 %v3277
        %v3417 = vunpack.c.l.b16 %v3278
        %v3418 = vunpack.c.l.b16 %v3279
        %v3419 = vunpack.c.l.b16 %v3280
        %v3420 = vunpack.c.l.b16 %v3281
        %v3421 = vunpack.c.l.b16 %v3282
        %v3422 = vunpack.c.l.b16 %v3283
        %v3423 = vunpack.c.l.b16 %v3284
        %v3424 = vunpack.c.l.b16 %v3285
        %v3425 = vunpack.c.l.b16 %v3286
        %v3426 = vunpack.c.l.b16 %v3287
        %v3427 = vunpack.c.l.b16 %v3288
        %v3428 = vunpack.c.l.b16 %v3289
        %v3429 = vunpack.c.l.b16 %v3290
        %v3430 = vunpack.c.l.b16 %v3291
        %v3431 = vunpack.c.l.b16 %v3292
        %v3432 = vunpack.c.l.b16 %v3293
        %v3433 = vunpack.c.l.b16 %v3294
        %v3434 = vunpack.c.l.b16 %v3295
        %v3435 = vunpack.c.l.b16 %v3296
        %v3436 = vunpack.c.l.b16 %v3297
        %v3437 = vunpack.c.l.b16 %v3298
        %v3438 = vunpack.c.l.b16 %v3299
        %v3439 = vunpack.c.l.b16 %v3300
        %v3440 = vunpack.c.l.b16 %v3301
        %v3441 = vunpack.c.l.b16 %v3302
        %v3442 = vunpack.c.l.b16 %v3303
        %v3443 = vunpack.c.l.b16 %v3304
        %v3444 = vunpack.c.l.b16 %v3305
        %v3445 = vunpack.c.l.b16 %v3306
        %v3446 = vunpack.c.l.b16 %v3307
        %v3447 = vunpack.c.l.b16 %v3308
        %v3448 = vunpack.c.l.b16 %v3309
        %v3449 = vunpack.c.l.b16 %v3310
        %v3450 = vunpack.c.l.b16 %v3311
        %v3451 = vunpack.c.l.b16 %v3312
        %v3452 = vunpack.c.l.b16 %v3313
        %v3453 = vunpack.c.l.b16 %v3314
        %v3454 = vunpack.c.l.b16 %v3315
        %v3455 = vunpack.c.l.b16 %v3316
        %v3456 = vunpack.c.l.b16 %v3317
        %v3457 = vunpack.c.l.b16 %v3318
        %v3458 = vunpack.c.l.b16 %v3319
        %v3459 = vunpack.c.l.b16 %v3320
        %v3460 = vunpack.c.l.b16 %v3321
        %v3461 = vunpack.c.l.b16 %v3322
        %v3462 = vunpack.c.l.b16 %v3323
        %v3463 = vunpack.c.l.b16 %v3324
        %v3464 = vunpack.c.l.b16 %v3325
        %v3465 = vunpack.c.l.b16 %v3326
        %v3466 = vpack.c.b16 %v3403, %v3402
        %v3467 = vpack.c.b16 %v3405, %v3404
        %v3468 = vpack.c.b16 %v3407, %v3406
        %v3469 = vpack.c.b16 %v3409, %v3408
        %v3470 = vpack.c.b16 %v3411, %v3410
        %v3471 = vpack.c.b16 %v3413, %v3412
        %v3472 = vpack.c.b16 %v3415, %v3414
        %v3473 = vpack.c.b16 %v3417, %v3416
        %v3474 = vpack.c.b16 %v3419, %v3418
        %v3475 = vpack.c.b16 %v3421, %v3420
        %v3476 = vpack.c.b16 %v3423, %v3422
        %v3477 = vpack.c.b16 %v3425, %v3424
        %v3478 = vpack.c.b16 %v3427, %v3426
        %v3479 = vpack.c.b16 %v3429, %v3428
        %v3480 = vpack.c.b16 %v3431, %v3430
        %v3481 = vpack.c.b16 %v3433, %v3432
        %v3482 = vpack.c.b16 %v3435, %v3434
        %v3483 = vpack.c.b16 %v3437, %v3436
        %v3484 = vpack.c.b16 %v3439, %v3438
        %v3485 = vpack.c.b16 %v3441, %v3440
        %v3486 = vpack.c.b16 %v3443, %v3442
        %v3487 = vpack.c.b16 %v3445, %v3444
        %v3488 = vpack.c.b16 %v3447, %v3446
        %v3489 = vpack.c.b16 %v3449, %v3448
        %v3490 = vpack.c.b16 %v3451, %v3450
        %v3491 = vpack.c.b16 %v3453, %v3452
        %v3492 = vpack.c.b16 %v3455, %v3454
        %v3493 = vpack.c.b16 %v3457, %v3456
        %v3494 = vpack.c.b16 %v3459, %v3458
        %v3495 = vpack.c.b16 %v3461, %v3460
        %v3496 = vpack.c.b16 %v3463, %v3462
        %v3497 = vpack.c.b16 %v3465, %v3464
        %3530 = vmatprep.subr.bf16.mxu0 0
        %3531 = vmatpush1.bf16.msra.mxu0 %v3466
        %3532 = vmatprep.subr.bf16.mxu0 0
        %3533 = vmatpush1.bf16.msra.mxu0 %v3467
        %3534 = vmatprep.subr.bf16.mxu0 0
        %3535 = vmatpush1.bf16.msra.mxu0 %v3468
        %3536 = vmatprep.subr.bf16.mxu0 0
        %3537 = vmatpush1.bf16.msra.mxu0 %v3469
        %3538 = vmatprep.subr.bf16.mxu0 0
        %3539 = vmatpush1.bf16.msra.mxu0 %v3470
        %3540 = vmatprep.subr.bf16.mxu0 0
        %3541 = vmatpush1.bf16.msra.mxu0 %v3471
        %3542 = vmatprep.subr.bf16.mxu0 0
        %3543 = vmatpush1.bf16.msra.mxu0 %v3472
        %3544 = vmatprep.subr.bf16.mxu0 0
        %3545 = vmatpush1.bf16.msra.mxu0 %v3473
        %3546 = vmatprep.subr.bf16.mxu0 0
        %3547 = vmatpush1.bf16.msra.mxu0 %v3474
        %3548 = vmatprep.subr.bf16.mxu0 0
        %3549 = vmatpush1.bf16.msra.mxu0 %v3475
        %3550 = vmatprep.subr.bf16.mxu0 0
        %3551 = vmatpush1.bf16.msra.mxu0 %v3476
        %3552 = vmatprep.subr.bf16.mxu0 0
        %3553 = vmatpush1.bf16.msra.mxu0 %v3477
        %3554 = vmatprep.subr.bf16.mxu0 0
        %3555 = vmatpush1.bf16.msra.mxu0 %v3478
        %3556 = vmatprep.subr.bf16.mxu0 0
        %3557 = vmatpush1.bf16.msra.mxu0 %v3479
        %3558 = vmatprep.subr.bf16.mxu0 0
        %3559 = vmatpush1.bf16.msra.mxu0 %v3480
        %3560 = vmatprep.subr.bf16.mxu0 0
        %3561 = vmatpush1.bf16.msra.mxu0 %v3481
        %3562 = vmatprep.mubr.bf16.mxu0 %v3328
        %3563 = vmatmul.mubr.bf16.gmra.mrb[0].mxu0 %v3327
        %v3564 = vpop.f32.mrb[0].mxu0
        %v3565 = vadd.f32 %v3336, %v3564
        %v3566 = vpop.f32.mrb[0].mxu0
        %v3567 = vpop.f32.mrb[0].mxu0
        %v3568 = vpop.f32.mrb[0].mxu0
        %3569 = vdwg.mxu0
        %3570 = vmatprep.subr.bf16.mxu0 0
        %3571 = vmatpush1.bf16.msra.mxu0 %v3482
        %3572 = vmatprep.subr.bf16.mxu0 0
        %3573 = vmatpush1.bf16.msra.mxu0 %v3483
        %3574 = vmatprep.subr.bf16.mxu0 0
        %3575 = vmatpush1.bf16.msra.mxu0 %v3484
        %3576 = vmatprep.subr.bf16.mxu0 0
        %3577 = vmatpush1.bf16.msra.mxu0 %v3485
        %3578 = vmatprep.subr.bf16.mxu0 0
        %3579 = vmatpush1.bf16.msra.mxu0 %v3486
        %3580 = vmatprep.subr.bf16.mxu0 0
        %3581 = vmatpush1.bf16.msra.mxu0 %v3487
        %3582 = vmatprep.subr.bf16.mxu0 0
        %3583 = vmatpush1.bf16.msra.mxu0 %v3488
        %3584 = vmatprep.subr.bf16.mxu0 0
        %3585 = vmatpush1.bf16.msra.mxu0 %v3489
        %3586 = vmatprep.subr.bf16.mxu0 0
        %3587 = vmatpush1.bf16.msra.mxu0 %v3490
        %3588 = vmatprep.subr.bf16.mxu0 0
        %3589 = vmatpush1.bf16.msra.mxu0 %v3491
        %3590 = vmatprep.subr.bf16.mxu0 0
        %3591 = vmatpush1.bf16.msra.mxu0 %v3492
        %3592 = vmatprep.subr.bf16.mxu0 0
        %3593 = vmatpush1.bf16.msra.mxu0 %v3493
        %3594 = vmatprep.subr.bf16.mxu0 0
        %3595 = vmatpush1.bf16.msra.mxu0 %v3494
        %3596 = vmatprep.subr.bf16.mxu0 0
        %3597 = vmatpush1.bf16.msra.mxu0 %v3495
        %3598 = vmatprep.subr.bf16.mxu0 0
        %3599 = vmatpush1.bf16.msra.mxu0 %v3496
        %3600 = vmatprep.subr.bf16.mxu0 0
        %3601 = vmatpush1.bf16.msra.mxu0 %v3497
        %3602 = vmatprep.mubr.bf16.mxu0 %v3330
        %3603 = vmatmul.mubr.bf16.gmra.mrb[0].mxu0 %v3329
        %v3604 = vpop.f32.mrb[0].mxu0
        %v3605 = vadd.f32 %v3565, %v3604
        %v3606 = vpop.f32.mrb[0].mxu0
        %v3607 = vpop.f32.mrb[0].mxu0
        %v3608 = vpop.f32.mrb[0].mxu0
        %3609 = vdwg.mxu0
        %v3610 = vadd.f32 %v2907, %v3605
        %3611 = vadd.xlane.f32.xlu0 %v3610
        %v3612 = vpop.xlane.xlu0 %3611
        %v3613 = vmul.f32 %v3612, %v2910
        %v3614 = vsub.f32 %v3610, %v3613
        %v3615 = vmul.f32 %v3614, %v3614
        %3616 = vadd.xlane.f32.xlu0 %v3615
        %v3617 = vpop.xlane.xlu0 %3616
        %v3618 = vmul.f32 %v3617, %v2910
        %v3619 = vadd.f32 %v3618, 1e-05
        %v3620 = vrsqrt.pop %v3619
        %v3621 = vmul.f32 %v3614, %v3620
        %v3622 = vlaneseq
        %v3623 = vshrl.u32 %v3622, 7
        %v3624 = vsub.s32 0, %v3623
        %v3625 = vrot.slane %v1165, %v3624
        %v3626 = vmul.f32 %v3621, %v3625
        %v3627 = vlaneseq
        %v3628 = vshrl.u32 %v3627, 7
        %v3629 = vsub.s32 1, %v3628
        %v3630 = vrot.slane %v1165, %v3629
        %v3631 = vadd.f32 %v3626, %v3630
        %3632 = vst [vmem:[#allocation3] sm:$0xff] %v3631
        %v3633 = vld [vmem:[#allocation2] sm:$0xff]
        %v3634 = vld [vmem:[#allocation2 + $0x8] sm:$0xff]
        %v3635 = vld [vmem:[%s929] sm:$0xf]
        %3636 = vadd.xlane.f32.xlu0 %v3633
        %v3637 = vpop.xlane.xlu0 %3636
        %3638 = vadd.xlane.f32.xlu0 %v3634
        %v3639 = vpop.xlane.xlu0 %3638
        %v3640 = vmul.f32 %v3637, %v2910
        %v3641 = vmul.f32 %v3639, %v2910
        %v3642 = vsub.f32 %v3633, %v3640
        %v3643 = vsub.f32 %v3634, %v3641
        %v3644 = vmul.f32 %v3642, %v3642
        %v3645 = vmul.f32 %v3643, %v3643
        %3646 = vadd.xlane.f32.xlu0 %v3644
        %v3647 = vpop.xlane.xlu0 %3646
        %3648 = vadd.xlane.f32.xlu0 %v3645
        %v3649 = vpop.xlane.xlu0 %3648
        %v3650 = vmul.f32 %v3647, %v2910
        %v3651 = vmul.f32 %v3649, %v2910
        %v3652 = vadd.f32 %v3650, 1e-06
        %v3653 = vadd.f32 %v3651, 1e-06
        %v3654 = vrsqrt.pop %v3652
        %v3655 = vrsqrt.pop %v3653
        %v3656 = vmul.f32 %v3642, %v3654
        %v3657 = vmul.f32 %v3643, %v3655
        %v3658 = vlaneseq
        %v3659 = vshrl.u32 %v3658, 7
        %v3660 = vsub.s32 0, %v3659
        %v3661 = vrot.slane %v3635, %v3660
        %v3662 = vmul.f32 %v3656, %v3661
        %v3663 = vmul.f32 %v3657, %v3661
        %v3664 = vlaneseq
        %v3665 = vshrl.u32 %v3664, 7
        %v3666 = vsub.s32 1, %v3665
        %v3667 = vrot.slane %v3635, %v3666
        %v3668 = vadd.f32 %v3662, %v3667
        %v3669 = vadd.f32 %v3663, %v3667
        %v3670 = vld [vmem:[%s1135] sm:$0xff]
        %v3671 = vld [vmem:[%s1135 + $0x8] sm:$0xf]
        %v3672 = vld [vmem:[%s1135 + $0xc] sm:$0xff]
        %v3673 = vld [vmem:[%s1135 + $0x14] sm:$0xf]
        %v3674 = vld [vmem:[%s1135 + $0x18] sm:$0xff]
        %v3675 = vld [vmem:[%s1135 + $0x20] sm:$0xf]
        %v3676 = vld [vmem:[%s1135 + $0x24] sm:$0xff]
        %v3677 = vld [vmem:[%s1135 + $0x2c] sm:$0xf]
        %v3678 = vld [vmem:[%s1135 + $0x30] sm:$0xff]
        %v3679 = vld [vmem:[%s1135 + $0x38] sm:$0xf]
        %v3680 = vld [vmem:[%s1135 + $0x3c] sm:$0xff]
        %v3681 = vld [vmem:[%s1135 + $0x44] sm:$0xf]
        %v3682 = vld [vmem:[%s1135 + $0x48] sm:$0xff]
        %v3683 = vld [vmem:[%s1135 + $0x50] sm:$0xf]
        %v3684 = vld [vmem:[%s1135 + $0x54] sm:$0xff]
        %v3685 = vld [vmem:[%s1135 + $0x5c] sm:$0xf]
        %v3686 = vld [vmem:[%s1135 + $0x60] sm:$0xff]
        %v3687 = vld [vmem:[%s1135 + $0x68] sm:$0xf]
        %v3688 = vld [vmem:[%s1135 + $0x6c] sm:$0xff]
        %v3689 = vld [vmem:[%s1135 + $0x74] sm:$0xf]
        %v3690 = vld [vmem:[%s1135 + $0x78] sm:$0xff]
        %v3691 = vld [vmem:[%s1135 + $0x80] sm:$0xf]
        %v3692 = vld [vmem:[%s1135 + $0x84] sm:$0xff]
        %v3693 = vld [vmem:[%s1135 + $0x8c] sm:$0xf]
        %v3694 = vld [vmem:[%s1135 + $0x90] sm:$0xff]
        %v3695 = vld [vmem:[%s1135 + $0x98] sm:$0xf]
        %v3696 = vld [vmem:[%s1135 + $0x9c] sm:$0xff]
        %v3697 = vld [vmem:[%s1135 + $0xa4] sm:$0xf]
        %v3698 = vld [vmem:[%s1135 + $0xa8] sm:$0xff]
        %v3699 = vld [vmem:[%s1135 + $0xb0] sm:$0xf]
        %v3700 = vld [vmem:[%s1135 + $0xb4] sm:$0xff]
        %v3701 = vld [vmem:[%s1135 + $0xbc] sm:$0xf]
        %v3702 = vld [vmem:[%s938] sm:$0x7]
        %v3703 = vld [vmem:[%s947] sm:$0xf]
        %v3704 = vld [vmem:[%s947 + $0x4] sm:$0xf]
        %v3705 = vld [vmem:[%s947 + $0x8] sm:$0xf]
        %v3706 = vld [vmem:[%s947 + $0xc] sm:$0xf]
        %v3707 = vld [vmem:[%s947 + $0x10] sm:$0xf]
        %v3708 = vld [vmem:[%s947 + $0x14] sm:$0xf]
        %v3709 = vld [vmem:[%s947 + $0x18] sm:$0xf]
        %v3710 = vld [vmem:[%s947 + $0x1c] sm:$0xf]
        %v3711 = vld [vmem:[%s947 + $0x20] sm:$0xf]
        %v3712 = vld [vmem:[%s947 + $0x24] sm:$0xf]
        %v3713 = vld [vmem:[%s947 + $0x28] sm:$0xf]
        %v3714 = vld [vmem:[%s947 + $0x2c] sm:$0xf]
        %v3715 = vld [vmem:[%s947 + $0x30] sm:$0xf]
        %v3716 = vld [vmem:[%s947 + $0x34] sm:$0xf]
        %v3717 = vld [vmem:[%s947 + $0x38] sm:$0xf]
        %v3718 = vld [vmem:[%s947 + $0x3c] sm:$0xf]
        %v3719 = vld [vmem:[%s1138] sm:$0x1]
        %v3720 = vpack.c.bf16 %v3669, %v3668
        %v3722 = vlaneseq
        %v3723 = vshrl.u32 %v3722, 7
        %v3724 = vsub.s32 0, %v3723
        %v3725 = vrot.slane %v3702, %v3724
        %v3726 = vlaneseq
        %v3727 = vshrl.u32 %v3726, 7
        %v3728 = vsub.s32 1, %v3727
        %v3729 = vrot.slane %v3702, %v3728
        %v3730 = vlaneseq
        %v3731 = vshrl.u32 %v3730, 7
        %v3732 = vsub.s32 2, %v3731
        %v3733 = vrot.slane %v3702, %v3732
        %v3769 = vunpack.c.l.b16 %v3670
        %v3770 = vunpack.c.h.b16 %v3670
        %v3771 = vunpack.c.l.b16 %v3671
        %v3772 = vunpack.c.l.b16 %v3672
        %v3773 = vunpack.c.h.b16 %v3672
        %v3774 = vunpack.c.l.b16 %v3673
        %v3775 = vunpack.c.l.b16 %v3674
        %v3776 = vunpack.c.h.b16 %v3674
        %v3777 = vunpack.c.l.b16 %v3675
        %v3778 = vunpack.c.l.b16 %v3676
        %v3779 = vunpack.c.h.b16 %v3676
        %v3780 = vunpack.c.l.b16 %v3677
        %v3781 = vunpack.c.l.b16 %v3678
        %v3782 = vunpack.c.h.b16 %v3678
        %v3783 = vunpack.c.l.b16 %v3679
        %v3784 = vunpack.c.l.b16 %v3680
        %v3785 = vunpack.c.h.b16 %v3680
        %v3786 = vunpack.c.l.b16 %v3681
        %v3787 = vunpack.c.l.b16 %v3682
        %v3788 = vunpack.c.h.b16 %v3682
        %v3789 = vunpack.c.l.b16 %v3683
        %v3790 = vunpack.c.l.b16 %v3684
        %v3791 = vunpack.c.h.b16 %v3684
        %v3792 = vunpack.c.l.b16 %v3685
        %v3793 = vunpack.c.l.b16 %v3686
        %v3794 = vunpack.c.h.b16 %v3686
        %v3795 = vunpack.c.l.b16 %v3687
        %v3796 = vunpack.c.l.b16 %v3688
        %v3797 = vunpack.c.h.b16 %v3688
        %v3798 = vunpack.c.l.b16 %v3689
        %v3799 = vunpack.c.l.b16 %v3690
        %v3800 = vunpack.c.h.b16 %v3690
        %v3801 = vunpack.c.l.b16 %v3691
        %v3802 = vunpack.c.l.b16 %v3692
        %v3803 = vunpack.c.h.b16 %v3692
        %v3804 = vunpack.c.l.b16 %v3693
        %v3805 = vunpack.c.l.b16 %v3694
        %v3806 = vunpack.c.h.b16 %v3694
        %v3807 = vunpack.c.l.b16 %v3695
        %v3808 = vunpack.c.l.b16 %v3696
        %v3809 = vunpack.c.h.b16 %v3696
        %v3810 = vunpack.c.l.b16 %v3697
        %v3811 = vunpack.c.l.b16 %v3698
        %v3812 = vunpack.c.h.b16 %v3698
        %v3813 = vunpack.c.l.b16 %v3699
        %v3814 = vunpack.c.l.b16 %v3700
        %v3815 = vunpack.c.h.b16 %v3700
        %v3816 = vunpack.c.l.b16 %v3701
        %v3817 = vpack.c.b16 %v3772, %v3769
        %v3818 = vpack.c.b16 %v3773, %v3770
        %v3819 = vpack.c.b16 %v3774, %v3771
        %v3820 = vpack.c.b16 %v3778, %v3775
        %v3821 = vpack.c.b16 %v3779, %v3776
        %v3822 = vpack.c.b16 %v3780, %v3777
        %v3823 = vpack.c.b16 %v3784, %v3781
        %v3824 = vpack.c.b16 %v3785, %v3782
        %v3825 = vpack.c.b16 %v3786, %v3783
        %v3826 = vpack.c.b16 %v3790, %v3787
        %v3827 = vpack.c.b16 %v3791, %v3788
        %v3828 = vpack.c.b16 %v3792, %v3789
        %v3829 = vpack.c.b16 %v3796, %v3793
        %v3830 = vpack.c.b16 %v3797, %v3794
        %v3831 = vpack.c.b16 %v3798, %v3795
        %v3832 = vpack.c.b16 %v3802, %v3799
        %v3833 = vpack.c.b16 %v3803, %v3800
        %v3834 = vpack.c.b16 %v3804, %v3801
        %v3835 = vpack.c.b16 %v3808, %v3805
        %v3836 = vpack.c.b16 %v3809, %v3806
        %v3837 = vpack.c.b16 %v3810, %v3807
        %v3838 = vpack.c.b16 %v3814, %v3811
        %v3839 = vpack.c.b16 %v3815, %v3812
        %v3840 = vpack.c.b16 %v3816, %v3813
        %3865 = vmatprep.subr.bf16.mxu0 %v3818
        %3866 = vmatpush1.bf16.msra.mxu0 %v3817
        %3867 = vmatprep.subr.bf16.mxu0 %v3821
        %3868 = vmatpush1.bf16.msra.mxu0 %v3820
        %3869 = vmatprep.subr.bf16.mxu0 %v3824
        %3870 = vmatpush1.bf16.msra.mxu0 %v3823
        %3871 = vmatprep.subr.bf16.mxu0 %v3827
        %3872 = vmatpush1.bf16.msra.mxu0 %v3826
        %3873 = vmatprep.subr.bf16.mxu0 %v3830
        %3874 = vmatpush1.bf16.msra.mxu0 %v3829
        %3875 = vmatprep.subr.bf16.mxu0 %v3833
        %3876 = vmatpush1.bf16.msra.mxu0 %v3832
        %3877 = vmatprep.subr.bf16.mxu0 %v3836
        %3878 = vmatpush1.bf16.msra.mxu0 %v3835
        %3879 = vmatprep.subr.bf16.mxu0 %v3839
        %3880 = vmatpush1.bf16.msra.mxu0 %v3838
        %3881 = vmatprep.subr.bf16.mxu0 0
        %3882 = vmatpush1.bf16.msra.mxu0 0
        %3883 = vmatprep.subr.bf16.mxu0 0
        %3884 = vmatpush1.bf16.msra.mxu0 0
        %3885 = vmatprep.subr.bf16.mxu0 0
        %3886 = vmatpush1.bf16.msra.mxu0 0
        %3887 = vmatprep.subr.bf16.mxu0 0
        %3888 = vmatpush1.bf16.msra.mxu0 0
        %3889 = vmatprep.subr.bf16.mxu0 0
        %3890 = vmatpush1.bf16.msra.mxu0 0
        %3891 = vmatprep.subr.bf16.mxu0 0
        %3892 = vmatpush1.bf16.msra.mxu0 0
        %3893 = vmatprep.subr.bf16.mxu0 0
        %3894 = vmatpush1.bf16.msra.mxu0 0
        %3895 = vmatprep.subr.bf16.mxu0 0
        %3896 = vmatpush1.bf16.msra.mxu0 0
        %3897 = vmatprep.mubr.bf16.mxu0 0
        %3898 = vmatmul.mubr.bf16.gmra.mrb[0].mxu0 %v3720
        %v3899 = vpop.f32.mrb[0].mxu0
        %v3900 = vadd.f32 %v3725, %v3899
        %v3901 = vpop.f32.mrb[0].mxu0
        %v3902 = vadd.f32 %v3729, %v3901
        %v3903 = vpop.f32.mrb[0].mxu0
        %v3904 = vadd.f32 %v3725, %v3903
        %v3905 = vpop.f32.mrb[0].mxu0
        %v3906 = vadd.f32 %v3729, %v3905
        %3907 = vdwg.mxu0
        %3908 = vmatprep.subr.bf16.mxu0 0
        %3909 = vmatpush1.bf16.msra.mxu0 %v3819
        %3910 = vmatprep.subr.bf16.mxu0 0
        %3911 = vmatpush1.bf16.msra.mxu0 %v3822
        %3912 = vmatprep.subr.bf16.mxu0 0
        %3913 = vmatpush1.bf16.msra.mxu0 %v3825
        %3914 = vmatprep.subr.bf16.mxu0 0
        %3915 = vmatpush1.bf16.msra.mxu0 %v3828
        %3916 = vmatprep.subr.bf16.mxu0 0
        %3917 = vmatpush1.bf16.msra.mxu0 %v3831
        %3918 = vmatprep.subr.bf16.mxu0 0
        %3919 = vmatpush1.bf16.msra.mxu0 %v3834
        %3920 = vmatprep.subr.bf16.mxu0 0
        %3921 = vmatpush1.bf16.msra.mxu0 %v3837
        %3922 = vmatprep.subr.bf16.mxu0 0
        %3923 = vmatpush1.bf16.msra.mxu0 %v3840
        %3924 = vmatprep.subr.bf16.mxu0 0
        %3925 = vmatpush1.bf16.msra.mxu0 0
        %3926 = vmatprep.subr.bf16.mxu0 0
        %3927 = vmatpush1.bf16.msra.mxu0 0
        %3928 = vmatprep.subr.bf16.mxu0 0
        %3929 = vmatpush1.bf16.msra.mxu0 0
        %3930 = vmatprep.subr.bf16.mxu0 0
        %3931 = vmatpush1.bf16.msra.mxu0 0
        %3932 = vmatprep.subr.bf16.mxu0 0
        %3933 = vmatpush1.bf16.msra.mxu0 0
        %3934 = vmatprep.subr.bf16.mxu0 0
        %3935 = vmatpush1.bf16.msra.mxu0 0
        %3936 = vmatprep.subr.bf16.mxu0 0
        %3937 = vmatpush1.bf16.msra.mxu0 0
        %3938 = vmatprep.subr.bf16.mxu0 0
        %3939 = vmatpush1.bf16.msra.mxu0 0
        %3940 = vmatprep.mubr.bf16.mxu0 0
        %3941 = vmatmul.mubr.bf16.gmra.mrb[0].mxu0 %v3720
        %v3942 = vpop.f32.mrb[0].mxu0
        %v3943 = vadd.f32 %v3733, %v3942
        %v3944 = vpop.f32.mrb[0].mxu0
        %v3945 = vpop.f32.mrb[0].mxu0
        %v3946 = vadd.f32 %v3733, %v3945
        %v3947 = vpop.f32.mrb[0].mxu0
        %3948 = vdwg.mxu0
        %v3950 = vsel %vm1442, %v3900, 0
        %v3953 = vsel %vm1442, %v3904, 0
        %v3956 = vsel %vm1442, %v3902, 0
        %v3959 = vsel %vm1442, %v3906, 0
        %3961 = vmatprep.subr.mxu0 0.0
        %3962 = vmatpush1.xpose.msra.mxu0 %v3956
        %3963 = vmatprep.subr.mxu0 0.0
        %3964 = vmatpush1.xpose.msra.mxu0 %v3959
        %3965 = vmatprep.subr.mxu0 0.0
        %3966 = vmatpush1.xpose.msra.mxu0 0.0
        %3967 = vmatprep.subr.mxu0 0.0
        %3968 = vmatpush1.xpose.msra.mxu0 0.0
        %3969 = vmatprep.subr.mxu0 0.0
        %3970 = vmatpush1.xpose.msra.mxu0 0.0
        %3971 = vmatprep.subr.mxu0 0.0
        %3972 = vmatpush1.xpose.msra.mxu0 0.0
        %3973 = vmatprep.subr.mxu0 0.0
        %3974 = vmatpush1.xpose.msra.mxu0 0.0
        %3975 = vmatprep.subr.mxu0 0.0
        %3976 = vmatpush1.xpose.msra.mxu0 0.0
        %3977 = vmatprep.subr.mxu0 0.0
        %3978 = vmatpush1.xpose.msra.mxu0 0.0
        %3979 = vmatprep.subr.mxu0 0.0
        %3980 = vmatpush1.xpose.msra.mxu0 0.0
        %3981 = vmatprep.subr.mxu0 0.0
        %3982 = vmatpush1.xpose.msra.mxu0 0.0
        %3983 = vmatprep.subr.mxu0 0.0
        %3984 = vmatpush1.xpose.msra.mxu0 0.0
        %3985 = vmatprep.subr.mxu0 0.0
        %3986 = vmatpush1.xpose.msra.mxu0 0.0
        %3987 = vmatprep.subr.mxu0 0.0
        %3988 = vmatpush1.xpose.msra.mxu0 0.0
        %3989 = vmatprep.subr.mxu0 0.0
        %3990 = vmatpush1.xpose.msra.mxu0 0.0
        %3991 = vmatprep.subr.mxu0 0.0
        %3992 = vmatpush1.xpose.msra.mxu0 0.0
        %3993 = vmatprep.subr.mxu0 0.0
        %3994 = vmatpush1.xpose.msra.mxu0 0.0
        %3995 = vmatprep.subr.mxu0 0.0
        %3996 = vmatpush1.xpose.msra.mxu0 0.0
        %3997 = vmatprep.subr.mxu0 0.0
        %3998 = vmatpush1.xpose.msra.mxu0 0.0
        %3999 = vmatprep.subr.mxu0 0.0
        %4000 = vmatpush1.xpose.msra.mxu0 0.0
        %4001 = vmatprep.subr.mxu0 0.0
        %4002 = vmatpush1.xpose.msra.mxu0 0.0
        %4003 = vmatprep.subr.mxu0 0.0
        %4004 = vmatpush1.xpose.msra.mxu0 0.0
        %4005 = vmatprep.subr.mxu0 0.0
        %4006 = vmatpush1.xpose.msra.mxu0 0.0
        %4007 = vmatprep.subr.mxu0 0.0
        %4008 = vmatpush1.xpose.msra.mxu0 0.0
        %4009 = vmatprep.subr.mxu0 0.0
        %4010 = vmatpush1.xpose.msra.mxu0 0.0
        %4011 = vmatprep.subr.mxu0 0.0
        %4012 = vmatpush1.xpose.msra.mxu0 0.0
        %4013 = vmatprep.subr.mxu0 0.0
        %4014 = vmatpush1.xpose.msra.mxu0 0.0
        %4015 = vmatprep.subr.mxu0 0.0
        %4016 = vmatpush1.xpose.msra.mxu0 0.0
        %4017 = vmatprep.subr.mxu0 0.0
        %4018 = vmatpush1.xpose.msra.mxu0 0.0
        %4019 = vmatprep.subr.mxu0 0.0
        %4020 = vmatpush1.xpose.msra.mxu0 0.0
        %4021 = vmatprep.subr.mxu0 0.0
        %4022 = vmatpush1.xpose.msra.mxu0 0.0
        %4023 = vmatprep.subr.mxu0 0.0
        %4024 = vmatpush1.xpose.msra.mxu0 0.0
        %4025 = vmatprep.mubr.f32.mxu0 0.0
        %4026 = vmatmul.mubr.f32.gmra.mrb[0].mxu0 %v3950
        %v4027 = vpop.f32.mrb[0].mxu0
        %v4028 = vadd.f32 0.0, %v4027
        %v4029 = vpop.f32.mrb[0].mxu0
        %4030 = vmatprep.mubr.f32.mxu0 0.0
        %4031 = vmatmul.mubr.f32.gmra.mrb[0].mxu0 %v3953
        %v4032 = vpop.f32.mrb[0].mxu0
        %v4033 = vadd.f32 0.0, %v4032
        %v4034 = vpop.f32.mrb[0].mxu0
        %4035 = vdwg.mxu0
        %v4036 = vmul.f32 %v4028, 0.25
        %v4037 = vmul.f32 %v4033, 0.25
        %v4038 = vadd.f32 %v4036, %v1163
        %v4039 = vadd.f32 %v4037, %v1163
        %v4040 = vsel %vm1442, %v4038, -inf
        %4041 = vmax.xlane.f32.xlu0 %v4040
        %v4042 = vpop.xlane.xlu0 %4041
        %v4043 = vsel %vm1442, %v4039, -inf
        %4044 = vmax.xlane.f32.xlu0 %v4043
        %v4045 = vpop.xlane.xlu0 %4044
        %v4046 = vsub.f32 %v4038, %v4042
        %v4047 = vsub.f32 %v4039, %v4045
        %v4048 = vmul.f32 %v4046, 1.442695
        %v4049 = vpow.pop %v4048
        %v4050 = vmul.f32 %v4047, 1.442695
        %v4051 = vpow.pop %v4050
        %v4052 = vsel %vm1442, %v4049, 0.0
        %4053 = vadd.xlane.f32.xlu0 %v4052
        %v4054 = vpop.xlane.xlu0 %4053
        %v4055 = vsel %vm1442, %v4051, 0.0
        %4056 = vadd.xlane.f32.xlu0 %v4055
        %v4057 = vpop.xlane.xlu0 %4056
        %v4058 = vrcp.pop %v4054
        %v4059 = vrcp.pop %v4057
        %v4060 = vmul.f32 %v4049, %v4058
        %v4061 = vmul.f32 %v4051, %v4059
        %v4063 = vsel %vm1442, %v4060, 0
        %v4066 = vsel %vm1442, %v4061, 0
        %4068 = vmatprep.subr.mxu0 0.0
        %4069 = vmatpush1.msra.mxu0 %v3943
        %4070 = vmatprep.subr.mxu0 0.0
        %4071 = vmatpush1.msra.mxu0 %v3946
        %4072 = vmatprep.subr.mxu0 0.0
        %4073 = vmatpush1.msra.mxu0 0.0
        %4074 = vmatprep.subr.mxu0 0.0
        %4075 = vmatpush1.msra.mxu0 0.0
        %4076 = vmatprep.subr.mxu0 0.0
        %4077 = vmatpush1.msra.mxu0 0.0
        %4078 = vmatprep.subr.mxu0 0.0
        %4079 = vmatpush1.msra.mxu0 0.0
        %4080 = vmatprep.subr.mxu0 0.0
        %4081 = vmatpush1.msra.mxu0 0.0
        %4082 = vmatprep.subr.mxu0 0.0
        %4083 = vmatpush1.msra.mxu0 0.0
        %4084 = vmatprep.subr.mxu0 0.0
        %4085 = vmatpush1.msra.mxu0 0.0
        %4086 = vmatprep.subr.mxu0 0.0
        %4087 = vmatpush1.msra.mxu0 0.0
        %4088 = vmatprep.subr.mxu0 0.0
        %4089 = vmatpush1.msra.mxu0 0.0
        %4090 = vmatprep.subr.mxu0 0.0
        %4091 = vmatpush1.msra.mxu0 0.0
        %4092 = vmatprep.subr.mxu0 0.0
        %4093 = vmatpush1.msra.mxu0 0.0
        %4094 = vmatprep.subr.mxu0 0.0
        %4095 = vmatpush1.msra.mxu0 0.0
        %4096 = vmatprep.subr.mxu0 0.0
        %4097 = vmatpush1.msra.mxu0 0.0
        %4098 = vmatprep.subr.mxu0 0.0
        %4099 = vmatpush1.msra.mxu0 0.0
        %4100 = vmatprep.subr.mxu0 0.0
        %4101 = vmatpush1.msra.mxu0 0.0
        %4102 = vmatprep.subr.mxu0 0.0
        %4103 = vmatpush1.msra.mxu0 0.0
        %4104 = vmatprep.subr.mxu0 0.0
        %4105 = vmatpush1.msra.mxu0 0.0
        %4106 = vmatprep.subr.mxu0 0.0
        %4107 = vmatpush1.msra.mxu0 0.0
        %4108 = vmatprep.subr.mxu0 0.0
        %4109 = vmatpush1.msra.mxu0 0.0
        %4110 = vmatprep.subr.mxu0 0.0
        %4111 = vmatpush1.msra.mxu0 0.0
        %4112 = vmatprep.subr.mxu0 0.0
        %4113 = vmatpush1.msra.mxu0 0.0
        %4114 = vmatprep.subr.mxu0 0.0
        %4115 = vmatpush1.msra.mxu0 0.0
        %4116 = vmatprep.subr.mxu0 0.0
        %4117 = vmatpush1.msra.mxu0 0.0
        %4118 = vmatprep.subr.mxu0 0.0
        %4119 = vmatpush1.msra.mxu0 0.0
        %4120 = vmatprep.subr.mxu0 0.0
        %4121 = vmatpush1.msra.mxu0 0.0
        %4122 = vmatprep.subr.mxu0 0.0
        %4123 = vmatpush1.msra.mxu0 0.0
        %4124 = vmatprep.subr.mxu0 0.0
        %4125 = vmatpush1.msra.mxu0 0.0
        %4126 = vmatprep.subr.mxu0 0.0
        %4127 = vmatpush1.msra.mxu0 0.0
        %4128 = vmatprep.subr.mxu0 0.0
        %4129 = vmatpush1.msra.mxu0 0.0
        %4130 = vmatprep.subr.mxu0 0.0
        %4131 = vmatpush1.msra.mxu0 0.0
        %4132 = vmatprep.mubr.f32.mxu0 0.0
        %4133 = vmatmul.mubr.f32.gmra.mrb[0].mxu0 %v4063
        %v4134 = vpop.f32.mrb[0].mxu0
        %v4135 = vadd.f32 0.0, %v4134
        %v4136 = vpop.f32.mrb[0].mxu0
        %4137 = vmatprep.mubr.f32.mxu0 0.0
        %4138 = vmatmul.mubr.f32.gmra.mrb[0].mxu0 %v4066
        %v4139 = vpop.f32.mrb[0].mxu0
        %v4140 = vadd.f32 0.0, %v4139
        %v4141 = vpop.f32.mrb[0].mxu0
        %4142 = vdwg.mxu0
        %4143 = vst.msk [vmem:[#allocation4] sm:$0xff] %vm1442, %v4135
        %4144 = vst.msk [vmem:[#allocation4 + $0x8] sm:$0xff] %vm1442, %v4140
        %4145 = vrot.lane.b32.xlu0 %v3900, 112
        %v4146 = vpop.permute.xlu0 %4145
        %4147 = vrot.lane.b32.xlu0 %v3904, 112
        %v4148 = vpop.permute.xlu0 %4147
        %4149 = vrot.lane.b32.xlu0 %v3902, 112
        %v4150 = vpop.permute.xlu0 %4149
        %4151 = vrot.lane.b32.xlu0 %v3906, 112
        %v4152 = vpop.permute.xlu0 %4151
        %v4153 = vsel %vm1442, %v4146, 0
        %v4155 = vsel %vm1442, %v4148, 0
        %v4157 = vsel %vm1442, %v4150, 0
        %v4159 = vsel %vm1442, %v4152, 0
        %4161 = vmatprep.subr.mxu0 0.0
        %4162 = vmatpush1.xpose.msra.mxu0 %v4157
        %4163 = vmatprep.subr.mxu0 0.0
        %4164 = vmatpush1.xpose.msra.mxu0 %v4159
        %4165 = vmatprep.subr.mxu0 0.0
        %4166 = vmatpush1.xpose.msra.mxu0 0.0
        %4167 = vmatprep.subr.mxu0 0.0
        %4168 = vmatpush1.xpose.msra.mxu0 0.0
        %4169 = vmatprep.subr.mxu0 0.0
        %4170 = vmatpush1.xpose.msra.mxu0 0.0
        %4171 = vmatprep.subr.mxu0 0.0
        %4172 = vmatpush1.xpose.msra.mxu0 0.0
        %4173 = vmatprep.subr.mxu0 0.0
        %4174 = vmatpush1.xpose.msra.mxu0 0.0
        %4175 = vmatprep.subr.mxu0 0.0
        %4176 = vmatpush1.xpose.msra.mxu0 0.0
        %4177 = vmatprep.subr.mxu0 0.0
        %4178 = vmatpush1.xpose.msra.mxu0 0.0
        %4179 = vmatprep.subr.mxu0 0.0
        %4180 = vmatpush1.xpose.msra.mxu0 0.0
        %4181 = vmatprep.subr.mxu0 0.0
        %4182 = vmatpush1.xpose.msra.mxu0 0.0
        %4183 = vmatprep.subr.mxu0 0.0
        %4184 = vmatpush1.xpose.msra.mxu0 0.0
        %4185 = vmatprep.subr.mxu0 0.0
        %4186 = vmatpush1.xpose.msra.mxu0 0.0
        %4187 = vmatprep.subr.mxu0 0.0
        %4188 = vmatpush1.xpose.msra.mxu0 0.0
        %4189 = vmatprep.subr.mxu0 0.0
        %4190 = vmatpush1.xpose.msra.mxu0 0.0
        %4191 = vmatprep.subr.mxu0 0.0
        %4192 = vmatpush1.xpose.msra.mxu0 0.0
        %4193 = vmatprep.subr.mxu0 0.0
        %4194 = vmatpush1.xpose.msra.mxu0 0.0
        %4195 = vmatprep.subr.mxu0 0.0
        %4196 = vmatpush1.xpose.msra.mxu0 0.0
        %4197 = vmatprep.subr.mxu0 0.0
        %4198 = vmatpush1.xpose.msra.mxu0 0.0
        %4199 = vmatprep.subr.mxu0 0.0
        %4200 = vmatpush1.xpose.msra.mxu0 0.0
        %4201 = vmatprep.subr.mxu0 0.0
        %4202 = vmatpush1.xpose.msra.mxu0 0.0
        %4203 = vmatprep.subr.mxu0 0.0
        %4204 = vmatpush1.xpose.msra.mxu0 0.0
        %4205 = vmatprep.subr.mxu0 0.0
        %4206 = vmatpush1.xpose.msra.mxu0 0.0
        %4207 = vmatprep.subr.mxu0 0.0
        %4208 = vmatpush1.xpose.msra.mxu0 0.0
        %4209 = vmatprep.subr.mxu0 0.0
        %4210 = vmatpush1.xpose.msra.mxu0 0.0
        %4211 = vmatprep.subr.mxu0 0.0
        %4212 = vmatpush1.xpose.msra.mxu0 0.0
        %4213 = vmatprep.subr.mxu0 0.0
        %4214 = vmatpush1.xpose.msra.mxu0 0.0
        %4215 = vmatprep.subr.mxu0 0.0
        %4216 = vmatpush1.xpose.msra.mxu0 0.0
        %4217 = vmatprep.subr.mxu0 0.0
        %4218 = vmatpush1.xpose.msra.mxu0 0.0
        %4219 = vmatprep.subr.mxu0 0.0
        %4220 = vmatpush1.xpose.msra.mxu0 0.0
        %4221 = vmatprep.subr.mxu0 0.0
        %4222 = vmatpush1.xpose.msra.mxu0 0.0
        %4223 = vmatprep.subr.mxu0 0.0
        %4224 = vmatpush1.xpose.msra.mxu0 0.0
        %4225 = vmatprep.mubr.f32.mxu0 0.0
        %4226 = vmatmul.mubr.f32.gmra.mrb[0].mxu0 %v4153
        %v4227 = vpop.f32.mrb[0].mxu0
        %v4228 = vadd.f32 0.0, %v4227
        %v4229 = vpop.f32.mrb[0].mxu0
        %4230 = vmatprep.mubr.f32.mxu0 0.0
        %4231 = vmatmul.mubr.f32.gmra.mrb[0].mxu0 %v4155
        %v4232 = vpop.f32.mrb[0].mxu0
        %v4233 = vadd.f32 0.0, %v4232
        %v4234 = vpop.f32.mrb[0].mxu0
        %4235 = vdwg.mxu0
        %v4236 = vmul.f32 %v4228, 0.25
        %v4237 = vmul.f32 %v4233, 0.25
        %v4238 = vadd.f32 %v4236, %v1163
        %v4239 = vadd.f32 %v4237, %v1163
        %v4240 = vsel %vm1442, %v4238, -inf
        %4241 = vmax.xlane.f32.xlu0 %v4240
        %v4242 = vpop.xlane.xlu0 %4241
        %v4243 = vsel %vm1442, %v4239, -inf
        %4244 = vmax.xlane.f32.xlu0 %v4243
        %v4245 = vpop.xlane.xlu0 %4244
        %v4246 = vsub.f32 %v4238, %v4242
        %v4247 = vsub.f32 %v4239, %v4245
        %v4248 = vmul.f32 %v4246, 1.442695
        %v4249 = vpow.pop %v4248
        %v4250 = vmul.f32 %v4247, 1.442695
        %v4251 = vpow.pop %v4250
        %v4252 = vsel %vm1442, %v4249, 0.0
        %4253 = vadd.xlane.f32.xlu0 %v4252
        %v4254 = vpop.xlane.xlu0 %4253
        %v4255 = vsel %vm1442, %v4251, 0.0
        %4256 = vadd.xlane.f32.xlu0 %v4255
        %v4257 = vpop.xlane.xlu0 %4256
        %v4258 = vrcp.pop %v4254
        %v4259 = vrcp.pop %v4257
        %v4260 = vmul.f32 %v4249, %v4258
        %v4261 = vmul.f32 %v4251, %v4259
        %4264 = vrot.lane.b32.xlu0 %v3943, 112
        %v4265 = vpop.permute.xlu0 %4264
        %4266 = vrot.lane.b32.xlu0 %v3946, 112
        %v4267 = vpop.permute.xlu0 %4266
        %v4271 = vsel %vm1442, %v4260, 0
        %v4274 = vsel %vm1442, %v4261, 0
        %4276 = vmatprep.subr.mxu0 0.0
        %4277 = vmatpush1.msra.mxu0 %v4265
        %4278 = vmatprep.subr.mxu0 0.0
        %4279 = vmatpush1.msra.mxu0 %v4267
        %4280 = vmatprep.subr.mxu0 0.0
        %4281 = vmatpush1.msra.mxu0 0.0
        %4282 = vmatprep.subr.mxu0 0.0
        %4283 = vmatpush1.msra.mxu0 0.0
        %4284 = vmatprep.subr.mxu0 0.0
        %4285 = vmatpush1.msra.mxu0 0.0
        %4286 = vmatprep.subr.mxu0 0.0
        %4287 = vmatpush1.msra.mxu0 0.0
        %4288 = vmatprep.subr.mxu0 0.0
        %4289 = vmatpush1.msra.mxu0 0.0
        %4290 = vmatprep.subr.mxu0 0.0
        %4291 = vmatpush1.msra.mxu0 0.0
        %4292 = vmatprep.subr.mxu0 0.0
        %4293 = vmatpush1.msra.mxu0 0.0
        %4294 = vmatprep.subr.mxu0 0.0
        %4295 = vmatpush1.msra.mxu0 0.0
        %4296 = vmatprep.subr.mxu0 0.0
        %4297 = vmatpush1.msra.mxu0 0.0
        %4298 = vmatprep.subr.mxu0 0.0
        %4299 = vmatpush1.msra.mxu0 0.0
        %4300 = vmatprep.subr.mxu0 0.0
        %4301 = vmatpush1.msra.mxu0 0.0
        %4302 = vmatprep.subr.mxu0 0.0
        %4303 = vmatpush1.msra.mxu0 0.0
        %4304 = vmatprep.subr.mxu0 0.0
        %4305 = vmatpush1.msra.mxu0 0.0
        %4306 = vmatprep.subr.mxu0 0.0
        %4307 = vmatpush1.msra.mxu0 0.0
        %4308 = vmatprep.subr.mxu0 0.0
        %4309 = vmatpush1.msra.mxu0 0.0
        %4310 = vmatprep.subr.mxu0 0.0
        %4311 = vmatpush1.msra.mxu0 0.0
        %4312 = vmatprep.subr.mxu0 0.0
        %4313 = vmatpush1.msra.mxu0 0.0
        %4314 = vmatprep.subr.mxu0 0.0
        %4315 = vmatpush1.msra.mxu0 0.0
        %4316 = vmatprep.subr.mxu0 0.0
        %4317 = vmatpush1.msra.mxu0 0.0
        %4318 = vmatprep.subr.mxu0 0.0
        %4319 = vmatpush1.msra.mxu0 0.0
        %4320 = vmatprep.subr.mxu0 0.0
        %4321 = vmatpush1.msra.mxu0 0.0
        %4322 = vmatprep.subr.mxu0 0.0
        %4323 = vmatpush1.msra.mxu0 0.0
        %4324 = vmatprep.subr.mxu0 0.0
        %4325 = vmatpush1.msra.mxu0 0.0
        %4326 = vmatprep.subr.mxu0 0.0
        %4327 = vmatpush1.msra.mxu0 0.0
        %4328 = vmatprep.subr.mxu0 0.0
        %4329 = vmatpush1.msra.mxu0 0.0
        %4330 = vmatprep.subr.mxu0 0.0
        %4331 = vmatpush1.msra.mxu0 0.0
        %4332 = vmatprep.subr.mxu0 0.0
        %4333 = vmatpush1.msra.mxu0 0.0
        %4334 = vmatprep.subr.mxu0 0.0
        %4335 = vmatpush1.msra.mxu0 0.0
        %4336 = vmatprep.subr.mxu0 0.0
        %4337 = vmatpush1.msra.mxu0 0.0
        %4338 = vmatprep.subr.mxu0 0.0
        %4339 = vmatpush1.msra.mxu0 0.0
        %4340 = vmatprep.mubr.f32.mxu0 0.0
        %4341 = vmatmul.mubr.f32.gmra.mrb[0].mxu0 %v4271
        %v4342 = vpop.f32.mrb[0].mxu0
        %v4343 = vadd.f32 0.0, %v4342
        %v4344 = vpop.f32.mrb[0].mxu0
        %4345 = vmatprep.mubr.f32.mxu0 0.0
        %4346 = vmatmul.mubr.f32.gmra.mrb[0].mxu0 %v4274
        %v4347 = vpop.f32.mrb[0].mxu0
        %v4348 = vadd.f32 0.0, %v4347
        %v4349 = vpop.f32.mrb[0].mxu0
        %4350 = vdwg.mxu0
        %4353 = vrot.lane.b32.xlu0 %v4343, 16
        %v4354 = vpop.permute.xlu0 %4353
        %4355 = vrot.lane.b32.xlu0 %v4348, 16
        %v4356 = vpop.permute.xlu0 %4355
        %4359 = vst.msk [vmem:[#allocation4] sm:$0xff] %vm1777, %v4354
        %4360 = vst.msk [vmem:[#allocation4 + $0x8] sm:$0xff] %vm1777, %v4356
        %4361 = vrot.lane.b32.xlu0 %v3900, 96
        %v4362 = vpop.permute.xlu0 %4361
        %4363 = vrot.lane.b32.xlu0 %v3904, 96
        %v4364 = vpop.permute.xlu0 %4363
        %4365 = vrot.lane.b32.xlu0 %v3902, 96
        %v4366 = vpop.permute.xlu0 %4365
        %4367 = vrot.lane.b32.xlu0 %v3906, 96
        %v4368 = vpop.permute.xlu0 %4367
        %v4369 = vsel %vm1442, %v4362, 0
        %v4371 = vsel %vm1442, %v4364, 0
        %v4373 = vsel %vm1442, %v4366, 0
        %v4375 = vsel %vm1442, %v4368, 0
        %4377 = vmatprep.subr.mxu0 0.0
        %4378 = vmatpush1.xpose.msra.mxu0 %v4373
        %4379 = vmatprep.subr.mxu0 0.0
        %4380 = vmatpush1.xpose.msra.mxu0 %v4375
        %4381 = vmatprep.subr.mxu0 0.0
        %4382 = vmatpush1.xpose.msra.mxu0 0.0
        %4383 = vmatprep.subr.mxu0 0.0
        %4384 = vmatpush1.xpose.msra.mxu0 0.0
        %4385 = vmatprep.subr.mxu0 0.0
        %4386 = vmatpush1.xpose.msra.mxu0 0.0
        %4387 = vmatprep.subr.mxu0 0.0
        %4388 = vmatpush1.xpose.msra.mxu0 0.0
        %4389 = vmatprep.subr.mxu0 0.0
        %4390 = vmatpush1.xpose.msra.mxu0 0.0
        %4391 = vmatprep.subr.mxu0 0.0
        %4392 = vmatpush1.xpose.msra.mxu0 0.0
        %4393 = vmatprep.subr.mxu0 0.0
        %4394 = vmatpush1.xpose.msra.mxu0 0.0
        %4395 = vmatprep.subr.mxu0 0.0
        %4396 = vmatpush1.xpose.msra.mxu0 0.0
        %4397 = vmatprep.subr.mxu0 0.0
        %4398 = vmatpush1.xpose.msra.mxu0 0.0
        %4399 = vmatprep.subr.mxu0 0.0
        %4400 = vmatpush1.xpose.msra.mxu0 0.0
        %4401 = vmatprep.subr.mxu0 0.0
        %4402 = vmatpush1.xpose.msra.mxu0 0.0
        %4403 = vmatprep.subr.mxu0 0.0
        %4404 = vmatpush1.xpose.msra.mxu0 0.0
        %4405 = vmatprep.subr.mxu0 0.0
        %4406 = vmatpush1.xpose.msra.mxu0 0.0
        %4407 = vmatprep.subr.mxu0 0.0
        %4408 = vmatpush1.xpose.msra.mxu0 0.0
        %4409 = vmatprep.subr.mxu0 0.0
        %4410 = vmatpush1.xpose.msra.mxu0 0.0
        %4411 = vmatprep.subr.mxu0 0.0
        %4412 = vmatpush1.xpose.msra.mxu0 0.0
        %4413 = vmatprep.subr.mxu0 0.0
        %4414 = vmatpush1.xpose.msra.mxu0 0.0
        %4415 = vmatprep.subr.mxu0 0.0
        %4416 = vmatpush1.xpose.msra.mxu0 0.0
        %4417 = vmatprep.subr.mxu0 0.0
        %4418 = vmatpush1.xpose.msra.mxu0 0.0
        %4419 = vmatprep.subr.mxu0 0.0
        %4420 = vmatpush1.xpose.msra.mxu0 0.0
        %4421 = vmatprep.subr.mxu0 0.0
        %4422 = vmatpush1.xpose.msra.mxu0 0.0
        %4423 = vmatprep.subr.mxu0 0.0
        %4424 = vmatpush1.xpose.msra.mxu0 0.0
        %4425 = vmatprep.subr.mxu0 0.0
        %4426 = vmatpush1.xpose.msra.mxu0 0.0
        %4427 = vmatprep.subr.mxu0 0.0
        %4428 = vmatpush1.xpose.msra.mxu0 0.0
        %4429 = vmatprep.subr.mxu0 0.0
        %4430 = vmatpush1.xpose.msra.mxu0 0.0
        %4431 = vmatprep.subr.mxu0 0.0
        %4432 = vmatpush1.xpose.msra.mxu0 0.0
        %4433 = vmatprep.subr.mxu0 0.0
        %4434 = vmatpush1.xpose.msra.mxu0 0.0
        %4435 = vmatprep.subr.mxu0 0.0
        %4436 = vmatpush1.xpose.msra.mxu0 0.0
        %4437 = vmatprep.subr.mxu0 0.0
        %4438 = vmatpush1.xpose.msra.mxu0 0.0
        %4439 = vmatprep.subr.mxu0 0.0
        %4440 = vmatpush1.xpose.msra.mxu0 0.0
        %4441 = vmatprep.mubr.f32.mxu0 0.0
        %4442 = vmatmul.mubr.f32.gmra.mrb[0].mxu0 %v4369
        %v4443 = vpop.f32.mrb[0].mxu0
        %v4444 = vadd.f32 0.0, %v4443
        %v4445 = vpop.f32.mrb[0].mxu0
        %4446 = vmatprep.mubr.f32.mxu0 0.0
        %4447 = vmatmul.mubr.f32.gmra.mrb[0].mxu0 %v4371
        %v4448 = vpop.f32.mrb[0].mxu0
        %v4449 = vadd.f32 0.0, %v4448
        %v4450 = vpop.f32.mrb[0].mxu0
        %4451 = vdwg.mxu0
        %v4452 = vmul.f32 %v4444, 0.25
        %v4453 = vmul.f32 %v4449, 0.25
        %v4454 = vadd.f32 %v4452, %v1163
        %v4455 = vadd.f32 %v4453, %v1163
        %v4456 = vsel %vm1442, %v4454, -inf
        %4457 = vmax.xlane.f32.xlu0 %v4456
        %v4458 = vpop.xlane.xlu0 %4457
        %v4459 = vsel %vm1442, %v4455, -inf
        %4460 = vmax.xlane.f32.xlu0 %v4459
        %v4461 = vpop.xlane.xlu0 %4460
        %v4462 = vsub.f32 %v4454, %v4458
        %v4463 = vsub.f32 %v4455, %v4461
        %v4464 = vmul.f32 %v4462, 1.442695
        %v4465 = vpow.pop %v4464
        %v4466 = vmul.f32 %v4463, 1.442695
        %v4467 = vpow.pop %v4466
        %v4468 = vsel %vm1442, %v4465, 0.0
        %4469 = vadd.xlane.f32.xlu0 %v4468
        %v4470 = vpop.xlane.xlu0 %4469
        %v4471 = vsel %vm1442, %v4467, 0.0
        %4472 = vadd.xlane.f32.xlu0 %v4471
        %v4473 = vpop.xlane.xlu0 %4472
        %v4474 = vrcp.pop %v4470
        %v4475 = vrcp.pop %v4473
        %v4476 = vmul.f32 %v4465, %v4474
        %v4477 = vmul.f32 %v4467, %v4475
        %4478 = vrot.lane.b32.xlu0 %v3943, 96
        %v4479 = vpop.permute.xlu0 %4478
        %4480 = vrot.lane.b32.xlu0 %v3946, 96
        %v4481 = vpop.permute.xlu0 %4480
        %v4485 = vsel %vm1442, %v4476, 0
        %v4488 = vsel %vm1442, %v4477, 0
        %4490 = vmatprep.subr.mxu0 0.0
        %4491 = vmatpush1.msra.mxu0 %v4479
        %4492 = vmatprep.subr.mxu0 0.0
        %4493 = vmatpush1.msra.mxu0 %v4481
        %4494 = vmatprep.subr.mxu0 0.0
        %4495 = vmatpush1.msra.mxu0 0.0
        %4496 = vmatprep.subr.mxu0 0.0
        %4497 = vmatpush1.msra.mxu0 0.0
        %4498 = vmatprep.subr.mxu0 0.0
        %4499 = vmatpush1.msra.mxu0 0.0
        %4500 = vmatprep.subr.mxu0 0.0
        %4501 = vmatpush1.msra.mxu0 0.0
        %4502 = vmatprep.subr.mxu0 0.0
        %4503 = vmatpush1.msra.mxu0 0.0
        %4504 = vmatprep.subr.mxu0 0.0
        %4505 = vmatpush1.msra.mxu0 0.0
        %4506 = vmatprep.subr.mxu0 0.0
        %4507 = vmatpush1.msra.mxu0 0.0
        %4508 = vmatprep.subr.mxu0 0.0
        %4509 = vmatpush1.msra.mxu0 0.0
        %4510 = vmatprep.subr.mxu0 0.0
        %4511 = vmatpush1.msra.mxu0 0.0
        %4512 = vmatprep.subr.mxu0 0.0
        %4513 = vmatpush1.msra.mxu0 0.0
        %4514 = vmatprep.subr.mxu0 0.0
        %4515 = vmatpush1.msra.mxu0 0.0
        %4516 = vmatprep.subr.mxu0 0.0
        %4517 = vmatpush1.msra.mxu0 0.0
        %4518 = vmatprep.subr.mxu0 0.0
        %4519 = vmatpush1.msra.mxu0 0.0
        %4520 = vmatprep.subr.mxu0 0.0
        %4521 = vmatpush1.msra.mxu0 0.0
        %4522 = vmatprep.subr.mxu0 0.0
        %4523 = vmatpush1.msra.mxu0 0.0
        %4524 = vmatprep.subr.mxu0 0.0
        %4525 = vmatpush1.msra.mxu0 0.0
        %4526 = vmatprep.subr.mxu0 0.0
        %4527 = vmatpush1.msra.mxu0 0.0
        %4528 = vmatprep.subr.mxu0 0.0
        %4529 = vmatpush1.msra.mxu0 0.0
        %4530 = vmatprep.subr.mxu0 0.0
        %4531 = vmatpush1.msra.mxu0 0.0
        %4532 = vmatprep.subr.mxu0 0.0
        %4533 = vmatpush1.msra.mxu0 0.0
        %4534 = vmatprep.subr.mxu0 0.0
        %4535 = vmatpush1.msra.mxu0 0.0
        %4536 = vmatprep.subr.mxu0 0.0
        %4537 = vmatpush1.msra.mxu0 0.0
        %4538 = vmatprep.subr.mxu0 0.0
        %4539 = vmatpush1.msra.mxu0 0.0
        %4540 = vmatprep.subr.mxu0 0.0
        %4541 = vmatpush1.msra.mxu0 0.0
        %4542 = vmatprep.subr.mxu0 0.0
        %4543 = vmatpush1.msra.mxu0 0.0
        %4544 = vmatprep.subr.mxu0 0.0
        %4545 = vmatpush1.msra.mxu0 0.0
        %4546 = vmatprep.subr.mxu0 0.0
        %4547 = vmatpush1.msra.mxu0 0.0
        %4548 = vmatprep.subr.mxu0 0.0
        %4549 = vmatpush1.msra.mxu0 0.0
        %4550 = vmatprep.subr.mxu0 0.0
        %4551 = vmatpush1.msra.mxu0 0.0
        %4552 = vmatprep.subr.mxu0 0.0
        %4553 = vmatpush1.msra.mxu0 0.0
        %4554 = vmatprep.mubr.f32.mxu0 0.0
        %4555 = vmatmul.mubr.f32.gmra.mrb[0].mxu0 %v4485
        %v4556 = vpop.f32.mrb[0].mxu0
        %v4557 = vadd.f32 0.0, %v4556
        %v4558 = vpop.f32.mrb[0].mxu0
        %4559 = vmatprep.mubr.f32.mxu0 0.0
        %4560 = vmatmul.mubr.f32.gmra.mrb[0].mxu0 %v4488
        %v4561 = vpop.f32.mrb[0].mxu0
        %v4562 = vadd.f32 0.0, %v4561
        %v4563 = vpop.f32.mrb[0].mxu0
        %4564 = vdwg.mxu0
        %4567 = vrot.lane.b32.xlu0 %v4557, 32
        %v4568 = vpop.permute.xlu0 %4567
        %4569 = vrot.lane.b32.xlu0 %v4562, 32
        %v4570 = vpop.permute.xlu0 %4569
        %4573 = vst.msk [vmem:[#allocation4] sm:$0xff] %vm1949, %v4568
        %4574 = vst.msk [vmem:[#allocation4 + $0x8] sm:$0xff] %vm1949, %v4570
        %4575 = vrot.lane.b32.xlu0 %v3900, 80
        %v4576 = vpop.permute.xlu0 %4575
        %4577 = vrot.lane.b32.xlu0 %v3904, 80
        %v4578 = vpop.permute.xlu0 %4577
        %4579 = vrot.lane.b32.xlu0 %v3902, 80
        %v4580 = vpop.permute.xlu0 %4579
        %4581 = vrot.lane.b32.xlu0 %v3906, 80
        %v4582 = vpop.permute.xlu0 %4581
        %v4583 = vsel %vm1442, %v4576, 0
        %v4585 = vsel %vm1442, %v4578, 0
        %v4587 = vsel %vm1442, %v4580, 0
        %v4589 = vsel %vm1442, %v4582, 0
        %4591 = vmatprep.subr.mxu0 0.0
        %4592 = vmatpush1.xpose.msra.mxu0 %v4587
        %4593 = vmatprep.subr.mxu0 0.0
        %4594 = vmatpush1.xpose.msra.mxu0 %v4589
        %4595 = vmatprep.subr.mxu0 0.0
        %4596 = vmatpush1.xpose.msra.mxu0 0.0
        %4597 = vmatprep.subr.mxu0 0.0
        %4598 = vmatpush1.xpose.msra.mxu0 0.0
        %4599 = vmatprep.subr.mxu0 0.0
        %4600 = vmatpush1.xpose.msra.mxu0 0.0
        %4601 = vmatprep.subr.mxu0 0.0
        %4602 = vmatpush1.xpose.msra.mxu0 0.0
        %4603 = vmatprep.subr.mxu0 0.0
        %4604 = vmatpush1.xpose.msra.mxu0 0.0
        %4605 = vmatprep.subr.mxu0 0.0
        %4606 = vmatpush1.xpose.msra.mxu0 0.0
        %4607 = vmatprep.subr.mxu0 0.0
        %4608 = vmatpush1.xpose.msra.mxu0 0.0
        %4609 = vmatprep.subr.mxu0 0.0
        %4610 = vmatpush1.xpose.msra.mxu0 0.0
        %4611 = vmatprep.subr.mxu0 0.0
        %4612 = vmatpush1.xpose.msra.mxu0 0.0
        %4613 = vmatprep.subr.mxu0 0.0
        %4614 = vmatpush1.xpose.msra.mxu0 0.0
        %4615 = vmatprep.subr.mxu0 0.0
        %4616 = vmatpush1.xpose.msra.mxu0 0.0
        %4617 = vmatprep.subr.mxu0 0.0
        %4618 = vmatpush1.xpose.msra.mxu0 0.0
        %4619 = vmatprep.subr.mxu0 0.0
        %4620 = vmatpush1.xpose.msra.mxu0 0.0
        %4621 = vmatprep.subr.mxu0 0.0
        %4622 = vmatpush1.xpose.msra.mxu0 0.0
        %4623 = vmatprep.subr.mxu0 0.0
        %4624 = vmatpush1.xpose.msra.mxu0 0.0
        %4625 = vmatprep.subr.mxu0 0.0
        %4626 = vmatpush1.xpose.msra.mxu0 0.0
        %4627 = vmatprep.subr.mxu0 0.0
        %4628 = vmatpush1.xpose.msra.mxu0 0.0
        %4629 = vmatprep.subr.mxu0 0.0
        %4630 = vmatpush1.xpose.msra.mxu0 0.0
        %4631 = vmatprep.subr.mxu0 0.0
        %4632 = vmatpush1.xpose.msra.mxu0 0.0
        %4633 = vmatprep.subr.mxu0 0.0
        %4634 = vmatpush1.xpose.msra.mxu0 0.0
        %4635 = vmatprep.subr.mxu0 0.0
        %4636 = vmatpush1.xpose.msra.mxu0 0.0
        %4637 = vmatprep.subr.mxu0 0.0
        %4638 = vmatpush1.xpose.msra.mxu0 0.0
        %4639 = vmatprep.subr.mxu0 0.0
        %4640 = vmatpush1.xpose.msra.mxu0 0.0
        %4641 = vmatprep.subr.mxu0 0.0
        %4642 = vmatpush1.xpose.msra.mxu0 0.0
        %4643 = vmatprep.subr.mxu0 0.0
        %4644 = vmatpush1.xpose.msra.mxu0 0.0
        %4645 = vmatprep.subr.mxu0 0.0
        %4646 = vmatpush1.xpose.msra.mxu0 0.0
        %4647 = vmatprep.subr.mxu0 0.0
        %4648 = vmatpush1.xpose.msra.mxu0 0.0
        %4649 = vmatprep.subr.mxu0 0.0
        %4650 = vmatpush1.xpose.msra.mxu0 0.0
        %4651 = vmatprep.subr.mxu0 0.0
        %4652 = vmatpush1.xpose.msra.mxu0 0.0
        %4653 = vmatprep.subr.mxu0 0.0
        %4654 = vmatpush1.xpose.msra.mxu0 0.0
        %4655 = vmatprep.mubr.f32.mxu0 0.0
        %4656 = vmatmul.mubr.f32.gmra.mrb[0].mxu0 %v4583
        %v4657 = vpop.f32.mrb[0].mxu0
        %v4658 = vadd.f32 0.0, %v4657
        %v4659 = vpop.f32.mrb[0].mxu0
        %4660 = vmatprep.mubr.f32.mxu0 0.0
        %4661 = vmatmul.mubr.f32.gmra.mrb[0].mxu0 %v4585
        %v4662 = vpop.f32.mrb[0].mxu0
        %v4663 = vadd.f32 0.0, %v4662
        %v4664 = vpop.f32.mrb[0].mxu0
        %4665 = vdwg.mxu0
        %v4666 = vmul.f32 %v4658, 0.25
        %v4667 = vmul.f32 %v4663, 0.25
        %v4668 = vadd.f32 %v4666, %v1163
        %v4669 = vadd.f32 %v4667, %v1163
        %v4670 = vsel %vm1442, %v4668, -inf
        %4671 = vmax.xlane.f32.xlu0 %v4670
        %v4672 = vpop.xlane.xlu0 %4671
        %v4673 = vsel %vm1442, %v4669, -inf
        %4674 = vmax.xlane.f32.xlu0 %v4673
        %v4675 = vpop.xlane.xlu0 %4674
        %v4676 = vsub.f32 %v4668, %v4672
        %v4677 = vsub.f32 %v4669, %v4675
        %v4678 = vmul.f32 %v4676, 1.442695
        %v4679 = vpow.pop %v4678
        %v4680 = vmul.f32 %v4677, 1.442695
        %v4681 = vpow.pop %v4680
        %v4682 = vsel %vm1442, %v4679, 0.0
        %4683 = vadd.xlane.f32.xlu0 %v4682
        %v4684 = vpop.xlane.xlu0 %4683
        %v4685 = vsel %vm1442, %v4681, 0.0
        %4686 = vadd.xlane.f32.xlu0 %v4685
        %v4687 = vpop.xlane.xlu0 %4686
        %v4688 = vrcp.pop %v4684
        %v4689 = vrcp.pop %v4687
        %v4690 = vmul.f32 %v4679, %v4688
        %v4691 = vmul.f32 %v4681, %v4689
        %4692 = vrot.lane.b32.xlu0 %v3943, 80
        %v4693 = vpop.permute.xlu0 %4692
        %4694 = vrot.lane.b32.xlu0 %v3946, 80
        %v4695 = vpop.permute.xlu0 %4694
        %v4699 = vsel %vm1442, %v4690, 0
        %v4702 = vsel %vm1442, %v4691, 0
        %4704 = vmatprep.subr.mxu0 0.0
        %4705 = vmatpush1.msra.mxu0 %v4693
        %4706 = vmatprep.subr.mxu0 0.0
        %4707 = vmatpush1.msra.mxu0 %v4695
        %4708 = vmatprep.subr.mxu0 0.0
        %4709 = vmatpush1.msra.mxu0 0.0
        %4710 = vmatprep.subr.mxu0 0.0
        %4711 = vmatpush1.msra.mxu0 0.0
        %4712 = vmatprep.subr.mxu0 0.0
        %4713 = vmatpush1.msra.mxu0 0.0
        %4714 = vmatprep.subr.mxu0 0.0
        %4715 = vmatpush1.msra.mxu0 0.0
        %4716 = vmatprep.subr.mxu0 0.0
        %4717 = vmatpush1.msra.mxu0 0.0
        %4718 = vmatprep.subr.mxu0 0.0
        %4719 = vmatpush1.msra.mxu0 0.0
        %4720 = vmatprep.subr.mxu0 0.0
        %4721 = vmatpush1.msra.mxu0 0.0
        %4722 = vmatprep.subr.mxu0 0.0
        %4723 = vmatpush1.msra.mxu0 0.0
        %4724 = vmatprep.subr.mxu0 0.0
        %4725 = vmatpush1.msra.mxu0 0.0
        %4726 = vmatprep.subr.mxu0 0.0
        %4727 = vmatpush1.msra.mxu0 0.0
        %4728 = vmatprep.subr.mxu0 0.0
        %4729 = vmatpush1.msra.mxu0 0.0
        %4730 = vmatprep.subr.mxu0 0.0
        %4731 = vmatpush1.msra.mxu0 0.0
        %4732 = vmatprep.subr.mxu0 0.0
        %4733 = vmatpush1.msra.mxu0 0.0
        %4734 = vmatprep.subr.mxu0 0.0
        %4735 = vmatpush1.msra.mxu0 0.0
        %4736 = vmatprep.subr.mxu0 0.0
        %4737 = vmatpush1.msra.mxu0 0.0
        %4738 = vmatprep.subr.mxu0 0.0
        %4739 = vmatpush1.msra.mxu0 0.0
        %4740 = vmatprep.subr.mxu0 0.0
        %4741 = vmatpush1.msra.mxu0 0.0
        %4742 = vmatprep.subr.mxu0 0.0
        %4743 = vmatpush1.msra.mxu0 0.0
        %4744 = vmatprep.subr.mxu0 0.0
        %4745 = vmatpush1.msra.mxu0 0.0
        %4746 = vmatprep.subr.mxu0 0.0
        %4747 = vmatpush1.msra.mxu0 0.0
        %4748 = vmatprep.subr.mxu0 0.0
        %4749 = vmatpush1.msra.mxu0 0.0
        %4750 = vmatprep.subr.mxu0 0.0
        %4751 = vmatpush1.msra.mxu0 0.0
        %4752 = vmatprep.subr.mxu0 0.0
        %4753 = vmatpush1.msra.mxu0 0.0
        %4754 = vmatprep.subr.mxu0 0.0
        %4755 = vmatpush1.msra.mxu0 0.0
        %4756 = vmatprep.subr.mxu0 0.0
        %4757 = vmatpush1.msra.mxu0 0.0
        %4758 = vmatprep.subr.mxu0 0.0
        %4759 = vmatpush1.msra.mxu0 0.0
        %4760 = vmatprep.subr.mxu0 0.0
        %4761 = vmatpush1.msra.mxu0 0.0
        %4762 = vmatprep.subr.mxu0 0.0
        %4763 = vmatpush1.msra.mxu0 0.0
        %4764 = vmatprep.subr.mxu0 0.0
        %4765 = vmatpush1.msra.mxu0 0.0
        %4766 = vmatprep.subr.mxu0 0.0
        %4767 = vmatpush1.msra.mxu0 0.0
        %4768 = vmatprep.mubr.f32.mxu0 0.0
        %4769 = vmatmul.mubr.f32.gmra.mrb[0].mxu0 %v4699
        %v4770 = vpop.f32.mrb[0].mxu0
        %v4771 = vadd.f32 0.0, %v4770
        %v4772 = vpop.f32.mrb[0].mxu0
        %4773 = vmatprep.mubr.f32.mxu0 0.0
        %4774 = vmatmul.mubr.f32.gmra.mrb[0].mxu0 %v4702
        %v4775 = vpop.f32.mrb[0].mxu0
        %v4776 = vadd.f32 0.0, %v4775
        %v4777 = vpop.f32.mrb[0].mxu0
        %4778 = vdwg.mxu0
        %4781 = vrot.lane.b32.xlu0 %v4771, 48
        %v4782 = vpop.permute.xlu0 %4781
        %4783 = vrot.lane.b32.xlu0 %v4776, 48
        %v4784 = vpop.permute.xlu0 %4783
        %4787 = vst.msk [vmem:[#allocation4] sm:$0xff] %vm2121, %v4782
        %4788 = vst.msk [vmem:[#allocation4 + $0x8] sm:$0xff] %vm2121, %v4784
        %4789 = vrot.lane.b32.xlu0 %v3900, 64
        %v4790 = vpop.permute.xlu0 %4789
        %4791 = vrot.lane.b32.xlu0 %v3904, 64
        %v4792 = vpop.permute.xlu0 %4791
        %4793 = vrot.lane.b32.xlu0 %v3902, 64
        %v4794 = vpop.permute.xlu0 %4793
        %4795 = vrot.lane.b32.xlu0 %v3906, 64
        %v4796 = vpop.permute.xlu0 %4795
        %v4797 = vsel %vm1442, %v4790, 0
        %v4799 = vsel %vm1442, %v4792, 0
        %v4801 = vsel %vm1442, %v4794, 0
        %v4803 = vsel %vm1442, %v4796, 0
        %4805 = vmatprep.subr.mxu0 0.0
        %4806 = vmatpush1.xpose.msra.mxu0 %v4801
        %4807 = vmatprep.subr.mxu0 0.0
        %4808 = vmatpush1.xpose.msra.mxu0 %v4803
        %4809 = vmatprep.subr.mxu0 0.0
        %4810 = vmatpush1.xpose.msra.mxu0 0.0
        %4811 = vmatprep.subr.mxu0 0.0
        %4812 = vmatpush1.xpose.msra.mxu0 0.0
        %4813 = vmatprep.subr.mxu0 0.0
        %4814 = vmatpush1.xpose.msra.mxu0 0.0
        %4815 = vmatprep.subr.mxu0 0.0
        %4816 = vmatpush1.xpose.msra.mxu0 0.0
        %4817 = vmatprep.subr.mxu0 0.0
        %4818 = vmatpush1.xpose.msra.mxu0 0.0
        %4819 = vmatprep.subr.mxu0 0.0
        %4820 = vmatpush1.xpose.msra.mxu0 0.0
        %4821 = vmatprep.subr.mxu0 0.0
        %4822 = vmatpush1.xpose.msra.mxu0 0.0
        %4823 = vmatprep.subr.mxu0 0.0
        %4824 = vmatpush1.xpose.msra.mxu0 0.0
        %4825 = vmatprep.subr.mxu0 0.0
        %4826 = vmatpush1.xpose.msra.mxu0 0.0
        %4827 = vmatprep.subr.mxu0 0.0
        %4828 = vmatpush1.xpose.msra.mxu0 0.0
        %4829 = vmatprep.subr.mxu0 0.0
        %4830 = vmatpush1.xpose.msra.mxu0 0.0
        %4831 = vmatprep.subr.mxu0 0.0
        %4832 = vmatpush1.xpose.msra.mxu0 0.0
        %4833 = vmatprep.subr.mxu0 0.0
        %4834 = vmatpush1.xpose.msra.mxu0 0.0
        %4835 = vmatprep.subr.mxu0 0.0
        %4836 = vmatpush1.xpose.msra.mxu0 0.0
        %4837 = vmatprep.subr.mxu0 0.0
        %4838 = vmatpush1.xpose.msra.mxu0 0.0
        %4839 = vmatprep.subr.mxu0 0.0
        %4840 = vmatpush1.xpose.msra.mxu0 0.0
        %4841 = vmatprep.subr.mxu0 0.0
        %4842 = vmatpush1.xpose.msra.mxu0 0.0
        %4843 = vmatprep.subr.mxu0 0.0
        %4844 = vmatpush1.xpose.msra.mxu0 0.0
        %4845 = vmatprep.subr.mxu0 0.0
        %4846 = vmatpush1.xpose.msra.mxu0 0.0
        %4847 = vmatprep.subr.mxu0 0.0
        %4848 = vmatpush1.xpose.msra.mxu0 0.0
        %4849 = vmatprep.subr.mxu0 0.0
        %4850 = vmatpush1.xpose.msra.mxu0 0.0
        %4851 = vmatprep.subr.mxu0 0.0
        %4852 = vmatpush1.xpose.msra.mxu0 0.0
        %4853 = vmatprep.subr.mxu0 0.0
        %4854 = vmatpush1.xpose.msra.mxu0 0.0
        %4855 = vmatprep.subr.mxu0 0.0
        %4856 = vmatpush1.xpose.msra.mxu0 0.0
        %4857 = vmatprep.subr.mxu0 0.0
        %4858 = vmatpush1.xpose.msra.mxu0 0.0
        %4859 = vmatprep.subr.mxu0 0.0
        %4860 = vmatpush1.xpose.msra.mxu0 0.0
        %4861 = vmatprep.subr.mxu0 0.0
        %4862 = vmatpush1.xpose.msra.mxu0 0.0
        %4863 = vmatprep.subr.mxu0 0.0
        %4864 = vmatpush1.xpose.msra.mxu0 0.0
        %4865 = vmatprep.subr.mxu0 0.0
        %4866 = vmatpush1.xpose.msra.mxu0 0.0
        %4867 = vmatprep.subr.mxu0 0.0
        %4868 = vmatpush1.xpose.msra.mxu0 0.0
        %4869 = vmatprep.mubr.f32.mxu0 0.0
        %4870 = vmatmul.mubr.f32.gmra.mrb[0].mxu0 %v4797
        %v4871 = vpop.f32.mrb[0].mxu0
        %v4872 = vadd.f32 0.0, %v4871
        %v4873 = vpop.f32.mrb[0].mxu0
        %4874 = vmatprep.mubr.f32.mxu0 0.0
        %4875 = vmatmul.mubr.f32.gmra.mrb[0].mxu0 %v4799
        %v4876 = vpop.f32.mrb[0].mxu0
        %v4877 = vadd.f32 0.0, %v4876
        %v4878 = vpop.f32.mrb[0].mxu0
        %4879 = vdwg.mxu0
        %v4880 = vmul.f32 %v4872, 0.25
        %v4881 = vmul.f32 %v4877, 0.25
        %v4882 = vadd.f32 %v4880, %v1163
        %v4883 = vadd.f32 %v4881, %v1163
        %v4884 = vsel %vm1442, %v4882, -inf
        %4885 = vmax.xlane.f32.xlu0 %v4884
        %v4886 = vpop.xlane.xlu0 %4885
        %v4887 = vsel %vm1442, %v4883, -inf
        %4888 = vmax.xlane.f32.xlu0 %v4887
        %v4889 = vpop.xlane.xlu0 %4888
        %v4890 = vsub.f32 %v4882, %v4886
        %v4891 = vsub.f32 %v4883, %v4889
        %v4892 = vmul.f32 %v4890, 1.442695
        %v4893 = vpow.pop %v4892
        %v4894 = vmul.f32 %v4891, 1.442695
        %v4895 = vpow.pop %v4894
        %v4896 = vsel %vm1442, %v4893, 0.0
        %4897 = vadd.xlane.f32.xlu0 %v4896
        %v4898 = vpop.xlane.xlu0 %4897
        %v4899 = vsel %vm1442, %v4895, 0.0
        %4900 = vadd.xlane.f32.xlu0 %v4899
        %v4901 = vpop.xlane.xlu0 %4900
        %v4902 = vrcp.pop %v4898
        %v4903 = vrcp.pop %v4901
        %v4904 = vmul.f32 %v4893, %v4902
        %v4905 = vmul.f32 %v4895, %v4903
        %4906 = vrot.lane.b32.xlu0 %v3943, 64
        %v4907 = vpop.permute.xlu0 %4906
        %4908 = vrot.lane.b32.xlu0 %v3946, 64
        %v4909 = vpop.permute.xlu0 %4908
        %v4913 = vsel %vm1442, %v4904, 0
        %v4916 = vsel %vm1442, %v4905, 0
        %4918 = vmatprep.subr.mxu0 0.0
        %4919 = vmatpush1.msra.mxu0 %v4907
        %4920 = vmatprep.subr.mxu0 0.0
        %4921 = vmatpush1.msra.mxu0 %v4909
        %4922 = vmatprep.subr.mxu0 0.0
        %4923 = vmatpush1.msra.mxu0 0.0
        %4924 = vmatprep.subr.mxu0 0.0
        %4925 = vmatpush1.msra.mxu0 0.0
        %4926 = vmatprep.subr.mxu0 0.0
        %4927 = vmatpush1.msra.mxu0 0.0
        %4928 = vmatprep.subr.mxu0 0.0
        %4929 = vmatpush1.msra.mxu0 0.0
        %4930 = vmatprep.subr.mxu0 0.0
        %4931 = vmatpush1.msra.mxu0 0.0
        %4932 = vmatprep.subr.mxu0 0.0
        %4933 = vmatpush1.msra.mxu0 0.0
        %4934 = vmatprep.subr.mxu0 0.0
        %4935 = vmatpush1.msra.mxu0 0.0
        %4936 = vmatprep.subr.mxu0 0.0
        %4937 = vmatpush1.msra.mxu0 0.0
        %4938 = vmatprep.subr.mxu0 0.0
        %4939 = vmatpush1.msra.mxu0 0.0
        %4940 = vmatprep.subr.mxu0 0.0
        %4941 = vmatpush1.msra.mxu0 0.0
        %4942 = vmatprep.subr.mxu0 0.0
        %4943 = vmatpush1.msra.mxu0 0.0
        %4944 = vmatprep.subr.mxu0 0.0
        %4945 = vmatpush1.msra.mxu0 0.0
        %4946 = vmatprep.subr.mxu0 0.0
        %4947 = vmatpush1.msra.mxu0 0.0
        %4948 = vmatprep.subr.mxu0 0.0
        %4949 = vmatpush1.msra.mxu0 0.0
        %4950 = vmatprep.subr.mxu0 0.0
        %4951 = vmatpush1.msra.mxu0 0.0
        %4952 = vmatprep.subr.mxu0 0.0
        %4953 = vmatpush1.msra.mxu0 0.0
        %4954 = vmatprep.subr.mxu0 0.0
        %4955 = vmatpush1.msra.mxu0 0.0
        %4956 = vmatprep.subr.mxu0 0.0
        %4957 = vmatpush1.msra.mxu0 0.0
        %4958 = vmatprep.subr.mxu0 0.0
        %4959 = vmatpush1.msra.mxu0 0.0
        %4960 = vmatprep.subr.mxu0 0.0
        %4961 = vmatpush1.msra.mxu0 0.0
        %4962 = vmatprep.subr.mxu0 0.0
        %4963 = vmatpush1.msra.mxu0 0.0
        %4964 = vmatprep.subr.mxu0 0.0
        %4965 = vmatpush1.msra.mxu0 0.0
        %4966 = vmatprep.subr.mxu0 0.0
        %4967 = vmatpush1.msra.mxu0 0.0
        %4968 = vmatprep.subr.mxu0 0.0
        %4969 = vmatpush1.msra.mxu0 0.0
        %4970 = vmatprep.subr.mxu0 0.0
        %4971 = vmatpush1.msra.mxu0 0.0
        %4972 = vmatprep.subr.mxu0 0.0
        %4973 = vmatpush1.msra.mxu0 0.0
        %4974 = vmatprep.subr.mxu0 0.0
        %4975 = vmatpush1.msra.mxu0 0.0
        %4976 = vmatprep.subr.mxu0 0.0
        %4977 = vmatpush1.msra.mxu0 0.0
        %4978 = vmatprep.subr.mxu0 0.0
        %4979 = vmatpush1.msra.mxu0 0.0
        %4980 = vmatprep.subr.mxu0 0.0
        %4981 = vmatpush1.msra.mxu0 0.0
        %4982 = vmatprep.mubr.f32.mxu0 0.0
        %4983 = vmatmul.mubr.f32.gmra.mrb[0].mxu0 %v4913
        %v4984 = vpop.f32.mrb[0].mxu0
        %v4985 = vadd.f32 0.0, %v4984
        %v4986 = vpop.f32.mrb[0].mxu0
        %4987 = vmatprep.mubr.f32.mxu0 0.0
        %4988 = vmatmul.mubr.f32.gmra.mrb[0].mxu0 %v4916
        %v4989 = vpop.f32.mrb[0].mxu0
        %v4990 = vadd.f32 0.0, %v4989
        %v4991 = vpop.f32.mrb[0].mxu0
        %4992 = vdwg.mxu0
        %4995 = vrot.lane.b32.xlu0 %v4985, 64
        %v4996 = vpop.permute.xlu0 %4995
        %4997 = vrot.lane.b32.xlu0 %v4990, 64
        %v4998 = vpop.permute.xlu0 %4997
        %5001 = vst.msk [vmem:[#allocation4] sm:$0xff] %vm2293, %v4996
        %5002 = vst.msk [vmem:[#allocation4 + $0x8] sm:$0xff] %vm2293, %v4998
        %5003 = vrot.lane.b32.xlu0 %v3900, 48
        %v5004 = vpop.permute.xlu0 %5003
        %5005 = vrot.lane.b32.xlu0 %v3904, 48
        %v5006 = vpop.permute.xlu0 %5005
        %5007 = vrot.lane.b32.xlu0 %v3902, 48
        %v5008 = vpop.permute.xlu0 %5007
        %5009 = vrot.lane.b32.xlu0 %v3906, 48
        %v5010 = vpop.permute.xlu0 %5009
        %v5011 = vsel %vm1442, %v5004, 0
        %v5013 = vsel %vm1442, %v5006, 0
        %v5015 = vsel %vm1442, %v5008, 0
        %v5017 = vsel %vm1442, %v5010, 0
        %5019 = vmatprep.subr.mxu0 0.0
        %5020 = vmatpush1.xpose.msra.mxu0 %v5015
        %5021 = vmatprep.subr.mxu0 0.0
        %5022 = vmatpush1.xpose.msra.mxu0 %v5017
        %5023 = vmatprep.subr.mxu0 0.0
        %5024 = vmatpush1.xpose.msra.mxu0 0.0
        %5025 = vmatprep.subr.mxu0 0.0
        %5026 = vmatpush1.xpose.msra.mxu0 0.0
        %5027 = vmatprep.subr.mxu0 0.0
        %5028 = vmatpush1.xpose.msra.mxu0 0.0
        %5029 = vmatprep.subr.mxu0 0.0
        %5030 = vmatpush1.xpose.msra.mxu0 0.0
        %5031 = vmatprep.subr.mxu0 0.0
        %5032 = vmatpush1.xpose.msra.mxu0 0.0
        %5033 = vmatprep.subr.mxu0 0.0
        %5034 = vmatpush1.xpose.msra.mxu0 0.0
        %5035 = vmatprep.subr.mxu0 0.0
        %5036 = vmatpush1.xpose.msra.mxu0 0.0
        %5037 = vmatprep.subr.mxu0 0.0
        %5038 = vmatpush1.xpose.msra.mxu0 0.0
        %5039 = vmatprep.subr.mxu0 0.0
        %5040 = vmatpush1.xpose.msra.mxu0 0.0
        %5041 = vmatprep.subr.mxu0 0.0
        %5042 = vmatpush1.xpose.msra.mxu0 0.0
        %5043 = vmatprep.subr.mxu0 0.0
        %5044 = vmatpush1.xpose.msra.mxu0 0.0
        %5045 = vmatprep.subr.mxu0 0.0
        %5046 = vmatpush1.xpose.msra.mxu0 0.0
        %5047 = vmatprep.subr.mxu0 0.0
        %5048 = vmatpush1.xpose.msra.mxu0 0.0
        %5049 = vmatprep.subr.mxu0 0.0
        %5050 = vmatpush1.xpose.msra.mxu0 0.0
        %5051 = vmatprep.subr.mxu0 0.0
        %5052 = vmatpush1.xpose.msra.mxu0 0.0
        %5053 = vmatprep.subr.mxu0 0.0
        %5054 = vmatpush1.xpose.msra.mxu0 0.0
        %5055 = vmatprep.subr.mxu0 0.0
        %5056 = vmatpush1.xpose.msra.mxu0 0.0
        %5057 = vmatprep.subr.mxu0 0.0
        %5058 = vmatpush1.xpose.msra.mxu0 0.0
        %5059 = vmatprep.subr.mxu0 0.0
        %5060 = vmatpush1.xpose.msra.mxu0 0.0
        %5061 = vmatprep.subr.mxu0 0.0
        %5062 = vmatpush1.xpose.msra.mxu0 0.0
        %5063 = vmatprep.subr.mxu0 0.0
        %5064 = vmatpush1.xpose.msra.mxu0 0.0
        %5065 = vmatprep.subr.mxu0 0.0
        %5066 = vmatpush1.xpose.msra.mxu0 0.0
        %5067 = vmatprep.subr.mxu0 0.0
        %5068 = vmatpush1.xpose.msra.mxu0 0.0
        %5069 = vmatprep.subr.mxu0 0.0
        %5070 = vmatpush1.xpose.msra.mxu0 0.0
        %5071 = vmatprep.subr.mxu0 0.0
        %5072 = vmatpush1.xpose.msra.mxu0 0.0
        %5073 = vmatprep.subr.mxu0 0.0
        %5074 = vmatpush1.xpose.msra.mxu0 0.0
        %5075 = vmatprep.subr.mxu0 0.0
        %5076 = vmatpush1.xpose.msra.mxu0 0.0
        %5077 = vmatprep.subr.mxu0 0.0
        %5078 = vmatpush1.xpose.msra.mxu0 0.0
        %5079 = vmatprep.subr.mxu0 0.0
        %5080 = vmatpush1.xpose.msra.mxu0 0.0
        %5081 = vmatprep.subr.mxu0 0.0
        %5082 = vmatpush1.xpose.msra.mxu0 0.0
        %5083 = vmatprep.mubr.f32.mxu0 0.0
        %5084 = vmatmul.mubr.f32.gmra.mrb[0].mxu0 %v5011
        %v5085 = vpop.f32.mrb[0].mxu0
        %v5086 = vadd.f32 0.0, %v5085
        %v5087 = vpop.f32.mrb[0].mxu0
        %5088 = vmatprep.mubr.f32.mxu0 0.0
        %5089 = vmatmul.mubr.f32.gmra.mrb[0].mxu0 %v5013
        %v5090 = vpop.f32.mrb[0].mxu0
        %v5091 = vadd.f32 0.0, %v5090
        %v5092 = vpop.f32.mrb[0].mxu0
        %5093 = vdwg.mxu0
        %v5094 = vmul.f32 %v5086, 0.25
        %v5095 = vmul.f32 %v5091, 0.25
        %v5096 = vadd.f32 %v5094, %v1163
        %v5097 = vadd.f32 %v5095, %v1163
        %v5098 = vsel %vm1442, %v5096, -inf
        %5099 = vmax.xlane.f32.xlu0 %v5098
        %v5100 = vpop.xlane.xlu0 %5099
        %v5101 = vsel %vm1442, %v5097, -inf
        %5102 = vmax.xlane.f32.xlu0 %v5101
        %v5103 = vpop.xlane.xlu0 %5102
        %v5104 = vsub.f32 %v5096, %v5100
        %v5105 = vsub.f32 %v5097, %v5103
        %v5106 = vmul.f32 %v5104, 1.442695
        %v5107 = vpow.pop %v5106
        %v5108 = vmul.f32 %v5105, 1.442695
        %v5109 = vpow.pop %v5108
        %v5110 = vsel %vm1442, %v5107, 0.0
        %5111 = vadd.xlane.f32.xlu0 %v5110
        %v5112 = vpop.xlane.xlu0 %5111
        %v5113 = vsel %vm1442, %v5109, 0.0
        %5114 = vadd.xlane.f32.xlu0 %v5113
        %v5115 = vpop.xlane.xlu0 %5114
        %v5116 = vrcp.pop %v5112
        %v5117 = vrcp.pop %v5115
        %v5118 = vmul.f32 %v5107, %v5116
        %v5119 = vmul.f32 %v5109, %v5117
        %5120 = vrot.lane.b32.xlu0 %v3943, 48
        %v5121 = vpop.permute.xlu0 %5120
        %5122 = vrot.lane.b32.xlu0 %v3946, 48
        %v5123 = vpop.permute.xlu0 %5122
        %v5127 = vsel %vm1442, %v5118, 0
        %v5130 = vsel %vm1442, %v5119, 0
        %5132 = vmatprep.subr.mxu0 0.0
        %5133 = vmatpush1.msra.mxu0 %v5121
        %5134 = vmatprep.subr.mxu0 0.0
        %5135 = vmatpush1.msra.mxu0 %v5123
        %5136 = vmatprep.subr.mxu0 0.0
        %5137 = vmatpush1.msra.mxu0 0.0
        %5138 = vmatprep.subr.mxu0 0.0
        %5139 = vmatpush1.msra.mxu0 0.0
        %5140 = vmatprep.subr.mxu0 0.0
        %5141 = vmatpush1.msra.mxu0 0.0
        %5142 = vmatprep.subr.mxu0 0.0
        %5143 = vmatpush1.msra.mxu0 0.0
        %5144 = vmatprep.subr.mxu0 0.0
        %5145 = vmatpush1.msra.mxu0 0.0
        %5146 = vmatprep.subr.mxu0 0.0
        %5147 = vmatpush1.msra.mxu0 0.0
        %5148 = vmatprep.subr.mxu0 0.0
        %5149 = vmatpush1.msra.mxu0 0.0
        %5150 = vmatprep.subr.mxu0 0.0
        %5151 = vmatpush1.msra.mxu0 0.0
        %5152 = vmatprep.subr.mxu0 0.0
        %5153 = vmatpush1.msra.mxu0 0.0
        %5154 = vmatprep.subr.mxu0 0.0
        %5155 = vmatpush1.msra.mxu0 0.0
        %5156 = vmatprep.subr.mxu0 0.0
        %5157 = vmatpush1.msra.mxu0 0.0
        %5158 = vmatprep.subr.mxu0 0.0
        %5159 = vmatpush1.msra.mxu0 0.0
        %5160 = vmatprep.subr.mxu0 0.0
        %5161 = vmatpush1.msra.mxu0 0.0
        %5162 = vmatprep.subr.mxu0 0.0
        %5163 = vmatpush1.msra.mxu0 0.0
        %5164 = vmatprep.subr.mxu0 0.0
        %5165 = vmatpush1.msra.mxu0 0.0
        %5166 = vmatprep.subr.mxu0 0.0
        %5167 = vmatpush1.msra.mxu0 0.0
        %5168 = vmatprep.subr.mxu0 0.0
        %5169 = vmatpush1.msra.mxu0 0.0
        %5170 = vmatprep.subr.mxu0 0.0
        %5171 = vmatpush1.msra.mxu0 0.0
        %5172 = vmatprep.subr.mxu0 0.0
        %5173 = vmatpush1.msra.mxu0 0.0
        %5174 = vmatprep.subr.mxu0 0.0
        %5175 = vmatpush1.msra.mxu0 0.0
        %5176 = vmatprep.subr.mxu0 0.0
        %5177 = vmatpush1.msra.mxu0 0.0
        %5178 = vmatprep.subr.mxu0 0.0
        %5179 = vmatpush1.msra.mxu0 0.0
        %5180 = vmatprep.subr.mxu0 0.0
        %5181 = vmatpush1.msra.mxu0 0.0
        %5182 = vmatprep.subr.mxu0 0.0
        %5183 = vmatpush1.msra.mxu0 0.0
        %5184 = vmatprep.subr.mxu0 0.0
        %5185 = vmatpush1.msra.mxu0 0.0
        %5186 = vmatprep.subr.mxu0 0.0
        %5187 = vmatpush1.msra.mxu0 0.0
        %5188 = vmatprep.subr.mxu0 0.0
        %5189 = vmatpush1.msra.mxu0 0.0
        %5190 = vmatprep.subr.mxu0 0.0
        %5191 = vmatpush1.msra.mxu0 0.0
        %5192 = vmatprep.subr.mxu0 0.0
        %5193 = vmatpush1.msra.mxu0 0.0
        %5194 = vmatprep.subr.mxu0 0.0
        %5195 = vmatpush1.msra.mxu0 0.0
        %5196 = vmatprep.mubr.f32.mxu0 0.0
        %5197 = vmatmul.mubr.f32.gmra.mrb[0].mxu0 %v5127
        %v5198 = vpop.f32.mrb[0].mxu0
        %v5199 = vadd.f32 0.0, %v5198
        %v5200 = vpop.f32.mrb[0].mxu0
        %5201 = vmatprep.mubr.f32.mxu0 0.0
        %5202 = vmatmul.mubr.f32.gmra.mrb[0].mxu0 %v5130
        %v5203 = vpop.f32.mrb[0].mxu0
        %v5204 = vadd.f32 0.0, %v5203
        %v5205 = vpop.f32.mrb[0].mxu0
        %5206 = vdwg.mxu0
        %5209 = vrot.lane.b32.xlu0 %v5199, 80
        %v5210 = vpop.permute.xlu0 %5209
        %5211 = vrot.lane.b32.xlu0 %v5204, 80
        %v5212 = vpop.permute.xlu0 %5211
        %5215 = vst.msk [vmem:[#allocation4] sm:$0xff] %vm2465, %v5210
        %5216 = vst.msk [vmem:[#allocation4 + $0x8] sm:$0xff] %vm2465, %v5212
        %5217 = vrot.lane.b32.xlu0 %v3900, 32
        %v5218 = vpop.permute.xlu0 %5217
        %5219 = vrot.lane.b32.xlu0 %v3904, 32
        %v5220 = vpop.permute.xlu0 %5219
        %5221 = vrot.lane.b32.xlu0 %v3902, 32
        %v5222 = vpop.permute.xlu0 %5221
        %5223 = vrot.lane.b32.xlu0 %v3906, 32
        %v5224 = vpop.permute.xlu0 %5223
        %v5225 = vsel %vm1442, %v5218, 0
        %v5227 = vsel %vm1442, %v5220, 0
        %v5229 = vsel %vm1442, %v5222, 0
        %v5231 = vsel %vm1442, %v5224, 0
        %5233 = vmatprep.subr.mxu0 0.0
        %5234 = vmatpush1.xpose.msra.mxu0 %v5229
        %5235 = vmatprep.subr.mxu0 0.0
        %5236 = vmatpush1.xpose.msra.mxu0 %v5231
        %5237 = vmatprep.subr.mxu0 0.0
        %5238 = vmatpush1.xpose.msra.mxu0 0.0
        %5239 = vmatprep.subr.mxu0 0.0
        %5240 = vmatpush1.xpose.msra.mxu0 0.0
        %5241 = vmatprep.subr.mxu0 0.0
        %5242 = vmatpush1.xpose.msra.mxu0 0.0
        %5243 = vmatprep.subr.mxu0 0.0
        %5244 = vmatpush1.xpose.msra.mxu0 0.0
        %5245 = vmatprep.subr.mxu0 0.0
        %5246 = vmatpush1.xpose.msra.mxu0 0.0
        %5247 = vmatprep.subr.mxu0 0.0
        %5248 = vmatpush1.xpose.msra.mxu0 0.0
        %5249 = vmatprep.subr.mxu0 0.0
        %5250 = vmatpush1.xpose.msra.mxu0 0.0
        %5251 = vmatprep.subr.mxu0 0.0
        %5252 = vmatpush1.xpose.msra.mxu0 0.0
        %5253 = vmatprep.subr.mxu0 0.0
        %5254 = vmatpush1.xpose.msra.mxu0 0.0
        %5255 = vmatprep.subr.mxu0 0.0
        %5256 = vmatpush1.xpose.msra.mxu0 0.0
        %5257 = vmatprep.subr.mxu0 0.0
        %5258 = vmatpush1.xpose.msra.mxu0 0.0
        %5259 = vmatprep.subr.mxu0 0.0
        %5260 = vmatpush1.xpose.msra.mxu0 0.0
        %5261 = vmatprep.subr.mxu0 0.0
        %5262 = vmatpush1.xpose.msra.mxu0 0.0
        %5263 = vmatprep.subr.mxu0 0.0
        %5264 = vmatpush1.xpose.msra.mxu0 0.0
        %5265 = vmatprep.subr.mxu0 0.0
        %5266 = vmatpush1.xpose.msra.mxu0 0.0
        %5267 = vmatprep.subr.mxu0 0.0
        %5268 = vmatpush1.xpose.msra.mxu0 0.0
        %5269 = vmatprep.subr.mxu0 0.0
        %5270 = vmatpush1.xpose.msra.mxu0 0.0
        %5271 = vmatprep.subr.mxu0 0.0
        %5272 = vmatpush1.xpose.msra.mxu0 0.0
        %5273 = vmatprep.subr.mxu0 0.0
        %5274 = vmatpush1.xpose.msra.mxu0 0.0
        %5275 = vmatprep.subr.mxu0 0.0
        %5276 = vmatpush1.xpose.msra.mxu0 0.0
        %5277 = vmatprep.subr.mxu0 0.0
        %5278 = vmatpush1.xpose.msra.mxu0 0.0
        %5279 = vmatprep.subr.mxu0 0.0
        %5280 = vmatpush1.xpose.msra.mxu0 0.0
        %5281 = vmatprep.subr.mxu0 0.0
        %5282 = vmatpush1.xpose.msra.mxu0 0.0
        %5283 = vmatprep.subr.mxu0 0.0
        %5284 = vmatpush1.xpose.msra.mxu0 0.0
        %5285 = vmatprep.subr.mxu0 0.0
        %5286 = vmatpush1.xpose.msra.mxu0 0.0
        %5287 = vmatprep.subr.mxu0 0.0
        %5288 = vmatpush1.xpose.msra.mxu0 0.0
        %5289 = vmatprep.subr.mxu0 0.0
        %5290 = vmatpush1.xpose.msra.mxu0 0.0
        %5291 = vmatprep.subr.mxu0 0.0
        %5292 = vmatpush1.xpose.msra.mxu0 0.0
        %5293 = vmatprep.subr.mxu0 0.0
        %5294 = vmatpush1.xpose.msra.mxu0 0.0
        %5295 = vmatprep.subr.mxu0 0.0
        %5296 = vmatpush1.xpose.msra.mxu0 0.0
        %5297 = vmatprep.mubr.f32.mxu0 0.0
        %5298 = vmatmul.mubr.f32.gmra.mrb[0].mxu0 %v5225
        %v5299 = vpop.f32.mrb[0].mxu0
        %v5300 = vadd.f32 0.0, %v5299
        %v5301 = vpop.f32.mrb[0].mxu0
        %5302 = vmatprep.mubr.f32.mxu0 0.0
        %5303 = vmatmul.mubr.f32.gmra.mrb[0].mxu0 %v5227
        %v5304 = vpop.f32.mrb[0].mxu0
        %v5305 = vadd.f32 0.0, %v5304
        %v5306 = vpop.f32.mrb[0].mxu0
        %5307 = vdwg.mxu0
        %v5308 = vmul.f32 %v5300, 0.25
        %v5309 = vmul.f32 %v5305, 0.25
        %v5310 = vadd.f32 %v5308, %v1163
        %v5311 = vadd.f32 %v5309, %v1163
        %v5312 = vsel %vm1442, %v5310, -inf
        %5313 = vmax.xlane.f32.xlu0 %v5312
        %v5314 = vpop.xlane.xlu0 %5313
        %v5315 = vsel %vm1442, %v5311, -inf
        %5316 = vmax.xlane.f32.xlu0 %v5315
        %v5317 = vpop.xlane.xlu0 %5316
        %v5318 = vsub.f32 %v5310, %v5314
        %v5319 = vsub.f32 %v5311, %v5317
        %v5320 = vmul.f32 %v5318, 1.442695
        %v5321 = vpow.pop %v5320
        %v5322 = vmul.f32 %v5319, 1.442695
        %v5323 = vpow.pop %v5322
        %v5324 = vsel %vm1442, %v5321, 0.0
        %5325 = vadd.xlane.f32.xlu0 %v5324
        %v5326 = vpop.xlane.xlu0 %5325
        %v5327 = vsel %vm1442, %v5323, 0.0
        %5328 = vadd.xlane.f32.xlu0 %v5327
        %v5329 = vpop.xlane.xlu0 %5328
        %v5330 = vrcp.pop %v5326
        %v5331 = vrcp.pop %v5329
        %v5332 = vmul.f32 %v5321, %v5330
        %v5333 = vmul.f32 %v5323, %v5331
        %5334 = vrot.lane.b32.xlu0 %v3943, 32
        %v5335 = vpop.permute.xlu0 %5334
        %5336 = vrot.lane.b32.xlu0 %v3946, 32
        %v5337 = vpop.permute.xlu0 %5336
        %v5341 = vsel %vm1442, %v5332, 0
        %v5344 = vsel %vm1442, %v5333, 0
        %5346 = vmatprep.subr.mxu0 0.0
        %5347 = vmatpush1.msra.mxu0 %v5335
        %5348 = vmatprep.subr.mxu0 0.0
        %5349 = vmatpush1.msra.mxu0 %v5337
        %5350 = vmatprep.subr.mxu0 0.0
        %5351 = vmatpush1.msra.mxu0 0.0
        %5352 = vmatprep.subr.mxu0 0.0
        %5353 = vmatpush1.msra.mxu0 0.0
        %5354 = vmatprep.subr.mxu0 0.0
        %5355 = vmatpush1.msra.mxu0 0.0
        %5356 = vmatprep.subr.mxu0 0.0
        %5357 = vmatpush1.msra.mxu0 0.0
        %5358 = vmatprep.subr.mxu0 0.0
        %5359 = vmatpush1.msra.mxu0 0.0
        %5360 = vmatprep.subr.mxu0 0.0
        %5361 = vmatpush1.msra.mxu0 0.0
        %5362 = vmatprep.subr.mxu0 0.0
        %5363 = vmatpush1.msra.mxu0 0.0
        %5364 = vmatprep.subr.mxu0 0.0
        %5365 = vmatpush1.msra.mxu0 0.0
        %5366 = vmatprep.subr.mxu0 0.0
        %5367 = vmatpush1.msra.mxu0 0.0
        %5368 = vmatprep.subr.mxu0 0.0
        %5369 = vmatpush1.msra.mxu0 0.0
        %5370 = vmatprep.subr.mxu0 0.0
        %5371 = vmatpush1.msra.mxu0 0.0
        %5372 = vmatprep.subr.mxu0 0.0
        %5373 = vmatpush1.msra.mxu0 0.0
        %5374 = vmatprep.subr.mxu0 0.0
        %5375 = vmatpush1.msra.mxu0 0.0
        %5376 = vmatprep.subr.mxu0 0.0
        %5377 = vmatpush1.msra.mxu0 0.0
        %5378 = vmatprep.subr.mxu0 0.0
        %5379 = vmatpush1.msra.mxu0 0.0
        %5380 = vmatprep.subr.mxu0 0.0
        %5381 = vmatpush1.msra.mxu0 0.0
        %5382 = vmatprep.subr.mxu0 0.0
        %5383 = vmatpush1.msra.mxu0 0.0
        %5384 = vmatprep.subr.mxu0 0.0
        %5385 = vmatpush1.msra.mxu0 0.0
        %5386 = vmatprep.subr.mxu0 0.0
        %5387 = vmatpush1.msra.mxu0 0.0
        %5388 = vmatprep.subr.mxu0 0.0
        %5389 = vmatpush1.msra.mxu0 0.0
        %5390 = vmatprep.subr.mxu0 0.0
        %5391 = vmatpush1.msra.mxu0 0.0
        %5392 = vmatprep.subr.mxu0 0.0
        %5393 = vmatpush1.msra.mxu0 0.0
        %5394 = vmatprep.subr.mxu0 0.0
        %5395 = vmatpush1.msra.mxu0 0.0
        %5396 = vmatprep.subr.mxu0 0.0
        %5397 = vmatpush1.msra.mxu0 0.0
        %5398 = vmatprep.subr.mxu0 0.0
        %5399 = vmatpush1.msra.mxu0 0.0
        %5400 = vmatprep.subr.mxu0 0.0
        %5401 = vmatpush1.msra.mxu0 0.0
        %5402 = vmatprep.subr.mxu0 0.0
        %5403 = vmatpush1.msra.mxu0 0.0
        %5404 = vmatprep.subr.mxu0 0.0
        %5405 = vmatpush1.msra.mxu0 0.0
        %5406 = vmatprep.subr.mxu0 0.0
        %5407 = vmatpush1.msra.mxu0 0.0
        %5408 = vmatprep.subr.mxu0 0.0
        %5409 = vmatpush1.msra.mxu0 0.0
        %5410 = vmatprep.mubr.f32.mxu0 0.0
        %5411 = vmatmul.mubr.f32.gmra.mrb[0].mxu0 %v5341
        %v5412 = vpop.f32.mrb[0].mxu0
        %v5413 = vadd.f32 0.0, %v5412
        %v5414 = vpop.f32.mrb[0].mxu0
        %5415 = vmatprep.mubr.f32.mxu0 0.0
        %5416 = vmatmul.mubr.f32.gmra.mrb[0].mxu0 %v5344
        %v5417 = vpop.f32.mrb[0].mxu0
        %v5418 = vadd.f32 0.0, %v5417
        %v5419 = vpop.f32.mrb[0].mxu0
        %5420 = vdwg.mxu0
        %5423 = vrot.lane.b32.xlu0 %v5413, 96
        %v5424 = vpop.permute.xlu0 %5423
        %5425 = vrot.lane.b32.xlu0 %v5418, 96
        %v5426 = vpop.permute.xlu0 %5425
        %5429 = vst.msk [vmem:[#allocation4] sm:$0xff] %vm2637, %v5424
        %5430 = vst.msk [vmem:[#allocation4 + $0x8] sm:$0xff] %vm2637, %v5426
        %5431 = vrot.lane.b32.xlu0 %v3900, 16
        %v5432 = vpop.permute.xlu0 %5431
        %5433 = vrot.lane.b32.xlu0 %v3904, 16
        %v5434 = vpop.permute.xlu0 %5433
        %5435 = vrot.lane.b32.xlu0 %v3902, 16
        %v5436 = vpop.permute.xlu0 %5435
        %5437 = vrot.lane.b32.xlu0 %v3906, 16
        %v5438 = vpop.permute.xlu0 %5437
        %v5439 = vsel %vm1442, %v5432, 0
        %v5441 = vsel %vm1442, %v5434, 0
        %v5443 = vsel %vm1442, %v5436, 0
        %v5445 = vsel %vm1442, %v5438, 0
        %5447 = vmatprep.subr.mxu0 0.0
        %5448 = vmatpush1.xpose.msra.mxu0 %v5443
        %5449 = vmatprep.subr.mxu0 0.0
        %5450 = vmatpush1.xpose.msra.mxu0 %v5445
        %5451 = vmatprep.subr.mxu0 0.0
        %5452 = vmatpush1.xpose.msra.mxu0 0.0
        %5453 = vmatprep.subr.mxu0 0.0
        %5454 = vmatpush1.xpose.msra.mxu0 0.0
        %5455 = vmatprep.subr.mxu0 0.0
        %5456 = vmatpush1.xpose.msra.mxu0 0.0
        %5457 = vmatprep.subr.mxu0 0.0
        %5458 = vmatpush1.xpose.msra.mxu0 0.0
        %5459 = vmatprep.subr.mxu0 0.0
        %5460 = vmatpush1.xpose.msra.mxu0 0.0
        %5461 = vmatprep.subr.mxu0 0.0
        %5462 = vmatpush1.xpose.msra.mxu0 0.0
        %5463 = vmatprep.subr.mxu0 0.0
        %5464 = vmatpush1.xpose.msra.mxu0 0.0
        %5465 = vmatprep.subr.mxu0 0.0
        %5466 = vmatpush1.xpose.msra.mxu0 0.0
        %5467 = vmatprep.subr.mxu0 0.0
        %5468 = vmatpush1.xpose.msra.mxu0 0.0
        %5469 = vmatprep.subr.mxu0 0.0
        %5470 = vmatpush1.xpose.msra.mxu0 0.0
        %5471 = vmatprep.subr.mxu0 0.0
        %5472 = vmatpush1.xpose.msra.mxu0 0.0
        %5473 = vmatprep.subr.mxu0 0.0
        %5474 = vmatpush1.xpose.msra.mxu0 0.0
        %5475 = vmatprep.subr.mxu0 0.0
        %5476 = vmatpush1.xpose.msra.mxu0 0.0
        %5477 = vmatprep.subr.mxu0 0.0
        %5478 = vmatpush1.xpose.msra.mxu0 0.0
        %5479 = vmatprep.subr.mxu0 0.0
        %5480 = vmatpush1.xpose.msra.mxu0 0.0
        %5481 = vmatprep.subr.mxu0 0.0
        %5482 = vmatpush1.xpose.msra.mxu0 0.0
        %5483 = vmatprep.subr.mxu0 0.0
        %5484 = vmatpush1.xpose.msra.mxu0 0.0
        %5485 = vmatprep.subr.mxu0 0.0
        %5486 = vmatpush1.xpose.msra.mxu0 0.0
        %5487 = vmatprep.subr.mxu0 0.0
        %5488 = vmatpush1.xpose.msra.mxu0 0.0
        %5489 = vmatprep.subr.mxu0 0.0
        %5490 = vmatpush1.xpose.msra.mxu0 0.0
        %5491 = vmatprep.subr.mxu0 0.0
        %5492 = vmatpush1.xpose.msra.mxu0 0.0
        %5493 = vmatprep.subr.mxu0 0.0
        %5494 = vmatpush1.xpose.msra.mxu0 0.0
        %5495 = vmatprep.subr.mxu0 0.0
        %5496 = vmatpush1.xpose.msra.mxu0 0.0
        %5497 = vmatprep.subr.mxu0 0.0
        %5498 = vmatpush1.xpose.msra.mxu0 0.0
        %5499 = vmatprep.subr.mxu0 0.0
        %5500 = vmatpush1.xpose.msra.mxu0 0.0
        %5501 = vmatprep.subr.mxu0 0.0
        %5502 = vmatpush1.xpose.msra.mxu0 0.0
        %5503 = vmatprep.subr.mxu0 0.0
        %5504 = vmatpush1.xpose.msra.mxu0 0.0
        %5505 = vmatprep.subr.mxu0 0.0
        %5506 = vmatpush1.xpose.msra.mxu0 0.0
        %5507 = vmatprep.subr.mxu0 0.0
        %5508 = vmatpush1.xpose.msra.mxu0 0.0
        %5509 = vmatprep.subr.mxu0 0.0
        %5510 = vmatpush1.xpose.msra.mxu0 0.0
        %5511 = vmatprep.mubr.f32.mxu0 0.0
        %5512 = vmatmul.mubr.f32.gmra.mrb[0].mxu0 %v5439
        %v5513 = vpop.f32.mrb[0].mxu0
        %v5514 = vadd.f32 0.0, %v5513
        %v5515 = vpop.f32.mrb[0].mxu0
        %5516 = vmatprep.mubr.f32.mxu0 0.0
        %5517 = vmatmul.mubr.f32.gmra.mrb[0].mxu0 %v5441
        %v5518 = vpop.f32.mrb[0].mxu0
        %v5519 = vadd.f32 0.0, %v5518
        %v5520 = vpop.f32.mrb[0].mxu0
        %5521 = vdwg.mxu0
        %v5522 = vmul.f32 %v5514, 0.25
        %v5523 = vmul.f32 %v5519, 0.25
        %v5524 = vadd.f32 %v5522, %v1163
        %v5525 = vadd.f32 %v5523, %v1163
        %v5526 = vsel %vm1442, %v5524, -inf
        %5527 = vmax.xlane.f32.xlu0 %v5526
        %v5528 = vpop.xlane.xlu0 %5527
        %v5529 = vsel %vm1442, %v5525, -inf
        %5530 = vmax.xlane.f32.xlu0 %v5529
        %v5531 = vpop.xlane.xlu0 %5530
        %v5532 = vsub.f32 %v5524, %v5528
        %v5533 = vsub.f32 %v5525, %v5531
        %v5534 = vmul.f32 %v5532, 1.442695
        %v5535 = vpow.pop %v5534
        %v5536 = vmul.f32 %v5533, 1.442695
        %v5537 = vpow.pop %v5536
        %v5538 = vsel %vm1442, %v5535, 0.0
        %5539 = vadd.xlane.f32.xlu0 %v5538
        %v5540 = vpop.xlane.xlu0 %5539
        %v5541 = vsel %vm1442, %v5537, 0.0
        %5542 = vadd.xlane.f32.xlu0 %v5541
        %v5543 = vpop.xlane.xlu0 %5542
        %v5544 = vrcp.pop %v5540
        %v5545 = vrcp.pop %v5543
        %v5546 = vmul.f32 %v5535, %v5544
        %v5547 = vmul.f32 %v5537, %v5545
        %5548 = vrot.lane.b32.xlu0 %v3943, 16
        %v5549 = vpop.permute.xlu0 %5548
        %5550 = vrot.lane.b32.xlu0 %v3946, 16
        %v5551 = vpop.permute.xlu0 %5550
        %v5555 = vsel %vm1442, %v5546, 0
        %v5558 = vsel %vm1442, %v5547, 0
        %5560 = vmatprep.subr.mxu0 0.0
        %5561 = vmatpush1.msra.mxu0 %v5549
        %5562 = vmatprep.subr.mxu0 0.0
        %5563 = vmatpush1.msra.mxu0 %v5551
        %5564 = vmatprep.subr.mxu0 0.0
        %5565 = vmatpush1.msra.mxu0 0.0
        %5566 = vmatprep.subr.mxu0 0.0
        %5567 = vmatpush1.msra.mxu0 0.0
        %5568 = vmatprep.subr.mxu0 0.0
        %5569 = vmatpush1.msra.mxu0 0.0
        %5570 = vmatprep.subr.mxu0 0.0
        %5571 = vmatpush1.msra.mxu0 0.0
        %5572 = vmatprep.subr.mxu0 0.0
        %5573 = vmatpush1.msra.mxu0 0.0
        %5574 = vmatprep.subr.mxu0 0.0
        %5575 = vmatpush1.msra.mxu0 0.0
        %5576 = vmatprep.subr.mxu0 0.0
        %5577 = vmatpush1.msra.mxu0 0.0
        %5578 = vmatprep.subr.mxu0 0.0
        %5579 = vmatpush1.msra.mxu0 0.0
        %5580 = vmatprep.subr.mxu0 0.0
        %5581 = vmatpush1.msra.mxu0 0.0
        %5582 = vmatprep.subr.mxu0 0.0
        %5583 = vmatpush1.msra.mxu0 0.0
        %5584 = vmatprep.subr.mxu0 0.0
        %5585 = vmatpush1.msra.mxu0 0.0
        %5586 = vmatprep.subr.mxu0 0.0
        %5587 = vmatpush1.msra.mxu0 0.0
        %5588 = vmatprep.subr.mxu0 0.0
        %5589 = vmatpush1.msra.mxu0 0.0
        %5590 = vmatprep.subr.mxu0 0.0
        %5591 = vmatpush1.msra.mxu0 0.0
        %5592 = vmatprep.subr.mxu0 0.0
        %5593 = vmatpush1.msra.mxu0 0.0
        %5594 = vmatprep.subr.mxu0 0.0
        %5595 = vmatpush1.msra.mxu0 0.0
        %5596 = vmatprep.subr.mxu0 0.0
        %5597 = vmatpush1.msra.mxu0 0.0
        %5598 = vmatprep.subr.mxu0 0.0
        %5599 = vmatpush1.msra.mxu0 0.0
        %5600 = vmatprep.subr.mxu0 0.0
        %5601 = vmatpush1.msra.mxu0 0.0
        %5602 = vmatprep.subr.mxu0 0.0
        %5603 = vmatpush1.msra.mxu0 0.0
        %5604 = vmatprep.subr.mxu0 0.0
        %5605 = vmatpush1.msra.mxu0 0.0
        %5606 = vmatprep.subr.mxu0 0.0
        %5607 = vmatpush1.msra.mxu0 0.0
        %5608 = vmatprep.subr.mxu0 0.0
        %5609 = vmatpush1.msra.mxu0 0.0
        %5610 = vmatprep.subr.mxu0 0.0
        %5611 = vmatpush1.msra.mxu0 0.0
        %5612 = vmatprep.subr.mxu0 0.0
        %5613 = vmatpush1.msra.mxu0 0.0
        %5614 = vmatprep.subr.mxu0 0.0
        %5615 = vmatpush1.msra.mxu0 0.0
        %5616 = vmatprep.subr.mxu0 0.0
        %5617 = vmatpush1.msra.mxu0 0.0
        %5618 = vmatprep.subr.mxu0 0.0
        %5619 = vmatpush1.msra.mxu0 0.0
        %5620 = vmatprep.subr.mxu0 0.0
        %5621 = vmatpush1.msra.mxu0 0.0
        %5622 = vmatprep.subr.mxu0 0.0
        %5623 = vmatpush1.msra.mxu0 0.0
        %5624 = vmatprep.mubr.f32.mxu0 0.0
        %5625 = vmatmul.mubr.f32.gmra.mrb[0].mxu0 %v5555
        %v5626 = vpop.f32.mrb[0].mxu0
        %v5627 = vadd.f32 0.0, %v5626
        %v5628 = vpop.f32.mrb[0].mxu0
        %5629 = vmatprep.mubr.f32.mxu0 0.0
        %5630 = vmatmul.mubr.f32.gmra.mrb[0].mxu0 %v5558
        %v5631 = vpop.f32.mrb[0].mxu0
        %v5632 = vadd.f32 0.0, %v5631
        %v5633 = vpop.f32.mrb[0].mxu0
        %5634 = vdwg.mxu0
        %5637 = vrot.lane.b32.xlu0 %v5627, 112
        %v5638 = vpop.permute.xlu0 %5637
        %5639 = vrot.lane.b32.xlu0 %v5632, 112
        %v5640 = vpop.permute.xlu0 %5639
        %5643 = vst.msk [vmem:[#allocation4] sm:$0xff] %vm2809, %v5638
        %5644 = vst.msk [vmem:[#allocation4 + $0x8] sm:$0xff] %vm2809, %v5640
        %v5645 = vld [vmem:[#allocation4] sm:$0xff]
        %v5646 = vld [vmem:[#allocation4 + $0x8] sm:$0xff]
        %v5647 = vpack.c.bf16 %v5646, %v5645
        %v5649 = vlaneseq
        %v5650 = vshrl.u32 %v5649, 7
        %v5651 = vsub.s32 0, %v5650
        %v5652 = vrot.slane %v3719, %v5651
        %v5670 = vunpack.c.l.b16 %v3703
        %v5671 = vunpack.c.l.b16 %v3704
        %v5672 = vunpack.c.l.b16 %v3705
        %v5673 = vunpack.c.l.b16 %v3706
        %v5674 = vunpack.c.l.b16 %v3707
        %v5675 = vunpack.c.l.b16 %v3708
        %v5676 = vunpack.c.l.b16 %v3709
        %v5677 = vunpack.c.l.b16 %v3710
        %v5678 = vunpack.c.l.b16 %v3711
        %v5679 = vunpack.c.l.b16 %v3712
        %v5680 = vunpack.c.l.b16 %v3713
        %v5681 = vunpack.c.l.b16 %v3714
        %v5682 = vunpack.c.l.b16 %v3715
        %v5683 = vunpack.c.l.b16 %v3716
        %v5684 = vunpack.c.l.b16 %v3717
        %v5685 = vunpack.c.l.b16 %v3718
        %v5686 = vpack.c.b16 %v5671, %v5670
        %v5687 = vpack.c.b16 %v5673, %v5672
        %v5688 = vpack.c.b16 %v5675, %v5674
        %v5689 = vpack.c.b16 %v5677, %v5676
        %v5690 = vpack.c.b16 %v5679, %v5678
        %v5691 = vpack.c.b16 %v5681, %v5680
        %v5692 = vpack.c.b16 %v5683, %v5682
        %v5693 = vpack.c.b16 %v5685, %v5684
        %5702 = vmatprep.subr.bf16.mxu0 0
        %5703 = vmatpush1.bf16.msra.mxu0 %v5686
        %5704 = vmatprep.subr.bf16.mxu0 0
        %5705 = vmatpush1.bf16.msra.mxu0 %v5687
        %5706 = vmatprep.subr.bf16.mxu0 0
        %5707 = vmatpush1.bf16.msra.mxu0 %v5688
        %5708 = vmatprep.subr.bf16.mxu0 0
        %5709 = vmatpush1.bf16.msra.mxu0 %v5689
        %5710 = vmatprep.subr.bf16.mxu0 0
        %5711 = vmatpush1.bf16.msra.mxu0 %v5690
        %5712 = vmatprep.subr.bf16.mxu0 0
        %5713 = vmatpush1.bf16.msra.mxu0 %v5691
        %5714 = vmatprep.subr.bf16.mxu0 0
        %5715 = vmatpush1.bf16.msra.mxu0 %v5692
        %5716 = vmatprep.subr.bf16.mxu0 0
        %5717 = vmatpush1.bf16.msra.mxu0 %v5693
        %5718 = vmatprep.subr.bf16.mxu0 0
        %5719 = vmatpush1.bf16.msra.mxu0 0
        %5720 = vmatprep.subr.bf16.mxu0 0
        %5721 = vmatpush1.bf16.msra.mxu0 0
        %5722 = vmatprep.subr.bf16.mxu0 0
        %5723 = vmatpush1.bf16.msra.mxu0 0
        %5724 = vmatprep.subr.bf16.mxu0 0
        %5725 = vmatpush1.bf16.msra.mxu0 0
        %5726 = vmatprep.subr.bf16.mxu0 0
        %5727 = vmatpush1.bf16.msra.mxu0 0
        %5728 = vmatprep.subr.bf16.mxu0 0
        %5729 = vmatpush1.bf16.msra.mxu0 0
        %5730 = vmatprep.subr.bf16.mxu0 0
        %5731 = vmatpush1.bf16.msra.mxu0 0
        %5732 = vmatprep.subr.bf16.mxu0 0
        %5733 = vmatpush1.bf16.msra.mxu0 0
        %5734 = vmatprep.mubr.bf16.mxu0 0
        %5735 = vmatmul.mubr.bf16.gmra.mrb[0].mxu0 %v5647
        %v5736 = vpop.f32.mrb[0].mxu0
        %v5737 = vadd.f32 %v5652, %v5736
        %v5738 = vpop.f32.mrb[0].mxu0
        %v5739 = vpop.f32.mrb[0].mxu0
        %v5740 = vadd.f32 %v5652, %v5739
        %v5741 = vpop.f32.mrb[0].mxu0
        %5742 = vdwg.mxu0
        %v5743 = vadd.f32 %v3633, %v5737
        %v5744 = vadd.f32 %v3634, %v5740
        %5745 = vadd.xlane.f32.xlu0 %v5743
        %v5746 = vpop.xlane.xlu0 %5745
        %5747 = vadd.xlane.f32.xlu0 %v5744
        %v5748 = vpop.xlane.xlu0 %5747
        %v5749 = vmul.f32 %v5746, %v2910
        %v5750 = vmul.f32 %v5748, %v2910
        %v5751 = vsub.f32 %v5743, %v5749
        %v5752 = vsub.f32 %v5744, %v5750
        %v5753 = vmul.f32 %v5751, %v5751
        %v5754 = vmul.f32 %v5752, %v5752
        %5755 = vadd.xlane.f32.xlu0 %v5753
        %v5756 = vpop.xlane.xlu0 %5755
        %5757 = vadd.xlane.f32.xlu0 %v5754
        %v5758 = vpop.xlane.xlu0 %5757
        %v5759 = vmul.f32 %v5756, %v2910
        %v5760 = vmul.f32 %v5758, %v2910
        %v5761 = vadd.f32 %v5759, 1e-06
        %v5762 = vadd.f32 %v5760, 1e-06
        %v5763 = vrsqrt.pop %v5761
        %v5764 = vrsqrt.pop %v5762
        %v5765 = vmul.f32 %v5751, %v5763
        %v5766 = vmul.f32 %v5752, %v5764
        %v5767 = vlaneseq
        %v5768 = vshrl.u32 %v5767, 7
        %v5769 = vsub.s32 2, %v5768
        %v5770 = vrot.slane %v3635, %v5769
        %v5771 = vmul.f32 %v5765, %v5770
        %v5772 = vmul.f32 %v5766, %v5770
        %v5773 = vlaneseq
        %v5774 = vshrl.u32 %v5773, 7
        %v5775 = vsub.s32 3, %v5774
        %v5776 = vrot.slane %v3635, %v5775
        %v5777 = vadd.f32 %v5771, %v5776
        %v5778 = vadd.f32 %v5772, %v5776
        %v5779 = vld [vmem:[%s1143] sm:$0xff]
        %v5780 = vld [vmem:[%s1143 + $0x8] sm:$0xff]
        %v5781 = vld [vmem:[%s1143 + $0x10] sm:$0xff]
        %v5782 = vld [vmem:[%s1143 + $0x18] sm:$0xff]
        %v5783 = vld [vmem:[%s1143 + $0x20] sm:$0xff]
        %v5784 = vld [vmem:[%s1143 + $0x28] sm:$0xff]
        %v5785 = vld [vmem:[%s1143 + $0x30] sm:$0xff]
        %v5786 = vld [vmem:[%s1143 + $0x38] sm:$0xff]
        %v5787 = vld [vmem:[%s1143 + $0x40] sm:$0xff]
        %v5788 = vld [vmem:[%s1143 + $0x48] sm:$0xff]
        %v5789 = vld [vmem:[%s1143 + $0x50] sm:$0xff]
        %v5790 = vld [vmem:[%s1143 + $0x58] sm:$0xff]
        %v5791 = vld [vmem:[%s1143 + $0x60] sm:$0xff]
        %v5792 = vld [vmem:[%s1143 + $0x68] sm:$0xff]
        %v5793 = vld [vmem:[%s1143 + $0x70] sm:$0xff]
        %v5794 = vld [vmem:[%s1143 + $0x78] sm:$0xff]
        %v5795 = vld [vmem:[%s1143 + $0x80] sm:$0xff]
        %v5796 = vld [vmem:[%s1143 + $0x88] sm:$0xff]
        %v5797 = vld [vmem:[%s1143 + $0x90] sm:$0xff]
        %v5798 = vld [vmem:[%s1143 + $0x98] sm:$0xff]
        %v5799 = vld [vmem:[%s1143 + $0xa0] sm:$0xff]
        %v5800 = vld [vmem:[%s1143 + $0xa8] sm:$0xff]
        %v5801 = vld [vmem:[%s1143 + $0xb0] sm:$0xff]
        %v5802 = vld [vmem:[%s1143 + $0xb8] sm:$0xff]
        %v5803 = vld [vmem:[%s1143 + $0xc0] sm:$0xff]
        %v5804 = vld [vmem:[%s1143 + $0xc8] sm:$0xff]
        %v5805 = vld [vmem:[%s1143 + $0xd0] sm:$0xff]
        %v5806 = vld [vmem:[%s1143 + $0xd8] sm:$0xff]
        %v5807 = vld [vmem:[%s1143 + $0xe0] sm:$0xff]
        %v5808 = vld [vmem:[%s1143 + $0xe8] sm:$0xff]
        %v5809 = vld [vmem:[%s1143 + $0xf0] sm:$0xff]
        %v5810 = vld [vmem:[%s1143 + $0xf8] sm:$0xff]
        %v5811 = vpack.c.bf16 %v5778, %v5777
        %v5812 = vld [vmem:[%s956] sm:$0xf]
        %v5814 = vlaneseq
        %v5815 = vshrl.u32 %v5814, 7
        %v5816 = vsub.s32 0, %v5815
        %v5817 = vrot.slane %v5812, %v5816
        %v5818 = vlaneseq
        %v5819 = vshrl.u32 %v5818, 7
        %v5820 = vsub.s32 1, %v5819
        %v5821 = vrot.slane %v5812, %v5820
        %v5822 = vlaneseq
        %v5823 = vshrl.u32 %v5822, 7
        %v5824 = vsub.s32 2, %v5823
        %v5825 = vrot.slane %v5812, %v5824
        %v5826 = vlaneseq
        %v5827 = vshrl.u32 %v5826, 7
        %v5828 = vsub.s32 3, %v5827
        %v5829 = vrot.slane %v5812, %v5828
        %v5866 = vunpack.c.l.b16 %v5779
        %v5867 = vunpack.c.h.b16 %v5779
        %v5868 = vunpack.c.l.b16 %v5780
        %v5869 = vunpack.c.h.b16 %v5780
        %v5870 = vunpack.c.l.b16 %v5781
        %v5871 = vunpack.c.h.b16 %v5781
        %v5872 = vunpack.c.l.b16 %v5782
        %v5873 = vunpack.c.h.b16 %v5782
        %v5874 = vunpack.c.l.b16 %v5783
        %v5875 = vunpack.c.h.b16 %v5783
        %v5876 = vunpack.c.l.b16 %v5784
        %v5877 = vunpack.c.h.b16 %v5784
        %v5878 = vunpack.c.l.b16 %v5785
        %v5879 = vunpack.c.h.b16 %v5785
        %v5880 = vunpack.c.l.b16 %v5786
        %v5881 = vunpack.c.h.b16 %v5786
        %v5882 = vunpack.c.l.b16 %v5787
        %v5883 = vunpack.c.h.b16 %v5787
        %v5884 = vunpack.c.l.b16 %v5788
        %v5885 = vunpack.c.h.b16 %v5788
        %v5886 = vunpack.c.l.b16 %v5789
        %v5887 = vunpack.c.h.b16 %v5789
        %v5888 = vunpack.c.l.b16 %v5790
        %v5889 = vunpack.c.h.b16 %v5790
        %v5890 = vunpack.c.l.b16 %v5791
        %v5891 = vunpack.c.h.b16 %v5791
        %v5892 = vunpack.c.l.b16 %v5792
        %v5893 = vunpack.c.h.b16 %v5792
        %v5894 = vunpack.c.l.b16 %v5793
        %v5895 = vunpack.c.h.b16 %v5793
        %v5896 = vunpack.c.l.b16 %v5794
        %v5897 = vunpack.c.h.b16 %v5794
        %v5898 = vunpack.c.l.b16 %v5795
        %v5899 = vunpack.c.h.b16 %v5795
        %v5900 = vunpack.c.l.b16 %v5796
        %v5901 = vunpack.c.h.b16 %v5796
        %v5902 = vunpack.c.l.b16 %v5797
        %v5903 = vunpack.c.h.b16 %v5797
        %v5904 = vunpack.c.l.b16 %v5798
        %v5905 = vunpack.c.h.b16 %v5798
        %v5906 = vunpack.c.l.b16 %v5799
        %v5907 = vunpack.c.h.b16 %v5799
        %v5908 = vunpack.c.l.b16 %v5800
        %v5909 = vunpack.c.h.b16 %v5800
        %v5910 = vunpack.c.l.b16 %v5801
        %v5911 = vunpack.c.h.b16 %v5801
        %v5912 = vunpack.c.l.b16 %v5802
        %v5913 = vunpack.c.h.b16 %v5802
        %v5914 = vunpack.c.l.b16 %v5803
        %v5915 = vunpack.c.h.b16 %v5803
        %v5916 = vunpack.c.l.b16 %v5804
        %v5917 = vunpack.c.h.b16 %v5804
        %v5918 = vunpack.c.l.b16 %v5805
        %v5919 = vunpack.c.h.b16 %v5805
        %v5920 = vunpack.c.l.b16 %v5806
        %v5921 = vunpack.c.h.b16 %v5806
        %v5922 = vunpack.c.l.b16 %v5807
        %v5923 = vunpack.c.h.b16 %v5807
        %v5924 = vunpack.c.l.b16 %v5808
        %v5925 = vunpack.c.h.b16 %v5808
        %v5926 = vunpack.c.l.b16 %v5809
        %v5927 = vunpack.c.h.b16 %v5809
        %v5928 = vunpack.c.l.b16 %v5810
        %v5929 = vunpack.c.h.b16 %v5810
        %v5930 = vpack.c.b16 %v5870, %v5866
        %v5931 = vpack.c.b16 %v5871, %v5867
        %v5932 = vpack.c.b16 %v5872, %v5868
        %v5933 = vpack.c.b16 %v5873, %v5869
        %v5934 = vpack.c.b16 %v5878, %v5874
        %v5935 = vpack.c.b16 %v5879, %v5875
        %v5936 = vpack.c.b16 %v5880, %v5876
        %v5937 = vpack.c.b16 %v5881, %v5877
        %v5938 = vpack.c.b16 %v5886, %v5882
        %v5939 = vpack.c.b16 %v5887, %v5883
        %v5940 = vpack.c.b16 %v5888, %v5884
        %v5941 = vpack.c.b16 %v5889, %v5885
        %v5942 = vpack.c.b16 %v5894, %v5890
        %v5943 = vpack.c.b16 %v5895, %v5891
        %v5944 = vpack.c.b16 %v5896, %v5892
        %v5945 = vpack.c.b16 %v5897, %v5893
        %v5946 = vpack.c.b16 %v5902, %v5898
        %v5947 = vpack.c.b16 %v5903, %v5899
        %v5948 = vpack.c.b16 %v5904, %v5900
        %v5949 = vpack.c.b16 %v5905, %v5901
        %v5950 = vpack.c.b16 %v5910, %v5906
        %v5951 = vpack.c.b16 %v5911, %v5907
        %v5952 = vpack.c.b16 %v5912, %v5908
        %v5953 = vpack.c.b16 %v5913, %v5909
        %v5954 = vpack.c.b16 %v5918, %v5914
        %v5955 = vpack.c.b16 %v5919, %v5915
        %v5956 = vpack.c.b16 %v5920, %v5916
        %v5957 = vpack.c.b16 %v5921, %v5917
        %v5958 = vpack.c.b16 %v5926, %v5922
        %v5959 = vpack.c.b16 %v5927, %v5923
        %v5960 = vpack.c.b16 %v5928, %v5924
        %v5961 = vpack.c.b16 %v5929, %v5925
        %5994 = vmatprep.subr.bf16.mxu0 %v5931
        %5995 = vmatpush1.bf16.msra.mxu0 %v5930
        %5996 = vmatprep.subr.bf16.mxu0 %v5935
        %5997 = vmatpush1.bf16.msra.mxu0 %v5934
        %5998 = vmatprep.subr.bf16.mxu0 %v5939
        %5999 = vmatpush1.bf16.msra.mxu0 %v5938
        %6000 = vmatprep.subr.bf16.mxu0 %v5943
        %6001 = vmatpush1.bf16.msra.mxu0 %v5942
        %6002 = vmatprep.subr.bf16.mxu0 %v5947
        %6003 = vmatpush1.bf16.msra.mxu0 %v5946
        %6004 = vmatprep.subr.bf16.mxu0 %v5951
        %6005 = vmatpush1.bf16.msra.mxu0 %v5950
        %6006 = vmatprep.subr.bf16.mxu0 %v5955
        %6007 = vmatpush1.bf16.msra.mxu0 %v5954
        %6008 = vmatprep.subr.bf16.mxu0 %v5959
        %6009 = vmatpush1.bf16.msra.mxu0 %v5958
        %6010 = vmatprep.subr.bf16.mxu0 0
        %6011 = vmatpush1.bf16.msra.mxu0 0
        %6012 = vmatprep.subr.bf16.mxu0 0
        %6013 = vmatpush1.bf16.msra.mxu0 0
        %6014 = vmatprep.subr.bf16.mxu0 0
        %6015 = vmatpush1.bf16.msra.mxu0 0
        %6016 = vmatprep.subr.bf16.mxu0 0
        %6017 = vmatpush1.bf16.msra.mxu0 0
        %6018 = vmatprep.subr.bf16.mxu0 0
        %6019 = vmatpush1.bf16.msra.mxu0 0
        %6020 = vmatprep.subr.bf16.mxu0 0
        %6021 = vmatpush1.bf16.msra.mxu0 0
        %6022 = vmatprep.subr.bf16.mxu0 0
        %6023 = vmatpush1.bf16.msra.mxu0 0
        %6024 = vmatprep.subr.bf16.mxu0 0
        %6025 = vmatpush1.bf16.msra.mxu0 0
        %6026 = vmatprep.mubr.bf16.mxu0 0
        %6027 = vmatmul.mubr.bf16.gmra.mrb[0].mxu0 %v5811
        %v6028 = vpop.f32.mrb[0].mxu0
        %v6029 = vadd.f32 %v5817, %v6028
        %v6030 = vpop.f32.mrb[0].mxu0
        %v6031 = vadd.f32 %v5821, %v6030
        %v6032 = vpop.f32.mrb[0].mxu0
        %v6033 = vadd.f32 %v5817, %v6032
        %v6034 = vpop.f32.mrb[0].mxu0
        %v6035 = vadd.f32 %v5821, %v6034
        %6036 = vdwg.mxu0
        %6037 = vmatprep.subr.bf16.mxu0 %v5933
        %6038 = vmatpush1.bf16.msra.mxu0 %v5932
        %6039 = vmatprep.subr.bf16.mxu0 %v5937
        %6040 = vmatpush1.bf16.msra.mxu0 %v5936
        %6041 = vmatprep.subr.bf16.mxu0 %v5941
        %6042 = vmatpush1.bf16.msra.mxu0 %v5940
        %6043 = vmatprep.subr.bf16.mxu0 %v5945
        %6044 = vmatpush1.bf16.msra.mxu0 %v5944
        %6045 = vmatprep.subr.bf16.mxu0 %v5949
        %6046 = vmatpush1.bf16.msra.mxu0 %v5948
        %6047 = vmatprep.subr.bf16.mxu0 %v5953
        %6048 = vmatpush1.bf16.msra.mxu0 %v5952
        %6049 = vmatprep.subr.bf16.mxu0 %v5957
        %6050 = vmatpush1.bf16.msra.mxu0 %v5956
        %6051 = vmatprep.subr.bf16.mxu0 %v5961
        %6052 = vmatpush1.bf16.msra.mxu0 %v5960
        %6053 = vmatprep.subr.bf16.mxu0 0
        %6054 = vmatpush1.bf16.msra.mxu0 0
        %6055 = vmatprep.subr.bf16.mxu0 0
        %6056 = vmatpush1.bf16.msra.mxu0 0
        %6057 = vmatprep.subr.bf16.mxu0 0
        %6058 = vmatpush1.bf16.msra.mxu0 0
        %6059 = vmatprep.subr.bf16.mxu0 0
        %6060 = vmatpush1.bf16.msra.mxu0 0
        %6061 = vmatprep.subr.bf16.mxu0 0
        %6062 = vmatpush1.bf16.msra.mxu0 0
        %6063 = vmatprep.subr.bf16.mxu0 0
        %6064 = vmatpush1.bf16.msra.mxu0 0
        %6065 = vmatprep.subr.bf16.mxu0 0
        %6066 = vmatpush1.bf16.msra.mxu0 0
        %6067 = vmatprep.subr.bf16.mxu0 0
        %6068 = vmatpush1.bf16.msra.mxu0 0
        %6069 = vmatprep.mubr.bf16.mxu0 0
        %6070 = vmatmul.mubr.bf16.gmra.mrb[0].mxu0 %v5811
        %v6071 = vpop.f32.mrb[0].mxu0
        %v6072 = vadd.f32 %v5825, %v6071
        %v6073 = vpop.f32.mrb[0].mxu0
        %v6074 = vadd.f32 %v5829, %v6073
        %v6075 = vpop.f32.mrb[0].mxu0
        %v6076 = vadd.f32 %v5825, %v6075
        %v6077 = vpop.f32.mrb[0].mxu0
        %v6078 = vadd.f32 %v5829, %v6077
        %6079 = vdwg.mxu0
        %v6080 = vmul.f32 %v6029, 0.5
        %v6081 = vmul.f32 %v6031, 0.5
        %v6082 = vmul.f32 %v6072, 0.5
        %v6083 = vmul.f32 %v6074, 0.5
        %v6084 = vmul.f32 %v6033, 0.5
        %v6085 = vmul.f32 %v6035, 0.5
        %v6086 = vmul.f32 %v6076, 0.5
        %v6087 = vmul.f32 %v6078, 0.5
        %v6088 = vmul.f32 %v6029, 0.044715
        %v6089 = vmul.f32 %v6031, 0.044715
        %v6090 = vmul.f32 %v6072, 0.044715
        %v6091 = vmul.f32 %v6074, 0.044715
        %v6092 = vmul.f32 %v6033, 0.044715
        %v6093 = vmul.f32 %v6035, 0.044715
        %v6094 = vmul.f32 %v6076, 0.044715
        %v6095 = vmul.f32 %v6078, 0.044715
        %v6096 = vmul.f32 %v6088, %v6029
        %v6097 = vmul.f32 %v6089, %v6031
        %v6098 = vmul.f32 %v6090, %v6072
        %v6099 = vmul.f32 %v6091, %v6074
        %v6100 = vmul.f32 %v6092, %v6033
        %v6101 = vmul.f32 %v6093, %v6035
        %v6102 = vmul.f32 %v6094, %v6076
        %v6103 = vmul.f32 %v6095, %v6078
        %v6104 = vmul.f32 %v6096, %v6029
        %v6105 = vmul.f32 %v6097, %v6031
        %v6106 = vmul.f32 %v6098, %v6072
        %v6107 = vmul.f32 %v6099, %v6074
        %v6108 = vmul.f32 %v6100, %v6033
        %v6109 = vmul.f32 %v6101, %v6035
        %v6110 = vmul.f32 %v6102, %v6076
        %v6111 = vmul.f32 %v6103, %v6078
        %v6112 = vadd.f32 %v6029, %v6104
        %v6113 = vadd.f32 %v6031, %v6105
        %v6114 = vadd.f32 %v6072, %v6106
        %v6115 = vadd.f32 %v6074, %v6107
        %v6116 = vadd.f32 %v6033, %v6108
        %v6117 = vadd.f32 %v6035, %v6109
        %v6118 = vadd.f32 %v6076, %v6110
        %v6119 = vadd.f32 %v6078, %v6111
        %v6120 = vmul.f32 %v6112, 0.7978846
        %v6121 = vmul.f32 %v6113, 0.7978846
        %v6122 = vmul.f32 %v6114, 0.7978846
        %v6123 = vmul.f32 %v6115, 0.7978846
        %v6124 = vmul.f32 %v6116, 0.7978846
        %v6125 = vmul.f32 %v6117, 0.7978846
        %v6126 = vmul.f32 %v6118, 0.7978846
        %v6127 = vmul.f32 %v6119, 0.7978846
        %v6128 = vtanh.pop %v6120
        %v6129 = vtanh.pop %v6121
        %v6130 = vtanh.pop %v6122
        %v6131 = vtanh.pop %v6123
        %v6132 = vtanh.pop %v6124
        %v6133 = vtanh.pop %v6125
        %v6134 = vtanh.pop %v6126
        %v6135 = vtanh.pop %v6127
        %v6136 = vadd.f32 %v6128, 1.0
        %v6137 = vadd.f32 %v6129, 1.0
        %v6138 = vadd.f32 %v6130, 1.0
        %v6139 = vadd.f32 %v6131, 1.0
        %v6140 = vadd.f32 %v6132, 1.0
        %v6141 = vadd.f32 %v6133, 1.0
        %v6142 = vadd.f32 %v6134, 1.0
        %v6143 = vadd.f32 %v6135, 1.0
        %v6144 = vmul.f32 %v6080, %v6136
        %v6145 = vmul.f32 %v6081, %v6137
        %v6146 = vmul.f32 %v6082, %v6138
        %v6147 = vmul.f32 %v6083, %v6139
        %v6148 = vmul.f32 %v6084, %v6140
        %v6149 = vmul.f32 %v6085, %v6141
        %v6150 = vmul.f32 %v6086, %v6142
        %v6151 = vmul.f32 %v6087, %v6143
        %v6152 = vld [vmem:[%s965] sm:$0xf]
        %v6153 = vld [vmem:[%s965 + $0x4] sm:$0xf]
        %v6154 = vld [vmem:[%s965 + $0x8] sm:$0xf]
        %v6155 = vld [vmem:[%s965 + $0xc] sm:$0xf]
        %v6156 = vld [vmem:[%s965 + $0x10] sm:$0xf]
        %v6157 = vld [vmem:[%s965 + $0x14] sm:$0xf]
        %v6158 = vld [vmem:[%s965 + $0x18] sm:$0xf]
        %v6159 = vld [vmem:[%s965 + $0x1c] sm:$0xf]
        %v6160 = vld [vmem:[%s965 + $0x20] sm:$0xf]
        %v6161 = vld [vmem:[%s965 + $0x24] sm:$0xf]
        %v6162 = vld [vmem:[%s965 + $0x28] sm:$0xf]
        %v6163 = vld [vmem:[%s965 + $0x2c] sm:$0xf]
        %v6164 = vld [vmem:[%s965 + $0x30] sm:$0xf]
        %v6165 = vld [vmem:[%s965 + $0x34] sm:$0xf]
        %v6166 = vld [vmem:[%s965 + $0x38] sm:$0xf]
        %v6167 = vld [vmem:[%s965 + $0x3c] sm:$0xf]
        %v6168 = vld [vmem:[%s965 + $0x40] sm:$0xf]
        %v6169 = vld [vmem:[%s965 + $0x44] sm:$0xf]
        %v6170 = vld [vmem:[%s965 + $0x48] sm:$0xf]
        %v6171 = vld [vmem:[%s965 + $0x4c] sm:$0xf]
        %v6172 = vld [vmem:[%s965 + $0x50] sm:$0xf]
        %v6173 = vld [vmem:[%s965 + $0x54] sm:$0xf]
        %v6174 = vld [vmem:[%s965 + $0x58] sm:$0xf]
        %v6175 = vld [vmem:[%s965 + $0x5c] sm:$0xf]
        %v6176 = vld [vmem:[%s965 + $0x60] sm:$0xf]
        %v6177 = vld [vmem:[%s965 + $0x64] sm:$0xf]
        %v6178 = vld [vmem:[%s965 + $0x68] sm:$0xf]
        %v6179 = vld [vmem:[%s965 + $0x6c] sm:$0xf]
        %v6180 = vld [vmem:[%s965 + $0x70] sm:$0xf]
        %v6181 = vld [vmem:[%s965 + $0x74] sm:$0xf]
        %v6182 = vld [vmem:[%s965 + $0x78] sm:$0xf]
        %v6183 = vld [vmem:[%s965 + $0x7c] sm:$0xf]
        %v6184 = vld [vmem:[%s965 + $0x80] sm:$0xf]
        %v6185 = vld [vmem:[%s965 + $0x84] sm:$0xf]
        %v6186 = vld [vmem:[%s965 + $0x88] sm:$0xf]
        %v6187 = vld [vmem:[%s965 + $0x8c] sm:$0xf]
        %v6188 = vld [vmem:[%s965 + $0x90] sm:$0xf]
        %v6189 = vld [vmem:[%s965 + $0x94] sm:$0xf]
        %v6190 = vld [vmem:[%s965 + $0x98] sm:$0xf]
        %v6191 = vld [vmem:[%s965 + $0x9c] sm:$0xf]
        %v6192 = vld [vmem:[%s965 + $0xa0] sm:$0xf]
        %v6193 = vld [vmem:[%s965 + $0xa4] sm:$0xf]
        %v6194 = vld [vmem:[%s965 + $0xa8] sm:$0xf]
        %v6195 = vld [vmem:[%s965 + $0xac] sm:$0xf]
        %v6196 = vld [vmem:[%s965 + $0xb0] sm:$0xf]
        %v6197 = vld [vmem:[%s965 + $0xb4] sm:$0xf]
        %v6198 = vld [vmem:[%s965 + $0xb8] sm:$0xf]
        %v6199 = vld [vmem:[%s965 + $0xbc] sm:$0xf]
        %v6200 = vld [vmem:[%s965 + $0xc0] sm:$0xf]
        %v6201 = vld [vmem:[%s965 + $0xc4] sm:$0xf]
        %v6202 = vld [vmem:[%s965 + $0xc8] sm:$0xf]
        %v6203 = vld [vmem:[%s965 + $0xcc] sm:$0xf]
        %v6204 = vld [vmem:[%s965 + $0xd0] sm:$0xf]
        %v6205 = vld [vmem:[%s965 + $0xd4] sm:$0xf]
        %v6206 = vld [vmem:[%s965 + $0xd8] sm:$0xf]
        %v6207 = vld [vmem:[%s965 + $0xdc] sm:$0xf]
        %v6208 = vld [vmem:[%s965 + $0xe0] sm:$0xf]
        %v6209 = vld [vmem:[%s965 + $0xe4] sm:$0xf]
        %v6210 = vld [vmem:[%s965 + $0xe8] sm:$0xf]
        %v6211 = vld [vmem:[%s965 + $0xec] sm:$0xf]
        %v6212 = vld [vmem:[%s965 + $0xf0] sm:$0xf]
        %v6213 = vld [vmem:[%s965 + $0xf4] sm:$0xf]
        %v6214 = vld [vmem:[%s965 + $0xf8] sm:$0xf]
        %v6215 = vld [vmem:[%s965 + $0xfc] sm:$0xf]
        %v6216 = vpack.c.bf16 %v6148, %v6144
        %v6217 = vpack.c.bf16 %v6149, %v6145
        %v6218 = vpack.c.bf16 %v6150, %v6146
        %v6219 = vpack.c.bf16 %v6151, %v6147
        %v6220 = vld [vmem:[%s973] sm:$0x1]
        %v6222 = vlaneseq
        %v6223 = vshrl.u32 %v6222, 7
        %v6224 = vsub.s32 0, %v6223
        %v6225 = vrot.slane %v6220, %v6224
        %v6291 = vunpack.c.l.b16 %v6152
        %v6292 = vunpack.c.l.b16 %v6153
        %v6293 = vunpack.c.l.b16 %v6154
        %v6294 = vunpack.c.l.b16 %v6155
        %v6295 = vunpack.c.l.b16 %v6156
        %v6296 = vunpack.c.l.b16 %v6157
        %v6297 = vunpack.c.l.b16 %v6158
        %v6298 = vunpack.c.l.b16 %v6159
        %v6299 = vunpack.c.l.b16 %v6160
        %v6300 = vunpack.c.l.b16 %v6161
        %v6301 = vunpack.c.l.b16 %v6162
        %v6302 = vunpack.c.l.b16 %v6163
        %v6303 = vunpack.c.l.b16 %v6164
        %v6304 = vunpack.c.l.b16 %v6165
        %v6305 = vunpack.c.l.b16 %v6166
        %v6306 = vunpack.c.l.b16 %v6167
        %v6307 = vunpack.c.l.b16 %v6168
        %v6308 = vunpack.c.l.b16 %v6169
        %v6309 = vunpack.c.l.b16 %v6170
        %v6310 = vunpack.c.l.b16 %v6171
        %v6311 = vunpack.c.l.b16 %v6172
        %v6312 = vunpack.c.l.b16 %v6173
        %v6313 = vunpack.c.l.b16 %v6174
        %v6314 = vunpack.c.l.b16 %v6175
        %v6315 = vunpack.c.l.b16 %v6176
        %v6316 = vunpack.c.l.b16 %v6177
        %v6317 = vunpack.c.l.b16 %v6178
        %v6318 = vunpack.c.l.b16 %v6179
        %v6319 = vunpack.c.l.b16 %v6180
        %v6320 = vunpack.c.l.b16 %v6181
        %v6321 = vunpack.c.l.b16 %v6182
        %v6322 = vunpack.c.l.b16 %v6183
        %v6323 = vunpack.c.l.b16 %v6184
        %v6324 = vunpack.c.l.b16 %v6185
        %v6325 = vunpack.c.l.b16 %v6186
        %v6326 = vunpack.c.l.b16 %v6187
        %v6327 = vunpack.c.l.b16 %v6188
        %v6328 = vunpack.c.l.b16 %v6189
        %v6329 = vunpack.c.l.b16 %v6190
        %v6330 = vunpack.c.l.b16 %v6191
        %v6331 = vunpack.c.l.b16 %v6192
        %v6332 = vunpack.c.l.b16 %v6193
        %v6333 = vunpack.c.l.b16 %v6194
        %v6334 = vunpack.c.l.b16 %v6195
        %v6335 = vunpack.c.l.b16 %v6196
        %v6336 = vunpack.c.l.b16 %v6197
        %v6337 = vunpack.c.l.b16 %v6198
        %v6338 = vunpack.c.l.b16 %v6199
        %v6339 = vunpack.c.l.b16 %v6200
        %v6340 = vunpack.c.l.b16 %v6201
        %v6341 = vunpack.c.l.b16 %v6202
        %v6342 = vunpack.c.l.b16 %v6203
        %v6343 = vunpack.c.l.b16 %v6204
        %v6344 = vunpack.c.l.b16 %v6205
        %v6345 = vunpack.c.l.b16 %v6206
        %v6346 = vunpack.c.l.b16 %v6207
        %v6347 = vunpack.c.l.b16 %v6208
        %v6348 = vunpack.c.l.b16 %v6209
        %v6349 = vunpack.c.l.b16 %v6210
        %v6350 = vunpack.c.l.b16 %v6211
        %v6351 = vunpack.c.l.b16 %v6212
        %v6352 = vunpack.c.l.b16 %v6213
        %v6353 = vunpack.c.l.b16 %v6214
        %v6354 = vunpack.c.l.b16 %v6215
        %v6355 = vpack.c.b16 %v6292, %v6291
        %v6356 = vpack.c.b16 %v6294, %v6293
        %v6357 = vpack.c.b16 %v6296, %v6295
        %v6358 = vpack.c.b16 %v6298, %v6297
        %v6359 = vpack.c.b16 %v6300, %v6299
        %v6360 = vpack.c.b16 %v6302, %v6301
        %v6361 = vpack.c.b16 %v6304, %v6303
        %v6362 = vpack.c.b16 %v6306, %v6305
        %v6363 = vpack.c.b16 %v6308, %v6307
        %v6364 = vpack.c.b16 %v6310, %v6309
        %v6365 = vpack.c.b16 %v6312, %v6311
        %v6366 = vpack.c.b16 %v6314, %v6313
        %v6367 = vpack.c.b16 %v6316, %v6315
        %v6368 = vpack.c.b16 %v6318, %v6317
        %v6369 = vpack.c.b16 %v6320, %v6319
        %v6370 = vpack.c.b16 %v6322, %v6321
        %v6371 = vpack.c.b16 %v6324, %v6323
        %v6372 = vpack.c.b16 %v6326, %v6325
        %v6373 = vpack.c.b16 %v6328, %v6327
        %v6374 = vpack.c.b16 %v6330, %v6329
        %v6375 = vpack.c.b16 %v6332, %v6331
        %v6376 = vpack.c.b16 %v6334, %v6333
        %v6377 = vpack.c.b16 %v6336, %v6335
        %v6378 = vpack.c.b16 %v6338, %v6337
        %v6379 = vpack.c.b16 %v6340, %v6339
        %v6380 = vpack.c.b16 %v6342, %v6341
        %v6381 = vpack.c.b16 %v6344, %v6343
        %v6382 = vpack.c.b16 %v6346, %v6345
        %v6383 = vpack.c.b16 %v6348, %v6347
        %v6384 = vpack.c.b16 %v6350, %v6349
        %v6385 = vpack.c.b16 %v6352, %v6351
        %v6386 = vpack.c.b16 %v6354, %v6353
        %6419 = vmatprep.subr.bf16.mxu0 0
        %6420 = vmatpush1.bf16.msra.mxu0 %v6355
        %6421 = vmatprep.subr.bf16.mxu0 0
        %6422 = vmatpush1.bf16.msra.mxu0 %v6356
        %6423 = vmatprep.subr.bf16.mxu0 0
        %6424 = vmatpush1.bf16.msra.mxu0 %v6357
        %6425 = vmatprep.subr.bf16.mxu0 0
        %6426 = vmatpush1.bf16.msra.mxu0 %v6358
        %6427 = vmatprep.subr.bf16.mxu0 0
        %6428 = vmatpush1.bf16.msra.mxu0 %v6359
        %6429 = vmatprep.subr.bf16.mxu0 0
        %6430 = vmatpush1.bf16.msra.mxu0 %v6360
        %6431 = vmatprep.subr.bf16.mxu0 0
        %6432 = vmatpush1.bf16.msra.mxu0 %v6361
        %6433 = vmatprep.subr.bf16.mxu0 0
        %6434 = vmatpush1.bf16.msra.mxu0 %v6362
        %6435 = vmatprep.subr.bf16.mxu0 0
        %6436 = vmatpush1.bf16.msra.mxu0 %v6363
        %6437 = vmatprep.subr.bf16.mxu0 0
        %6438 = vmatpush1.bf16.msra.mxu0 %v6364
        %6439 = vmatprep.subr.bf16.mxu0 0
        %6440 = vmatpush1.bf16.msra.mxu0 %v6365
        %6441 = vmatprep.subr.bf16.mxu0 0
        %6442 = vmatpush1.bf16.msra.mxu0 %v6366
        %6443 = vmatprep.subr.bf16.mxu0 0
        %6444 = vmatpush1.bf16.msra.mxu0 %v6367
        %6445 = vmatprep.subr.bf16.mxu0 0
        %6446 = vmatpush1.bf16.msra.mxu0 %v6368
        %6447 = vmatprep.subr.bf16.mxu0 0
        %6448 = vmatpush1.bf16.msra.mxu0 %v6369
        %6449 = vmatprep.subr.bf16.mxu0 0
        %6450 = vmatpush1.bf16.msra.mxu0 %v6370
        %6451 = vmatprep.mubr.bf16.mxu0 %v6217
        %6452 = vmatmul.mubr.bf16.gmra.mrb[0].mxu0 %v6216
        %v6453 = vpop.f32.mrb[0].mxu0
        %v6454 = vadd.f32 %v6225, %v6453
        %v6455 = vpop.f32.mrb[0].mxu0
        %v6456 = vpop.f32.mrb[0].mxu0
        %v6457 = vadd.f32 %v6225, %v6456
        %v6458 = vpop.f32.mrb[0].mxu0
        %6459 = vdwg.mxu0
        %6460 = vmatprep.subr.bf16.mxu0 0
        %6461 = vmatpush1.bf16.msra.mxu0 %v6371
        %6462 = vmatprep.subr.bf16.mxu0 0
        %6463 = vmatpush1.bf16.msra.mxu0 %v6372
        %6464 = vmatprep.subr.bf16.mxu0 0
        %6465 = vmatpush1.bf16.msra.mxu0 %v6373
        %6466 = vmatprep.subr.bf16.mxu0 0
        %6467 = vmatpush1.bf16.msra.mxu0 %v6374
        %6468 = vmatprep.subr.bf16.mxu0 0
        %6469 = vmatpush1.bf16.msra.mxu0 %v6375
        %6470 = vmatprep.subr.bf16.mxu0 0
        %6471 = vmatpush1.bf16.msra.mxu0 %v6376
        %6472 = vmatprep.subr.bf16.mxu0 0
        %6473 = vmatpush1.bf16.msra.mxu0 %v6377
        %6474 = vmatprep.subr.bf16.mxu0 0
        %6475 = vmatpush1.bf16.msra.mxu0 %v6378
        %6476 = vmatprep.subr.bf16.mxu0 0
        %6477 = vmatpush1.bf16.msra.mxu0 %v6379
        %6478 = vmatprep.subr.bf16.mxu0 0
        %6479 = vmatpush1.bf16.msra.mxu0 %v6380
        %6480 = vmatprep.subr.bf16.mxu0 0
        %6481 = vmatpush1.bf16.msra.mxu0 %v6381
        %6482 = vmatprep.subr.bf16.mxu0 0
        %6483 = vmatpush1.bf16.msra.mxu0 %v6382
        %6484 = vmatprep.subr.bf16.mxu0 0
        %6485 = vmatpush1.bf16.msra.mxu0 %v6383
        %6486 = vmatprep.subr.bf16.mxu0 0
        %6487 = vmatpush1.bf16.msra.mxu0 %v6384
        %6488 = vmatprep.subr.bf16.mxu0 0
        %6489 = vmatpush1.bf16.msra.mxu0 %v6385
        %6490 = vmatprep.subr.bf16.mxu0 0
        %6491 = vmatpush1.bf16.msra.mxu0 %v6386
        %6492 = vmatprep.mubr.bf16.mxu0 %v6219
        %6493 = vmatmul.mubr.bf16.gmra.mrb[0].mxu0 %v6218
        %v6494 = vpop.f32.mrb[0].mxu0
        %v6495 = vadd.f32 %v6454, %v6494
        %v6496 = vpop.f32.mrb[0].mxu0
        %v6497 = vpop.f32.mrb[0].mxu0
        %v6498 = vadd.f32 %v6457, %v6497
        %v6499 = vpop.f32.mrb[0].mxu0
        %6500 = vdwg.mxu0
        %v6501 = vadd.f32 %v5743, %v6495
        %v6502 = vadd.f32 %v5744, %v6498
        %6503 = vst [vmem:[#allocation2] sm:$0xff] %v6501
        %6504 = vst [vmem:[#allocation2 + $0x8] sm:$0xff] %v6502
        %p6505 = scmp.eq.s32.totalorder %s56, 11
        // Predicated region
        $region181: #{avmodel_forward.1} parent=111 // pred_check
          %p6506 = pneg %p6505
        $region182: #{avmodel_forward.1} parent=111 // pred_check_branch
          %6508 = sbr.rel (%p6506) target = $region184
        $region183: #{avmodel_forward.1} parent=111 // pred_region
          %v6509 = vld [vmem:[#allocation25] sm:$0x3]
          %vm6510 = vcmask 1040384
          %v6511 = vsel %vm6510, %v3631, 0.0
          %6512 = vadd.xlane.f32.xlu0 %v6511
          %v6513 = vpop.xlane.xlu0 %6512
          %v6514 = vmul.f32 %v6513, %v2910
          %v6515 = vsub.f32 %v3631, %v6514
          %v6516 = vmul.f32 %v6515, %v6515
          %v6517 = vsel %vm6510, %v6516, 0.0
          %6518 = vadd.xlane.f32.xlu0 %v6517
          %v6519 = vpop.xlane.xlu0 %6518
          %v6520 = vmul.f32 %v6519, %v2910
          %v6521 = vadd.f32 %v6520, 1e-06
          %v6522 = vrsqrt.pop %v6521
          %v6523 = vmul.f32 %v6515, %v6522
          %v6524 = vmul.f32 %v6523, %v6509
          %v6526 = vrot.slane %v6509, 1
          %v6528 = vadd.f32 %v6524, %v6526
          %v6529 = vsel %vm6510, %v6501, 0.0
          %6530 = vadd.xlane.f32.xlu0 %v6529
          %v6531 = vpop.xlane.xlu0 %6530
          %v6532 = vmul.f32 %v6531, %v2910
          %v6533 = vsub.f32 %v6501, %v6532
          %v6534 = vmul.f32 %v6533, %v6533
          %v6535 = vsel %vm6510, %v6534, 0.0
          %6536 = vadd.xlane.f32.xlu0 %v6535
          %v6537 = vpop.xlane.xlu0 %6536
          %v6538 = vmul.f32 %v6537, %v2910
          %v6539 = vadd.f32 %v6538, 1e-06
          %v6540 = vrsqrt.pop %v6539
          %v6541 = vmul.f32 %v6533, %v6540
          %v6542 = vmul.f32 %v6541, %v6509
          %v6543 = vadd.f32 %v6542, %v6526
          %v6544 = vadd.f32 %v6528, %v6543
          %v6545 = vmul.f32 %v6544, 0.5
          %v6546 = vld [vmem:[#allocation27] sm:$0xf]
          %v6547 = vld [vmem:[#allocation27 + $0x4] sm:$0xf]
          %v6548 = vld [vmem:[#allocation27 + $0x8] sm:$0xf]
          %v6549 = vld [vmem:[#allocation27 + $0xc] sm:$0xf]
          %v6550 = vld [vmem:[#allocation27 + $0x10] sm:$0xf]
          %v6551 = vld [vmem:[#allocation27 + $0x14] sm:$0xf]
          %v6552 = vld [vmem:[#allocation27 + $0x18] sm:$0xf]
          %v6553 = vld [vmem:[#allocation27 + $0x1c] sm:$0xf]
          %v6554 = vld [vmem:[#allocation27 + $0x20] sm:$0xf]
          %v6555 = vld [vmem:[#allocation27 + $0x24] sm:$0xf]
          %v6556 = vld [vmem:[#allocation27 + $0x28] sm:$0xf]
          %v6557 = vld [vmem:[#allocation27 + $0x2c] sm:$0xf]
          %v6558 = vld [vmem:[#allocation27 + $0x30] sm:$0xf]
          %v6559 = vld [vmem:[#allocation27 + $0x34] sm:$0xf]
          %v6560 = vld [vmem:[#allocation27 + $0x38] sm:$0xf]
          %v6561 = vld [vmem:[#allocation27 + $0x3c] sm:$0xf]
          %v6562 = vpack.c.bf16 %v6545, %v6545
          %v6563 = vld [vmem:[#allocation28] sm:$0x1]
          %v6580 = vunpack.c.l.b16 %v6546
          %v6581 = vunpack.c.l.b16 %v6547
          %v6582 = vunpack.c.l.b16 %v6548
          %v6583 = vunpack.c.l.b16 %v6549
          %v6584 = vunpack.c.l.b16 %v6550
          %v6585 = vunpack.c.l.b16 %v6551
          %v6586 = vunpack.c.l.b16 %v6552
          %v6587 = vunpack.c.l.b16 %v6553
          %v6588 = vunpack.c.l.b16 %v6554
          %v6589 = vunpack.c.l.b16 %v6555
          %v6590 = vunpack.c.l.b16 %v6556
          %v6591 = vunpack.c.l.b16 %v6557
          %v6592 = vunpack.c.l.b16 %v6558
          %v6593 = vunpack.c.l.b16 %v6559
          %v6594 = vunpack.c.l.b16 %v6560
          %v6595 = vunpack.c.l.b16 %v6561
          %v6596 = vpack.c.b16 %v6581, %v6580
          %v6597 = vpack.c.b16 %v6583, %v6582
          %v6598 = vpack.c.b16 %v6585, %v6584
          %v6599 = vpack.c.b16 %v6587, %v6586
          %v6600 = vpack.c.b16 %v6589, %v6588
          %v6601 = vpack.c.b16 %v6591, %v6590
          %v6602 = vpack.c.b16 %v6593, %v6592
          %v6603 = vpack.c.b16 %v6595, %v6594
          %6612 = vmatprep.subr.bf16.mxu0 0
          %6613 = vmatpush1.bf16.msra.mxu0 %v6596
          %6614 = vmatprep.subr.bf16.mxu0 0
          %6615 = vmatpush1.bf16.msra.mxu0 %v6597
          %6616 = vmatprep.subr.bf16.mxu0 0
          %6617 = vmatpush1.bf16.msra.mxu0 %v6598
          %6618 = vmatprep.subr.bf16.mxu0 0
          %6619 = vmatpush1.bf16.msra.mxu0 %v6599
          %6620 = vmatprep.subr.bf16.mxu0 0
          %6621 = vmatpush1.bf16.msra.mxu0 %v6600
          %6622 = vmatprep.subr.bf16.mxu0 0
          %6623 = vmatpush1.bf16.msra.mxu0 %v6601
          %6624 = vmatprep.subr.bf16.mxu0 0
          %6625 = vmatpush1.bf16.msra.mxu0 %v6602
          %6626 = vmatprep.subr.bf16.mxu0 0
          %6627 = vmatpush1.bf16.msra.mxu0 %v6603
          %6628 = vmatprep.subr.bf16.mxu0 0
          %6629 = vmatpush1.bf16.msra.mxu0 0
          %6630 = vmatprep.subr.bf16.mxu0 0
          %6631 = vmatpush1.bf16.msra.mxu0 0
          %6632 = vmatprep.subr.bf16.mxu0 0
          %6633 = vmatpush1.bf16.msra.mxu0 0
          %6634 = vmatprep.subr.bf16.mxu0 0
          %6635 = vmatpush1.bf16.msra.mxu0 0
          %6636 = vmatprep.subr.bf16.mxu0 0
          %6637 = vmatpush1.bf16.msra.mxu0 0
          %6638 = vmatprep.subr.bf16.mxu0 0
          %6639 = vmatpush1.bf16.msra.mxu0 0
          %6640 = vmatprep.subr.bf16.mxu0 0
          %6641 = vmatpush1.bf16.msra.mxu0 0
          %6642 = vmatprep.subr.bf16.mxu0 0
          %6643 = vmatpush1.bf16.msra.mxu0 0
          %6644 = vmatprep.mubr.bf16.mxu0 0
          %6645 = vmatmul.mubr.bf16.gmra.mrb[0].mxu0 %v6562
          %v6646 = vpop.f32.mrb[0].mxu0
          %v6647 = vadd.f32 %v6563, %v6646
          %v6648 = vpop.f32.mrb[0].mxu0
          %v6649 = vpop.f32.mrb[0].mxu0
          %v6650 = vpop.f32.mrb[0].mxu0
          %6651 = vdwg.mxu0
          %6652 = vst [vmem:[%s1147] sm:$0x1] %v6647
        $region184: #{avmodel_forward.1} parent=111 // pred_fallthru
          _
        %p6653 = scmp.lt.s32.totalorder %s55, 1
        %s6654 = scalar_select %p6653, %s55, 1
        %s6655 = smul.addr %s6654, 8
        %s6656 = scalar_lea.vmem %s23, %s6655
        // Predicated region
        $region185: #{avmodel_forward.1} parent=111 // pred_check
          %p6657 = pneg %p619
        $region186: #{avmodel_forward.1} parent=111 // pred_check_branch
          %6659 = sbr.rel (%p6657) target = $region188
        $region187: #{avmodel_forward.1} parent=111 // pred_region
          _
        $region188: #{avmodel_forward.1} parent=111 // pred_fallthru
          _
      $region112: #{avmodel_forward.1} parent=5 // pred_fallthru
        _
      %p6660 = scmp.le.s32.totalorder 2, %s46
      // Predicated region
      $region189: #{avmodel_forward.1} parent=5 // pred_check
        %p6661 = pneg %p6660
      $region190: #{avmodel_forward.1} parent=5 // pred_check_branch
        %6663 = sbr.rel (%p6661) target = $region192
      $region191: #{avmodel_forward.1} parent=5 // pred_region
        %s6664 = ssub.s32 %s46, 2
        // Predicated region
        $region193: #{avmodel_forward.1} parent=191 // pred_check
          %p6665 = pneg %p625
        $region194: #{avmodel_forward.1} parent=191 // pred_check_branch
          %6667 = sbr.rel (%p6665) target = $region196
        $region195: #{avmodel_forward.1} parent=191 // pred_region
          %p6668 = scmp.lt.s32.totalorder %s57, 1
          %s6669 = scalar_select %p6668, %s57, 1
          %s6670 = smul.addr %s6669, 8
          %s6671 = scalar_lea.vmem %s23, %s6670
        $region196: #{avmodel_forward.1} parent=191 // pred_fallthru
          _
      $region192: #{avmodel_forward.1} parent=5 // pred_fallthru
        _
    $region6: #{avmodel_forward.1} parent=1 // loop_footer
      %s50 = sadd.s32 1, %s46
    $region7: #{avmodel_forward.1} parent=1 // loop_footer_branch
      %45 = sbr.rel target = $region3
    $region8: #{avmodel_forward.1} parent=1 // loop_exit
      _
    %6672 = vsyncpa [#allocation6], 1
    %s6673 = scalar_lea.sflag [#allocation6], 1
    %6674 = vsyncpa %s6673, 1
    %6675 = vsyncpa [#allocation8], 1
    %s6676 = scalar_lea.sflag [#allocation8], 1
    %6677 = vsyncpa %s6676, 1
    %6678 = vsyncpa [#allocation11], 1
    %s6679 = scalar_lea.sflag [#allocation11], 1
    %6680 = vsyncpa %s6679, 1
    %6681 = vsyncpa [#allocation14], 1
    %s6682 = scalar_lea.sflag [#allocation14], 1
    %6683 = vsyncpa %s6682, 1
    %6684 = vsyncpa [#allocation17], 1
    %6685 = vsyncpa [#allocation20], 1
    %6686 = vsyncpa [#allocation23], 1
    %6687 = vsyncpa [#allocation26], 1
    %6688 = vsyncpa [#allocation29], 1

</llo_original>
